<compile_context>
chip_gen: v6e
topology: v6e:2x2x1
jax: 0.10.0
libtpu: 0.0.40
codegen_flags: <defaults>
</compile_context>

<pallas_src>
import functools

import numpy as np
import jax
import jax.numpy as jnp
from jax import lax
from jax.experimental import pallas as pl
from jax.experimental.pallas import tpu as pltpu


_DEFAULT_TM = 512          # large row tiles: these matmuls are HBM-bound (tiny K)
_VMEM_CACHE = None


def _round_up(a, b):
    return (a + b - 1) // b * b


def _vmem_limit():
    """Generation-aware scoped-VMEM limit (v7x only has 64 MiB physical)."""
    global _VMEM_CACHE
    if _VMEM_CACHE is None:
        try:
            cap = int(pltpu.get_tpu_info().vmem_capacity_bytes)
        except Exception:
            cap = 128 * 1024 * 1024
        _VMEM_CACHE = int(min(max(cap // 2, 16 * 1024 * 1024), 64 * 1024 * 1024))
    return _VMEM_CACHE


# ----------------------------------------------------------------------------
# Pallas kernels
# ----------------------------------------------------------------------------
def _mm_bias_kernel(x_ref, w_ref, b_ref, o_ref, *, relu):
    acc = jnp.dot(x_ref[...].astype(jnp.bfloat16), w_ref[...],
                  preferred_element_type=jnp.float32)
    acc = acc + b_ref[...]
    if relu:
        acc = jnp.maximum(acc, 0.0)
    o_ref[...] = acc.astype(o_ref.dtype)


def _mm_bias_stats_kernel(x_ref, w_ref, b_ref, o_ref, st_ref, *, relu, m_true, tm):
    acc = jnp.dot(x_ref[...].astype(jnp.bfloat16), w_ref[...],
                  preferred_element_type=jnp.float32)
    acc = acc + b_ref[...]
    if relu:
        acc = jnp.maximum(acc, 0.0)
    o_ref[...] = acc.astype(o_ref.dtype)
    # Per-tile partial (sum, sum-of-squares) for BatchNorm batch statistics.
    # Mask out padded rows (they hold the bias because the padded x rows are 0).
    row = pl.program_id(0) * tm + lax.broadcasted_iota(jnp.int32, (tm, 1), 0)
    acc_m = jnp.where(row < m_true, acc, 0.0)
    st_ref[0, 0:1, :] = jnp.sum(acc_m, axis=0, keepdims=True)
    st_ref[0, 1:2, :] = jnp.sum(acc_m * acc_m, axis=0, keepdims=True)


def _affine_kernel(x_ref, s_ref, t_ref, o_ref, *, relu):
    y = x_ref[...].astype(jnp.float32) * s_ref[...] + t_ref[...]
    if relu:
        y = jnp.maximum(y, 0.0)
    o_ref[...] = y.astype(o_ref.dtype)


def _bilstm_kernel(xp_ref, mk_ref, whh_ref, out_ref, h_ref, c_ref, *, H, TB):
    """One time-block of both LSTM directions.

    Grid is (direction ["parallel"], time block ["arbitrary"]).  The index_maps
    already present reversed time blocks for the backward direction; in-block
    order is reversed here.  h/c persist in VMEM scratch across time blocks.
    """
    d = pl.program_id(0)

    @pl.when(pl.program_id(1) == 0)
    def _():
        h_ref[...] = jnp.zeros_like(h_ref)
        c_ref[...] = jnp.zeros_like(c_ref)

    whh = whh_ref[0]                                          # (H, 4H) bf16

    def step(s, carry):
        j = s + d * (TB - 1 - 2 * s)                          # reverse in-block for bwd
        h_prev = h_ref[...]
        c_prev = c_ref[...]
        gates = xp_ref[0, j] + jnp.dot(h_prev.astype(jnp.bfloat16), whh,
                                       preferred_element_type=jnp.float32)
        i_g = jax.nn.sigmoid(gates[:, 0:H])
        f_g = jax.nn.sigmoid(gates[:, H:2 * H])
        g_g = jnp.tanh(gates[:, 2 * H:3 * H])
        o_g = jax.nn.sigmoid(gates[:, 3 * H:4 * H])
        c_new = f_g * c_prev + i_g * g_g
        h_new = o_g * jnp.tanh(c_new)
        m = mk_ref[j]                                         # (Beff, 1) in {0, 1}
        h_ref[...] = h_prev + m * (h_new - h_prev)            # packed-seq: freeze state
        c_ref[...] = c_prev + m * (c_new - c_prev)
        out_ref[0, j] = (h_new * m).astype(out_ref.dtype)     # pad frames output zeros
        return carry

    lax.fori_loop(0, TB, step, 0, unroll=True)


# ----------------------------------------------------------------------------
# Pallas wrappers
# ----------------------------------------------------------------------------
def matmul_packed(x, w_p, b_p, n_out, relu=False, out_dtype=jnp.float32, tm=None):
    """y = act(x @ w + b) with a pre-padded bf16 weight (K, Np) and f32 bias (1, Np)."""
    M, K = x.shape
    _, Np = w_p.shape
    if tm is None:
        tm = _DEFAULT_TM
    tm_eff = min(tm, _round_up(M, 16))
    Mp = _round_up(M, tm_eff)
    x_p = x if Mp == M else jnp.pad(x, ((0, Mp - M), (0, 0)))
    out = pl.pallas_call(
        functools.partial(_mm_bias_kernel, relu=relu),
        out_shape=jax.ShapeDtypeStruct((Mp, Np), out_dtype),
        grid=(Mp // tm_eff,),
        in_specs=[
            pl.BlockSpec((tm_eff, K), lambda i: (i, 0)),
            pl.BlockSpec((K, Np), lambda i: (0, 0)),      # weight resident in VMEM
            pl.BlockSpec((1, Np), lambda i: (0, 0)),
        ],
        out_specs=pl.BlockSpec((tm_eff, Np), lambda i: (i, 0)),
        compiler_params=pltpu.CompilerParams(
            dimension_semantics=("parallel",), vmem_limit_bytes=_vmem_limit()),
    )(x_p, w_p, b_p)
    return out[:M, :n_out]


def matmul_packed_stats(x, w_p, b_p, relu=False, out_dtype=jnp.bfloat16, tm=None):
    """Like matmul_packed but also emits per-tile (sum, sum-sq) partials.

    Returns the FULL padded (Mp, Np) output plus stats of shape (n_tiles, 2, Np)."""
    M, K = x.shape
    _, Np = w_p.shape
    if tm is None:
        tm = _DEFAULT_TM
    tm_eff = min(tm, _round_up(M, 16))
    Mp = _round_up(M, tm_eff)
    nblk = Mp // tm_eff
    x_p = x if Mp == M else jnp.pad(x, ((0, Mp - M), (0, 0)))
    y, st = pl.pallas_call(
        functools.partial(_mm_bias_stats_kernel, relu=relu, m_true=M, tm=tm_eff),
        out_shape=(jax.ShapeDtypeStruct((Mp, Np), out_dtype),
                   jax.ShapeDtypeStruct((nblk, 2, Np), jnp.float32)),
        grid=(nblk,),
        in_specs=[
            pl.BlockSpec((tm_eff, K), lambda i: (i, 0)),
            pl.BlockSpec((K, Np), lambda i: (0, 0)),
            pl.BlockSpec((1, Np), lambda i: (0, 0)),
        ],
        out_specs=(pl.BlockSpec((tm_eff, Np), lambda i: (i, 0)),
                   pl.BlockSpec((1, 2, Np), lambda i: (i, 0, 0))),
        compiler_params=pltpu.CompilerParams(
            dimension_semantics=("parallel",), vmem_limit_bytes=_vmem_limit()),
    )(x_p, w_p, b_p)
    return y, st


def affine_act(x2d, scale, shift, relu=False, out_dtype=jnp.float32, tm=None):
    """Row-parallel per-column affine (+ReLU): y = x*scale + shift; x2d:(M,N)."""
    M, N = x2d.shape
    if tm is None:
        tm = _DEFAULT_TM
    tm_eff = min(tm, _round_up(M, 16))
    Mp = _round_up(M, tm_eff)
    Np = _round_up(N, 128)
    x_p = x2d if (Mp == M and Np == N) else jnp.pad(x2d, ((0, Mp - M), (0, Np - N)))
    s_p = jnp.pad(scale.astype(jnp.float32), (0, Np - N)).reshape(1, Np)
    t_p = jnp.pad(shift.astype(jnp.float32), (0, Np - N)).reshape(1, Np)
    out = pl.pallas_call(
        functools.partial(_affine_kernel, relu=relu),
        out_shape=jax.ShapeDtypeStruct((Mp, Np), out_dtype),
        grid=(Mp // tm_eff,),
        in_specs=[
            pl.BlockSpec((tm_eff, Np), lambda i: (i, 0)),
            pl.BlockSpec((1, Np), lambda i: (0, 0)),
            pl.BlockSpec((1, Np), lambda i: (0, 0)),
        ],
        out_specs=pl.BlockSpec((tm_eff, Np), lambda i: (i, 0)),
        compiler_params=pltpu.CompilerParams(
            dimension_semantics=("parallel",), vmem_limit_bytes=_vmem_limit()),
    )(x_p, s_p, t_p)
    return out[:M, :N]


def bilstm_recurrence(xp4, mask, whh2, H, TB):
    """xp4:(2, Tp, Beff, 4H) f32 preactivations (fwd, bwd), mask:(Tp, Beff, 1),
    whh2:(2, H, 4H) bf16 -> (2, Tp, Beff, H) bf16 hidden states."""
    _, Tp, Beff, G = xp4.shape
    nblk = Tp // TB

    def tmap(d, i):                      # reversed time blocks for the bwd direction
        return (1 - d) * i + d * (nblk - 1 - i)

    return pl.pallas_call(
        functools.partial(_bilstm_kernel, H=H, TB=TB),
        out_shape=jax.ShapeDtypeStruct((2, Tp, Beff, H), jnp.bfloat16),
        grid=(2, nblk),
        in_specs=[
            pl.BlockSpec((1, TB, Beff, G), lambda d, i: (d, tmap(d, i), 0, 0)),
            pl.BlockSpec((TB, Beff, 1), lambda d, i: (tmap(d, i), 0, 0)),
            pl.BlockSpec((1, H, G), lambda d, i: (d, 0, 0)),   # w_hh resident
        ],
        out_specs=pl.BlockSpec((1, TB, Beff, H), lambda d, i: (d, tmap(d, i), 0, 0)),
        scratch_shapes=[pltpu.VMEM((Beff, H), jnp.float32),
                        pltpu.VMEM((Beff, H), jnp.float32)],
        compiler_params=pltpu.CompilerParams(
            dimension_semantics=("parallel", "arbitrary"),   # dir x 2 TCs, time serial
            vmem_limit_bytes=_vmem_limit()),
    )(xp4, mask.astype(jnp.float32), whh2)


# ----------------------------------------------------------------------------
# Layer helpers
# ----------------------------------------------------------------------------
def avg_pool1d(x, k):
    """nn.AvgPool1d(k, stride=1, padding=k//2, count_include_pad=True)."""
    pad = k // 2
    T = x.shape[-1]
    xp = jnp.pad(x, ((0, 0), (0, 0), (pad, pad)))
    Tout = T + 2 * pad - k + 1
    acc = jnp.zeros(x.shape[:-1] + (Tout,), jnp.float32)
    for i in range(k):
        acc = acc + xp[..., i:i + Tout]
    return acc / k


def conv_bn_relu_nhwc(x, blk, cout, k, stride, eps=1e-5):
    """nn.Conv2d + nn.BatchNorm2d(train, batch stats) + ReLU, channels-last."""
    B, Hh, Ww, Cin = x.shape
    pad = k // 2
    Ho = (Hh + 2 * pad - k) // stride + 1
    Wo = (Ww + 2 * pad - k) // stride + 1
    xp = jnp.pad(x, ((0, 0), (pad, pad), (pad, pad), (0, 0)))
    # TODO(synk): fold the kh*kw shifts into a reduction grid axis of the conv
    # matmul (accumulator scratch) to avoid materialising im2col patches in HBM.
    cols = [xp[:, di:di + stride * Ho:stride, dj:dj + stride * Wo:stride, :]
            for di in range(k) for dj in range(k)]
    patches = jnp.stack(cols, axis=3).reshape(B * Ho * Wo, k * k * Cin)

    y, st = matmul_packed_stats(patches, blk['w'], blk['b'], relu=False,
                                out_dtype=jnp.bfloat16)
    m = B * Ho * Wo
    s1 = jnp.sum(st[:, 0, :], axis=0)
    s2 = jnp.sum(st[:, 1, :], axis=0)
    mean = s1 / m
    var = jnp.maximum(s2 / m - mean * mean, 0.0)   # biased var (BN training mode)

    Np = y.shape[1]
    gamma_p = jnp.pad(blk['gamma'].astype(jnp.float32), (0, Np - cout))
    beta_p = jnp.pad(blk['beta'].astype(jnp.float32), (0, Np - cout))
    scale = gamma_p * lax.rsqrt(var + eps)
    shift = beta_p - mean * scale
    z = affine_act(y, scale, shift, relu=True, out_dtype=jnp.bfloat16)
    return z[:m, :cout].reshape(B, Ho, Wo, cout)


def lstm_projection_tm(x_tm, lengths, p, H, lin):
    """LSTM_Projection (bidirectional LSTM on packed sequences + per-direction
    Linear+ReLU heads).  x_tm:(T, Beff, In) time-major -> (T, Beff, 2*lin) bf16."""
    T, Beff, In = x_tm.shape
    G = 4 * H

    # Fused fwd+bwd input projection (one matmul, 8H output columns);
    # both LSTM biases folded into the projection bias.  f32 preactivations.
    proj = matmul_packed(x_tm.reshape(T * Beff, In), p['wih'], p['bih'],
                         n_out=8 * H, relu=False, out_dtype=jnp.float32)

    TB = T if T <= 16 else 16
    Tp = _round_up(T, TB)
    xp4 = jnp.transpose(proj.reshape(T, Beff, 2, G), (2, 0, 1, 3))   # (2,T,Beff,4H)
    if Tp != T:
        xp4 = jnp.pad(xp4, ((0, 0), (0, Tp - T), (0, 0), (0, 0)))
    mask = (jnp.arange(Tp)[:, None] < jnp.asarray(lengths)[None, :]
            ).astype(jnp.float32)[:, :, None]                        # (Tp, Beff, 1)

    out = bilstm_recurrence(xp4, mask, p['whh'], H, TB)              # (2,Tp,Beff,H)
    hcat = jnp.concatenate([out[0, :T], out[1, :T]], axis=-1)        # (T, Beff, 2H)

    # Fused block-diagonal projection heads (+ ReLU): one matmul, 2*lin columns.
    y = matmul_packed(hcat.reshape(T * Beff, 2 * H), p['whead'], p['bhead'],
                      n_out=2 * lin, relu=True, out_dtype=jnp.bfloat16)
    return y.reshape(T, Beff, 2 * lin)


# ----------------------------------------------------------------------------
# TS_VAD_SC forward
# ----------------------------------------------------------------------------
def ts_vad_sc_forward(pp, cfg, x, embedding, nframes):
    B, Freq, Time = x.shape
    spk = embedding.shape[1]
    E = cfg['speaker_embedding_dim']
    L = cfg['Linear_dim']

    # BatchNorm2d(1) in training mode (batch statistics) + avg-pool + 2-channel
    # stack: cheap prologue left to XLA so it fuses into one pass over x.
    # TODO(synk): eval-mode BN (running stats) would need the running buffers.
    m1 = jnp.mean(x)
    m2 = jnp.mean(x * x)
    var0 = jnp.maximum(m2 - m1 * m1, 0.0)
    sc0 = pp['bn0_gamma'][0] * lax.rsqrt(var0 + 1e-5)
    sh0 = pp['bn0_beta'][0] - m1 * sc0
    x3 = x * sc0 + sh0
    x3m = avg_pool1d(x3, cfg['average_pooling'])
    h = jnp.stack([x3, x3m], axis=-1).astype(jnp.bfloat16)       # NHWC (B,Freq,Time,2)

    for blk, (cin, cout, k, s) in zip(pp['conv_blocks'], cfg['cnn_configs']):
        h = conv_bn_relu_nhwc(h, blk, cout, k, s)
    Bc, Fp, Tc, Cout = h.shape
    Freq2 = Cout * Fp
    assert Freq2 == pp['lin_w_top'].shape[0]

    # x_6 features ordered as cout*F' + f (PyTorch NCHW reshape), time-major.
    x6_tm = jnp.transpose(h, (2, 0, 3, 1)).reshape(Tc, B, Freq2)

    # Splice split: x6 @ W_top once per (t,b), embedding @ W_bot once per (b,s);
    # broadcast-add + bias + ReLU -> no spk-times duplicated x7 in HBM.
    a_tb = matmul_packed(x6_tm.reshape(Tc * B, Freq2), pp['lin_w_top'], pp['lin_b'],
                         n_out=L, relu=False, out_dtype=jnp.float32)
    b_bs = matmul_packed(embedding.reshape(B * spk, E), pp['lin_w_bot'],
                         pp['lin_zero_b'], n_out=L, relu=False, out_dtype=jnp.float32)
    x8 = jax.nn.relu(a_tb.reshape(Tc, B, 1, L) + b_bs.reshape(1, B, spk, L))
    x8 = x8.astype(jnp.bfloat16).reshape(Tc, B * spk, L)

    nf = np.asarray(nframes, np.int32)
    lens_spk = np.repeat(nf, spk)

    x9 = lstm_projection_tm(x8, lens_spk, pp['blstmp1'],
                            cfg['Shared_BLSTM_dim'], cfg['Linear_Shared_layer1_dim'])
    x10 = lstm_projection_tm(x9, lens_spk, pp['blstmp2'],
                             cfg['Shared_BLSTM_dim'], cfg['Linear_Shared_layer2_dim'])

    # Combine speakers: (T, B*spk, D) -> (T, B, spk*D)   (no transpose needed).
    D = x10.shape[-1]
    x11 = x10.reshape(Tc, B, spk * D)
    x12 = lstm_projection_tm(x11, nf, pp['blstmp'],
                             cfg['BLSTM_dim'], cfg['BLSTM_Projection_dim'])

    # Select valid frames per sequence (nframes static -> static slices), then FC.
    x13 = jnp.concatenate([x12[:int(n), b, :] for b, n in enumerate(nframes)], axis=0)
    out = matmul_packed(x13, pp['fc_w'], pp['fc_b'], n_out=cfg['output_dim'],
                        relu=False, out_dtype=jnp.float32)
    return [out]


# ----------------------------------------------------------------------------
# Parameter init (PyTorch-like shapes) and one-time packing (outside jit)
# ----------------------------------------------------------------------------
def init_params(cfg, key):
    def u(shape, scale=0.1):
        nonlocal key
        key, sub = jax.random.split(key)
        return jax.random.uniform(sub, shape, jnp.float32, -scale, scale)

    def lstm_proj_params(in_dim, hidden, lin_dim):
        def direction():
            return {'w_ih': u((4 * hidden, in_dim)), 'w_hh': u((4 * hidden, hidden)),
                    'b_ih': u((4 * hidden,)), 'b_hh': u((4 * hidden,))}
        return {'fwd': direction(), 'bwd': direction(),
                'proj_f_w': u((lin_dim, hidden)), 'proj_f_b': u((lin_dim,)),
                'proj_b_w': u((lin_dim, hidden)), 'proj_b_b': u((lin_dim,))}

    conv_blocks = []
    for cin, cout, k, s in cfg['cnn_configs']:
        conv_blocks.append({'w': u((cout, cin, k, k)), 'b': u((cout,)),
                            'gamma': jnp.ones((cout,), jnp.float32),
                            'beta': jnp.zeros((cout,), jnp.float32)})

    return {
        'bn0_gamma': jnp.ones((1,), jnp.float32),
        'bn0_beta': jnp.zeros((1,), jnp.float32),
        'conv_blocks': conv_blocks,
        'linear_w': u((cfg['Linear_dim'], cfg['splice_size'])),
        'linear_b': u((cfg['Linear_dim'],)),
        'blstmp1': lstm_proj_params(cfg['Linear_dim'], cfg['Shared_BLSTM_dim'],
                                    cfg['Linear_Shared_layer1_dim']),
        'blstmp2': lstm_proj_params(cfg['Linear_Shared_layer1_dim'] * 2,
                                    cfg['Shared_BLSTM_dim'],
                                    cfg['Linear_Shared_layer2_dim']),
        'blstmp': lstm_proj_params(
            cfg['Linear_Shared_layer2_dim'] * 2 * cfg['output_speaker'],
            cfg['BLSTM_dim'], cfg['BLSTM_Projection_dim']),
        'fc_w': u((cfg['output_dim'], cfg['BLSTM_Projection_dim'] * 2)),
        'fc_b': u((cfg['output_dim'],)),
    }


def _pack_matmul(w_t, b):
    """w_t:(K, N) f32, b:(N,) -> bf16 (K, Np) lane-padded weight + f32 (1, Np) bias."""
    K, N = w_t.shape
    Np = _round_up(N, 128)
    w_p = jnp.pad(w_t.astype(jnp.float32), ((0, 0), (0, Np - N))).astype(jnp.bfloat16)
    b_p = jnp.pad(b.astype(jnp.float32), (0, Np - N)).reshape(1, Np)
    return w_p, b_p


def pack_params(raw, cfg):
    """One-time weight preprocessing (transposes, fusion, padding, bf16 casts)."""
    E = cfg['speaker_embedding_dim']
    Freq2 = cfg['splice_size'] - E
    p = {'bn0_gamma': raw['bn0_gamma'], 'bn0_beta': raw['bn0_beta']}

    conv_blocks = []
    for blk, (cin, cout, k, s) in zip(raw['conv_blocks'], cfg['cnn_configs']):
        wmat = jnp.transpose(blk['w'], (2, 3, 1, 0)).reshape(k * k * cin, cout)
        w_p, b_p = _pack_matmul(wmat, blk['b'])
        conv_blocks.append({'w': w_p, 'b': b_p, 'gamma': blk['gamma'],
                            'beta': blk['beta']})
    p['conv_blocks'] = conv_blocks

    lw = raw['linear_w']                                    # (L, Freq2 + E)
    p['lin_w_top'], p['lin_b'] = _pack_matmul(lw[:, :Freq2].T, raw['linear_b'])
    p['lin_w_bot'], p['lin_zero_b'] = _pack_matmul(lw[:, Freq2:].T,
                                                   jnp.zeros_like(raw['linear_b']))

    def pack_lstm(lp):
        H = lp['fwd']['w_hh'].shape[1]
        wih = jnp.concatenate([lp['fwd']['w_ih'].T, lp['bwd']['w_ih'].T], axis=1)
        bih = jnp.concatenate([lp['fwd']['b_ih'] + lp['fwd']['b_hh'],
                               lp['bwd']['b_ih'] + lp['bwd']['b_hh']], axis=0)
        wih_p, bih_p = _pack_matmul(wih, bih)
        whh = jnp.stack([lp['fwd']['w_hh'].T, lp['bwd']['w_hh'].T],
                        axis=0).astype(jnp.bfloat16)        # (2, H, 4H)
        lin = lp['proj_f_w'].shape[0]
        w_bd = jnp.zeros((2 * H, 2 * lin), jnp.float32)
        w_bd = w_bd.at[:H, :lin].set(lp['proj_f_w'].T).at[H:, lin:].set(lp['proj_b_w'].T)
        b_bd = jnp.concatenate([lp['proj_f_b'], lp['proj_b_b']], axis=0)
        whead_p, bhead_p = _pack_matmul(w_bd, b_bd)
        return {'wih': wih_p, 'bih': bih_p, 'whh': whh,
                'whead': whead_p, 'bhead': bhead_p}

    p['blstmp1'] = pack_lstm(raw['blstmp1'])
    p['blstmp2'] = pack_lstm(raw['blstmp2'])
    p['blstmp'] = pack_lstm(raw['blstmp'])

    p['fc_w'], p['fc_b'] = _pack_matmul(raw['fc_w'].T, raw['fc_b'])
    return p


if __name__ == "__main__":
    cfg = dict(
        input_dim=16, speaker_embedding_dim=8, Linear_dim=32,
        Shared_BLSTM_dim=16, Linear_Shared_layer1_dim=16,
        Linear_Shared_layer2_dim=16, BLSTM_dim=16, BLSTM_Projection_dim=16,
        output_dim=2, output_speaker=4, average_pooling=3,
        cnn_configs=[[2, 4, 3, 1], [4, 4, 3, 1], [4, 4, 3, 1], [4, 4, 3, 1]],
        splice_size=4 * 16 + 8,   # Cout * Freq + speaker_embedding_dim
    )
    B, Freq, Time = 2, cfg['input_dim'], 8
    key = jax.random.PRNGKey(0)
    kx, ke, kp = jax.random.split(key, 3)
    x = jax.random.normal(kx, (B, Freq, Time), jnp.float32)
    embedding = jax.random.normal(
        ke, (B, cfg['output_speaker'], cfg['speaker_embedding_dim']), jnp.float32)
    nframes = [8, 6]   # descending; max(nframes) == Time (required by the reshape)

    raw = init_params(cfg, kp)
    packed = pack_params(raw, cfg)            # one-time weight prep, outside jit

    fwd = jax.jit(lambda p, xx, ee: ts_vad_sc_forward(p, cfg, xx, ee, nframes))
    outs = fwd(packed, x, embedding)
    out = jax.block_until_ready(outs[0])
    assert out.shape == (sum(nframes), cfg['output_dim']), out.shape
    assert bool(jnp.all(jnp.isfinite(out)))
    print("KERNEL_OK")
</pallas_src>

<mosaic_0001>
module attributes {stable_mosaic.version = 11 : i64} {
  func.func @_mm_bias_stats_kernel(%arg0: i32, %arg1: memref<256x18xbf16, #tpu.memory_space<vmem>>, %arg2: memref<18x128xbf16, #tpu.memory_space<vmem>>, %arg3: memref<1x128xf32, #tpu.memory_space<vmem>>, %arg4: memref<256x128xbf16, #tpu.memory_space<vmem>>, %arg5: memref<1x2x128xf32, #tpu.memory_space<vmem>>) attributes {dimension_semantics = [#tpu.dimension_semantics<parallel>], iteration_bounds = array<i64: 1>, scalar_prefetch = 0 : i64, scratch_operands = 0 : i64, tpu.core_type = #tpu.core_type<tc>, window_params = [{transform_indices = @transform_0, window_bounds = array<i64: 256, 18>}, {pipeline_mode = #tpu.pipeline_mode<synchronous>, transform_indices = @transform_1, window_bounds = array<i64: 18, 128>}, {pipeline_mode = #tpu.pipeline_mode<synchronous>, transform_indices = @transform_2, window_bounds = array<i64: 1, 128>}, {transform_indices = @transform_3, window_bounds = array<i64: 256, 128>}, {transform_indices = @transform_4, window_bounds = array<i64: 1, 2, 128>}]} {
    %c0 = arith.constant 0 : index
    %c0_0 = arith.constant 0 : index
    %0 = vector.load %arg1[%c0, %c0_0] : memref<256x18xbf16, #tpu.memory_space<vmem>>, vector<256x18xbf16>
    %c0_1 = arith.constant 0 : index
    %c0_2 = arith.constant 0 : index
    %1 = vector.load %arg2[%c0_1, %c0_2] : memref<18x128xbf16, #tpu.memory_space<vmem>>, vector<18x128xbf16>
    %cst = arith.constant dense<0.000000e+00> : vector<256x128xf32>
    %2 = tpu.matmul %0, %1, %cst {dimension_numbers = #tpu.dot_dimension_numbers<[1], [0], [0], [1], [0, 0, 1, 1], [], []>} : vector<256x18xbf16>, vector<18x128xbf16>, vector<256x128xf32> -> vector<256x128xf32>
    %c0_3 = arith.constant 0 : index
    %c0_4 = arith.constant 0 : index
    %3 = vector.load %arg3[%c0_3, %c0_4] : memref<1x128xf32, #tpu.memory_space<vmem>>, vector<1x128xf32>
    %4 = vector.broadcast %3 : vector<1x128xf32> to vector<256x128xf32>
    %5 = arith.addf %2, %4 : vector<256x128xf32>
    %6 = arith.truncf %5 : vector<256x128xf32> to vector<256x128xbf16>
    %c0_5 = arith.constant 0 : index
    %c0_6 = arith.constant 0 : index
    %7 = vector.load %arg4[%c0_5, %c0_6] : memref<256x128xbf16, #tpu.memory_space<vmem>>, vector<256x128xbf16>
    tpu.vector_store %arg4[%c0_5, %c0_6], %6 {strides = array<i32>} : memref<256x128xbf16, #tpu.memory_space<vmem>>, vector<256x128xbf16>,
    %c256_i32 = arith.constant 256 : i32
    %8 = arith.muli %arg0, %c256_i32 : i32
    %9 = tpu.iota {dimensions = array<i32: 0>} : vector<256x1xi32>
    %10 = vector.broadcast %8 : i32 to vector<256x1xi32>
    %11 = arith.addi %10, %9 : vector<256x1xi32>
    %c256_i32_7 = arith.constant 256 : i32
    %12 = vector.broadcast %c256_i32_7 : i32 to vector<256x1xi32>
    %13 = arith.cmpi slt, %11, %12 : vector<256x1xi32>
    %cst_8 = arith.constant 0.000000e+00 : f32
    %14 = vector.shape_cast %13 : vector<256x1xi1> to vector<256x1xi1>
    %15 = vector.broadcast %14 : vector<256x1xi1> to vector<256x128xi1>
    %16 = vector.broadcast %cst_8 : f32 to vector<256x128xf32>
    %17 = arith.select %15, %5, %16 : vector<256x128xi1>, vector<256x128xf32>
    %cst_9 = arith.constant dense<0.000000e+00> : vector<128xf32>
    %18 = vector.multi_reduction <add>, %17, %cst_9 [0] : vector<256x128xf32> to vector<128xf32>
    %19 = vector.shape_cast %18 : vector<128xf32> to vector<1x128xf32>
    %c0_10 = arith.constant 0 : index
    %c0_11 = arith.constant 0 : index
    %c0_12 = arith.constant 0 : index
    %20 = vector.load %arg5[%c0_10, %c0_11, %c0_12] : memref<1x2x128xf32, #tpu.memory_space<vmem>>, vector<1x1x128xf32>
    %21 = vector.shape_cast %20 : vector<1x1x128xf32> to vector<1x128xf32>
    %22 = vector.shape_cast %19 : vector<1x128xf32> to vector<1x1x128xf32>
    tpu.vector_store %arg5[%c0_10, %c0_11, %c0_12], %22 {strides = array<i32>} : memref<1x2x128xf32, #tpu.memory_space<vmem>>, vector<1x1x128xf32>,
    %23 = arith.mulf %17, %17 : vector<256x128xf32>
    %cst_13 = arith.constant dense<0.000000e+00> : vector<128xf32>
    %24 = vector.multi_reduction <add>, %23, %cst_13 [0] : vector<256x128xf32> to vector<128xf32>
    %25 = vector.shape_cast %24 : vector<128xf32> to vector<1x128xf32>
    %c0_14 = arith.constant 0 : index
    %c1 = arith.constant 1 : index
    %c0_15 = arith.constant 0 : index
    %26 = vector.load %arg5[%c0_14, %c1, %c0_15] : memref<1x2x128xf32, #tpu.memory_space<vmem>>, vector<1x1x128xf32>
    %27 = vector.shape_cast %26 : vector<1x1x128xf32> to vector<1x128xf32>
    %28 = vector.shape_cast %25 : vector<1x128xf32> to vector<1x1x128xf32>
    tpu.vector_store %arg5[%c0_14, %c1, %c0_15], %28 {strides = array<i32>} : memref<1x2x128xf32, #tpu.memory_space<vmem>>, vector<1x1x128xf32>,
    return
  }
  func.func @transform_0(%arg0: i32) -> (i32, i32) {
    %c0_i32 = arith.constant 0 : i32
    %c0_i32_0 = arith.constant 0 : i32
    return %arg0, %c0_i32 : i32, i32
  }
  func.func @transform_1(%arg0: i32) -> (i32, i32) {
    %c0_i32 = arith.constant 0 : i32
    %c0_i32_0 = arith.constant 0 : i32
    %c0_i32_1 = arith.constant 0 : i32
    return %c0_i32, %c0_i32_0 : i32, i32
  }
  func.func @transform_2(%arg0: i32) -> (i32, i32) {
    %c0_i32 = arith.constant 0 : i32
    %c0_i32_0 = arith.constant 0 : i32
    %c0_i32_1 = arith.constant 0 : i32
    return %c0_i32, %c0_i32_0 : i32, i32
  }
  func.func @transform_3(%arg0: i32) -> (i32, i32) {
    %c0_i32 = arith.constant 0 : i32
    %c0_i32_0 = arith.constant 0 : i32
    return %arg0, %c0_i32 : i32, i32
  }
  func.func @transform_4(%arg0: i32) -> (i32, i32, i32) {
    %c0_i32 = arith.constant 0 : i32
    %c0_i32_0 = arith.constant 0 : i32
    %c0_i32_1 = arith.constant 0 : i32
    return %arg0, %c0_i32, %c0_i32_0 : i32, i32, i32
  }
}

module attributes {stable_mosaic.version = 11 : i64} {
  func.func @_affine_kernel(%arg0: i32, %arg1: memref<256x128xbf16, #tpu.memory_space<vmem>>, %arg2: memref<1x128xf32, #tpu.memory_space<vmem>>, %arg3: memref<1x128xf32, #tpu.memory_space<vmem>>, %arg4: memref<256x128xbf16, #tpu.memory_space<vmem>>) attributes {dimension_semantics = [#tpu.dimension_semantics<parallel>], iteration_bounds = array<i64: 1>, scalar_prefetch = 0 : i64, scratch_operands = 0 : i64, tpu.core_type = #tpu.core_type<tc>, window_params = [{transform_indices = @transform_0, window_bounds = array<i64: 256, 128>}, {pipeline_mode = #tpu.pipeline_mode<synchronous>, transform_indices = @transform_1, window_bounds = array<i64: 1, 128>}, {pipeline_mode = #tpu.pipeline_mode<synchronous>, transform_indices = @transform_2, window_bounds = array<i64: 1, 128>}, {transform_indices = @transform_3, window_bounds = array<i64: 256, 128>}]} {
    %c0 = arith.constant 0 : index
    %c0_0 = arith.constant 0 : index
    %0 = vector.load %arg1[%c0, %c0_0] : memref<256x128xbf16, #tpu.memory_space<vmem>>, vector<256x128xbf16>
    %1 = arith.extf %0 : vector<256x128xbf16> to vector<256x128xf32>
    %c0_1 = arith.constant 0 : index
    %c0_2 = arith.constant 0 : index
    %2 = vector.load %arg2[%c0_1, %c0_2] : memref<1x128xf32, #tpu.memory_space<vmem>>, vector<1x128xf32>
    %3 = vector.broadcast %2 : vector<1x128xf32> to vector<256x128xf32>
    %4 = arith.mulf %1, %3 : vector<256x128xf32>
    %c0_3 = arith.constant 0 : index
    %c0_4 = arith.constant 0 : index
    %5 = vector.load %arg3[%c0_3, %c0_4] : memref<1x128xf32, #tpu.memory_space<vmem>>, vector<1x128xf32>
    %6 = vector.broadcast %5 : vector<1x128xf32> to vector<256x128xf32>
    %7 = arith.addf %4, %6 : vector<256x128xf32>
    %cst = arith.constant 0.000000e+00 : f32
    %8 = vector.broadcast %cst : f32 to vector<256x128xf32>
    %9 = arith.maximumf %7, %8 : vector<256x128xf32>
    %10 = arith.truncf %9 : vector<256x128xf32> to vector<256x128xbf16>
    %c0_5 = arith.constant 0 : index
    %c0_6 = arith.constant 0 : index
    %11 = vector.load %arg4[%c0_5, %c0_6] : memref<256x128xbf16, #tpu.memory_space<vmem>>, vector<256x128xbf16>
    tpu.vector_store %arg4[%c0_5, %c0_6], %10 {strides = array<i32>} : memref<256x128xbf16, #tpu.memory_space<vmem>>, vector<256x128xbf16>,
    return
  }
  func.func @transform_0(%arg0: i32) -> (i32, i32) {
    %c0_i32 = arith.constant 0 : i32
    %c0_i32_0 = arith.constant 0 : i32
    return %arg0, %c0_i32 : i32, i32
  }
  func.func @transform_1(%arg0: i32) -> (i32, i32) {
    %c0_i32 = arith.constant 0 : i32
    %c0_i32_0 = arith.constant 0 : i32
    %c0_i32_1 = arith.constant 0 : i32
    return %c0_i32, %c0_i32_0 : i32, i32
  }
  func.func @transform_2(%arg0: i32) -> (i32, i32) {
    %c0_i32 = arith.constant 0 : i32
    %c0_i32_0 = arith.constant 0 : i32
    %c0_i32_1 = arith.constant 0 : i32
    return %c0_i32, %c0_i32_0 : i32, i32
  }
  func.func @transform_3(%arg0: i32) -> (i32, i32) {
    %c0_i32 = arith.constant 0 : i32
    %c0_i32_0 = arith.constant 0 : i32
    return %arg0, %c0_i32 : i32, i32
  }
}

module attributes {stable_mosaic.version = 11 : i64} {
  func.func @_mm_bias_stats_kernel(%arg0: i32, %arg1: memref<256x36xbf16, #tpu.memory_space<vmem>>, %arg2: memref<36x128xbf16, #tpu.memory_space<vmem>>, %arg3: memref<1x128xf32, #tpu.memory_space<vmem>>, %arg4: memref<256x128xbf16, #tpu.memory_space<vmem>>, %arg5: memref<1x2x128xf32, #tpu.memory_space<vmem>>) attributes {dimension_semantics = [#tpu.dimension_semantics<parallel>], iteration_bounds = array<i64: 1>, scalar_prefetch = 0 : i64, scratch_operands = 0 : i64, tpu.core_type = #tpu.core_type<tc>, window_params = [{transform_indices = @transform_0, window_bounds = array<i64: 256, 36>}, {pipeline_mode = #tpu.pipeline_mode<synchronous>, transform_indices = @transform_1, window_bounds = array<i64: 36, 128>}, {pipeline_mode = #tpu.pipeline_mode<synchronous>, transform_indices = @transform_2, window_bounds = array<i64: 1, 128>}, {transform_indices = @transform_3, window_bounds = array<i64: 256, 128>}, {transform_indices = @transform_4, window_bounds = array<i64: 1, 2, 128>}]} {
    %c0 = arith.constant 0 : index
    %c0_0 = arith.constant 0 : index
    %0 = vector.load %arg1[%c0, %c0_0] : memref<256x36xbf16, #tpu.memory_space<vmem>>, vector<256x36xbf16>
    %c0_1 = arith.constant 0 : index
    %c0_2 = arith.constant 0 : index
    %1 = vector.load %arg2[%c0_1, %c0_2] : memref<36x128xbf16, #tpu.memory_space<vmem>>, vector<36x128xbf16>
    %cst = arith.constant dense<0.000000e+00> : vector<256x128xf32>
    %2 = tpu.matmul %0, %1, %cst {dimension_numbers = #tpu.dot_dimension_numbers<[1], [0], [0], [1], [0, 0, 1, 1], [], []>} : vector<256x36xbf16>, vector<36x128xbf16>, vector<256x128xf32> -> vector<256x128xf32>
    %c0_3 = arith.constant 0 : index
    %c0_4 = arith.constant 0 : index
    %3 = vector.load %arg3[%c0_3, %c0_4] : memref<1x128xf32, #tpu.memory_space<vmem>>, vector<1x128xf32>
    %4 = vector.broadcast %3 : vector<1x128xf32> to vector<256x128xf32>
    %5 = arith.addf %2, %4 : vector<256x128xf32>
    %6 = arith.truncf %5 : vector<256x128xf32> to vector<256x128xbf16>
    %c0_5 = arith.constant 0 : index
    %c0_6 = arith.constant 0 : index
    %7 = vector.load %arg4[%c0_5, %c0_6] : memref<256x128xbf16, #tpu.memory_space<vmem>>, vector<256x128xbf16>
    tpu.vector_store %arg4[%c0_5, %c0_6], %6 {strides = array<i32>} : memref<256x128xbf16, #tpu.memory_space<vmem>>, vector<256x128xbf16>,
    %c256_i32 = arith.constant 256 : i32
    %8 = arith.muli %arg0, %c256_i32 : i32
    %9 = tpu.iota {dimensions = array<i32: 0>} : vector<256x1xi32>
    %10 = vector.broadcast %8 : i32 to vector<256x1xi32>
    %11 = arith.addi %10, %9 : vector<256x1xi32>
    %c256_i32_7 = arith.constant 256 : i32
    %12 = vector.broadcast %c256_i32_7 : i32 to vector<256x1xi32>
    %13 = arith.cmpi slt, %11, %12 : vector<256x1xi32>
    %cst_8 = arith.constant 0.000000e+00 : f32
    %14 = vector.shape_cast %13 : vector<256x1xi1> to vector<256x1xi1>
    %15 = vector.broadcast %14 : vector<256x1xi1> to vector<256x128xi1>
    %16 = vector.broadcast %cst_8 : f32 to vector<256x128xf32>
    %17 = arith.select %15, %5, %16 : vector<256x128xi1>, vector<256x128xf32>
    %cst_9 = arith.constant dense<0.000000e+00> : vector<128xf32>
    %18 = vector.multi_reduction <add>, %17, %cst_9 [0] : vector<256x128xf32> to vector<128xf32>
    %19 = vector.shape_cast %18 : vector<128xf32> to vector<1x128xf32>
    %c0_10 = arith.constant 0 : index
    %c0_11 = arith.constant 0 : index
    %c0_12 = arith.constant 0 : index
    %20 = vector.load %arg5[%c0_10, %c0_11, %c0_12] : memref<1x2x128xf32, #tpu.memory_space<vmem>>, vector<1x1x128xf32>
    %21 = vector.shape_cast %20 : vector<1x1x128xf32> to vector<1x128xf32>
    %22 = vector.shape_cast %19 : vector<1x128xf32> to vector<1x1x128xf32>
    tpu.vector_store %arg5[%c0_10, %c0_11, %c0_12], %22 {strides = array<i32>} : memref<1x2x128xf32, #tpu.memory_space<vmem>>, vector<1x1x128xf32>,
    %23 = arith.mulf %17, %17 : vector<256x128xf32>
    %cst_13 = arith.constant dense<0.000000e+00> : vector<128xf32>
    %24 = vector.multi_reduction <add>, %23, %cst_13 [0] : vector<256x128xf32> to vector<128xf32>
    %25 = vector.shape_cast %24 : vector<128xf32> to vector<1x128xf32>
    %c0_14 = arith.constant 0 : index
    %c1 = arith.constant 1 : index
    %c0_15 = arith.constant 0 : index
    %26 = vector.load %arg5[%c0_14, %c1, %c0_15] : memref<1x2x128xf32, #tpu.memory_space<vmem>>, vector<1x1x128xf32>
    %27 = vector.shape_cast %26 : vector<1x1x128xf32> to vector<1x128xf32>
    %28 = vector.shape_cast %25 : vector<1x128xf32> to vector<1x1x128xf32>
    tpu.vector_store %arg5[%c0_14, %c1, %c0_15], %28 {strides = array<i32>} : memref<1x2x128xf32, #tpu.memory_space<vmem>>, vector<1x1x128xf32>,
    return
  }
  func.func @transform_0(%arg0: i32) -> (i32, i32) {
    %c0_i32 = arith.constant 0 : i32
    %c0_i32_0 = arith.constant 0 : i32
    return %arg0, %c0_i32 : i32, i32
  }
  func.func @transform_1(%arg0: i32) -> (i32, i32) {
    %c0_i32 = arith.constant 0 : i32
    %c0_i32_0 = arith.constant 0 : i32
    %c0_i32_1 = arith.constant 0 : i32
    return %c0_i32, %c0_i32_0 : i32, i32
  }
  func.func @transform_2(%arg0: i32) -> (i32, i32) {
    %c0_i32 = arith.constant 0 : i32
    %c0_i32_0 = arith.constant 0 : i32
    %c0_i32_1 = arith.constant 0 : i32
    return %c0_i32, %c0_i32_0 : i32, i32
  }
  func.func @transform_3(%arg0: i32) -> (i32, i32) {
    %c0_i32 = arith.constant 0 : i32
    %c0_i32_0 = arith.constant 0 : i32
    return %arg0, %c0_i32 : i32, i32
  }
  func.func @transform_4(%arg0: i32) -> (i32, i32, i32) {
    %c0_i32 = arith.constant 0 : i32
    %c0_i32_0 = arith.constant 0 : i32
    %c0_i32_1 = arith.constant 0 : i32
    return %arg0, %c0_i32, %c0_i32_0 : i32, i32, i32
  }
}

module attributes {stable_mosaic.version = 11 : i64} {
  func.func @_mm_bias_kernel(%arg0: i32, %arg1: memref<16x64xbf16, #tpu.memory_space<vmem>>, %arg2: memref<64x128xbf16, #tpu.memory_space<vmem>>, %arg3: memref<1x128xf32, #tpu.memory_space<vmem>>, %arg4: memref<16x128xf32, #tpu.memory_space<vmem>>) attributes {dimension_semantics = [#tpu.dimension_semantics<parallel>], iteration_bounds = array<i64: 1>, scalar_prefetch = 0 : i64, scratch_operands = 0 : i64, tpu.core_type = #tpu.core_type<tc>, window_params = [{transform_indices = @transform_0, window_bounds = array<i64: 16, 64>}, {pipeline_mode = #tpu.pipeline_mode<synchronous>, transform_indices = @transform_1, window_bounds = array<i64: 64, 128>}, {pipeline_mode = #tpu.pipeline_mode<synchronous>, transform_indices = @transform_2, window_bounds = array<i64: 1, 128>}, {transform_indices = @transform_3, window_bounds = array<i64: 16, 128>}]} {
    %c0 = arith.constant 0 : index
    %c0_0 = arith.constant 0 : index
    %0 = vector.load %arg1[%c0, %c0_0] : memref<16x64xbf16, #tpu.memory_space<vmem>>, vector<16x64xbf16>
    %c0_1 = arith.constant 0 : index
    %c0_2 = arith.constant 0 : index
    %1 = vector.load %arg2[%c0_1, %c0_2] : memref<64x128xbf16, #tpu.memory_space<vmem>>, vector<64x128xbf16>
    %cst = arith.constant dense<0.000000e+00> : vector<16x128xf32>
    %2 = tpu.matmul %0, %1, %cst {dimension_numbers = #tpu.dot_dimension_numbers<[1], [0], [0], [1], [0, 0, 1, 1], [], []>} : vector<16x64xbf16>, vector<64x128xbf16>, vector<16x128xf32> -> vector<16x128xf32>
    %c0_3 = arith.constant 0 : index
    %c0_4 = arith.constant 0 : index
    %3 = vector.load %arg3[%c0_3, %c0_4] : memref<1x128xf32, #tpu.memory_space<vmem>>, vector<1x128xf32>
    %4 = vector.broadcast %3 : vector<1x128xf32> to vector<16x128xf32>
    %5 = arith.addf %2, %4 : vector<16x128xf32>
    %c0_5 = arith.constant 0 : index
    %c0_6 = arith.constant 0 : index
    %6 = vector.load %arg4[%c0_5, %c0_6] : memref<16x128xf32, #tpu.memory_space<vmem>>, vector<16x128xf32>
    tpu.vector_store %arg4[%c0_5, %c0_6], %5 {strides = array<i32>} : memref<16x128xf32, #tpu.memory_space<vmem>>, vector<16x128xf32>,
    return
  }
  func.func @transform_0(%arg0: i32) -> (i32, i32) {
    %c0_i32 = arith.constant 0 : i32
    %c0_i32_0 = arith.constant 0 : i32
    return %arg0, %c0_i32 : i32, i32
  }
  func.func @transform_1(%arg0: i32) -> (i32, i32) {
    %c0_i32 = arith.constant 0 : i32
    %c0_i32_0 = arith.constant 0 : i32
    %c0_i32_1 = arith.constant 0 : i32
    return %c0_i32, %c0_i32_0 : i32, i32
  }
  func.func @transform_2(%arg0: i32) -> (i32, i32) {
    %c0_i32 = arith.constant 0 : i32
    %c0_i32_0 = arith.constant 0 : i32
    %c0_i32_1 = arith.constant 0 : i32
    return %c0_i32, %c0_i32_0 : i32, i32
  }
  func.func @transform_3(%arg0: i32) -> (i32, i32) {
    %c0_i32 = arith.constant 0 : i32
    %c0_i32_0 = arith.constant 0 : i32
    return %arg0, %c0_i32 : i32, i32
  }
}

module attributes {stable_mosaic.version = 11 : i64} {
  func.func @_mm_bias_kernel(%arg0: i32, %arg1: memref<16x8xf32, #tpu.memory_space<vmem>>, %arg2: memref<8x128xbf16, #tpu.memory_space<vmem>>, %arg3: memref<1x128xf32, #tpu.memory_space<vmem>>, %arg4: memref<16x128xf32, #tpu.memory_space<vmem>>) attributes {dimension_semantics = [#tpu.dimension_semantics<parallel>], iteration_bounds = array<i64: 1>, scalar_prefetch = 0 : i64, scratch_operands = 0 : i64, tpu.core_type = #tpu.core_type<tc>, window_params = [{transform_indices = @transform_0, window_bounds = array<i64: 16, 8>}, {pipeline_mode = #tpu.pipeline_mode<synchronous>, transform_indices = @transform_1, window_bounds = array<i64: 8, 128>}, {pipeline_mode = #tpu.pipeline_mode<synchronous>, transform_indices = @transform_2, window_bounds = array<i64: 1, 128>}, {transform_indices = @transform_3, window_bounds = array<i64: 16, 128>}]} {
    %c0 = arith.constant 0 : index
    %c0_0 = arith.constant 0 : index
    %0 = vector.load %arg1[%c0, %c0_0] : memref<16x8xf32, #tpu.memory_space<vmem>>, vector<16x8xf32>
    %1 = arith.truncf %0 : vector<16x8xf32> to vector<16x8xbf16>
    %c0_1 = arith.constant 0 : index
    %c0_2 = arith.constant 0 : index
    %2 = vector.load %arg2[%c0_1, %c0_2] : memref<8x128xbf16, #tpu.memory_space<vmem>>, vector<8x128xbf16>
    %cst = arith.constant dense<0.000000e+00> : vector<16x128xf32>
    %3 = tpu.matmul %1, %2, %cst {dimension_numbers = #tpu.dot_dimension_numbers<[1], [0], [0], [1], [0, 0, 1, 1], [], []>} : vector<16x8xbf16>, vector<8x128xbf16>, vector<16x128xf32> -> vector<16x128xf32>
    %c0_3 = arith.constant 0 : index
    %c0_4 = arith.constant 0 : index
    %4 = vector.load %arg3[%c0_3, %c0_4] : memref<1x128xf32, #tpu.memory_space<vmem>>, vector<1x128xf32>
    %5 = vector.broadcast %4 : vector<1x128xf32> to vector<16x128xf32>
    %6 = arith.addf %3, %5 : vector<16x128xf32>
    %c0_5 = arith.constant 0 : index
    %c0_6 = arith.constant 0 : index
    %7 = vector.load %arg4[%c0_5, %c0_6] : memref<16x128xf32, #tpu.memory_space<vmem>>, vector<16x128xf32>
    tpu.vector_store %arg4[%c0_5, %c0_6], %6 {strides = array<i32>} : memref<16x128xf32, #tpu.memory_space<vmem>>, vector<16x128xf32>,
    return
  }
  func.func @transform_0(%arg0: i32) -> (i32, i32) {
    %c0_i32 = arith.constant 0 : i32
    %c0_i32_0 = arith.constant 0 : i32
    return %arg0, %c0_i32 : i32, i32
  }
  func.func @transform_1(%arg0: i32) -> (i32, i32) {
    %c0_i32 = arith.constant 0 : i32
    %c0_i32_0 = arith.constant 0 : i32
    %c0_i32_1 = arith.constant 0 : i32
    return %c0_i32, %c0_i32_0 : i32, i32
  }
  func.func @transform_2(%arg0: i32) -> (i32, i32) {
    %c0_i32 = arith.constant 0 : i32
    %c0_i32_0 = arith.constant 0 : i32
    %c0_i32_1 = arith.constant 0 : i32
    return %c0_i32, %c0_i32_0 : i32, i32
  }
  func.func @transform_3(%arg0: i32) -> (i32, i32) {
    %c0_i32 = arith.constant 0 : i32
    %c0_i32_0 = arith.constant 0 : i32
    return %arg0, %c0_i32 : i32, i32
  }
}

module attributes {stable_mosaic.version = 11 : i64} {
  func.func @_mm_bias_kernel(%arg0: i32, %arg1: memref<64x32xbf16, #tpu.memory_space<vmem>>, %arg2: memref<32x128xbf16, #tpu.memory_space<vmem>>, %arg3: memref<1x128xf32, #tpu.memory_space<vmem>>, %arg4: memref<64x128xf32, #tpu.memory_space<vmem>>) attributes {dimension_semantics = [#tpu.dimension_semantics<parallel>], iteration_bounds = array<i64: 1>, scalar_prefetch = 0 : i64, scratch_operands = 0 : i64, tpu.core_type = #tpu.core_type<tc>, window_params = [{transform_indices = @transform_0, window_bounds = array<i64: 64, 32>}, {pipeline_mode = #tpu.pipeline_mode<synchronous>, transform_indices = @transform_1, window_bounds = array<i64: 32, 128>}, {pipeline_mode = #tpu.pipeline_mode<synchronous>, transform_indices = @transform_2, window_bounds = array<i64: 1, 128>}, {transform_indices = @transform_3, window_bounds = array<i64: 64, 128>}]} {
    %c0 = arith.constant 0 : index
    %c0_0 = arith.constant 0 : index
    %0 = vector.load %arg1[%c0, %c0_0] : memref<64x32xbf16, #tpu.memory_space<vmem>>, vector<64x32xbf16>
    %c0_1 = arith.constant 0 : index
    %c0_2 = arith.constant 0 : index
    %1 = vector.load %arg2[%c0_1, %c0_2] : memref<32x128xbf16, #tpu.memory_space<vmem>>, vector<32x128xbf16>
    %cst = arith.constant dense<0.000000e+00> : vector<64x128xf32>
    %2 = tpu.matmul %0, %1, %cst {dimension_numbers = #tpu.dot_dimension_numbers<[1], [0], [0], [1], [0, 0, 1, 1], [], []>} : vector<64x32xbf16>, vector<32x128xbf16>, vector<64x128xf32> -> vector<64x128xf32>
    %c0_3 = arith.constant 0 : index
    %c0_4 = arith.constant 0 : index
    %3 = vector.load %arg3[%c0_3, %c0_4] : memref<1x128xf32, #tpu.memory_space<vmem>>, vector<1x128xf32>
    %4 = vector.broadcast %3 : vector<1x128xf32> to vector<64x128xf32>
    %5 = arith.addf %2, %4 : vector<64x128xf32>
    %c0_5 = arith.constant 0 : index
    %c0_6 = arith.constant 0 : index
    %6 = vector.load %arg4[%c0_5, %c0_6] : memref<64x128xf32, #tpu.memory_space<vmem>>, vector<64x128xf32>
    tpu.vector_store %arg4[%c0_5, %c0_6], %5 {strides = array<i32>} : memref<64x128xf32, #tpu.memory_space<vmem>>, vector<64x128xf32>,
    return
  }
  func.func @transform_0(%arg0: i32) -> (i32, i32) {
    %c0_i32 = arith.constant 0 : i32
    %c0_i32_0 = arith.constant 0 : i32
    return %arg0, %c0_i32 : i32, i32
  }
  func.func @transform_1(%arg0: i32) -> (i32, i32) {
    %c0_i32 = arith.constant 0 : i32
    %c0_i32_0 = arith.constant 0 : i32
    %c0_i32_1 = arith.constant 0 : i32
    return %c0_i32, %c0_i32_0 : i32, i32
  }
  func.func @transform_2(%arg0: i32) -> (i32, i32) {
    %c0_i32 = arith.constant 0 : i32
    %c0_i32_0 = arith.constant 0 : i32
    %c0_i32_1 = arith.constant 0 : i32
    return %c0_i32, %c0_i32_0 : i32, i32
  }
  func.func @transform_3(%arg0: i32) -> (i32, i32) {
    %c0_i32 = arith.constant 0 : i32
    %c0_i32_0 = arith.constant 0 : i32
    return %arg0, %c0_i32 : i32, i32
  }
}

module attributes {stable_mosaic.version = 11 : i64} {
  func.func @_bilstm_kernel(%arg0: i32, %arg1: i32, %arg2: memref<1x8x8x64xf32, #tpu.memory_space<vmem>>, %arg3: memref<8x8x1xf32, #tpu.memory_space<vmem>>, %arg4: memref<1x16x64xbf16, #tpu.memory_space<vmem>>, %arg5: memref<1x8x8x16xbf16, #tpu.memory_space<vmem>>, %arg6: memref<8x16xf32, #tpu.memory_space<vmem>>, %arg7: memref<8x16xf32, #tpu.memory_space<vmem>>) attributes {dimension_semantics = [#tpu.dimension_semantics<parallel>, #tpu.dimension_semantics<arbitrary>], iteration_bounds = array<i64: 2, 1>, scalar_prefetch = 0 : i64, scratch_operands = 2 : i64, tpu.core_type = #tpu.core_type<tc>, window_params = [{transform_indices = @transform_0, window_bounds = array<i64: 1, 8, 8, 64>}, {transform_indices = @transform_1, window_bounds = array<i64: 8, 8, 1>}, {transform_indices = @transform_2, window_bounds = array<i64: 1, 16, 64>}, {transform_indices = @transform_3, window_bounds = array<i64: 1, 8, 8, 16>}]} {
    %c0_i32 = arith.constant 0 : i32
    %0 = arith.cmpi eq, %arg1, %c0_i32 : i32
    %1 = arith.extui %0 : i1 to i32
    %c0_i32_0 = arith.constant 0 : i32
    %2 = arith.cmpi ne, %1, %c0_i32_0 : i32
    scf.if %2 {
      %cst_179 = arith.constant 0.000000e+00 : f32
      %461 = vector.broadcast %cst_179 : f32 to vector<8x16xf32>
      %c0_180 = arith.constant 0 : index
      %c0_181 = arith.constant 0 : index
      %462 = vector.load %arg6[%c0_180, %c0_181] : memref<8x16xf32, #tpu.memory_space<vmem>>, vector<8x16xf32>
      tpu.vector_store %arg6[%c0_180, %c0_181], %461 {strides = array<i32>} : memref<8x16xf32, #tpu.memory_space<vmem>>, vector<8x16xf32>,
      %cst_182 = arith.constant 0.000000e+00 : f32
      %463 = vector.broadcast %cst_182 : f32 to vector<8x16xf32>
      %c0_183 = arith.constant 0 : index
      %c0_184 = arith.constant 0 : index
      %464 = vector.load %arg7[%c0_183, %c0_184] : memref<8x16xf32, #tpu.memory_space<vmem>>, vector<8x16xf32>
      tpu.vector_store %arg7[%c0_183, %c0_184], %463 {strides = array<i32>} : memref<8x16xf32, #tpu.memory_space<vmem>>, vector<8x16xf32>,
    } else {
    }
    %c0 = arith.constant 0 : index
    %c0_1 = arith.constant 0 : index
    %c0_2 = arith.constant 0 : index
    %3 = vector.load %arg4[%c0, %c0_1, %c0_2] : memref<1x16x64xbf16, #tpu.memory_space<vmem>>, vector<1x16x64xbf16>
    %4 = vector.shape_cast %3 : vector<1x16x64xbf16> to vector<16x64xbf16>
    %c0_i32_3 = arith.constant 0 : i32
    %c2_i32 = arith.constant 2 : i32
    %5 = arith.muli %c2_i32, %c0_i32_3 : i32
    %c7_i32 = arith.constant 7 : i32
    %6 = arith.subi %c7_i32, %5 : i32
    %7 = arith.muli %arg0, %6 : i32
    %8 = arith.addi %c0_i32_3, %7 : i32
    %c0_4 = arith.constant 0 : index
    %c0_5 = arith.constant 0 : index
    %9 = vector.load %arg6[%c0_4, %c0_5] : memref<8x16xf32, #tpu.memory_space<vmem>>, vector<8x16xf32>
    %c0_6 = arith.constant 0 : index
    %c0_7 = arith.constant 0 : index
    %10 = vector.load %arg7[%c0_6, %c0_7] : memref<8x16xf32, #tpu.memory_space<vmem>>, vector<8x16xf32>
    %c0_8 = arith.constant 0 : index
    %11 = arith.index_cast %8 : i32 to index
    %c0_9 = arith.constant 0 : index
    %c0_10 = arith.constant 0 : index
    %12 = vector.load %arg2[%c0_8, %11, %c0_9, %c0_10] : memref<1x8x8x64xf32, #tpu.memory_space<vmem>>, vector<1x1x8x64xf32>
    %13 = vector.shape_cast %12 : vector<1x1x8x64xf32> to vector<8x64xf32>
    %14 = arith.truncf %9 : vector<8x16xf32> to vector<8x16xbf16>
    %cst = arith.constant dense<0.000000e+00> : vector<8x64xf32>
    %15 = tpu.matmul %14, %4, %cst {dimension_numbers = #tpu.dot_dimension_numbers<[1], [0], [0], [1], [0, 0, 1, 1], [], []>} : vector<8x16xbf16>, vector<16x64xbf16>, vector<8x64xf32> -> vector<8x64xf32>
    %16 = arith.addf %13, %15 : vector<8x64xf32>
    %17 = vector.extract_strided_slice %16 {offsets = [0, 0], sizes = [8, 16], strides = [1, 1]} : vector<8x64xf32> to vector<8x16xf32>
    %18 = arith.negf %17 : vector<8x16xf32>
    %19 = math.exp %18 : vector<8x16xf32>
    %cst_11 = arith.constant 1.000000e+00 : f32
    %20 = vector.broadcast %cst_11 : f32 to vector<8x16xf32>
    %21 = arith.addf %20, %19 : vector<8x16xf32>
    %22 = arith.divf %20, %21 : vector<8x16xf32>
    %23 = vector.extract_strided_slice %16 {offsets = [0, 16], sizes = [8, 16], strides = [1, 1]} : vector<8x64xf32> to vector<8x16xf32>
    %24 = arith.negf %23 : vector<8x16xf32>
    %25 = math.exp %24 : vector<8x16xf32>
    %cst_12 = arith.constant 1.000000e+00 : f32
    %26 = vector.broadcast %cst_12 : f32 to vector<8x16xf32>
    %27 = arith.addf %26, %25 : vector<8x16xf32>
    %28 = arith.divf %26, %27 : vector<8x16xf32>
    %29 = vector.extract_strided_slice %16 {offsets = [0, 32], sizes = [8, 16], strides = [1, 1]} : vector<8x64xf32> to vector<8x16xf32>
    %30 = math.tanh %29 : vector<8x16xf32>
    %31 = vector.extract_strided_slice %16 {offsets = [0, 48], sizes = [8, 16], strides = [1, 1]} : vector<8x64xf32> to vector<8x16xf32>
    %32 = arith.negf %31 : vector<8x16xf32>
    %33 = math.exp %32 : vector<8x16xf32>
    %cst_13 = arith.constant 1.000000e+00 : f32
    %34 = vector.broadcast %cst_13 : f32 to vector<8x16xf32>
    %35 = arith.addf %34, %33 : vector<8x16xf32>
    %36 = arith.divf %34, %35 : vector<8x16xf32>
    %37 = arith.mulf %28, %10 : vector<8x16xf32>
    %38 = arith.mulf %22, %30 : vector<8x16xf32>
    %39 = arith.addf %37, %38 : vector<8x16xf32>
    %40 = math.tanh %39 : vector<8x16xf32>
    %41 = arith.mulf %36, %40 : vector<8x16xf32>
    %42 = arith.index_cast %8 : i32 to index
    %c0_14 = arith.constant 0 : index
    %c0_15 = arith.constant 0 : index
    %43 = vector.load %arg3[%42, %c0_14, %c0_15] : memref<8x8x1xf32, #tpu.memory_space<vmem>>, vector<1x8x1xf32>
    %44 = vector.shape_cast %43 : vector<1x8x1xf32> to vector<8x1xf32>
    %45 = arith.subf %41, %9 : vector<8x16xf32>
    %46 = vector.broadcast %44 : vector<8x1xf32> to vector<8x16xf32>
    %47 = arith.mulf %46, %45 : vector<8x16xf32>
    %48 = arith.addf %9, %47 : vector<8x16xf32>
    %c0_16 = arith.constant 0 : index
    %c0_17 = arith.constant 0 : index
    %49 = vector.load %arg6[%c0_16, %c0_17] : memref<8x16xf32, #tpu.memory_space<vmem>>, vector<8x16xf32>
    tpu.vector_store %arg6[%c0_16, %c0_17], %48 {strides = array<i32>} : memref<8x16xf32, #tpu.memory_space<vmem>>, vector<8x16xf32>,
    %50 = arith.subf %39, %10 : vector<8x16xf32>
    %51 = vector.broadcast %44 : vector<8x1xf32> to vector<8x16xf32>
    %52 = arith.mulf %51, %50 : vector<8x16xf32>
    %53 = arith.addf %10, %52 : vector<8x16xf32>
    %c0_18 = arith.constant 0 : index
    %c0_19 = arith.constant 0 : index
    %54 = vector.load %arg7[%c0_18, %c0_19] : memref<8x16xf32, #tpu.memory_space<vmem>>, vector<8x16xf32>
    tpu.vector_store %arg7[%c0_18, %c0_19], %53 {strides = array<i32>} : memref<8x16xf32, #tpu.memory_space<vmem>>, vector<8x16xf32>,
    %55 = vector.broadcast %44 : vector<8x1xf32> to vector<8x16xf32>
    %56 = arith.mulf %41, %55 : vector<8x16xf32>
    %57 = arith.truncf %56 : vector<8x16xf32> to vector<8x16xbf16>
    %c0_20 = arith.constant 0 : index
    %58 = arith.index_cast %8 : i32 to index
    %c0_21 = arith.constant 0 : index
    %c0_22 = arith.constant 0 : index
    %59 = vector.load %arg5[%c0_20, %58, %c0_21, %c0_22] : memref<1x8x8x16xbf16, #tpu.memory_space<vmem>>, vector<1x1x8x16xbf16>
    %60 = vector.shape_cast %59 : vector<1x1x8x16xbf16> to vector<8x16xbf16>
    %61 = vector.shape_cast %57 : vector<8x16xbf16> to vector<1x1x8x16xbf16>
    tpu.vector_store %arg5[%c0_20, %58, %c0_21, %c0_22], %61 {strides = array<i32>} : memref<1x8x8x16xbf16, #tpu.memory_space<vmem>>, vector<1x1x8x16xbf16>,
    %c1_i32 = arith.constant 1 : i32
    %c2_i32_23 = arith.constant 2 : i32
    %62 = arith.muli %c2_i32_23, %c1_i32 : i32
    %c7_i32_24 = arith.constant 7 : i32
    %63 = arith.subi %c7_i32_24, %62 : i32
    %64 = arith.muli %arg0, %63 : i32
    %65 = arith.addi %c1_i32, %64 : i32
    %c0_25 = arith.constant 0 : index
    %c0_26 = arith.constant 0 : index
    %66 = vector.load %arg6[%c0_25, %c0_26] : memref<8x16xf32, #tpu.memory_space<vmem>>, vector<8x16xf32>
    %c0_27 = arith.constant 0 : index
    %c0_28 = arith.constant 0 : index
    %67 = vector.load %arg7[%c0_27, %c0_28] : memref<8x16xf32, #tpu.memory_space<vmem>>, vector<8x16xf32>
    %c0_29 = arith.constant 0 : index
    %68 = arith.index_cast %65 : i32 to index
    %c0_30 = arith.constant 0 : index
    %c0_31 = arith.constant 0 : index
    %69 = vector.load %arg2[%c0_29, %68, %c0_30, %c0_31] : memref<1x8x8x64xf32, #tpu.memory_space<vmem>>, vector<1x1x8x64xf32>
    %70 = vector.shape_cast %69 : vector<1x1x8x64xf32> to vector<8x64xf32>
    %71 = arith.truncf %66 : vector<8x16xf32> to vector<8x16xbf16>
    %cst_32 = arith.constant dense<0.000000e+00> : vector<8x64xf32>
    %72 = tpu.matmul %71, %4, %cst_32 {dimension_numbers = #tpu.dot_dimension_numbers<[1], [0], [0], [1], [0, 0, 1, 1], [], []>} : vector<8x16xbf16>, vector<16x64xbf16>, vector<8x64xf32> -> vector<8x64xf32>
    %73 = arith.addf %70, %72 : vector<8x64xf32>
    %74 = vector.extract_strided_slice %73 {offsets = [0, 0], sizes = [8, 16], strides = [1, 1]} : vector<8x64xf32> to vector<8x16xf32>
    %75 = arith.negf %74 : vector<8x16xf32>
    %76 = math.exp %75 : vector<8x16xf32>
    %cst_33 = arith.constant 1.000000e+00 : f32
    %77 = vector.broadcast %cst_33 : f32 to vector<8x16xf32>
    %78 = arith.addf %77, %76 : vector<8x16xf32>
    %79 = arith.divf %77, %78 : vector<8x16xf32>
    %80 = vector.extract_strided_slice %73 {offsets = [0, 16], sizes = [8, 16], strides = [1, 1]} : vector<8x64xf32> to vector<8x16xf32>
    %81 = arith.negf %80 : vector<8x16xf32>
    %82 = math.exp %81 : vector<8x16xf32>
    %cst_34 = arith.constant 1.000000e+00 : f32
    %83 = vector.broadcast %cst_34 : f32 to vector<8x16xf32>
    %84 = arith.addf %83, %82 : vector<8x16xf32>
    %85 = arith.divf %83, %84 : vector<8x16xf32>
    %86 = vector.extract_strided_slice %73 {offsets = [0, 32], sizes = [8, 16], strides = [1, 1]} : vector<8x64xf32> to vector<8x16xf32>
    %87 = math.tanh %86 : vector<8x16xf32>
    %88 = vector.extract_strided_slice %73 {offsets = [0, 48], sizes = [8, 16], strides = [1, 1]} : vector<8x64xf32> to vector<8x16xf32>
    %89 = arith.negf %88 : vector<8x16xf32>
    %90 = math.exp %89 : vector<8x16xf32>
    %cst_35 = arith.constant 1.000000e+00 : f32
    %91 = vector.broadcast %cst_35 : f32 to vector<8x16xf32>
    %92 = arith.addf %91, %90 : vector<8x16xf32>
    %93 = arith.divf %91, %92 : vector<8x16xf32>
    %94 = arith.mulf %85, %67 : vector<8x16xf32>
    %95 = arith.mulf %79, %87 : vector<8x16xf32>
    %96 = arith.addf %94, %95 : vector<8x16xf32>
    %97 = math.tanh %96 : vector<8x16xf32>
    %98 = arith.mulf %93, %97 : vector<8x16xf32>
    %99 = arith.index_cast %65 : i32 to index
    %c0_36 = arith.constant 0 : index
    %c0_37 = arith.constant 0 : index
    %100 = vector.load %arg3[%99, %c0_36, %c0_37] : memref<8x8x1xf32, #tpu.memory_space<vmem>>, vector<1x8x1xf32>
    %101 = vector.shape_cast %100 : vector<1x8x1xf32> to vector<8x1xf32>
    %102 = arith.subf %98, %66 : vector<8x16xf32>
    %103 = vector.broadcast %101 : vector<8x1xf32> to vector<8x16xf32>
    %104 = arith.mulf %103, %102 : vector<8x16xf32>
    %105 = arith.addf %66, %104 : vector<8x16xf32>
    %c0_38 = arith.constant 0 : index
    %c0_39 = arith.constant 0 : index
    %106 = vector.load %arg6[%c0_38, %c0_39] : memref<8x16xf32, #tpu.memory_space<vmem>>, vector<8x16xf32>
    tpu.vector_store %arg6[%c0_38, %c0_39], %105 {strides = array<i32>} : memref<8x16xf32, #tpu.memory_space<vmem>>, vector<8x16xf32>,
    %107 = arith.subf %96, %67 : vector<8x16xf32>
    %108 = vector.broadcast %101 : vector<8x1xf32> to vector<8x16xf32>
    %109 = arith.mulf %108, %107 : vector<8x16xf32>
    %110 = arith.addf %67, %109 : vector<8x16xf32>
    %c0_40 = arith.constant 0 : index
    %c0_41 = arith.constant 0 : index
    %111 = vector.load %arg7[%c0_40, %c0_41] : memref<8x16xf32, #tpu.memory_space<vmem>>, vector<8x16xf32>
    tpu.vector_store %arg7[%c0_40, %c0_41], %110 {strides = array<i32>} : memref<8x16xf32, #tpu.memory_space<vmem>>, vector<8x16xf32>,
    %112 = vector.broadcast %101 : vector<8x1xf32> to vector<8x16xf32>
    %113 = arith.mulf %98, %112 : vector<8x16xf32>
    %114 = arith.truncf %113 : vector<8x16xf32> to vector<8x16xbf16>
    %c0_42 = arith.constant 0 : index
    %115 = arith.index_cast %65 : i32 to index
    %c0_43 = arith.constant 0 : index
    %c0_44 = arith.constant 0 : index
    %116 = vector.load %arg5[%c0_42, %115, %c0_43, %c0_44] : memref<1x8x8x16xbf16, #tpu.memory_space<vmem>>, vector<1x1x8x16xbf16>
    %117 = vector.shape_cast %116 : vector<1x1x8x16xbf16> to vector<8x16xbf16>
    %118 = vector.shape_cast %114 : vector<8x16xbf16> to vector<1x1x8x16xbf16>
    tpu.vector_store %arg5[%c0_42, %115, %c0_43, %c0_44], %118 {strides = array<i32>} : memref<1x8x8x16xbf16, #tpu.memory_space<vmem>>, vector<1x1x8x16xbf16>,
    %c2_i32_45 = arith.constant 2 : i32
    %c2_i32_46 = arith.constant 2 : i32
    %119 = arith.muli %c2_i32_46, %c2_i32_45 : i32
    %c7_i32_47 = arith.constant 7 : i32
    %120 = arith.subi %c7_i32_47, %119 : i32
    %121 = arith.muli %arg0, %120 : i32
    %122 = arith.addi %c2_i32_45, %121 : i32
    %c0_48 = arith.constant 0 : index
    %c0_49 = arith.constant 0 : index
    %123 = vector.load %arg6[%c0_48, %c0_49] : memref<8x16xf32, #tpu.memory_space<vmem>>, vector<8x16xf32>
    %c0_50 = arith.constant 0 : index
    %c0_51 = arith.constant 0 : index
    %124 = vector.load %arg7[%c0_50, %c0_51] : memref<8x16xf32, #tpu.memory_space<vmem>>, vector<8x16xf32>
    %c0_52 = arith.constant 0 : index
    %125 = arith.index_cast %122 : i32 to index
    %c0_53 = arith.constant 0 : index
    %c0_54 = arith.constant 0 : index
    %126 = vector.load %arg2[%c0_52, %125, %c0_53, %c0_54] : memref<1x8x8x64xf32, #tpu.memory_space<vmem>>, vector<1x1x8x64xf32>
    %127 = vector.shape_cast %126 : vector<1x1x8x64xf32> to vector<8x64xf32>
    %128 = arith.truncf %123 : vector<8x16xf32> to vector<8x16xbf16>
    %cst_55 = arith.constant dense<0.000000e+00> : vector<8x64xf32>
    %129 = tpu.matmul %128, %4, %cst_55 {dimension_numbers = #tpu.dot_dimension_numbers<[1], [0], [0], [1], [0, 0, 1, 1], [], []>} : vector<8x16xbf16>, vector<16x64xbf16>, vector<8x64xf32> -> vector<8x64xf32>
    %130 = arith.addf %127, %129 : vector<8x64xf32>
    %131 = vector.extract_strided_slice %130 {offsets = [0, 0], sizes = [8, 16], strides = [1, 1]} : vector<8x64xf32> to vector<8x16xf32>
    %132 = arith.negf %131 : vector<8x16xf32>
    %133 = math.exp %132 : vector<8x16xf32>
    %cst_56 = arith.constant 1.000000e+00 : f32
    %134 = vector.broadcast %cst_56 : f32 to vector<8x16xf32>
    %135 = arith.addf %134, %133 : vector<8x16xf32>
    %136 = arith.divf %134, %135 : vector<8x16xf32>
    %137 = vector.extract_strided_slice %130 {offsets = [0, 16], sizes = [8, 16], strides = [1, 1]} : vector<8x64xf32> to vector<8x16xf32>
    %138 = arith.negf %137 : vector<8x16xf32>
    %139 = math.exp %138 : vector<8x16xf32>
    %cst_57 = arith.constant 1.000000e+00 : f32
    %140 = vector.broadcast %cst_57 : f32 to vector<8x16xf32>
    %141 = arith.addf %140, %139 : vector<8x16xf32>
    %142 = arith.divf %140, %141 : vector<8x16xf32>
    %143 = vector.extract_strided_slice %130 {offsets = [0, 32], sizes = [8, 16], strides = [1, 1]} : vector<8x64xf32> to vector<8x16xf32>
    %144 = math.tanh %143 : vector<8x16xf32>
    %145 = vector.extract_strided_slice %130 {offsets = [0, 48], sizes = [8, 16], strides = [1, 1]} : vector<8x64xf32> to vector<8x16xf32>
    %146 = arith.negf %145 : vector<8x16xf32>
    %147 = math.exp %146 : vector<8x16xf32>
    %cst_58 = arith.constant 1.000000e+00 : f32
    %148 = vector.broadcast %cst_58 : f32 to vector<8x16xf32>
    %149 = arith.addf %148, %147 : vector<8x16xf32>
    %150 = arith.divf %148, %149 : vector<8x16xf32>
    %151 = arith.mulf %142, %124 : vector<8x16xf32>
    %152 = arith.mulf %136, %144 : vector<8x16xf32>
    %153 = arith.addf %151, %152 : vector<8x16xf32>
    %154 = math.tanh %153 : vector<8x16xf32>
    %155 = arith.mulf %150, %154 : vector<8x16xf32>
    %156 = arith.index_cast %122 : i32 to index
    %c0_59 = arith.constant 0 : index
    %c0_60 = arith.constant 0 : index
    %157 = vector.load %arg3[%156, %c0_59, %c0_60] : memref<8x8x1xf32, #tpu.memory_space<vmem>>, vector<1x8x1xf32>
    %158 = vector.shape_cast %157 : vector<1x8x1xf32> to vector<8x1xf32>
    %159 = arith.subf %155, %123 : vector<8x16xf32>
    %160 = vector.broadcast %158 : vector<8x1xf32> to vector<8x16xf32>
    %161 = arith.mulf %160, %159 : vector<8x16xf32>
    %162 = arith.addf %123, %161 : vector<8x16xf32>
    %c0_61 = arith.constant 0 : index
    %c0_62 = arith.constant 0 : index
    %163 = vector.load %arg6[%c0_61, %c0_62] : memref<8x16xf32, #tpu.memory_space<vmem>>, vector<8x16xf32>
    tpu.vector_store %arg6[%c0_61, %c0_62], %162 {strides = array<i32>} : memref<8x16xf32, #tpu.memory_space<vmem>>, vector<8x16xf32>,
    %164 = arith.subf %153, %124 : vector<8x16xf32>
    %165 = vector.broadcast %158 : vector<8x1xf32> to vector<8x16xf32>
    %166 = arith.mulf %165, %164 : vector<8x16xf32>
    %167 = arith.addf %124, %166 : vector<8x16xf32>
    %c0_63 = arith.constant 0 : index
    %c0_64 = arith.constant 0 : index
    %168 = vector.load %arg7[%c0_63, %c0_64] : memref<8x16xf32, #tpu.memory_space<vmem>>, vector<8x16xf32>
    tpu.vector_store %arg7[%c0_63, %c0_64], %167 {strides = array<i32>} : memref<8x16xf32, #tpu.memory_space<vmem>>, vector<8x16xf32>,
    %169 = vector.broadcast %158 : vector<8x1xf32> to vector<8x16xf32>
    %170 = arith.mulf %155, %169 : vector<8x16xf32>
    %171 = arith.truncf %170 : vector<8x16xf32> to vector<8x16xbf16>
    %c0_65 = arith.constant 0 : index
    %172 = arith.index_cast %122 : i32 to index
    %c0_66 = arith.constant 0 : index
    %c0_67 = arith.constant 0 : index
    %173 = vector.load %arg5[%c0_65, %172, %c0_66, %c0_67] : memref<1x8x8x16xbf16, #tpu.memory_space<vmem>>, vector<1x1x8x16xbf16>
    %174 = vector.shape_cast %173 : vector<1x1x8x16xbf16> to vector<8x16xbf16>
    %175 = vector.shape_cast %171 : vector<8x16xbf16> to vector<1x1x8x16xbf16>
    tpu.vector_store %arg5[%c0_65, %172, %c0_66, %c0_67], %175 {strides = array<i32>} : memref<1x8x8x16xbf16, #tpu.memory_space<vmem>>, vector<1x1x8x16xbf16>,
    %c3_i32 = arith.constant 3 : i32
    %c2_i32_68 = arith.constant 2 : i32
    %176 = arith.muli %c2_i32_68, %c3_i32 : i32
    %c7_i32_69 = arith.constant 7 : i32
    %177 = arith.subi %c7_i32_69, %176 : i32
    %178 = arith.muli %arg0, %177 : i32
    %179 = arith.addi %c3_i32, %178 : i32
    %c0_70 = arith.constant 0 : index
    %c0_71 = arith.constant 0 : index
    %180 = vector.load %arg6[%c0_70, %c0_71] : memref<8x16xf32, #tpu.memory_space<vmem>>, vector<8x16xf32>
    %c0_72 = arith.constant 0 : index
    %c0_73 = arith.constant 0 : index
    %181 = vector.load %arg7[%c0_72, %c0_73] : memref<8x16xf32, #tpu.memory_space<vmem>>, vector<8x16xf32>
    %c0_74 = arith.constant 0 : index
    %182 = arith.index_cast %179 : i32 to index
    %c0_75 = arith.constant 0 : index
    %c0_76 = arith.constant 0 : index
    %183 = vector.load %arg2[%c0_74, %182, %c0_75, %c0_76] : memref<1x8x8x64xf32, #tpu.memory_space<vmem>>, vector<1x1x8x64xf32>
    %184 = vector.shape_cast %183 : vector<1x1x8x64xf32> to vector<8x64xf32>
    %185 = arith.truncf %180 : vector<8x16xf32> to vector<8x16xbf16>
    %cst_77 = arith.constant dense<0.000000e+00> : vector<8x64xf32>
    %186 = tpu.matmul %185, %4, %cst_77 {dimension_numbers = #tpu.dot_dimension_numbers<[1], [0], [0], [1], [0, 0, 1, 1], [], []>} : vector<8x16xbf16>, vector<16x64xbf16>, vector<8x64xf32> -> vector<8x64xf32>
    %187 = arith.addf %184, %186 : vector<8x64xf32>
    %188 = vector.extract_strided_slice %187 {offsets = [0, 0], sizes = [8, 16], strides = [1, 1]} : vector<8x64xf32> to vector<8x16xf32>
    %189 = arith.negf %188 : vector<8x16xf32>
    %190 = math.exp %189 : vector<8x16xf32>
    %cst_78 = arith.constant 1.000000e+00 : f32
    %191 = vector.broadcast %cst_78 : f32 to vector<8x16xf32>
    %192 = arith.addf %191, %190 : vector<8x16xf32>
    %193 = arith.divf %191, %192 : vector<8x16xf32>
    %194 = vector.extract_strided_slice %187 {offsets = [0, 16], sizes = [8, 16], strides = [1, 1]} : vector<8x64xf32> to vector<8x16xf32>
    %195 = arith.negf %194 : vector<8x16xf32>
    %196 = math.exp %195 : vector<8x16xf32>
    %cst_79 = arith.constant 1.000000e+00 : f32
    %197 = vector.broadcast %cst_79 : f32 to vector<8x16xf32>
    %198 = arith.addf %197, %196 : vector<8x16xf32>
    %199 = arith.divf %197, %198 : vector<8x16xf32>
    %200 = vector.extract_strided_slice %187 {offsets = [0, 32], sizes = [8, 16], strides = [1, 1]} : vector<8x64xf32> to vector<8x16xf32>
    %201 = math.tanh %200 : vector<8x16xf32>
    %202 = vector.extract_strided_slice %187 {offsets = [0, 48], sizes = [8, 16], strides = [1, 1]} : vector<8x64xf32> to vector<8x16xf32>
    %203 = arith.negf %202 : vector<8x16xf32>
    %204 = math.exp %203 : vector<8x16xf32>
    %cst_80 = arith.constant 1.000000e+00 : f32
    %205 = vector.broadcast %cst_80 : f32 to vector<8x16xf32>
    %206 = arith.addf %205, %204 : vector<8x16xf32>
    %207 = arith.divf %205, %206 : vector<8x16xf32>
    %208 = arith.mulf %199, %181 : vector<8x16xf32>
    %209 = arith.mulf %193, %201 : vector<8x16xf32>
    %210 = arith.addf %208, %209 : vector<8x16xf32>
    %211 = math.tanh %210 : vector<8x16xf32>
    %212 = arith.mulf %207, %211 : vector<8x16xf32>
    %213 = arith.index_cast %179 : i32 to index
    %c0_81 = arith.constant 0 : index
    %c0_82 = arith.constant 0 : index
    %214 = vector.load %arg3[%213, %c0_81, %c0_82] : memref<8x8x1xf32, #tpu.memory_space<vmem>>, vector<1x8x1xf32>
    %215 = vector.shape_cast %214 : vector<1x8x1xf32> to vector<8x1xf32>
    %216 = arith.subf %212, %180 : vector<8x16xf32>
    %217 = vector.broadcast %215 : vector<8x1xf32> to vector<8x16xf32>
    %218 = arith.mulf %217, %216 : vector<8x16xf32>
    %219 = arith.addf %180, %218 : vector<8x16xf32>
    %c0_83 = arith.constant 0 : index
    %c0_84 = arith.constant 0 : index
    %220 = vector.load %arg6[%c0_83, %c0_84] : memref<8x16xf32, #tpu.memory_space<vmem>>, vector<8x16xf32>
    tpu.vector_store %arg6[%c0_83, %c0_84], %219 {strides = array<i32>} : memref<8x16xf32, #tpu.memory_space<vmem>>, vector<8x16xf32>,
    %221 = arith.subf %210, %181 : vector<8x16xf32>
    %222 = vector.broadcast %215 : vector<8x1xf32> to vector<8x16xf32>
    %223 = arith.mulf %222, %221 : vector<8x16xf32>
    %224 = arith.addf %181, %223 : vector<8x16xf32>
    %c0_85 = arith.constant 0 : index
    %c0_86 = arith.constant 0 : index
    %225 = vector.load %arg7[%c0_85, %c0_86] : memref<8x16xf32, #tpu.memory_space<vmem>>, vector<8x16xf32>
    tpu.vector_store %arg7[%c0_85, %c0_86], %224 {strides = array<i32>} : memref<8x16xf32, #tpu.memory_space<vmem>>, vector<8x16xf32>,
    %226 = vector.broadcast %215 : vector<8x1xf32> to vector<8x16xf32>
    %227 = arith.mulf %212, %226 : vector<8x16xf32>
    %228 = arith.truncf %227 : vector<8x16xf32> to vector<8x16xbf16>
    %c0_87 = arith.constant 0 : index
    %229 = arith.index_cast %179 : i32 to index
    %c0_88 = arith.constant 0 : index
    %c0_89 = arith.constant 0 : index
    %230 = vector.load %arg5[%c0_87, %229, %c0_88, %c0_89] : memref<1x8x8x16xbf16, #tpu.memory_space<vmem>>, vector<1x1x8x16xbf16>
    %231 = vector.shape_cast %230 : vector<1x1x8x16xbf16> to vector<8x16xbf16>
    %232 = vector.shape_cast %228 : vector<8x16xbf16> to vector<1x1x8x16xbf16>
    tpu.vector_store %arg5[%c0_87, %229, %c0_88, %c0_89], %232 {strides = array<i32>} : memref<1x8x8x16xbf16, #tpu.memory_space<vmem>>, vector<1x1x8x16xbf16>,
    %c4_i32 = arith.constant 4 : i32
    %c2_i32_90 = arith.constant 2 : i32
    %233 = arith.muli %c2_i32_90, %c4_i32 : i32
    %c7_i32_91 = arith.constant 7 : i32
    %234 = arith.subi %c7_i32_91, %233 : i32
    %235 = arith.muli %arg0, %234 : i32
    %236 = arith.addi %c4_i32, %235 : i32
    %c0_92 = arith.constant 0 : index
    %c0_93 = arith.constant 0 : index
    %237 = vector.load %arg6[%c0_92, %c0_93] : memref<8x16xf32, #tpu.memory_space<vmem>>, vector<8x16xf32>
    %c0_94 = arith.constant 0 : index
    %c0_95 = arith.constant 0 : index
    %238 = vector.load %arg7[%c0_94, %c0_95] : memref<8x16xf32, #tpu.memory_space<vmem>>, vector<8x16xf32>
    %c0_96 = arith.constant 0 : index
    %239 = arith.index_cast %236 : i32 to index
    %c0_97 = arith.constant 0 : index
    %c0_98 = arith.constant 0 : index
    %240 = vector.load %arg2[%c0_96, %239, %c0_97, %c0_98] : memref<1x8x8x64xf32, #tpu.memory_space<vmem>>, vector<1x1x8x64xf32>
    %241 = vector.shape_cast %240 : vector<1x1x8x64xf32> to vector<8x64xf32>
    %242 = arith.truncf %237 : vector<8x16xf32> to vector<8x16xbf16>
    %cst_99 = arith.constant dense<0.000000e+00> : vector<8x64xf32>
    %243 = tpu.matmul %242, %4, %cst_99 {dimension_numbers = #tpu.dot_dimension_numbers<[1], [0], [0], [1], [0, 0, 1, 1], [], []>} : vector<8x16xbf16>, vector<16x64xbf16>, vector<8x64xf32> -> vector<8x64xf32>
    %244 = arith.addf %241, %243 : vector<8x64xf32>
    %245 = vector.extract_strided_slice %244 {offsets = [0, 0], sizes = [8, 16], strides = [1, 1]} : vector<8x64xf32> to vector<8x16xf32>
    %246 = arith.negf %245 : vector<8x16xf32>
    %247 = math.exp %246 : vector<8x16xf32>
    %cst_100 = arith.constant 1.000000e+00 : f32
    %248 = vector.broadcast %cst_100 : f32 to vector<8x16xf32>
    %249 = arith.addf %248, %247 : vector<8x16xf32>
    %250 = arith.divf %248, %249 : vector<8x16xf32>
    %251 = vector.extract_strided_slice %244 {offsets = [0, 16], sizes = [8, 16], strides = [1, 1]} : vector<8x64xf32> to vector<8x16xf32>
    %252 = arith.negf %251 : vector<8x16xf32>
    %253 = math.exp %252 : vector<8x16xf32>
    %cst_101 = arith.constant 1.000000e+00 : f32
    %254 = vector.broadcast %cst_101 : f32 to vector<8x16xf32>
    %255 = arith.addf %254, %253 : vector<8x16xf32>
    %256 = arith.divf %254, %255 : vector<8x16xf32>
    %257 = vector.extract_strided_slice %244 {offsets = [0, 32], sizes = [8, 16], strides = [1, 1]} : vector<8x64xf32> to vector<8x16xf32>
    %258 = math.tanh %257 : vector<8x16xf32>
    %259 = vector.extract_strided_slice %244 {offsets = [0, 48], sizes = [8, 16], strides = [1, 1]} : vector<8x64xf32> to vector<8x16xf32>
    %260 = arith.negf %259 : vector<8x16xf32>
    %261 = math.exp %260 : vector<8x16xf32>
    %cst_102 = arith.constant 1.000000e+00 : f32
    %262 = vector.broadcast %cst_102 : f32 to vector<8x16xf32>
    %263 = arith.addf %262, %261 : vector<8x16xf32>
    %264 = arith.divf %262, %263 : vector<8x16xf32>
    %265 = arith.mulf %256, %238 : vector<8x16xf32>
    %266 = arith.mulf %250, %258 : vector<8x16xf32>
    %267 = arith.addf %265, %266 : vector<8x16xf32>
    %268 = math.tanh %267 : vector<8x16xf32>
    %269 = arith.mulf %264, %268 : vector<8x16xf32>
    %270 = arith.index_cast %236 : i32 to index
    %c0_103 = arith.constant 0 : index
    %c0_104 = arith.constant 0 : index
    %271 = vector.load %arg3[%270, %c0_103, %c0_104] : memref<8x8x1xf32, #tpu.memory_space<vmem>>, vector<1x8x1xf32>
    %272 = vector.shape_cast %271 : vector<1x8x1xf32> to vector<8x1xf32>
    %273 = arith.subf %269, %237 : vector<8x16xf32>
    %274 = vector.broadcast %272 : vector<8x1xf32> to vector<8x16xf32>
    %275 = arith.mulf %274, %273 : vector<8x16xf32>
    %276 = arith.addf %237, %275 : vector<8x16xf32>
    %c0_105 = arith.constant 0 : index
    %c0_106 = arith.constant 0 : index
    %277 = vector.load %arg6[%c0_105, %c0_106] : memref<8x16xf32, #tpu.memory_space<vmem>>, vector<8x16xf32>
    tpu.vector_store %arg6[%c0_105, %c0_106], %276 {strides = array<i32>} : memref<8x16xf32, #tpu.memory_space<vmem>>, vector<8x16xf32>,
    %278 = arith.subf %267, %238 : vector<8x16xf32>
    %279 = vector.broadcast %272 : vector<8x1xf32> to vector<8x16xf32>
    %280 = arith.mulf %279, %278 : vector<8x16xf32>
    %281 = arith.addf %238, %280 : vector<8x16xf32>
    %c0_107 = arith.constant 0 : index
    %c0_108 = arith.constant 0 : index
    %282 = vector.load %arg7[%c0_107, %c0_108] : memref<8x16xf32, #tpu.memory_space<vmem>>, vector<8x16xf32>
    tpu.vector_store %arg7[%c0_107, %c0_108], %281 {strides = array<i32>} : memref<8x16xf32, #tpu.memory_space<vmem>>, vector<8x16xf32>,
    %283 = vector.broadcast %272 : vector<8x1xf32> to vector<8x16xf32>
    %284 = arith.mulf %269, %283 : vector<8x16xf32>
    %285 = arith.truncf %284 : vector<8x16xf32> to vector<8x16xbf16>
    %c0_109 = arith.constant 0 : index
    %286 = arith.index_cast %236 : i32 to index
    %c0_110 = arith.constant 0 : index
    %c0_111 = arith.constant 0 : index
    %287 = vector.load %arg5[%c0_109, %286, %c0_110, %c0_111] : memref<1x8x8x16xbf16, #tpu.memory_space<vmem>>, vector<1x1x8x16xbf16>
    %288 = vector.shape_cast %287 : vector<1x1x8x16xbf16> to vector<8x16xbf16>
    %289 = vector.shape_cast %285 : vector<8x16xbf16> to vector<1x1x8x16xbf16>
    tpu.vector_store %arg5[%c0_109, %286, %c0_110, %c0_111], %289 {strides = array<i32>} : memref<1x8x8x16xbf16, #tpu.memory_space<vmem>>, vector<1x1x8x16xbf16>,
    %c5_i32 = arith.constant 5 : i32
    %c2_i32_112 = arith.constant 2 : i32
    %290 = arith.muli %c2_i32_112, %c5_i32 : i32
    %c7_i32_113 = arith.constant 7 : i32
    %291 = arith.subi %c7_i32_113, %290 : i32
    %292 = arith.muli %arg0, %291 : i32
    %293 = arith.addi %c5_i32, %292 : i32
    %c0_114 = arith.constant 0 : index
    %c0_115 = arith.constant 0 : index
    %294 = vector.load %arg6[%c0_114, %c0_115] : memref<8x16xf32, #tpu.memory_space<vmem>>, vector<8x16xf32>
    %c0_116 = arith.constant 0 : index
    %c0_117 = arith.constant 0 : index
    %295 = vector.load %arg7[%c0_116, %c0_117] : memref<8x16xf32, #tpu.memory_space<vmem>>, vector<8x16xf32>
    %c0_118 = arith.constant 0 : index
    %296 = arith.index_cast %293 : i32 to index
    %c0_119 = arith.constant 0 : index
    %c0_120 = arith.constant 0 : index
    %297 = vector.load %arg2[%c0_118, %296, %c0_119, %c0_120] : memref<1x8x8x64xf32, #tpu.memory_space<vmem>>, vector<1x1x8x64xf32>
    %298 = vector.shape_cast %297 : vector<1x1x8x64xf32> to vector<8x64xf32>
    %299 = arith.truncf %294 : vector<8x16xf32> to vector<8x16xbf16>
    %cst_121 = arith.constant dense<0.000000e+00> : vector<8x64xf32>
    %300 = tpu.matmul %299, %4, %cst_121 {dimension_numbers = #tpu.dot_dimension_numbers<[1], [0], [0], [1], [0, 0, 1, 1], [], []>} : vector<8x16xbf16>, vector<16x64xbf16>, vector<8x64xf32> -> vector<8x64xf32>
    %301 = arith.addf %298, %300 : vector<8x64xf32>
    %302 = vector.extract_strided_slice %301 {offsets = [0, 0], sizes = [8, 16], strides = [1, 1]} : vector<8x64xf32> to vector<8x16xf32>
    %303 = arith.negf %302 : vector<8x16xf32>
    %304 = math.exp %303 : vector<8x16xf32>
    %cst_122 = arith.constant 1.000000e+00 : f32
    %305 = vector.broadcast %cst_122 : f32 to vector<8x16xf32>
    %306 = arith.addf %305, %304 : vector<8x16xf32>
    %307 = arith.divf %305, %306 : vector<8x16xf32>
    %308 = vector.extract_strided_slice %301 {offsets = [0, 16], sizes = [8, 16], strides = [1, 1]} : vector<8x64xf32> to vector<8x16xf32>
    %309 = arith.negf %308 : vector<8x16xf32>
    %310 = math.exp %309 : vector<8x16xf32>
    %cst_123 = arith.constant 1.000000e+00 : f32
    %311 = vector.broadcast %cst_123 : f32 to vector<8x16xf32>
    %312 = arith.addf %311, %310 : vector<8x16xf32>
    %313 = arith.divf %311, %312 : vector<8x16xf32>
    %314 = vector.extract_strided_slice %301 {offsets = [0, 32], sizes = [8, 16], strides = [1, 1]} : vector<8x64xf32> to vector<8x16xf32>
    %315 = math.tanh %314 : vector<8x16xf32>
    %316 = vector.extract_strided_slice %301 {offsets = [0, 48], sizes = [8, 16], strides = [1, 1]} : vector<8x64xf32> to vector<8x16xf32>
    %317 = arith.negf %316 : vector<8x16xf32>
    %318 = math.exp %317 : vector<8x16xf32>
    %cst_124 = arith.constant 1.000000e+00 : f32
    %319 = vector.broadcast %cst_124 : f32 to vector<8x16xf32>
    %320 = arith.addf %319, %318 : vector<8x16xf32>
    %321 = arith.divf %319, %320 : vector<8x16xf32>
    %322 = arith.mulf %313, %295 : vector<8x16xf32>
    %323 = arith.mulf %307, %315 : vector<8x16xf32>
    %324 = arith.addf %322, %323 : vector<8x16xf32>
    %325 = math.tanh %324 : vector<8x16xf32>
    %326 = arith.mulf %321, %325 : vector<8x16xf32>
    %327 = arith.index_cast %293 : i32 to index
    %c0_125 = arith.constant 0 : index
    %c0_126 = arith.constant 0 : index
    %328 = vector.load %arg3[%327, %c0_125, %c0_126] : memref<8x8x1xf32, #tpu.memory_space<vmem>>, vector<1x8x1xf32>
    %329 = vector.shape_cast %328 : vector<1x8x1xf32> to vector<8x1xf32>
    %330 = arith.subf %326, %294 : vector<8x16xf32>
    %331 = vector.broadcast %329 : vector<8x1xf32> to vector<8x16xf32>
    %332 = arith.mulf %331, %330 : vector<8x16xf32>
    %333 = arith.addf %294, %332 : vector<8x16xf32>
    %c0_127 = arith.constant 0 : index
    %c0_128 = arith.constant 0 : index
    %334 = vector.load %arg6[%c0_127, %c0_128] : memref<8x16xf32, #tpu.memory_space<vmem>>, vector<8x16xf32>
    tpu.vector_store %arg6[%c0_127, %c0_128], %333 {strides = array<i32>} : memref<8x16xf32, #tpu.memory_space<vmem>>, vector<8x16xf32>,
    %335 = arith.subf %324, %295 : vector<8x16xf32>
    %336 = vector.broadcast %329 : vector<8x1xf32> to vector<8x16xf32>
    %337 = arith.mulf %336, %335 : vector<8x16xf32>
    %338 = arith.addf %295, %337 : vector<8x16xf32>
    %c0_129 = arith.constant 0 : index
    %c0_130 = arith.constant 0 : index
    %339 = vector.load %arg7[%c0_129, %c0_130] : memref<8x16xf32, #tpu.memory_space<vmem>>, vector<8x16xf32>
    tpu.vector_store %arg7[%c0_129, %c0_130], %338 {strides = array<i32>} : memref<8x16xf32, #tpu.memory_space<vmem>>, vector<8x16xf32>,
    %340 = vector.broadcast %329 : vector<8x1xf32> to vector<8x16xf32>
    %341 = arith.mulf %326, %340 : vector<8x16xf32>
    %342 = arith.truncf %341 : vector<8x16xf32> to vector<8x16xbf16>
    %c0_131 = arith.constant 0 : index
    %343 = arith.index_cast %293 : i32 to index
    %c0_132 = arith.constant 0 : index
    %c0_133 = arith.constant 0 : index
    %344 = vector.load %arg5[%c0_131, %343, %c0_132, %c0_133] : memref<1x8x8x16xbf16, #tpu.memory_space<vmem>>, vector<1x1x8x16xbf16>
    %345 = vector.shape_cast %344 : vector<1x1x8x16xbf16> to vector<8x16xbf16>
    %346 = vector.shape_cast %342 : vector<8x16xbf16> to vector<1x1x8x16xbf16>
    tpu.vector_store %arg5[%c0_131, %343, %c0_132, %c0_133], %346 {strides = array<i32>} : memref<1x8x8x16xbf16, #tpu.memory_space<vmem>>, vector<1x1x8x16xbf16>,
    %c6_i32 = arith.constant 6 : i32
    %c2_i32_134 = arith.constant 2 : i32
    %347 = arith.muli %c2_i32_134, %c6_i32 : i32
    %c7_i32_135 = arith.constant 7 : i32
    %348 = arith.subi %c7_i32_135, %347 : i32
    %349 = arith.muli %arg0, %348 : i32
    %350 = arith.addi %c6_i32, %349 : i32
    %c0_136 = arith.constant 0 : index
    %c0_137 = arith.constant 0 : index
    %351 = vector.load %arg6[%c0_136, %c0_137] : memref<8x16xf32, #tpu.memory_space<vmem>>, vector<8x16xf32>
    %c0_138 = arith.constant 0 : index
    %c0_139 = arith.constant 0 : index
    %352 = vector.load %arg7[%c0_138, %c0_139] : memref<8x16xf32, #tpu.memory_space<vmem>>, vector<8x16xf32>
    %c0_140 = arith.constant 0 : index
    %353 = arith.index_cast %350 : i32 to index
    %c0_141 = arith.constant 0 : index
    %c0_142 = arith.constant 0 : index
    %354 = vector.load %arg2[%c0_140, %353, %c0_141, %c0_142] : memref<1x8x8x64xf32, #tpu.memory_space<vmem>>, vector<1x1x8x64xf32>
    %355 = vector.shape_cast %354 : vector<1x1x8x64xf32> to vector<8x64xf32>
    %356 = arith.truncf %351 : vector<8x16xf32> to vector<8x16xbf16>
    %cst_143 = arith.constant dense<0.000000e+00> : vector<8x64xf32>
    %357 = tpu.matmul %356, %4, %cst_143 {dimension_numbers = #tpu.dot_dimension_numbers<[1], [0], [0], [1], [0, 0, 1, 1], [], []>} : vector<8x16xbf16>, vector<16x64xbf16>, vector<8x64xf32> -> vector<8x64xf32>
    %358 = arith.addf %355, %357 : vector<8x64xf32>
    %359 = vector.extract_strided_slice %358 {offsets = [0, 0], sizes = [8, 16], strides = [1, 1]} : vector<8x64xf32> to vector<8x16xf32>
    %360 = arith.negf %359 : vector<8x16xf32>
    %361 = math.exp %360 : vector<8x16xf32>
    %cst_144 = arith.constant 1.000000e+00 : f32
    %362 = vector.broadcast %cst_144 : f32 to vector<8x16xf32>
    %363 = arith.addf %362, %361 : vector<8x16xf32>
    %364 = arith.divf %362, %363 : vector<8x16xf32>
    %365 = vector.extract_strided_slice %358 {offsets = [0, 16], sizes = [8, 16], strides = [1, 1]} : vector<8x64xf32> to vector<8x16xf32>
    %366 = arith.negf %365 : vector<8x16xf32>
    %367 = math.exp %366 : vector<8x16xf32>
    %cst_145 = arith.constant 1.000000e+00 : f32
    %368 = vector.broadcast %cst_145 : f32 to vector<8x16xf32>
    %369 = arith.addf %368, %367 : vector<8x16xf32>
    %370 = arith.divf %368, %369 : vector<8x16xf32>
    %371 = vector.extract_strided_slice %358 {offsets = [0, 32], sizes = [8, 16], strides = [1, 1]} : vector<8x64xf32> to vector<8x16xf32>
    %372 = math.tanh %371 : vector<8x16xf32>
    %373 = vector.extract_strided_slice %358 {offsets = [0, 48], sizes = [8, 16], strides = [1, 1]} : vector<8x64xf32> to vector<8x16xf32>
    %374 = arith.negf %373 : vector<8x16xf32>
    %375 = math.exp %374 : vector<8x16xf32>
    %cst_146 = arith.constant 1.000000e+00 : f32
    %376 = vector.broadcast %cst_146 : f32 to vector<8x16xf32>
    %377 = arith.addf %376, %375 : vector<8x16xf32>
    %378 = arith.divf %376, %377 : vector<8x16xf32>
    %379 = arith.mulf %370, %352 : vector<8x16xf32>
    %380 = arith.mulf %364, %372 : vector<8x16xf32>
    %381 = arith.addf %379, %380 : vector<8x16xf32>
    %382 = math.tanh %381 : vector<8x16xf32>
    %383 = arith.mulf %378, %382 : vector<8x16xf32>
    %384 = arith.index_cast %350 : i32 to index
    %c0_147 = arith.constant 0 : index
    %c0_148 = arith.constant 0 : index
    %385 = vector.load %arg3[%384, %c0_147, %c0_148] : memref<8x8x1xf32, #tpu.memory_space<vmem>>, vector<1x8x1xf32>
    %386 = vector.shape_cast %385 : vector<1x8x1xf32> to vector<8x1xf32>
    %387 = arith.subf %383, %351 : vector<8x16xf32>
    %388 = vector.broadcast %386 : vector<8x1xf32> to vector<8x16xf32>
    %389 = arith.mulf %388, %387 : vector<8x16xf32>
    %390 = arith.addf %351, %389 : vector<8x16xf32>
    %c0_149 = arith.constant 0 : index
    %c0_150 = arith.constant 0 : index
    %391 = vector.load %arg6[%c0_149, %c0_150] : memref<8x16xf32, #tpu.memory_space<vmem>>, vector<8x16xf32>
    tpu.vector_store %arg6[%c0_149, %c0_150], %390 {strides = array<i32>} : memref<8x16xf32, #tpu.memory_space<vmem>>, vector<8x16xf32>,
    %392 = arith.subf %381, %352 : vector<8x16xf32>
    %393 = vector.broadcast %386 : vector<8x1xf32> to vector<8x16xf32>
    %394 = arith.mulf %393, %392 : vector<8x16xf32>
    %395 = arith.addf %352, %394 : vector<8x16xf32>
    %c0_151 = arith.constant 0 : index
    %c0_152 = arith.constant 0 : index
    %396 = vector.load %arg7[%c0_151, %c0_152] : memref<8x16xf32, #tpu.memory_space<vmem>>, vector<8x16xf32>
    tpu.vector_store %arg7[%c0_151, %c0_152], %395 {strides = array<i32>} : memref<8x16xf32, #tpu.memory_space<vmem>>, vector<8x16xf32>,
    %397 = vector.broadcast %386 : vector<8x1xf32> to vector<8x16xf32>
    %398 = arith.mulf %383, %397 : vector<8x16xf32>
    %399 = arith.truncf %398 : vector<8x16xf32> to vector<8x16xbf16>
    %c0_153 = arith.constant 0 : index
    %400 = arith.index_cast %350 : i32 to index
    %c0_154 = arith.constant 0 : index
    %c0_155 = arith.constant 0 : index
    %401 = vector.load %arg5[%c0_153, %400, %c0_154, %c0_155] : memref<1x8x8x16xbf16, #tpu.memory_space<vmem>>, vector<1x1x8x16xbf16>
    %402 = vector.shape_cast %401 : vector<1x1x8x16xbf16> to vector<8x16xbf16>
    %403 = vector.shape_cast %399 : vector<8x16xbf16> to vector<1x1x8x16xbf16>
    tpu.vector_store %arg5[%c0_153, %400, %c0_154, %c0_155], %403 {strides = array<i32>} : memref<1x8x8x16xbf16, #tpu.memory_space<vmem>>, vector<1x1x8x16xbf16>,
    %c7_i32_156 = arith.constant 7 : i32
    %c2_i32_157 = arith.constant 2 : i32
    %404 = arith.muli %c2_i32_157, %c7_i32_156 : i32
    %c7_i32_158 = arith.constant 7 : i32
    %405 = arith.subi %c7_i32_158, %404 : i32
    %406 = arith.muli %arg0, %405 : i32
    %407 = arith.addi %c7_i32_156, %406 : i32
    %c0_159 = arith.constant 0 : index
    %c0_160 = arith.constant 0 : index
    %408 = vector.load %arg6[%c0_159, %c0_160] : memref<8x16xf32, #tpu.memory_space<vmem>>, vector<8x16xf32>
    %c0_161 = arith.constant 0 : index
    %c0_162 = arith.constant 0 : index
    %409 = vector.load %arg7[%c0_161, %c0_162] : memref<8x16xf32, #tpu.memory_space<vmem>>, vector<8x16xf32>
    %c0_163 = arith.constant 0 : index
    %410 = arith.index_cast %407 : i32 to index
    %c0_164 = arith.constant 0 : index
    %c0_165 = arith.constant 0 : index
    %411 = vector.load %arg2[%c0_163, %410, %c0_164, %c0_165] : memref<1x8x8x64xf32, #tpu.memory_space<vmem>>, vector<1x1x8x64xf32>
    %412 = vector.shape_cast %411 : vector<1x1x8x64xf32> to vector<8x64xf32>
    %413 = arith.truncf %408 : vector<8x16xf32> to vector<8x16xbf16>
    %cst_166 = arith.constant dense<0.000000e+00> : vector<8x64xf32>
    %414 = tpu.matmul %413, %4, %cst_166 {dimension_numbers = #tpu.dot_dimension_numbers<[1], [0], [0], [1], [0, 0, 1, 1], [], []>} : vector<8x16xbf16>, vector<16x64xbf16>, vector<8x64xf32> -> vector<8x64xf32>
    %415 = arith.addf %412, %414 : vector<8x64xf32>
    %416 = vector.extract_strided_slice %415 {offsets = [0, 0], sizes = [8, 16], strides = [1, 1]} : vector<8x64xf32> to vector<8x16xf32>
    %417 = arith.negf %416 : vector<8x16xf32>
    %418 = math.exp %417 : vector<8x16xf32>
    %cst_167 = arith.constant 1.000000e+00 : f32
    %419 = vector.broadcast %cst_167 : f32 to vector<8x16xf32>
    %420 = arith.addf %419, %418 : vector<8x16xf32>
    %421 = arith.divf %419, %420 : vector<8x16xf32>
    %422 = vector.extract_strided_slice %415 {offsets = [0, 16], sizes = [8, 16], strides = [1, 1]} : vector<8x64xf32> to vector<8x16xf32>
    %423 = arith.negf %422 : vector<8x16xf32>
    %424 = math.exp %423 : vector<8x16xf32>
    %cst_168 = arith.constant 1.000000e+00 : f32
    %425 = vector.broadcast %cst_168 : f32 to vector<8x16xf32>
    %426 = arith.addf %425, %424 : vector<8x16xf32>
    %427 = arith.divf %425, %426 : vector<8x16xf32>
    %428 = vector.extract_strided_slice %415 {offsets = [0, 32], sizes = [8, 16], strides = [1, 1]} : vector<8x64xf32> to vector<8x16xf32>
    %429 = math.tanh %428 : vector<8x16xf32>
    %430 = vector.extract_strided_slice %415 {offsets = [0, 48], sizes = [8, 16], strides = [1, 1]} : vector<8x64xf32> to vector<8x16xf32>
    %431 = arith.negf %430 : vector<8x16xf32>
    %432 = math.exp %431 : vector<8x16xf32>
    %cst_169 = arith.constant 1.000000e+00 : f32
    %433 = vector.broadcast %cst_169 : f32 to vector<8x16xf32>
    %434 = arith.addf %433, %432 : vector<8x16xf32>
    %435 = arith.divf %433, %434 : vector<8x16xf32>
    %436 = arith.mulf %427, %409 : vector<8x16xf32>
    %437 = arith.mulf %421, %429 : vector<8x16xf32>
    %438 = arith.addf %436, %437 : vector<8x16xf32>
    %439 = math.tanh %438 : vector<8x16xf32>
    %440 = arith.mulf %435, %439 : vector<8x16xf32>
    %441 = arith.index_cast %407 : i32 to index
    %c0_170 = arith.constant 0 : index
    %c0_171 = arith.constant 0 : index
    %442 = vector.load %arg3[%441, %c0_170, %c0_171] : memref<8x8x1xf32, #tpu.memory_space<vmem>>, vector<1x8x1xf32>
    %443 = vector.shape_cast %442 : vector<1x8x1xf32> to vector<8x1xf32>
    %444 = arith.subf %440, %408 : vector<8x16xf32>
    %445 = vector.broadcast %443 : vector<8x1xf32> to vector<8x16xf32>
    %446 = arith.mulf %445, %444 : vector<8x16xf32>
    %447 = arith.addf %408, %446 : vector<8x16xf32>
    %c0_172 = arith.constant 0 : index
    %c0_173 = arith.constant 0 : index
    %448 = vector.load %arg6[%c0_172, %c0_173] : memref<8x16xf32, #tpu.memory_space<vmem>>, vector<8x16xf32>
    tpu.vector_store %arg6[%c0_172, %c0_173], %447 {strides = array<i32>} : memref<8x16xf32, #tpu.memory_space<vmem>>, vector<8x16xf32>,
    %449 = arith.subf %438, %409 : vector<8x16xf32>
    %450 = vector.broadcast %443 : vector<8x1xf32> to vector<8x16xf32>
    %451 = arith.mulf %450, %449 : vector<8x16xf32>
    %452 = arith.addf %409, %451 : vector<8x16xf32>
    %c0_174 = arith.constant 0 : index
    %c0_175 = arith.constant 0 : index
    %453 = vector.load %arg7[%c0_174, %c0_175] : memref<8x16xf32, #tpu.memory_space<vmem>>, vector<8x16xf32>
    tpu.vector_store %arg7[%c0_174, %c0_175], %452 {strides = array<i32>} : memref<8x16xf32, #tpu.memory_space<vmem>>, vector<8x16xf32>,
    %454 = vector.broadcast %443 : vector<8x1xf32> to vector<8x16xf32>
    %455 = arith.mulf %440, %454 : vector<8x16xf32>
    %456 = arith.truncf %455 : vector<8x16xf32> to vector<8x16xbf16>
    %c0_176 = arith.constant 0 : index
    %457 = arith.index_cast %407 : i32 to index
    %c0_177 = arith.constant 0 : index
    %c0_178 = arith.constant 0 : index
    %458 = vector.load %arg5[%c0_176, %457, %c0_177, %c0_178] : memref<1x8x8x16xbf16, #tpu.memory_space<vmem>>, vector<1x1x8x16xbf16>
    %459 = vector.shape_cast %458 : vector<1x1x8x16xbf16> to vector<8x16xbf16>
    %460 = vector.shape_cast %456 : vector<8x16xbf16> to vector<1x1x8x16xbf16>
    tpu.vector_store %arg5[%c0_176, %457, %c0_177, %c0_178], %460 {strides = array<i32>} : memref<1x8x8x16xbf16, #tpu.memory_space<vmem>>, vector<1x1x8x16xbf16>,
    %c8_i32 = arith.constant 8 : i32
    return
  }
  func.func @transform_0(%arg0: i32, %arg1: i32) -> (i32, i32, i32, i32) {
    %c1_i32 = arith.constant 1 : i32
    %0 = arith.subi %c1_i32, %arg0 : i32
    %1 = arith.muli %0, %arg1 : i32
    %c0_i32 = arith.constant 0 : i32
    %2 = arith.subi %c0_i32, %arg1 : i32
    %3 = arith.muli %arg0, %2 : i32
    %4 = arith.addi %1, %3 : i32
    %c0_i32_0 = arith.constant 0 : i32
    %c0_i32_1 = arith.constant 0 : i32
    %c0_i32_2 = arith.constant 0 : i32
    return %arg0, %4, %c0_i32_0, %c0_i32_1 : i32, i32, i32, i32
  }
  func.func @transform_1(%arg0: i32, %arg1: i32) -> (i32, i32, i32) {
    %c1_i32 = arith.constant 1 : i32
    %0 = arith.subi %c1_i32, %arg0 : i32
    %1 = arith.muli %0, %arg1 : i32
    %c0_i32 = arith.constant 0 : i32
    %2 = arith.subi %c0_i32, %arg1 : i32
    %3 = arith.muli %arg0, %2 : i32
    %4 = arith.addi %1, %3 : i32
    %c0_i32_0 = arith.constant 0 : i32
    %c0_i32_1 = arith.constant 0 : i32
    %c0_i32_2 = arith.constant 0 : i32
    return %4, %c0_i32_0, %c0_i32_1 : i32, i32, i32
  }
  func.func @transform_2(%arg0: i32, %arg1: i32) -> (i32, i32, i32) {
    %c0_i32 = arith.constant 0 : i32
    %c0_i32_0 = arith.constant 0 : i32
    %c0_i32_1 = arith.constant 0 : i32
    return %arg0, %c0_i32, %c0_i32_0 : i32, i32, i32
  }
  func.func @transform_3(%arg0: i32, %arg1: i32) -> (i32, i32, i32, i32) {
    %c1_i32 = arith.constant 1 : i32
    %0 = arith.subi %c1_i32, %arg0 : i32
    %1 = arith.muli %0, %arg1 : i32
    %c0_i32 = arith.constant 0 : i32
    %2 = arith.subi %c0_i32, %arg1 : i32
    %3 = arith.muli %arg0, %2 : i32
    %4 = arith.addi %1, %3 : i32
    %c0_i32_0 = arith.constant 0 : i32
    %c0_i32_1 = arith.constant 0 : i32
    %c0_i32_2 = arith.constant 0 : i32
    return %arg0, %4, %c0_i32_0, %c0_i32_1 : i32, i32, i32, i32
  }
}

module attributes {stable_mosaic.version = 11 : i64} {
  func.func @_mm_bias_kernel(%arg0: i32, %arg1: memref<64x32xbf16, #tpu.memory_space<vmem>>, %arg2: memref<32x128xbf16, #tpu.memory_space<vmem>>, %arg3: memref<1x128xf32, #tpu.memory_space<vmem>>, %arg4: memref<64x128xbf16, #tpu.memory_space<vmem>>) attributes {dimension_semantics = [#tpu.dimension_semantics<parallel>], iteration_bounds = array<i64: 1>, scalar_prefetch = 0 : i64, scratch_operands = 0 : i64, tpu.core_type = #tpu.core_type<tc>, window_params = [{transform_indices = @transform_0, window_bounds = array<i64: 64, 32>}, {pipeline_mode = #tpu.pipeline_mode<synchronous>, transform_indices = @transform_1, window_bounds = array<i64: 32, 128>}, {pipeline_mode = #tpu.pipeline_mode<synchronous>, transform_indices = @transform_2, window_bounds = array<i64: 1, 128>}, {transform_indices = @transform_3, window_bounds = array<i64: 64, 128>}]} {
    %c0 = arith.constant 0 : index
    %c0_0 = arith.constant 0 : index
    %0 = vector.load %arg1[%c0, %c0_0] : memref<64x32xbf16, #tpu.memory_space<vmem>>, vector<64x32xbf16>
    %c0_1 = arith.constant 0 : index
    %c0_2 = arith.constant 0 : index
    %1 = vector.load %arg2[%c0_1, %c0_2] : memref<32x128xbf16, #tpu.memory_space<vmem>>, vector<32x128xbf16>
    %cst = arith.constant dense<0.000000e+00> : vector<64x128xf32>
    %2 = tpu.matmul %0, %1, %cst {dimension_numbers = #tpu.dot_dimension_numbers<[1], [0], [0], [1], [0, 0, 1, 1], [], []>} : vector<64x32xbf16>, vector<32x128xbf16>, vector<64x128xf32> -> vector<64x128xf32>
    %c0_3 = arith.constant 0 : index
    %c0_4 = arith.constant 0 : index
    %3 = vector.load %arg3[%c0_3, %c0_4] : memref<1x128xf32, #tpu.memory_space<vmem>>, vector<1x128xf32>
    %4 = vector.broadcast %3 : vector<1x128xf32> to vector<64x128xf32>
    %5 = arith.addf %2, %4 : vector<64x128xf32>
    %cst_5 = arith.constant 0.000000e+00 : f32
    %6 = vector.broadcast %cst_5 : f32 to vector<64x128xf32>
    %7 = arith.maximumf %5, %6 : vector<64x128xf32>
    %8 = arith.truncf %7 : vector<64x128xf32> to vector<64x128xbf16>
    %c0_6 = arith.constant 0 : index
    %c0_7 = arith.constant 0 : index
    %9 = vector.load %arg4[%c0_6, %c0_7] : memref<64x128xbf16, #tpu.memory_space<vmem>>, vector<64x128xbf16>
    tpu.vector_store %arg4[%c0_6, %c0_7], %8 {strides = array<i32>} : memref<64x128xbf16, #tpu.memory_space<vmem>>, vector<64x128xbf16>,
    return
  }
  func.func @transform_0(%arg0: i32) -> (i32, i32) {
    %c0_i32 = arith.constant 0 : i32
    %c0_i32_0 = arith.constant 0 : i32
    return %arg0, %c0_i32 : i32, i32
  }
  func.func @transform_1(%arg0: i32) -> (i32, i32) {
    %c0_i32 = arith.constant 0 : i32
    %c0_i32_0 = arith.constant 0 : i32
    %c0_i32_1 = arith.constant 0 : i32
    return %c0_i32, %c0_i32_0 : i32, i32
  }
  func.func @transform_2(%arg0: i32) -> (i32, i32) {
    %c0_i32 = arith.constant 0 : i32
    %c0_i32_0 = arith.constant 0 : i32
    %c0_i32_1 = arith.constant 0 : i32
    return %c0_i32, %c0_i32_0 : i32, i32
  }
  func.func @transform_3(%arg0: i32) -> (i32, i32) {
    %c0_i32 = arith.constant 0 : i32
    %c0_i32_0 = arith.constant 0 : i32
    return %arg0, %c0_i32 : i32, i32
  }
}

module attributes {stable_mosaic.version = 11 : i64} {
  func.func @_mm_bias_kernel(%arg0: i32, %arg1: memref<16x128xbf16, #tpu.memory_space<vmem>>, %arg2: memref<128x128xbf16, #tpu.memory_space<vmem>>, %arg3: memref<1x128xf32, #tpu.memory_space<vmem>>, %arg4: memref<16x128xf32, #tpu.memory_space<vmem>>) attributes {dimension_semantics = [#tpu.dimension_semantics<parallel>], iteration_bounds = array<i64: 1>, scalar_prefetch = 0 : i64, scratch_operands = 0 : i64, tpu.core_type = #tpu.core_type<tc>, window_params = [{transform_indices = @transform_0, window_bounds = array<i64: 16, 128>}, {pipeline_mode = #tpu.pipeline_mode<synchronous>, transform_indices = @transform_1, window_bounds = array<i64: 128, 128>}, {pipeline_mode = #tpu.pipeline_mode<synchronous>, transform_indices = @transform_2, window_bounds = array<i64: 1, 128>}, {transform_indices = @transform_3, window_bounds = array<i64: 16, 128>}]} {
    %c0 = arith.constant 0 : index
    %c0_0 = arith.constant 0 : index
    %0 = vector.load %arg1[%c0, %c0_0] : memref<16x128xbf16, #tpu.memory_space<vmem>>, vector<16x128xbf16>
    %c0_1 = arith.constant 0 : index
    %c0_2 = arith.constant 0 : index
    %1 = vector.load %arg2[%c0_1, %c0_2] : memref<128x128xbf16, #tpu.memory_space<vmem>>, vector<128x128xbf16>
    %cst = arith.constant dense<0.000000e+00> : vector<16x128xf32>
    %2 = tpu.matmul %0, %1, %cst {dimension_numbers = #tpu.dot_dimension_numbers<[1], [0], [0], [1], [0, 0, 1, 1], [], []>} : vector<16x128xbf16>, vector<128x128xbf16>, vector<16x128xf32> -> vector<16x128xf32>
    %c0_3 = arith.constant 0 : index
    %c0_4 = arith.constant 0 : index
    %3 = vector.load %arg3[%c0_3, %c0_4] : memref<1x128xf32, #tpu.memory_space<vmem>>, vector<1x128xf32>
    %4 = vector.broadcast %3 : vector<1x128xf32> to vector<16x128xf32>
    %5 = arith.addf %2, %4 : vector<16x128xf32>
    %c0_5 = arith.constant 0 : index
    %c0_6 = arith.constant 0 : index
    %6 = vector.load %arg4[%c0_5, %c0_6] : memref<16x128xf32, #tpu.memory_space<vmem>>, vector<16x128xf32>
    tpu.vector_store %arg4[%c0_5, %c0_6], %5 {strides = array<i32>} : memref<16x128xf32, #tpu.memory_space<vmem>>, vector<16x128xf32>,
    return
  }
  func.func @transform_0(%arg0: i32) -> (i32, i32) {
    %c0_i32 = arith.constant 0 : i32
    %c0_i32_0 = arith.constant 0 : i32
    return %arg0, %c0_i32 : i32, i32
  }
  func.func @transform_1(%arg0: i32) -> (i32, i32) {
    %c0_i32 = arith.constant 0 : i32
    %c0_i32_0 = arith.constant 0 : i32
    %c0_i32_1 = arith.constant 0 : i32
    return %c0_i32, %c0_i32_0 : i32, i32
  }
  func.func @transform_2(%arg0: i32) -> (i32, i32) {
    %c0_i32 = arith.constant 0 : i32
    %c0_i32_0 = arith.constant 0 : i32
    %c0_i32_1 = arith.constant 0 : i32
    return %c0_i32, %c0_i32_0 : i32, i32
  }
  func.func @transform_3(%arg0: i32) -> (i32, i32) {
    %c0_i32 = arith.constant 0 : i32
    %c0_i32_0 = arith.constant 0 : i32
    return %arg0, %c0_i32 : i32, i32
  }
}

module attributes {stable_mosaic.version = 11 : i64} {
  func.func @_bilstm_kernel(%arg0: i32, %arg1: i32, %arg2: memref<1x8x2x64xf32, #tpu.memory_space<vmem>>, %arg3: memref<8x2x1xf32, #tpu.memory_space<vmem>>, %arg4: memref<1x16x64xbf16, #tpu.memory_space<vmem>>, %arg5: memref<1x8x2x16xbf16, #tpu.memory_space<vmem>>, %arg6: memref<2x16xf32, #tpu.memory_space<vmem>>, %arg7: memref<2x16xf32, #tpu.memory_space<vmem>>) attributes {dimension_semantics = [#tpu.dimension_semantics<parallel>, #tpu.dimension_semantics<arbitrary>], iteration_bounds = array<i64: 2, 1>, scalar_prefetch = 0 : i64, scratch_operands = 2 : i64, tpu.core_type = #tpu.core_type<tc>, window_params = [{transform_indices = @transform_0, window_bounds = array<i64: 1, 8, 2, 64>}, {transform_indices = @transform_1, window_bounds = array<i64: 8, 2, 1>}, {transform_indices = @transform_2, window_bounds = array<i64: 1, 16, 64>}, {transform_indices = @transform_3, window_bounds = array<i64: 1, 8, 2, 16>}]} {
    %c0_i32 = arith.constant 0 : i32
    %0 = arith.cmpi eq, %arg1, %c0_i32 : i32
    %1 = arith.extui %0 : i1 to i32
    %c0_i32_0 = arith.constant 0 : i32
    %2 = arith.cmpi ne, %1, %c0_i32_0 : i32
    scf.if %2 {
      %cst_179 = arith.constant 0.000000e+00 : f32
      %461 = vector.broadcast %cst_179 : f32 to vector<2x16xf32>
      %c0_180 = arith.constant 0 : index
      %c0_181 = arith.constant 0 : index
      %462 = vector.load %arg6[%c0_180, %c0_181] : memref<2x16xf32, #tpu.memory_space<vmem>>, vector<2x16xf32>
      tpu.vector_store %arg6[%c0_180, %c0_181], %461 {strides = array<i32>} : memref<2x16xf32, #tpu.memory_space<vmem>>, vector<2x16xf32>,
      %cst_182 = arith.constant 0.000000e+00 : f32
      %463 = vector.broadcast %cst_182 : f32 to vector<2x16xf32>
      %c0_183 = arith.constant 0 : index
      %c0_184 = arith.constant 0 : index
      %464 = vector.load %arg7[%c0_183, %c0_184] : memref<2x16xf32, #tpu.memory_space<vmem>>, vector<2x16xf32>
      tpu.vector_store %arg7[%c0_183, %c0_184], %463 {strides = array<i32>} : memref<2x16xf32, #tpu.memory_space<vmem>>, vector<2x16xf32>,
    } else {
    }
    %c0 = arith.constant 0 : index
    %c0_1 = arith.constant 0 : index
    %c0_2 = arith.constant 0 : index
    %3 = vector.load %arg4[%c0, %c0_1, %c0_2] : memref<1x16x64xbf16, #tpu.memory_space<vmem>>, vector<1x16x64xbf16>
    %4 = vector.shape_cast %3 : vector<1x16x64xbf16> to vector<16x64xbf16>
    %c0_i32_3 = arith.constant 0 : i32
    %c2_i32 = arith.constant 2 : i32
    %5 = arith.muli %c2_i32, %c0_i32_3 : i32
    %c7_i32 = arith.constant 7 : i32
    %6 = arith.subi %c7_i32, %5 : i32
    %7 = arith.muli %arg0, %6 : i32
    %8 = arith.addi %c0_i32_3, %7 : i32
    %c0_4 = arith.constant 0 : index
    %c0_5 = arith.constant 0 : index
    %9 = vector.load %arg6[%c0_4, %c0_5] : memref<2x16xf32, #tpu.memory_space<vmem>>, vector<2x16xf32>
    %c0_6 = arith.constant 0 : index
    %c0_7 = arith.constant 0 : index
    %10 = vector.load %arg7[%c0_6, %c0_7] : memref<2x16xf32, #tpu.memory_space<vmem>>, vector<2x16xf32>
    %c0_8 = arith.constant 0 : index
    %11 = arith.index_cast %8 : i32 to index
    %c0_9 = arith.constant 0 : index
    %c0_10 = arith.constant 0 : index
    %12 = vector.load %arg2[%c0_8, %11, %c0_9, %c0_10] : memref<1x8x2x64xf32, #tpu.memory_space<vmem>>, vector<1x1x2x64xf32>
    %13 = vector.shape_cast %12 : vector<1x1x2x64xf32> to vector<2x64xf32>
    %14 = arith.truncf %9 : vector<2x16xf32> to vector<2x16xbf16>
    %cst = arith.constant dense<0.000000e+00> : vector<2x64xf32>
    %15 = tpu.matmul %14, %4, %cst {dimension_numbers = #tpu.dot_dimension_numbers<[1], [0], [0], [1], [0, 0, 1, 1], [], []>} : vector<2x16xbf16>, vector<16x64xbf16>, vector<2x64xf32> -> vector<2x64xf32>
    %16 = arith.addf %13, %15 : vector<2x64xf32>
    %17 = vector.extract_strided_slice %16 {offsets = [0, 0], sizes = [2, 16], strides = [1, 1]} : vector<2x64xf32> to vector<2x16xf32>
    %18 = arith.negf %17 : vector<2x16xf32>
    %19 = math.exp %18 : vector<2x16xf32>
    %cst_11 = arith.constant 1.000000e+00 : f32
    %20 = vector.broadcast %cst_11 : f32 to vector<2x16xf32>
    %21 = arith.addf %20, %19 : vector<2x16xf32>
    %22 = arith.divf %20, %21 : vector<2x16xf32>
    %23 = vector.extract_strided_slice %16 {offsets = [0, 16], sizes = [2, 16], strides = [1, 1]} : vector<2x64xf32> to vector<2x16xf32>
    %24 = arith.negf %23 : vector<2x16xf32>
    %25 = math.exp %24 : vector<2x16xf32>
    %cst_12 = arith.constant 1.000000e+00 : f32
    %26 = vector.broadcast %cst_12 : f32 to vector<2x16xf32>
    %27 = arith.addf %26, %25 : vector<2x16xf32>
    %28 = arith.divf %26, %27 : vector<2x16xf32>
    %29 = vector.extract_strided_slice %16 {offsets = [0, 32], sizes = [2, 16], strides = [1, 1]} : vector<2x64xf32> to vector<2x16xf32>
    %30 = math.tanh %29 : vector<2x16xf32>
    %31 = vector.extract_strided_slice %16 {offsets = [0, 48], sizes = [2, 16], strides = [1, 1]} : vector<2x64xf32> to vector<2x16xf32>
    %32 = arith.negf %31 : vector<2x16xf32>
    %33 = math.exp %32 : vector<2x16xf32>
    %cst_13 = arith.constant 1.000000e+00 : f32
    %34 = vector.broadcast %cst_13 : f32 to vector<2x16xf32>
    %35 = arith.addf %34, %33 : vector<2x16xf32>
    %36 = arith.divf %34, %35 : vector<2x16xf32>
    %37 = arith.mulf %28, %10 : vector<2x16xf32>
    %38 = arith.mulf %22, %30 : vector<2x16xf32>
    %39 = arith.addf %37, %38 : vector<2x16xf32>
    %40 = math.tanh %39 : vector<2x16xf32>
    %41 = arith.mulf %36, %40 : vector<2x16xf32>
    %42 = arith.index_cast %8 : i32 to index
    %c0_14 = arith.constant 0 : index
    %c0_15 = arith.constant 0 : index
    %43 = vector.load %arg3[%42, %c0_14, %c0_15] : memref<8x2x1xf32, #tpu.memory_space<vmem>>, vector<1x2x1xf32>
    %44 = vector.shape_cast %43 : vector<1x2x1xf32> to vector<2x1xf32>
    %45 = arith.subf %41, %9 : vector<2x16xf32>
    %46 = vector.broadcast %44 : vector<2x1xf32> to vector<2x16xf32>
    %47 = arith.mulf %46, %45 : vector<2x16xf32>
    %48 = arith.addf %9, %47 : vector<2x16xf32>
    %c0_16 = arith.constant 0 : index
    %c0_17 = arith.constant 0 : index
    %49 = vector.load %arg6[%c0_16, %c0_17] : memref<2x16xf32, #tpu.memory_space<vmem>>, vector<2x16xf32>
    tpu.vector_store %arg6[%c0_16, %c0_17], %48 {strides = array<i32>} : memref<2x16xf32, #tpu.memory_space<vmem>>, vector<2x16xf32>,
    %50 = arith.subf %39, %10 : vector<2x16xf32>
    %51 = vector.broadcast %44 : vector<2x1xf32> to vector<2x16xf32>
    %52 = arith.mulf %51, %50 : vector<2x16xf32>
    %53 = arith.addf %10, %52 : vector<2x16xf32>
    %c0_18 = arith.constant 0 : index
    %c0_19 = arith.constant 0 : index
    %54 = vector.load %arg7[%c0_18, %c0_19] : memref<2x16xf32, #tpu.memory_space<vmem>>, vector<2x16xf32>
    tpu.vector_store %arg7[%c0_18, %c0_19], %53 {strides = array<i32>} : memref<2x16xf32, #tpu.memory_space<vmem>>, vector<2x16xf32>,
    %55 = vector.broadcast %44 : vector<2x1xf32> to vector<2x16xf32>
    %56 = arith.mulf %41, %55 : vector<2x16xf32>
    %57 = arith.truncf %56 : vector<2x16xf32> to vector<2x16xbf16>
    %c0_20 = arith.constant 0 : index
    %58 = arith.index_cast %8 : i32 to index
    %c0_21 = arith.constant 0 : index
    %c0_22 = arith.constant 0 : index
    %59 = vector.load %arg5[%c0_20, %58, %c0_21, %c0_22] : memref<1x8x2x16xbf16, #tpu.memory_space<vmem>>, vector<1x1x2x16xbf16>
    %60 = vector.shape_cast %59 : vector<1x1x2x16xbf16> to vector<2x16xbf16>
    %61 = vector.shape_cast %57 : vector<2x16xbf16> to vector<1x1x2x16xbf16>
    tpu.vector_store %arg5[%c0_20, %58, %c0_21, %c0_22], %61 {strides = array<i32>} : memref<1x8x2x16xbf16, #tpu.memory_space<vmem>>, vector<1x1x2x16xbf16>,
    %c1_i32 = arith.constant 1 : i32
    %c2_i32_23 = arith.constant 2 : i32
    %62 = arith.muli %c2_i32_23, %c1_i32 : i32
    %c7_i32_24 = arith.constant 7 : i32
    %63 = arith.subi %c7_i32_24, %62 : i32
    %64 = arith.muli %arg0, %63 : i32
    %65 = arith.addi %c1_i32, %64 : i32
    %c0_25 = arith.constant 0 : index
    %c0_26 = arith.constant 0 : index
    %66 = vector.load %arg6[%c0_25, %c0_26] : memref<2x16xf32, #tpu.memory_space<vmem>>, vector<2x16xf32>
    %c0_27 = arith.constant 0 : index
    %c0_28 = arith.constant 0 : index
    %67 = vector.load %arg7[%c0_27, %c0_28] : memref<2x16xf32, #tpu.memory_space<vmem>>, vector<2x16xf32>
    %c0_29 = arith.constant 0 : index
    %68 = arith.index_cast %65 : i32 to index
    %c0_30 = arith.constant 0 : index
    %c0_31 = arith.constant 0 : index
    %69 = vector.load %arg2[%c0_29, %68, %c0_30, %c0_31] : memref<1x8x2x64xf32, #tpu.memory_space<vmem>>, vector<1x1x2x64xf32>
    %70 = vector.shape_cast %69 : vector<1x1x2x64xf32> to vector<2x64xf32>
    %71 = arith.truncf %66 : vector<2x16xf32> to vector<2x16xbf16>
    %cst_32 = arith.constant dense<0.000000e+00> : vector<2x64xf32>
    %72 = tpu.matmul %71, %4, %cst_32 {dimension_numbers = #tpu.dot_dimension_numbers<[1], [0], [0], [1], [0, 0, 1, 1], [], []>} : vector<2x16xbf16>, vector<16x64xbf16>, vector<2x64xf32> -> vector<2x64xf32>
    %73 = arith.addf %70, %72 : vector<2x64xf32>
    %74 = vector.extract_strided_slice %73 {offsets = [0, 0], sizes = [2, 16], strides = [1, 1]} : vector<2x64xf32> to vector<2x16xf32>
    %75 = arith.negf %74 : vector<2x16xf32>
    %76 = math.exp %75 : vector<2x16xf32>
    %cst_33 = arith.constant 1.000000e+00 : f32
    %77 = vector.broadcast %cst_33 : f32 to vector<2x16xf32>
    %78 = arith.addf %77, %76 : vector<2x16xf32>
    %79 = arith.divf %77, %78 : vector<2x16xf32>
    %80 = vector.extract_strided_slice %73 {offsets = [0, 16], sizes = [2, 16], strides = [1, 1]} : vector<2x64xf32> to vector<2x16xf32>
    %81 = arith.negf %80 : vector<2x16xf32>
    %82 = math.exp %81 : vector<2x16xf32>
    %cst_34 = arith.constant 1.000000e+00 : f32
    %83 = vector.broadcast %cst_34 : f32 to vector<2x16xf32>
    %84 = arith.addf %83, %82 : vector<2x16xf32>
    %85 = arith.divf %83, %84 : vector<2x16xf32>
    %86 = vector.extract_strided_slice %73 {offsets = [0, 32], sizes = [2, 16], strides = [1, 1]} : vector<2x64xf32> to vector<2x16xf32>
    %87 = math.tanh %86 : vector<2x16xf32>
    %88 = vector.extract_strided_slice %73 {offsets = [0, 48], sizes = [2, 16], strides = [1, 1]} : vector<2x64xf32> to vector<2x16xf32>
    %89 = arith.negf %88 : vector<2x16xf32>
    %90 = math.exp %89 : vector<2x16xf32>
    %cst_35 = arith.constant 1.000000e+00 : f32
    %91 = vector.broadcast %cst_35 : f32 to vector<2x16xf32>
    %92 = arith.addf %91, %90 : vector<2x16xf32>
    %93 = arith.divf %91, %92 : vector<2x16xf32>
    %94 = arith.mulf %85, %67 : vector<2x16xf32>
    %95 = arith.mulf %79, %87 : vector<2x16xf32>
    %96 = arith.addf %94, %95 : vector<2x16xf32>
    %97 = math.tanh %96 : vector<2x16xf32>
    %98 = arith.mulf %93, %97 : vector<2x16xf32>
    %99 = arith.index_cast %65 : i32 to index
    %c0_36 = arith.constant 0 : index
    %c0_37 = arith.constant 0 : index
    %100 = vector.load %arg3[%99, %c0_36, %c0_37] : memref<8x2x1xf32, #tpu.memory_space<vmem>>, vector<1x2x1xf32>
    %101 = vector.shape_cast %100 : vector<1x2x1xf32> to vector<2x1xf32>
    %102 = arith.subf %98, %66 : vector<2x16xf32>
    %103 = vector.broadcast %101 : vector<2x1xf32> to vector<2x16xf32>
    %104 = arith.mulf %103, %102 : vector<2x16xf32>
    %105 = arith.addf %66, %104 : vector<2x16xf32>
    %c0_38 = arith.constant 0 : index
    %c0_39 = arith.constant 0 : index
    %106 = vector.load %arg6[%c0_38, %c0_39] : memref<2x16xf32, #tpu.memory_space<vmem>>, vector<2x16xf32>
    tpu.vector_store %arg6[%c0_38, %c0_39], %105 {strides = array<i32>} : memref<2x16xf32, #tpu.memory_space<vmem>>, vector<2x16xf32>,
    %107 = arith.subf %96, %67 : vector<2x16xf32>
    %108 = vector.broadcast %101 : vector<2x1xf32> to vector<2x16xf32>
    %109 = arith.mulf %108, %107 : vector<2x16xf32>
    %110 = arith.addf %67, %109 : vector<2x16xf32>
    %c0_40 = arith.constant 0 : index
    %c0_41 = arith.constant 0 : index
    %111 = vector.load %arg7[%c0_40, %c0_41] : memref<2x16xf32, #tpu.memory_space<vmem>>, vector<2x16xf32>
    tpu.vector_store %arg7[%c0_40, %c0_41], %110 {strides = array<i32>} : memref<2x16xf32, #tpu.memory_space<vmem>>, vector<2x16xf32>,
    %112 = vector.broadcast %101 : vector<2x1xf32> to vector<2x16xf32>
    %113 = arith.mulf %98, %112 : vector<2x16xf32>
    %114 = arith.truncf %113 : vector<2x16xf32> to vector<2x16xbf16>
    %c0_42 = arith.constant 0 : index
    %115 = arith.index_cast %65 : i32 to index
    %c0_43 = arith.constant 0 : index
    %c0_44 = arith.constant 0 : index
    %116 = vector.load %arg5[%c0_42, %115, %c0_43, %c0_44] : memref<1x8x2x16xbf16, #tpu.memory_space<vmem>>, vector<1x1x2x16xbf16>
    %117 = vector.shape_cast %116 : vector<1x1x2x16xbf16> to vector<2x16xbf16>
    %118 = vector.shape_cast %114 : vector<2x16xbf16> to vector<1x1x2x16xbf16>
    tpu.vector_store %arg5[%c0_42, %115, %c0_43, %c0_44], %118 {strides = array<i32>} : memref<1x8x2x16xbf16, #tpu.memory_space<vmem>>, vector<1x1x2x16xbf16>,
    %c2_i32_45 = arith.constant 2 : i32
    %c2_i32_46 = arith.constant 2 : i32
    %119 = arith.muli %c2_i32_46, %c2_i32_45 : i32
    %c7_i32_47 = arith.constant 7 : i32
    %120 = arith.subi %c7_i32_47, %119 : i32
    %121 = arith.muli %arg0, %120 : i32
    %122 = arith.addi %c2_i32_45, %121 : i32
    %c0_48 = arith.constant 0 : index
    %c0_49 = arith.constant 0 : index
    %123 = vector.load %arg6[%c0_48, %c0_49] : memref<2x16xf32, #tpu.memory_space<vmem>>, vector<2x16xf32>
    %c0_50 = arith.constant 0 : index
    %c0_51 = arith.constant 0 : index
    %124 = vector.load %arg7[%c0_50, %c0_51] : memref<2x16xf32, #tpu.memory_space<vmem>>, vector<2x16xf32>
    %c0_52 = arith.constant 0 : index
    %125 = arith.index_cast %122 : i32 to index
    %c0_53 = arith.constant 0 : index
    %c0_54 = arith.constant 0 : index
    %126 = vector.load %arg2[%c0_52, %125, %c0_53, %c0_54] : memref<1x8x2x64xf32, #tpu.memory_space<vmem>>, vector<1x1x2x64xf32>
    %127 = vector.shape_cast %126 : vector<1x1x2x64xf32> to vector<2x64xf32>
    %128 = arith.truncf %123 : vector<2x16xf32> to vector<2x16xbf16>
    %cst_55 = arith.constant dense<0.000000e+00> : vector<2x64xf32>
    %129 = tpu.matmul %128, %4, %cst_55 {dimension_numbers = #tpu.dot_dimension_numbers<[1], [0], [0], [1], [0, 0, 1, 1], [], []>} : vector<2x16xbf16>, vector<16x64xbf16>, vector<2x64xf32> -> vector<2x64xf32>
    %130 = arith.addf %127, %129 : vector<2x64xf32>
    %131 = vector.extract_strided_slice %130 {offsets = [0, 0], sizes = [2, 16], strides = [1, 1]} : vector<2x64xf32> to vector<2x16xf32>
    %132 = arith.negf %131 : vector<2x16xf32>
    %133 = math.exp %132 : vector<2x16xf32>
    %cst_56 = arith.constant 1.000000e+00 : f32
    %134 = vector.broadcast %cst_56 : f32 to vector<2x16xf32>
    %135 = arith.addf %134, %133 : vector<2x16xf32>
    %136 = arith.divf %134, %135 : vector<2x16xf32>
    %137 = vector.extract_strided_slice %130 {offsets = [0, 16], sizes = [2, 16], strides = [1, 1]} : vector<2x64xf32> to vector<2x16xf32>
    %138 = arith.negf %137 : vector<2x16xf32>
    %139 = math.exp %138 : vector<2x16xf32>
    %cst_57 = arith.constant 1.000000e+00 : f32
    %140 = vector.broadcast %cst_57 : f32 to vector<2x16xf32>
    %141 = arith.addf %140, %139 : vector<2x16xf32>
    %142 = arith.divf %140, %141 : vector<2x16xf32>
    %143 = vector.extract_strided_slice %130 {offsets = [0, 32], sizes = [2, 16], strides = [1, 1]} : vector<2x64xf32> to vector<2x16xf32>
    %144 = math.tanh %143 : vector<2x16xf32>
    %145 = vector.extract_strided_slice %130 {offsets = [0, 48], sizes = [2, 16], strides = [1, 1]} : vector<2x64xf32> to vector<2x16xf32>
    %146 = arith.negf %145 : vector<2x16xf32>
    %147 = math.exp %146 : vector<2x16xf32>
    %cst_58 = arith.constant 1.000000e+00 : f32
    %148 = vector.broadcast %cst_58 : f32 to vector<2x16xf32>
    %149 = arith.addf %148, %147 : vector<2x16xf32>
    %150 = arith.divf %148, %149 : vector<2x16xf32>
    %151 = arith.mulf %142, %124 : vector<2x16xf32>
    %152 = arith.mulf %136, %144 : vector<2x16xf32>
    %153 = arith.addf %151, %152 : vector<2x16xf32>
    %154 = math.tanh %153 : vector<2x16xf32>
    %155 = arith.mulf %150, %154 : vector<2x16xf32>
    %156 = arith.index_cast %122 : i32 to index
    %c0_59 = arith.constant 0 : index
    %c0_60 = arith.constant 0 : index
    %157 = vector.load %arg3[%156, %c0_59, %c0_60] : memref<8x2x1xf32, #tpu.memory_space<vmem>>, vector<1x2x1xf32>
    %158 = vector.shape_cast %157 : vector<1x2x1xf32> to vector<2x1xf32>
    %159 = arith.subf %155, %123 : vector<2x16xf32>
    %160 = vector.broadcast %158 : vector<2x1xf32> to vector<2x16xf32>
    %161 = arith.mulf %160, %159 : vector<2x16xf32>
    %162 = arith.addf %123, %161 : vector<2x16xf32>
    %c0_61 = arith.constant 0 : index
    %c0_62 = arith.constant 0 : index
    %163 = vector.load %arg6[%c0_61, %c0_62] : memref<2x16xf32, #tpu.memory_space<vmem>>, vector<2x16xf32>
    tpu.vector_store %arg6[%c0_61, %c0_62], %162 {strides = array<i32>} : memref<2x16xf32, #tpu.memory_space<vmem>>, vector<2x16xf32>,
    %164 = arith.subf %153, %124 : vector<2x16xf32>
    %165 = vector.broadcast %158 : vector<2x1xf32> to vector<2x16xf32>
    %166 = arith.mulf %165, %164 : vector<2x16xf32>
    %167 = arith.addf %124, %166 : vector<2x16xf32>
    %c0_63 = arith.constant 0 : index
    %c0_64 = arith.constant 0 : index
    %168 = vector.load %arg7[%c0_63, %c0_64] : memref<2x16xf32, #tpu.memory_space<vmem>>, vector<2x16xf32>
    tpu.vector_store %arg7[%c0_63, %c0_64], %167 {strides = array<i32>} : memref<2x16xf32, #tpu.memory_space<vmem>>, vector<2x16xf32>,
    %169 = vector.broadcast %158 : vector<2x1xf32> to vector<2x16xf32>
    %170 = arith.mulf %155, %169 : vector<2x16xf32>
    %171 = arith.truncf %170 : vector<2x16xf32> to vector<2x16xbf16>
    %c0_65 = arith.constant 0 : index
    %172 = arith.index_cast %122 : i32 to index
    %c0_66 = arith.constant 0 : index
    %c0_67 = arith.constant 0 : index
    %173 = vector.load %arg5[%c0_65, %172, %c0_66, %c0_67] : memref<1x8x2x16xbf16, #tpu.memory_space<vmem>>, vector<1x1x2x16xbf16>
    %174 = vector.shape_cast %173 : vector<1x1x2x16xbf16> to vector<2x16xbf16>
    %175 = vector.shape_cast %171 : vector<2x16xbf16> to vector<1x1x2x16xbf16>
    tpu.vector_store %arg5[%c0_65, %172, %c0_66, %c0_67], %175 {strides = array<i32>} : memref<1x8x2x16xbf16, #tpu.memory_space<vmem>>, vector<1x1x2x16xbf16>,
    %c3_i32 = arith.constant 3 : i32
    %c2_i32_68 = arith.constant 2 : i32
    %176 = arith.muli %c2_i32_68, %c3_i32 : i32
    %c7_i32_69 = arith.constant 7 : i32
    %177 = arith.subi %c7_i32_69, %176 : i32
    %178 = arith.muli %arg0, %177 : i32
    %179 = arith.addi %c3_i32, %178 : i32
    %c0_70 = arith.constant 0 : index
    %c0_71 = arith.constant 0 : index
    %180 = vector.load %arg6[%c0_70, %c0_71] : memref<2x16xf32, #tpu.memory_space<vmem>>, vector<2x16xf32>
    %c0_72 = arith.constant 0 : index
    %c0_73 = arith.constant 0 : index
    %181 = vector.load %arg7[%c0_72, %c0_73] : memref<2x16xf32, #tpu.memory_space<vmem>>, vector<2x16xf32>
    %c0_74 = arith.constant 0 : index
    %182 = arith.index_cast %179 : i32 to index
    %c0_75 = arith.constant 0 : index
    %c0_76 = arith.constant 0 : index
    %183 = vector.load %arg2[%c0_74, %182, %c0_75, %c0_76] : memref<1x8x2x64xf32, #tpu.memory_space<vmem>>, vector<1x1x2x64xf32>
    %184 = vector.shape_cast %183 : vector<1x1x2x64xf32> to vector<2x64xf32>
    %185 = arith.truncf %180 : vector<2x16xf32> to vector<2x16xbf16>
    %cst_77 = arith.constant dense<0.000000e+00> : vector<2x64xf32>
    %186 = tpu.matmul %185, %4, %cst_77 {dimension_numbers = #tpu.dot_dimension_numbers<[1], [0], [0], [1], [0, 0, 1, 1], [], []>} : vector<2x16xbf16>, vector<16x64xbf16>, vector<2x64xf32> -> vector<2x64xf32>
    %187 = arith.addf %184, %186 : vector<2x64xf32>
    %188 = vector.extract_strided_slice %187 {offsets = [0, 0], sizes = [2, 16], strides = [1, 1]} : vector<2x64xf32> to vector<2x16xf32>
    %189 = arith.negf %188 : vector<2x16xf32>
    %190 = math.exp %189 : vector<2x16xf32>
    %cst_78 = arith.constant 1.000000e+00 : f32
    %191 = vector.broadcast %cst_78 : f32 to vector<2x16xf32>
    %192 = arith.addf %191, %190 : vector<2x16xf32>
    %193 = arith.divf %191, %192 : vector<2x16xf32>
    %194 = vector.extract_strided_slice %187 {offsets = [0, 16], sizes = [2, 16], strides = [1, 1]} : vector<2x64xf32> to vector<2x16xf32>
    %195 = arith.negf %194 : vector<2x16xf32>
    %196 = math.exp %195 : vector<2x16xf32>
    %cst_79 = arith.constant 1.000000e+00 : f32
    %197 = vector.broadcast %cst_79 : f32 to vector<2x16xf32>
    %198 = arith.addf %197, %196 : vector<2x16xf32>
    %199 = arith.divf %197, %198 : vector<2x16xf32>
    %200 = vector.extract_strided_slice %187 {offsets = [0, 32], sizes = [2, 16], strides = [1, 1]} : vector<2x64xf32> to vector<2x16xf32>
    %201 = math.tanh %200 : vector<2x16xf32>
    %202 = vector.extract_strided_slice %187 {offsets = [0, 48], sizes = [2, 16], strides = [1, 1]} : vector<2x64xf32> to vector<2x16xf32>
    %203 = arith.negf %202 : vector<2x16xf32>
    %204 = math.exp %203 : vector<2x16xf32>
    %cst_80 = arith.constant 1.000000e+00 : f32
    %205 = vector.broadcast %cst_80 : f32 to vector<2x16xf32>
    %206 = arith.addf %205, %204 : vector<2x16xf32>
    %207 = arith.divf %205, %206 : vector<2x16xf32>
    %208 = arith.mulf %199, %181 : vector<2x16xf32>
    %209 = arith.mulf %193, %201 : vector<2x16xf32>
    %210 = arith.addf %208, %209 : vector<2x16xf32>
    %211 = math.tanh %210 : vector<2x16xf32>
    %212 = arith.mulf %207, %211 : vector<2x16xf32>
    %213 = arith.index_cast %179 : i32 to index
    %c0_81 = arith.constant 0 : index
    %c0_82 = arith.constant 0 : index
    %214 = vector.load %arg3[%213, %c0_81, %c0_82] : memref<8x2x1xf32, #tpu.memory_space<vmem>>, vector<1x2x1xf32>
    %215 = vector.shape_cast %214 : vector<1x2x1xf32> to vector<2x1xf32>
    %216 = arith.subf %212, %180 : vector<2x16xf32>
    %217 = vector.broadcast %215 : vector<2x1xf32> to vector<2x16xf32>
    %218 = arith.mulf %217, %216 : vector<2x16xf32>
    %219 = arith.addf %180, %218 : vector<2x16xf32>
    %c0_83 = arith.constant 0 : index
    %c0_84 = arith.constant 0 : index
    %220 = vector.load %arg6[%c0_83, %c0_84] : memref<2x16xf32, #tpu.memory_space<vmem>>, vector<2x16xf32>
    tpu.vector_store %arg6[%c0_83, %c0_84], %219 {strides = array<i32>} : memref<2x16xf32, #tpu.memory_space<vmem>>, vector<2x16xf32>,
    %221 = arith.subf %210, %181 : vector<2x16xf32>
    %222 = vector.broadcast %215 : vector<2x1xf32> to vector<2x16xf32>
    %223 = arith.mulf %222, %221 : vector<2x16xf32>
    %224 = arith.addf %181, %223 : vector<2x16xf32>
    %c0_85 = arith.constant 0 : index
    %c0_86 = arith.constant 0 : index
    %225 = vector.load %arg7[%c0_85, %c0_86] : memref<2x16xf32, #tpu.memory_space<vmem>>, vector<2x16xf32>
    tpu.vector_store %arg7[%c0_85, %c0_86], %224 {strides = array<i32>} : memref<2x16xf32, #tpu.memory_space<vmem>>, vector<2x16xf32>,
    %226 = vector.broadcast %215 : vector<2x1xf32> to vector<2x16xf32>
    %227 = arith.mulf %212, %226 : vector<2x16xf32>
    %228 = arith.truncf %227 : vector<2x16xf32> to vector<2x16xbf16>
    %c0_87 = arith.constant 0 : index
    %229 = arith.index_cast %179 : i32 to index
    %c0_88 = arith.constant 0 : index
    %c0_89 = arith.constant 0 : index
    %230 = vector.load %arg5[%c0_87, %229, %c0_88, %c0_89] : memref<1x8x2x16xbf16, #tpu.memory_space<vmem>>, vector<1x1x2x16xbf16>
    %231 = vector.shape_cast %230 : vector<1x1x2x16xbf16> to vector<2x16xbf16>
    %232 = vector.shape_cast %228 : vector<2x16xbf16> to vector<1x1x2x16xbf16>
    tpu.vector_store %arg5[%c0_87, %229, %c0_88, %c0_89], %232 {strides = array<i32>} : memref<1x8x2x16xbf16, #tpu.memory_space<vmem>>, vector<1x1x2x16xbf16>,
    %c4_i32 = arith.constant 4 : i32
    %c2_i32_90 = arith.constant 2 : i32
    %233 = arith.muli %c2_i32_90, %c4_i32 : i32
    %c7_i32_91 = arith.constant 7 : i32
    %234 = arith.subi %c7_i32_91, %233 : i32
    %235 = arith.muli %arg0, %234 : i32
    %236 = arith.addi %c4_i32, %235 : i32
    %c0_92 = arith.constant 0 : index
    %c0_93 = arith.constant 0 : index
    %237 = vector.load %arg6[%c0_92, %c0_93] : memref<2x16xf32, #tpu.memory_space<vmem>>, vector<2x16xf32>
    %c0_94 = arith.constant 0 : index
    %c0_95 = arith.constant 0 : index
    %238 = vector.load %arg7[%c0_94, %c0_95] : memref<2x16xf32, #tpu.memory_space<vmem>>, vector<2x16xf32>
    %c0_96 = arith.constant 0 : index
    %239 = arith.index_cast %236 : i32 to index
    %c0_97 = arith.constant 0 : index
    %c0_98 = arith.constant 0 : index
    %240 = vector.load %arg2[%c0_96, %239, %c0_97, %c0_98] : memref<1x8x2x64xf32, #tpu.memory_space<vmem>>, vector<1x1x2x64xf32>
    %241 = vector.shape_cast %240 : vector<1x1x2x64xf32> to vector<2x64xf32>
    %242 = arith.truncf %237 : vector<2x16xf32> to vector<2x16xbf16>
    %cst_99 = arith.constant dense<0.000000e+00> : vector<2x64xf32>
    %243 = tpu.matmul %242, %4, %cst_99 {dimension_numbers = #tpu.dot_dimension_numbers<[1], [0], [0], [1], [0, 0, 1, 1], [], []>} : vector<2x16xbf16>, vector<16x64xbf16>, vector<2x64xf32> -> vector<2x64xf32>
    %244 = arith.addf %241, %243 : vector<2x64xf32>
    %245 = vector.extract_strided_slice %244 {offsets = [0, 0], sizes = [2, 16], strides = [1, 1]} : vector<2x64xf32> to vector<2x16xf32>
    %246 = arith.negf %245 : vector<2x16xf32>
    %247 = math.exp %246 : vector<2x16xf32>
    %cst_100 = arith.constant 1.000000e+00 : f32
    %248 = vector.broadcast %cst_100 : f32 to vector<2x16xf32>
    %249 = arith.addf %248, %247 : vector<2x16xf32>
    %250 = arith.divf %248, %249 : vector<2x16xf32>
    %251 = vector.extract_strided_slice %244 {offsets = [0, 16], sizes = [2, 16], strides = [1, 1]} : vector<2x64xf32> to vector<2x16xf32>
    %252 = arith.negf %251 : vector<2x16xf32>
    %253 = math.exp %252 : vector<2x16xf32>
    %cst_101 = arith.constant 1.000000e+00 : f32
    %254 = vector.broadcast %cst_101 : f32 to vector<2x16xf32>
    %255 = arith.addf %254, %253 : vector<2x16xf32>
    %256 = arith.divf %254, %255 : vector<2x16xf32>
    %257 = vector.extract_strided_slice %244 {offsets = [0, 32], sizes = [2, 16], strides = [1, 1]} : vector<2x64xf32> to vector<2x16xf32>
    %258 = math.tanh %257 : vector<2x16xf32>
    %259 = vector.extract_strided_slice %244 {offsets = [0, 48], sizes = [2, 16], strides = [1, 1]} : vector<2x64xf32> to vector<2x16xf32>
    %260 = arith.negf %259 : vector<2x16xf32>
    %261 = math.exp %260 : vector<2x16xf32>
    %cst_102 = arith.constant 1.000000e+00 : f32
    %262 = vector.broadcast %cst_102 : f32 to vector<2x16xf32>
    %263 = arith.addf %262, %261 : vector<2x16xf32>
    %264 = arith.divf %262, %263 : vector<2x16xf32>
    %265 = arith.mulf %256, %238 : vector<2x16xf32>
    %266 = arith.mulf %250, %258 : vector<2x16xf32>
    %267 = arith.addf %265, %266 : vector<2x16xf32>
    %268 = math.tanh %267 : vector<2x16xf32>
    %269 = arith.mulf %264, %268 : vector<2x16xf32>
    %270 = arith.index_cast %236 : i32 to index
    %c0_103 = arith.constant 0 : index
    %c0_104 = arith.constant 0 : index
    %271 = vector.load %arg3[%270, %c0_103, %c0_104] : memref<8x2x1xf32, #tpu.memory_space<vmem>>, vector<1x2x1xf32>
    %272 = vector.shape_cast %271 : vector<1x2x1xf32> to vector<2x1xf32>
    %273 = arith.subf %269, %237 : vector<2x16xf32>
    %274 = vector.broadcast %272 : vector<2x1xf32> to vector<2x16xf32>
    %275 = arith.mulf %274, %273 : vector<2x16xf32>
    %276 = arith.addf %237, %275 : vector<2x16xf32>
    %c0_105 = arith.constant 0 : index
    %c0_106 = arith.constant 0 : index
    %277 = vector.load %arg6[%c0_105, %c0_106] : memref<2x16xf32, #tpu.memory_space<vmem>>, vector<2x16xf32>
    tpu.vector_store %arg6[%c0_105, %c0_106], %276 {strides = array<i32>} : memref<2x16xf32, #tpu.memory_space<vmem>>, vector<2x16xf32>,
    %278 = arith.subf %267, %238 : vector<2x16xf32>
    %279 = vector.broadcast %272 : vector<2x1xf32> to vector<2x16xf32>
    %280 = arith.mulf %279, %278 : vector<2x16xf32>
    %281 = arith.addf %238, %280 : vector<2x16xf32>
    %c0_107 = arith.constant 0 : index
    %c0_108 = arith.constant 0 : index
    %282 = vector.load %arg7[%c0_107, %c0_108] : memref<2x16xf32, #tpu.memory_space<vmem>>, vector<2x16xf32>
    tpu.vector_store %arg7[%c0_107, %c0_108], %281 {strides = array<i32>} : memref<2x16xf32, #tpu.memory_space<vmem>>, vector<2x16xf32>,
    %283 = vector.broadcast %272 : vector<2x1xf32> to vector<2x16xf32>
    %284 = arith.mulf %269, %283 : vector<2x16xf32>
    %285 = arith.truncf %284 : vector<2x16xf32> to vector<2x16xbf16>
    %c0_109 = arith.constant 0 : index
    %286 = arith.index_cast %236 : i32 to index
    %c0_110 = arith.constant 0 : index
    %c0_111 = arith.constant 0 : index
    %287 = vector.load %arg5[%c0_109, %286, %c0_110, %c0_111] : memref<1x8x2x16xbf16, #tpu.memory_space<vmem>>, vector<1x1x2x16xbf16>
    %288 = vector.shape_cast %287 : vector<1x1x2x16xbf16> to vector<2x16xbf16>
    %289 = vector.shape_cast %285 : vector<2x16xbf16> to vector<1x1x2x16xbf16>
    tpu.vector_store %arg5[%c0_109, %286, %c0_110, %c0_111], %289 {strides = array<i32>} : memref<1x8x2x16xbf16, #tpu.memory_space<vmem>>, vector<1x1x2x16xbf16>,
    %c5_i32 = arith.constant 5 : i32
    %c2_i32_112 = arith.constant 2 : i32
    %290 = arith.muli %c2_i32_112, %c5_i32 : i32
    %c7_i32_113 = arith.constant 7 : i32
    %291 = arith.subi %c7_i32_113, %290 : i32
    %292 = arith.muli %arg0, %291 : i32
    %293 = arith.addi %c5_i32, %292 : i32
    %c0_114 = arith.constant 0 : index
    %c0_115 = arith.constant 0 : index
    %294 = vector.load %arg6[%c0_114, %c0_115] : memref<2x16xf32, #tpu.memory_space<vmem>>, vector<2x16xf32>
    %c0_116 = arith.constant 0 : index
    %c0_117 = arith.constant 0 : index
    %295 = vector.load %arg7[%c0_116, %c0_117] : memref<2x16xf32, #tpu.memory_space<vmem>>, vector<2x16xf32>
    %c0_118 = arith.constant 0 : index
    %296 = arith.index_cast %293 : i32 to index
    %c0_119 = arith.constant 0 : index
    %c0_120 = arith.constant 0 : index
    %297 = vector.load %arg2[%c0_118, %296, %c0_119, %c0_120] : memref<1x8x2x64xf32, #tpu.memory_space<vmem>>, vector<1x1x2x64xf32>
    %298 = vector.shape_cast %297 : vector<1x1x2x64xf32> to vector<2x64xf32>
    %299 = arith.truncf %294 : vector<2x16xf32> to vector<2x16xbf16>
    %cst_121 = arith.constant dense<0.000000e+00> : vector<2x64xf32>
    %300 = tpu.matmul %299, %4, %cst_121 {dimension_numbers = #tpu.dot_dimension_numbers<[1], [0], [0], [1], [0, 0, 1, 1], [], []>} : vector<2x16xbf16>, vector<16x64xbf16>, vector<2x64xf32> -> vector<2x64xf32>
    %301 = arith.addf %298, %300 : vector<2x64xf32>
    %302 = vector.extract_strided_slice %301 {offsets = [0, 0], sizes = [2, 16], strides = [1, 1]} : vector<2x64xf32> to vector<2x16xf32>
    %303 = arith.negf %302 : vector<2x16xf32>
    %304 = math.exp %303 : vector<2x16xf32>
    %cst_122 = arith.constant 1.000000e+00 : f32
    %305 = vector.broadcast %cst_122 : f32 to vector<2x16xf32>
    %306 = arith.addf %305, %304 : vector<2x16xf32>
    %307 = arith.divf %305, %306 : vector<2x16xf32>
    %308 = vector.extract_strided_slice %301 {offsets = [0, 16], sizes = [2, 16], strides = [1, 1]} : vector<2x64xf32> to vector<2x16xf32>
    %309 = arith.negf %308 : vector<2x16xf32>
    %310 = math.exp %309 : vector<2x16xf32>
    %cst_123 = arith.constant 1.000000e+00 : f32
    %311 = vector.broadcast %cst_123 : f32 to vector<2x16xf32>
    %312 = arith.addf %311, %310 : vector<2x16xf32>
    %313 = arith.divf %311, %312 : vector<2x16xf32>
    %314 = vector.extract_strided_slice %301 {offsets = [0, 32], sizes = [2, 16], strides = [1, 1]} : vector<2x64xf32> to vector<2x16xf32>
    %315 = math.tanh %314 : vector<2x16xf32>
    %316 = vector.extract_strided_slice %301 {offsets = [0, 48], sizes = [2, 16], strides = [1, 1]} : vector<2x64xf32> to vector<2x16xf32>
    %317 = arith.negf %316 : vector<2x16xf32>
    %318 = math.exp %317 : vector<2x16xf32>
    %cst_124 = arith.constant 1.000000e+00 : f32
    %319 = vector.broadcast %cst_124 : f32 to vector<2x16xf32>
    %320 = arith.addf %319, %318 : vector<2x16xf32>
    %321 = arith.divf %319, %320 : vector<2x16xf32>
    %322 = arith.mulf %313, %295 : vector<2x16xf32>
    %323 = arith.mulf %307, %315 : vector<2x16xf32>
    %324 = arith.addf %322, %323 : vector<2x16xf32>
    %325 = math.tanh %324 : vector<2x16xf32>
    %326 = arith.mulf %321, %325 : vector<2x16xf32>
    %327 = arith.index_cast %293 : i32 to index
    %c0_125 = arith.constant 0 : index
    %c0_126 = arith.constant 0 : index
    %328 = vector.load %arg3[%327, %c0_125, %c0_126] : memref<8x2x1xf32, #tpu.memory_space<vmem>>, vector<1x2x1xf32>
    %329 = vector.shape_cast %328 : vector<1x2x1xf32> to vector<2x1xf32>
    %330 = arith.subf %326, %294 : vector<2x16xf32>
    %331 = vector.broadcast %329 : vector<2x1xf32> to vector<2x16xf32>
    %332 = arith.mulf %331, %330 : vector<2x16xf32>
    %333 = arith.addf %294, %332 : vector<2x16xf32>
    %c0_127 = arith.constant 0 : index
    %c0_128 = arith.constant 0 : index
    %334 = vector.load %arg6[%c0_127, %c0_128] : memref<2x16xf32, #tpu.memory_space<vmem>>, vector<2x16xf32>
    tpu.vector_store %arg6[%c0_127, %c0_128], %333 {strides = array<i32>} : memref<2x16xf32, #tpu.memory_space<vmem>>, vector<2x16xf32>,
    %335 = arith.subf %324, %295 : vector<2x16xf32>
    %336 = vector.broadcast %329 : vector<2x1xf32> to vector<2x16xf32>
    %337 = arith.mulf %336, %335 : vector<2x16xf32>
    %338 = arith.addf %295, %337 : vector<2x16xf32>
    %c0_129 = arith.constant 0 : index
    %c0_130 = arith.constant 0 : index
    %339 = vector.load %arg7[%c0_129, %c0_130] : memref<2x16xf32, #tpu.memory_space<vmem>>, vector<2x16xf32>
    tpu.vector_store %arg7[%c0_129, %c0_130], %338 {strides = array<i32>} : memref<2x16xf32, #tpu.memory_space<vmem>>, vector<2x16xf32>,
    %340 = vector.broadcast %329 : vector<2x1xf32> to vector<2x16xf32>
    %341 = arith.mulf %326, %340 : vector<2x16xf32>
    %342 = arith.truncf %341 : vector<2x16xf32> to vector<2x16xbf16>
    %c0_131 = arith.constant 0 : index
    %343 = arith.index_cast %293 : i32 to index
    %c0_132 = arith.constant 0 : index
    %c0_133 = arith.constant 0 : index
    %344 = vector.load %arg5[%c0_131, %343, %c0_132, %c0_133] : memref<1x8x2x16xbf16, #tpu.memory_space<vmem>>, vector<1x1x2x16xbf16>
    %345 = vector.shape_cast %344 : vector<1x1x2x16xbf16> to vector<2x16xbf16>
    %346 = vector.shape_cast %342 : vector<2x16xbf16> to vector<1x1x2x16xbf16>
    tpu.vector_store %arg5[%c0_131, %343, %c0_132, %c0_133], %346 {strides = array<i32>} : memref<1x8x2x16xbf16, #tpu.memory_space<vmem>>, vector<1x1x2x16xbf16>,
    %c6_i32 = arith.constant 6 : i32
    %c2_i32_134 = arith.constant 2 : i32
    %347 = arith.muli %c2_i32_134, %c6_i32 : i32
    %c7_i32_135 = arith.constant 7 : i32
    %348 = arith.subi %c7_i32_135, %347 : i32
    %349 = arith.muli %arg0, %348 : i32
    %350 = arith.addi %c6_i32, %349 : i32
    %c0_136 = arith.constant 0 : index
    %c0_137 = arith.constant 0 : index
    %351 = vector.load %arg6[%c0_136, %c0_137] : memref<2x16xf32, #tpu.memory_space<vmem>>, vector<2x16xf32>
    %c0_138 = arith.constant 0 : index
    %c0_139 = arith.constant 0 : index
    %352 = vector.load %arg7[%c0_138, %c0_139] : memref<2x16xf32, #tpu.memory_space<vmem>>, vector<2x16xf32>
    %c0_140 = arith.constant 0 : index
    %353 = arith.index_cast %350 : i32 to index
    %c0_141 = arith.constant 0 : index
    %c0_142 = arith.constant 0 : index
    %354 = vector.load %arg2[%c0_140, %353, %c0_141, %c0_142] : memref<1x8x2x64xf32, #tpu.memory_space<vmem>>, vector<1x1x2x64xf32>
    %355 = vector.shape_cast %354 : vector<1x1x2x64xf32> to vector<2x64xf32>
    %356 = arith.truncf %351 : vector<2x16xf32> to vector<2x16xbf16>
    %cst_143 = arith.constant dense<0.000000e+00> : vector<2x64xf32>
    %357 = tpu.matmul %356, %4, %cst_143 {dimension_numbers = #tpu.dot_dimension_numbers<[1], [0], [0], [1], [0, 0, 1, 1], [], []>} : vector<2x16xbf16>, vector<16x64xbf16>, vector<2x64xf32> -> vector<2x64xf32>
    %358 = arith.addf %355, %357 : vector<2x64xf32>
    %359 = vector.extract_strided_slice %358 {offsets = [0, 0], sizes = [2, 16], strides = [1, 1]} : vector<2x64xf32> to vector<2x16xf32>
    %360 = arith.negf %359 : vector<2x16xf32>
    %361 = math.exp %360 : vector<2x16xf32>
    %cst_144 = arith.constant 1.000000e+00 : f32
    %362 = vector.broadcast %cst_144 : f32 to vector<2x16xf32>
    %363 = arith.addf %362, %361 : vector<2x16xf32>
    %364 = arith.divf %362, %363 : vector<2x16xf32>
    %365 = vector.extract_strided_slice %358 {offsets = [0, 16], sizes = [2, 16], strides = [1, 1]} : vector<2x64xf32> to vector<2x16xf32>
    %366 = arith.negf %365 : vector<2x16xf32>
    %367 = math.exp %366 : vector<2x16xf32>
    %cst_145 = arith.constant 1.000000e+00 : f32
    %368 = vector.broadcast %cst_145 : f32 to vector<2x16xf32>
    %369 = arith.addf %368, %367 : vector<2x16xf32>
    %370 = arith.divf %368, %369 : vector<2x16xf32>
    %371 = vector.extract_strided_slice %358 {offsets = [0, 32], sizes = [2, 16], strides = [1, 1]} : vector<2x64xf32> to vector<2x16xf32>
    %372 = math.tanh %371 : vector<2x16xf32>
    %373 = vector.extract_strided_slice %358 {offsets = [0, 48], sizes = [2, 16], strides = [1, 1]} : vector<2x64xf32> to vector<2x16xf32>
    %374 = arith.negf %373 : vector<2x16xf32>
    %375 = math.exp %374 : vector<2x16xf32>
    %cst_146 = arith.constant 1.000000e+00 : f32
    %376 = vector.broadcast %cst_146 : f32 to vector<2x16xf32>
    %377 = arith.addf %376, %375 : vector<2x16xf32>
    %378 = arith.divf %376, %377 : vector<2x16xf32>
    %379 = arith.mulf %370, %352 : vector<2x16xf32>
    %380 = arith.mulf %364, %372 : vector<2x16xf32>
    %381 = arith.addf %379, %380 : vector<2x16xf32>
    %382 = math.tanh %381 : vector<2x16xf32>
    %383 = arith.mulf %378, %382 : vector<2x16xf32>
    %384 = arith.index_cast %350 : i32 to index
    %c0_147 = arith.constant 0 : index
    %c0_148 = arith.constant 0 : index
    %385 = vector.load %arg3[%384, %c0_147, %c0_148] : memref<8x2x1xf32, #tpu.memory_space<vmem>>, vector<1x2x1xf32>
    %386 = vector.shape_cast %385 : vector<1x2x1xf32> to vector<2x1xf32>
    %387 = arith.subf %383, %351 : vector<2x16xf32>
    %388 = vector.broadcast %386 : vector<2x1xf32> to vector<2x16xf32>
    %389 = arith.mulf %388, %387 : vector<2x16xf32>
    %390 = arith.addf %351, %389 : vector<2x16xf32>
    %c0_149 = arith.constant 0 : index
    %c0_150 = arith.constant 0 : index
    %391 = vector.load %arg6[%c0_149, %c0_150] : memref<2x16xf32, #tpu.memory_space<vmem>>, vector<2x16xf32>
    tpu.vector_store %arg6[%c0_149, %c0_150], %390 {strides = array<i32>} : memref<2x16xf32, #tpu.memory_space<vmem>>, vector<2x16xf32>,
    %392 = arith.subf %381, %352 : vector<2x16xf32>
    %393 = vector.broadcast %386 : vector<2x1xf32> to vector<2x16xf32>
    %394 = arith.mulf %393, %392 : vector<2x16xf32>
    %395 = arith.addf %352, %394 : vector<2x16xf32>
    %c0_151 = arith.constant 0 : index
    %c0_152 = arith.constant 0 : index
    %396 = vector.load %arg7[%c0_151, %c0_152] : memref<2x16xf32, #tpu.memory_space<vmem>>, vector<2x16xf32>
    tpu.vector_store %arg7[%c0_151, %c0_152], %395 {strides = array<i32>} : memref<2x16xf32, #tpu.memory_space<vmem>>, vector<2x16xf32>,
    %397 = vector.broadcast %386 : vector<2x1xf32> to vector<2x16xf32>
    %398 = arith.mulf %383, %397 : vector<2x16xf32>
    %399 = arith.truncf %398 : vector<2x16xf32> to vector<2x16xbf16>
    %c0_153 = arith.constant 0 : index
    %400 = arith.index_cast %350 : i32 to index
    %c0_154 = arith.constant 0 : index
    %c0_155 = arith.constant 0 : index
    %401 = vector.load %arg5[%c0_153, %400, %c0_154, %c0_155] : memref<1x8x2x16xbf16, #tpu.memory_space<vmem>>, vector<1x1x2x16xbf16>
    %402 = vector.shape_cast %401 : vector<1x1x2x16xbf16> to vector<2x16xbf16>
    %403 = vector.shape_cast %399 : vector<2x16xbf16> to vector<1x1x2x16xbf16>
    tpu.vector_store %arg5[%c0_153, %400, %c0_154, %c0_155], %403 {strides = array<i32>} : memref<1x8x2x16xbf16, #tpu.memory_space<vmem>>, vector<1x1x2x16xbf16>,
    %c7_i32_156 = arith.constant 7 : i32
    %c2_i32_157 = arith.constant 2 : i32
    %404 = arith.muli %c2_i32_157, %c7_i32_156 : i32
    %c7_i32_158 = arith.constant 7 : i32
    %405 = arith.subi %c7_i32_158, %404 : i32
    %406 = arith.muli %arg0, %405 : i32
    %407 = arith.addi %c7_i32_156, %406 : i32
    %c0_159 = arith.constant 0 : index
    %c0_160 = arith.constant 0 : index
    %408 = vector.load %arg6[%c0_159, %c0_160] : memref<2x16xf32, #tpu.memory_space<vmem>>, vector<2x16xf32>
    %c0_161 = arith.constant 0 : index
    %c0_162 = arith.constant 0 : index
    %409 = vector.load %arg7[%c0_161, %c0_162] : memref<2x16xf32, #tpu.memory_space<vmem>>, vector<2x16xf32>
    %c0_163 = arith.constant 0 : index
    %410 = arith.index_cast %407 : i32 to index
    %c0_164 = arith.constant 0 : index
    %c0_165 = arith.constant 0 : index
    %411 = vector.load %arg2[%c0_163, %410, %c0_164, %c0_165] : memref<1x8x2x64xf32, #tpu.memory_space<vmem>>, vector<1x1x2x64xf32>
    %412 = vector.shape_cast %411 : vector<1x1x2x64xf32> to vector<2x64xf32>
    %413 = arith.truncf %408 : vector<2x16xf32> to vector<2x16xbf16>
    %cst_166 = arith.constant dense<0.000000e+00> : vector<2x64xf32>
    %414 = tpu.matmul %413, %4, %cst_166 {dimension_numbers = #tpu.dot_dimension_numbers<[1], [0], [0], [1], [0, 0, 1, 1], [], []>} : vector<2x16xbf16>, vector<16x64xbf16>, vector<2x64xf32> -> vector<2x64xf32>
    %415 = arith.addf %412, %414 : vector<2x64xf32>
    %416 = vector.extract_strided_slice %415 {offsets = [0, 0], sizes = [2, 16], strides = [1, 1]} : vector<2x64xf32> to vector<2x16xf32>
    %417 = arith.negf %416 : vector<2x16xf32>
    %418 = math.exp %417 : vector<2x16xf32>
    %cst_167 = arith.constant 1.000000e+00 : f32
    %419 = vector.broadcast %cst_167 : f32 to vector<2x16xf32>
    %420 = arith.addf %419, %418 : vector<2x16xf32>
    %421 = arith.divf %419, %420 : vector<2x16xf32>
    %422 = vector.extract_strided_slice %415 {offsets = [0, 16], sizes = [2, 16], strides = [1, 1]} : vector<2x64xf32> to vector<2x16xf32>
    %423 = arith.negf %422 : vector<2x16xf32>
    %424 = math.exp %423 : vector<2x16xf32>
    %cst_168 = arith.constant 1.000000e+00 : f32
    %425 = vector.broadcast %cst_168 : f32 to vector<2x16xf32>
    %426 = arith.addf %425, %424 : vector<2x16xf32>
    %427 = arith.divf %425, %426 : vector<2x16xf32>
    %428 = vector.extract_strided_slice %415 {offsets = [0, 32], sizes = [2, 16], strides = [1, 1]} : vector<2x64xf32> to vector<2x16xf32>
    %429 = math.tanh %428 : vector<2x16xf32>
    %430 = vector.extract_strided_slice %415 {offsets = [0, 48], sizes = [2, 16], strides = [1, 1]} : vector<2x64xf32> to vector<2x16xf32>
    %431 = arith.negf %430 : vector<2x16xf32>
    %432 = math.exp %431 : vector<2x16xf32>
    %cst_169 = arith.constant 1.000000e+00 : f32
    %433 = vector.broadcast %cst_169 : f32 to vector<2x16xf32>
    %434 = arith.addf %433, %432 : vector<2x16xf32>
    %435 = arith.divf %433, %434 : vector<2x16xf32>
    %436 = arith.mulf %427, %409 : vector<2x16xf32>
    %437 = arith.mulf %421, %429 : vector<2x16xf32>
    %438 = arith.addf %436, %437 : vector<2x16xf32>
    %439 = math.tanh %438 : vector<2x16xf32>
    %440 = arith.mulf %435, %439 : vector<2x16xf32>
    %441 = arith.index_cast %407 : i32 to index
    %c0_170 = arith.constant 0 : index
    %c0_171 = arith.constant 0 : index
    %442 = vector.load %arg3[%441, %c0_170, %c0_171] : memref<8x2x1xf32, #tpu.memory_space<vmem>>, vector<1x2x1xf32>
    %443 = vector.shape_cast %442 : vector<1x2x1xf32> to vector<2x1xf32>
    %444 = arith.subf %440, %408 : vector<2x16xf32>
    %445 = vector.broadcast %443 : vector<2x1xf32> to vector<2x16xf32>
    %446 = arith.mulf %445, %444 : vector<2x16xf32>
    %447 = arith.addf %408, %446 : vector<2x16xf32>
    %c0_172 = arith.constant 0 : index
    %c0_173 = arith.constant 0 : index
    %448 = vector.load %arg6[%c0_172, %c0_173] : memref<2x16xf32, #tpu.memory_space<vmem>>, vector<2x16xf32>
    tpu.vector_store %arg6[%c0_172, %c0_173], %447 {strides = array<i32>} : memref<2x16xf32, #tpu.memory_space<vmem>>, vector<2x16xf32>,
    %449 = arith.subf %438, %409 : vector<2x16xf32>
    %450 = vector.broadcast %443 : vector<2x1xf32> to vector<2x16xf32>
    %451 = arith.mulf %450, %449 : vector<2x16xf32>
    %452 = arith.addf %409, %451 : vector<2x16xf32>
    %c0_174 = arith.constant 0 : index
    %c0_175 = arith.constant 0 : index
    %453 = vector.load %arg7[%c0_174, %c0_175] : memref<2x16xf32, #tpu.memory_space<vmem>>, vector<2x16xf32>
    tpu.vector_store %arg7[%c0_174, %c0_175], %452 {strides = array<i32>} : memref<2x16xf32, #tpu.memory_space<vmem>>, vector<2x16xf32>,
    %454 = vector.broadcast %443 : vector<2x1xf32> to vector<2x16xf32>
    %455 = arith.mulf %440, %454 : vector<2x16xf32>
    %456 = arith.truncf %455 : vector<2x16xf32> to vector<2x16xbf16>
    %c0_176 = arith.constant 0 : index
    %457 = arith.index_cast %407 : i32 to index
    %c0_177 = arith.constant 0 : index
    %c0_178 = arith.constant 0 : index
    %458 = vector.load %arg5[%c0_176, %457, %c0_177, %c0_178] : memref<1x8x2x16xbf16, #tpu.memory_space<vmem>>, vector<1x1x2x16xbf16>
    %459 = vector.shape_cast %458 : vector<1x1x2x16xbf16> to vector<2x16xbf16>
    %460 = vector.shape_cast %456 : vector<2x16xbf16> to vector<1x1x2x16xbf16>
    tpu.vector_store %arg5[%c0_176, %457, %c0_177, %c0_178], %460 {strides = array<i32>} : memref<1x8x2x16xbf16, #tpu.memory_space<vmem>>, vector<1x1x2x16xbf16>,
    %c8_i32 = arith.constant 8 : i32
    return
  }
  func.func @transform_0(%arg0: i32, %arg1: i32) -> (i32, i32, i32, i32) {
    %c1_i32 = arith.constant 1 : i32
    %0 = arith.subi %c1_i32, %arg0 : i32
    %1 = arith.muli %0, %arg1 : i32
    %c0_i32 = arith.constant 0 : i32
    %2 = arith.subi %c0_i32, %arg1 : i32
    %3 = arith.muli %arg0, %2 : i32
    %4 = arith.addi %1, %3 : i32
    %c0_i32_0 = arith.constant 0 : i32
    %c0_i32_1 = arith.constant 0 : i32
    %c0_i32_2 = arith.constant 0 : i32
    return %arg0, %4, %c0_i32_0, %c0_i32_1 : i32, i32, i32, i32
  }
  func.func @transform_1(%arg0: i32, %arg1: i32) -> (i32, i32, i32) {
    %c1_i32 = arith.constant 1 : i32
    %0 = arith.subi %c1_i32, %arg0 : i32
    %1 = arith.muli %0, %arg1 : i32
    %c0_i32 = arith.constant 0 : i32
    %2 = arith.subi %c0_i32, %arg1 : i32
    %3 = arith.muli %arg0, %2 : i32
    %4 = arith.addi %1, %3 : i32
    %c0_i32_0 = arith.constant 0 : i32
    %c0_i32_1 = arith.constant 0 : i32
    %c0_i32_2 = arith.constant 0 : i32
    return %4, %c0_i32_0, %c0_i32_1 : i32, i32, i32
  }
  func.func @transform_2(%arg0: i32, %arg1: i32) -> (i32, i32, i32) {
    %c0_i32 = arith.constant 0 : i32
    %c0_i32_0 = arith.constant 0 : i32
    %c0_i32_1 = arith.constant 0 : i32
    return %arg0, %c0_i32, %c0_i32_0 : i32, i32, i32
  }
  func.func @transform_3(%arg0: i32, %arg1: i32) -> (i32, i32, i32, i32) {
    %c1_i32 = arith.constant 1 : i32
    %0 = arith.subi %c1_i32, %arg0 : i32
    %1 = arith.muli %0, %arg1 : i32
    %c0_i32 = arith.constant 0 : i32
    %2 = arith.subi %c0_i32, %arg1 : i32
    %3 = arith.muli %arg0, %2 : i32
    %4 = arith.addi %1, %3 : i32
    %c0_i32_0 = arith.constant 0 : i32
    %c0_i32_1 = arith.constant 0 : i32
    %c0_i32_2 = arith.constant 0 : i32
    return %arg0, %4, %c0_i32_0, %c0_i32_1 : i32, i32, i32, i32
  }
}

module attributes {stable_mosaic.version = 11 : i64} {
  func.func @_mm_bias_kernel(%arg0: i32, %arg1: memref<16x32xbf16, #tpu.memory_space<vmem>>, %arg2: memref<32x128xbf16, #tpu.memory_space<vmem>>, %arg3: memref<1x128xf32, #tpu.memory_space<vmem>>, %arg4: memref<16x128xbf16, #tpu.memory_space<vmem>>) attributes {dimension_semantics = [#tpu.dimension_semantics<parallel>], iteration_bounds = array<i64: 1>, scalar_prefetch = 0 : i64, scratch_operands = 0 : i64, tpu.core_type = #tpu.core_type<tc>, window_params = [{transform_indices = @transform_0, window_bounds = array<i64: 16, 32>}, {pipeline_mode = #tpu.pipeline_mode<synchronous>, transform_indices = @transform_1, window_bounds = array<i64: 32, 128>}, {pipeline_mode = #tpu.pipeline_mode<synchronous>, transform_indices = @transform_2, window_bounds = array<i64: 1, 128>}, {transform_indices = @transform_3, window_bounds = array<i64: 16, 128>}]} {
    %c0 = arith.constant 0 : index
    %c0_0 = arith.constant 0 : index
    %0 = vector.load %arg1[%c0, %c0_0] : memref<16x32xbf16, #tpu.memory_space<vmem>>, vector<16x32xbf16>
    %c0_1 = arith.constant 0 : index
    %c0_2 = arith.constant 0 : index
    %1 = vector.load %arg2[%c0_1, %c0_2] : memref<32x128xbf16, #tpu.memory_space<vmem>>, vector<32x128xbf16>
    %cst = arith.constant dense<0.000000e+00> : vector<16x128xf32>
    %2 = tpu.matmul %0, %1, %cst {dimension_numbers = #tpu.dot_dimension_numbers<[1], [0], [0], [1], [0, 0, 1, 1], [], []>} : vector<16x32xbf16>, vector<32x128xbf16>, vector<16x128xf32> -> vector<16x128xf32>
    %c0_3 = arith.constant 0 : index
    %c0_4 = arith.constant 0 : index
    %3 = vector.load %arg3[%c0_3, %c0_4] : memref<1x128xf32, #tpu.memory_space<vmem>>, vector<1x128xf32>
    %4 = vector.broadcast %3 : vector<1x128xf32> to vector<16x128xf32>
    %5 = arith.addf %2, %4 : vector<16x128xf32>
    %cst_5 = arith.constant 0.000000e+00 : f32
    %6 = vector.broadcast %cst_5 : f32 to vector<16x128xf32>
    %7 = arith.maximumf %5, %6 : vector<16x128xf32>
    %8 = arith.truncf %7 : vector<16x128xf32> to vector<16x128xbf16>
    %c0_6 = arith.constant 0 : index
    %c0_7 = arith.constant 0 : index
    %9 = vector.load %arg4[%c0_6, %c0_7] : memref<16x128xbf16, #tpu.memory_space<vmem>>, vector<16x128xbf16>
    tpu.vector_store %arg4[%c0_6, %c0_7], %8 {strides = array<i32>} : memref<16x128xbf16, #tpu.memory_space<vmem>>, vector<16x128xbf16>,
    return
  }
  func.func @transform_0(%arg0: i32) -> (i32, i32) {
    %c0_i32 = arith.constant 0 : i32
    %c0_i32_0 = arith.constant 0 : i32
    return %arg0, %c0_i32 : i32, i32
  }
  func.func @transform_1(%arg0: i32) -> (i32, i32) {
    %c0_i32 = arith.constant 0 : i32
    %c0_i32_0 = arith.constant 0 : i32
    %c0_i32_1 = arith.constant 0 : i32
    return %c0_i32, %c0_i32_0 : i32, i32
  }
  func.func @transform_2(%arg0: i32) -> (i32, i32) {
    %c0_i32 = arith.constant 0 : i32
    %c0_i32_0 = arith.constant 0 : i32
    %c0_i32_1 = arith.constant 0 : i32
    return %c0_i32, %c0_i32_0 : i32, i32
  }
  func.func @transform_3(%arg0: i32) -> (i32, i32) {
    %c0_i32 = arith.constant 0 : i32
    %c0_i32_0 = arith.constant 0 : i32
    return %arg0, %c0_i32 : i32, i32
  }
}

module attributes {stable_mosaic.version = 11 : i64} {
  func.func @_mm_bias_kernel(%arg0: i32, %arg1: memref<16x32xbf16, #tpu.memory_space<vmem>>, %arg2: memref<32x128xbf16, #tpu.memory_space<vmem>>, %arg3: memref<1x128xf32, #tpu.memory_space<vmem>>, %arg4: memref<16x128xf32, #tpu.memory_space<vmem>>) attributes {dimension_semantics = [#tpu.dimension_semantics<parallel>], iteration_bounds = array<i64: 1>, scalar_prefetch = 0 : i64, scratch_operands = 0 : i64, tpu.core_type = #tpu.core_type<tc>, window_params = [{transform_indices = @transform_0, window_bounds = array<i64: 16, 32>}, {pipeline_mode = #tpu.pipeline_mode<synchronous>, transform_indices = @transform_1, window_bounds = array<i64: 32, 128>}, {pipeline_mode = #tpu.pipeline_mode<synchronous>, transform_indices = @transform_2, window_bounds = array<i64: 1, 128>}, {transform_indices = @transform_3, window_bounds = array<i64: 16, 128>}]} {
    %c0 = arith.constant 0 : index
    %c0_0 = arith.constant 0 : index
    %0 = vector.load %arg1[%c0, %c0_0] : memref<16x32xbf16, #tpu.memory_space<vmem>>, vector<16x32xbf16>
    %c0_1 = arith.constant 0 : index
    %c0_2 = arith.constant 0 : index
    %1 = vector.load %arg2[%c0_1, %c0_2] : memref<32x128xbf16, #tpu.memory_space<vmem>>, vector<32x128xbf16>
    %cst = arith.constant dense<0.000000e+00> : vector<16x128xf32>
    %2 = tpu.matmul %0, %1, %cst {dimension_numbers = #tpu.dot_dimension_numbers<[1], [0], [0], [1], [0, 0, 1, 1], [], []>} : vector<16x32xbf16>, vector<32x128xbf16>, vector<16x128xf32> -> vector<16x128xf32>
    %c0_3 = arith.constant 0 : index
    %c0_4 = arith.constant 0 : index
    %3 = vector.load %arg3[%c0_3, %c0_4] : memref<1x128xf32, #tpu.memory_space<vmem>>, vector<1x128xf32>
    %4 = vector.broadcast %3 : vector<1x128xf32> to vector<16x128xf32>
    %5 = arith.addf %2, %4 : vector<16x128xf32>
    %c0_5 = arith.constant 0 : index
    %c0_6 = arith.constant 0 : index
    %6 = vector.load %arg4[%c0_5, %c0_6] : memref<16x128xf32, #tpu.memory_space<vmem>>, vector<16x128xf32>
    tpu.vector_store %arg4[%c0_5, %c0_6], %5 {strides = array<i32>} : memref<16x128xf32, #tpu.memory_space<vmem>>, vector<16x128xf32>,
    return
  }
  func.func @transform_0(%arg0: i32) -> (i32, i32) {
    %c0_i32 = arith.constant 0 : i32
    %c0_i32_0 = arith.constant 0 : i32
    return %arg0, %c0_i32 : i32, i32
  }
  func.func @transform_1(%arg0: i32) -> (i32, i32) {
    %c0_i32 = arith.constant 0 : i32
    %c0_i32_0 = arith.constant 0 : i32
    %c0_i32_1 = arith.constant 0 : i32
    return %c0_i32, %c0_i32_0 : i32, i32
  }
  func.func @transform_2(%arg0: i32) -> (i32, i32) {
    %c0_i32 = arith.constant 0 : i32
    %c0_i32_0 = arith.constant 0 : i32
    %c0_i32_1 = arith.constant 0 : i32
    return %c0_i32, %c0_i32_0 : i32, i32
  }
  func.func @transform_3(%arg0: i32) -> (i32, i32) {
    %c0_i32 = arith.constant 0 : i32
    %c0_i32_0 = arith.constant 0 : i32
    return %arg0, %c0_i32 : i32, i32
  }
}

</mosaic_0001>

<llo_original>
// kernel: _lambda_.21
$region0: #{_lambda_.21}
  #allocation0 [shape = 'u32[]', space=smem, size = 0x4, offset = 0x4, fixed_abs, tag = 'smem constant byte address 0x4 - core index']
  #allocation1 [shape = 'u32[144,128]{1,0:T(1,128)}', space=vmem, size = 0x12000, scoped, tag = 'internal scratch']
  %s0 = inlined_call_operand.vmem [shape: bf16[256,128], index: 0, kind: input, shape index: {}]
  %s1 = inlined_call_operand.vmem [shape: f32[1,128], index: 1, kind: input, shape index: {}]
  %s2 = inlined_call_operand.vmem [shape: f32[1,128], index: 2, kind: input, shape index: {}]
  %s3 = inlined_call_operand.vmem [shape: bf16[256,128], index: 3, kind: output, shape index: {}]
  %s4 = sld [smem:[#allocation0]]
  $region22: #{_lambda_.21} parent=0
    _
  %s6 = ssub.s32 1, %s4
  %s7 = scalar_select 0, %s6, %s4
  // Predicated region
  $region2: #{_lambda_.21} parent=0 // pred_check
    _
  $region3: #{_lambda_.21} parent=0 // pred_check_branch
    %9 = sbr.rel (0) target = $region5
  $region4: #{_lambda_.21} parent=0 // pred_region
    _
  $region5: #{_lambda_.21} parent=0 // pred_fallthru
    _
  // Predicated region
  $region6: #{_lambda_.21} parent=0 // pred_check
    _
  $region7: #{_lambda_.21} parent=0 // pred_check_branch
    %11 = sbr.rel (0) target = $region9
  $region8: #{_lambda_.21} parent=0 // pred_region
    _
  $region9: #{_lambda_.21} parent=0 // pred_fallthru
    _
  // Predicated region
  $region10: #{_lambda_.21} parent=0 // pred_check
    _
  $region11: #{_lambda_.21} parent=0 // pred_check_branch
    %13 = sbr.rel (0) target = $region13
  $region12: #{_lambda_.21} parent=0 // pred_region
    _
  $region13: #{_lambda_.21} parent=0 // pred_fallthru
    _
  %v14 = vld [vmem:[%s0] sm:$0xf]
  %v15 = vld [vmem:[%s0 + $0x4] sm:$0xf]
  %v16 = vld [vmem:[%s0 + $0x8] sm:$0xf]
  %v17 = vld [vmem:[%s0 + $0xc] sm:$0xf]
  %v18 = vld [vmem:[%s0 + $0x10] sm:$0xf]
  %v19 = vld [vmem:[%s0 + $0x14] sm:$0xf]
  %v20 = vld [vmem:[%s0 + $0x18] sm:$0xf]
  %v21 = vld [vmem:[%s0 + $0x1c] sm:$0xf]
  %v22 = vld [vmem:[%s0 + $0x20] sm:$0xf]
  %v23 = vld [vmem:[%s0 + $0x24] sm:$0xf]
  %v24 = vld [vmem:[%s0 + $0x28] sm:$0xf]
  %v25 = vld [vmem:[%s0 + $0x2c] sm:$0xf]
  %v26 = vld [vmem:[%s0 + $0x30] sm:$0xf]
  %v27 = vld [vmem:[%s0 + $0x34] sm:$0xf]
  %v28 = vld [vmem:[%s0 + $0x38] sm:$0xf]
  %v29 = vld [vmem:[%s0 + $0x3c] sm:$0xf]
  %v30 = vld [vmem:[%s0 + $0x40] sm:$0xf]
  %v31 = vld [vmem:[%s0 + $0x44] sm:$0xf]
  %v32 = vld [vmem:[%s0 + $0x48] sm:$0xf]
  %v33 = vld [vmem:[%s0 + $0x4c] sm:$0xf]
  %v34 = vld [vmem:[%s0 + $0x50] sm:$0xf]
  %v35 = vld [vmem:[%s0 + $0x54] sm:$0xf]
  %v36 = vld [vmem:[%s0 + $0x58] sm:$0xf]
  %v37 = vld [vmem:[%s0 + $0x5c] sm:$0xf]
  %v38 = vld [vmem:[%s0 + $0x60] sm:$0xf]
  %v39 = vld [vmem:[%s0 + $0x64] sm:$0xf]
  %v40 = vld [vmem:[%s0 + $0x68] sm:$0xf]
  %v41 = vld [vmem:[%s0 + $0x6c] sm:$0xf]
  %v42 = vld [vmem:[%s0 + $0x70] sm:$0xf]
  %v43 = vld [vmem:[%s0 + $0x74] sm:$0xf]
  %v44 = vld [vmem:[%s0 + $0x78] sm:$0xf]
  %v45 = vld [vmem:[%s0 + $0x7c] sm:$0xf]
  %v46 = vunpack.c.l.bf16 %v14
  %v47 = vunpack.c.l.bf16 %v15
  %v48 = vunpack.c.l.bf16 %v16
  %v49 = vunpack.c.l.bf16 %v17
  %v50 = vunpack.c.l.bf16 %v18
  %v51 = vunpack.c.l.bf16 %v19
  %v52 = vunpack.c.l.bf16 %v20
  %v53 = vunpack.c.l.bf16 %v21
  %v54 = vunpack.c.l.bf16 %v22
  %v55 = vunpack.c.l.bf16 %v23
  %v56 = vunpack.c.l.bf16 %v24
  %v57 = vunpack.c.l.bf16 %v25
  %v58 = vunpack.c.l.bf16 %v26
  %v59 = vunpack.c.l.bf16 %v27
  %v60 = vunpack.c.l.bf16 %v28
  %v61 = vunpack.c.l.bf16 %v29
  %v62 = vunpack.c.l.bf16 %v30
  %v63 = vunpack.c.l.bf16 %v31
  %v64 = vunpack.c.l.bf16 %v32
  %v65 = vunpack.c.l.bf16 %v33
  %v66 = vunpack.c.l.bf16 %v34
  %v67 = vunpack.c.l.bf16 %v35
  %v68 = vunpack.c.l.bf16 %v36
  %v69 = vunpack.c.l.bf16 %v37
  %v70 = vunpack.c.l.bf16 %v38
  %v71 = vunpack.c.l.bf16 %v39
  %v72 = vunpack.c.l.bf16 %v40
  %v73 = vunpack.c.l.bf16 %v41
  %v74 = vunpack.c.l.bf16 %v42
  %v75 = vunpack.c.l.bf16 %v43
  %v76 = vunpack.c.l.bf16 %v44
  %v77 = vunpack.c.l.bf16 %v45
  %v78 = vld [vmem:[%s1] sm:$0x1]
  %v80 = vlaneseq
  %v81 = vshrl.u32 %v80, 7
  %v82 = vsub.s32 0, %v81
  %v83 = vrot.slane %v78, %v82
  %v85 = vmul.f32 %v46, %v83
  %v86 = vmul.f32 %v47, %v83
  %v87 = vmul.f32 %v48, %v83
  %v88 = vmul.f32 %v49, %v83
  %v89 = vmul.f32 %v50, %v83
  %v90 = vmul.f32 %v51, %v83
  %v91 = vmul.f32 %v52, %v83
  %v92 = vmul.f32 %v53, %v83
  %v93 = vmul.f32 %v54, %v83
  %v94 = vmul.f32 %v55, %v83
  %v95 = vmul.f32 %v56, %v83
  %v96 = vmul.f32 %v57, %v83
  %v97 = vmul.f32 %v58, %v83
  %v98 = vmul.f32 %v59, %v83
  %v99 = vmul.f32 %v60, %v83
  %v100 = vmul.f32 %v61, %v83
  %v101 = vmul.f32 %v62, %v83
  %v102 = vmul.f32 %v63, %v83
  %v103 = vmul.f32 %v64, %v83
  %v104 = vmul.f32 %v65, %v83
  %v105 = vmul.f32 %v66, %v83
  %v106 = vmul.f32 %v67, %v83
  %v107 = vmul.f32 %v68, %v83
  %v108 = vmul.f32 %v69, %v83
  %v109 = vmul.f32 %v70, %v83
  %v110 = vmul.f32 %v71, %v83
  %v111 = vmul.f32 %v72, %v83
  %v112 = vmul.f32 %v73, %v83
  %v113 = vmul.f32 %v74, %v83
  %v114 = vmul.f32 %v75, %v83
  %v115 = vmul.f32 %v76, %v83
  %v116 = vmul.f32 %v77, %v83
  %v117 = vld [vmem:[%s2] sm:$0x1]
  %v119 = vlaneseq
  %v120 = vshrl.u32 %v119, 7
  %v121 = vsub.s32 0, %v120
  %v122 = vrot.slane %v117, %v121
  %v124 = vadd.f32 %v85, %v122
  %v125 = vadd.f32 %v86, %v122
  %v126 = vadd.f32 %v87, %v122
  %v127 = vadd.f32 %v88, %v122
  %v128 = vadd.f32 %v89, %v122
  %v129 = vadd.f32 %v90, %v122
  %v130 = vadd.f32 %v91, %v122
  %v131 = vadd.f32 %v92, %v122
  %v132 = vadd.f32 %v93, %v122
  %v133 = vadd.f32 %v94, %v122
  %v134 = vadd.f32 %v95, %v122
  %v135 = vadd.f32 %v96, %v122
  %v136 = vadd.f32 %v97, %v122
  %v137 = vadd.f32 %v98, %v122
  %v138 = vadd.f32 %v99, %v122
  %v139 = vadd.f32 %v100, %v122
  %v140 = vadd.f32 %v101, %v122
  %v141 = vadd.f32 %v102, %v122
  %v142 = vadd.f32 %v103, %v122
  %v143 = vadd.f32 %v104, %v122
  %v144 = vadd.f32 %v105, %v122
  %v145 = vadd.f32 %v106, %v122
  %v146 = vadd.f32 %v107, %v122
  %v147 = vadd.f32 %v108, %v122
  %v148 = vadd.f32 %v109, %v122
  %v149 = vadd.f32 %v110, %v122
  %v150 = vadd.f32 %v111, %v122
  %v151 = vadd.f32 %v112, %v122
  %v152 = vadd.f32 %v113, %v122
  %v153 = vadd.f32 %v114, %v122
  %v154 = vadd.f32 %v115, %v122
  %v155 = vadd.f32 %v116, %v122
  %v156 = vmax.f32 %v124, 0.0
  %v157 = vmax.f32 %v125, 0.0
  %v158 = vmax.f32 %v126, 0.0
  %v159 = vmax.f32 %v127, 0.0
  %v160 = vmax.f32 %v128, 0.0
  %v161 = vmax.f32 %v129, 0.0
  %v162 = vmax.f32 %v130, 0.0
  %v163 = vmax.f32 %v131, 0.0
  %v164 = vmax.f32 %v132, 0.0
  %v165 = vmax.f32 %v133, 0.0
  %v166 = vmax.f32 %v134, 0.0
  %v167 = vmax.f32 %v135, 0.0
  %v168 = vmax.f32 %v136, 0.0
  %v169 = vmax.f32 %v137, 0.0
  %v170 = vmax.f32 %v138, 0.0
  %v171 = vmax.f32 %v139, 0.0
  %v172 = vmax.f32 %v140, 0.0
  %v173 = vmax.f32 %v141, 0.0
  %v174 = vmax.f32 %v142, 0.0
  %v175 = vmax.f32 %v143, 0.0
  %v176 = vmax.f32 %v144, 0.0
  %v177 = vmax.f32 %v145, 0.0
  %v178 = vmax.f32 %v146, 0.0
  %v179 = vmax.f32 %v147, 0.0
  %v180 = vmax.f32 %v148, 0.0
  %v181 = vmax.f32 %v149, 0.0
  %v182 = vmax.f32 %v150, 0.0
  %v183 = vmax.f32 %v151, 0.0
  %v184 = vmax.f32 %v152, 0.0
  %v185 = vmax.f32 %v153, 0.0
  %v186 = vmax.f32 %v154, 0.0
  %v187 = vmax.f32 %v155, 0.0
  %v188 = vpack.c.bf16 %v157, %v156
  %v189 = vpack.c.bf16 %v159, %v158
  %v190 = vpack.c.bf16 %v161, %v160
  %v191 = vpack.c.bf16 %v163, %v162
  %v192 = vpack.c.bf16 %v165, %v164
  %v193 = vpack.c.bf16 %v167, %v166
  %v194 = vpack.c.bf16 %v169, %v168
  %v195 = vpack.c.bf16 %v171, %v170
  %v196 = vpack.c.bf16 %v173, %v172
  %v197 = vpack.c.bf16 %v175, %v174
  %v198 = vpack.c.bf16 %v177, %v176
  %v199 = vpack.c.bf16 %v179, %v178
  %v200 = vpack.c.bf16 %v181, %v180
  %v201 = vpack.c.bf16 %v183, %v182
  %v202 = vpack.c.bf16 %v185, %v184
  %v203 = vpack.c.bf16 %v187, %v186
  %v220 = vunpack.c.l.b16 %v188
  %v221 = vunpack.c.h.b16 %v188
  %v222 = vunpack.c.l.b16 %v189
  %v223 = vunpack.c.h.b16 %v189
  %v224 = vunpack.c.l.b16 %v190
  %v225 = vunpack.c.h.b16 %v190
  %v226 = vunpack.c.l.b16 %v191
  %v227 = vunpack.c.h.b16 %v191
  %v228 = vunpack.c.l.b16 %v192
  %v229 = vunpack.c.h.b16 %v192
  %v230 = vunpack.c.l.b16 %v193
  %v231 = vunpack.c.h.b16 %v193
  %v232 = vunpack.c.l.b16 %v194
  %v233 = vunpack.c.h.b16 %v194
  %v234 = vunpack.c.l.b16 %v195
  %v235 = vunpack.c.h.b16 %v195
  %v236 = vunpack.c.l.b16 %v196
  %v237 = vunpack.c.h.b16 %v196
  %v238 = vunpack.c.l.b16 %v197
  %v239 = vunpack.c.h.b16 %v197
  %v240 = vunpack.c.l.b16 %v198
  %v241 = vunpack.c.h.b16 %v198
  %v242 = vunpack.c.l.b16 %v199
  %v243 = vunpack.c.h.b16 %v199
  %v244 = vunpack.c.l.b16 %v200
  %v245 = vunpack.c.h.b16 %v200
  %v246 = vunpack.c.l.b16 %v201
  %v247 = vunpack.c.h.b16 %v201
  %v248 = vunpack.c.l.b16 %v202
  %v249 = vunpack.c.h.b16 %v202
  %v250 = vunpack.c.l.b16 %v203
  %v251 = vunpack.c.h.b16 %v203
  %v252 = vpack.c.b16 %v220, %v220
  %v253 = vpack.c.b16 %v221, %v221
  %v254 = vpack.c.b16 %v222, %v222
  %v255 = vpack.c.b16 %v223, %v223
  %v256 = vpack.c.b16 %v224, %v224
  %v257 = vpack.c.b16 %v225, %v225
  %v258 = vpack.c.b16 %v226, %v226
  %v259 = vpack.c.b16 %v227, %v227
  %v260 = vpack.c.b16 %v228, %v228
  %v261 = vpack.c.b16 %v229, %v229
  %v262 = vpack.c.b16 %v230, %v230
  %v263 = vpack.c.b16 %v231, %v231
  %v264 = vpack.c.b16 %v232, %v232
  %v265 = vpack.c.b16 %v233, %v233
  %v266 = vpack.c.b16 %v234, %v234
  %v267 = vpack.c.b16 %v235, %v235
  %v268 = vpack.c.b16 %v236, %v236
  %v269 = vpack.c.b16 %v237, %v237
  %v270 = vpack.c.b16 %v238, %v238
  %v271 = vpack.c.b16 %v239, %v239
  %v272 = vpack.c.b16 %v240, %v240
  %v273 = vpack.c.b16 %v241, %v241
  %v274 = vpack.c.b16 %v242, %v242
  %v275 = vpack.c.b16 %v243, %v243
  %v276 = vpack.c.b16 %v244, %v244
  %v277 = vpack.c.b16 %v245, %v245
  %v278 = vpack.c.b16 %v246, %v246
  %v279 = vpack.c.b16 %v247, %v247
  %v280 = vpack.c.b16 %v248, %v248
  %v281 = vpack.c.b16 %v249, %v249
  %v282 = vpack.c.b16 %v250, %v250
  %v283 = vpack.c.b16 %v251, %v251
  %316 = vst [vmem:[%s3] sm:$0xf] %v252
  %317 = vst [vmem:[%s3 + $0x4] sm:$0xf] %v253
  %318 = vst [vmem:[%s3 + $0x8] sm:$0xf] %v254
  %319 = vst [vmem:[%s3 + $0xc] sm:$0xf] %v255
  %320 = vst [vmem:[%s3 + $0x10] sm:$0xf] %v256
  %321 = vst [vmem:[%s3 + $0x14] sm:$0xf] %v257
  %322 = vst [vmem:[%s3 + $0x18] sm:$0xf] %v258
  %323 = vst [vmem:[%s3 + $0x1c] sm:$0xf] %v259
  %324 = vst [vmem:[%s3 + $0x20] sm:$0xf] %v260
  %325 = vst [vmem:[%s3 + $0x24] sm:$0xf] %v261
  %326 = vst [vmem:[%s3 + $0x28] sm:$0xf] %v262
  %327 = vst [vmem:[%s3 + $0x2c] sm:$0xf] %v263
  %328 = vst [vmem:[%s3 + $0x30] sm:$0xf] %v264
  %329 = vst [vmem:[%s3 + $0x34] sm:$0xf] %v265
  %330 = vst [vmem:[%s3 + $0x38] sm:$0xf] %v266
  %331 = vst [vmem:[%s3 + $0x3c] sm:$0xf] %v267
  %332 = vst [vmem:[%s3 + $0x40] sm:$0xf] %v268
  %333 = vst [vmem:[%s3 + $0x44] sm:$0xf] %v269
  %334 = vst [vmem:[%s3 + $0x48] sm:$0xf] %v270
  %335 = vst [vmem:[%s3 + $0x4c] sm:$0xf] %v271
  %336 = vst [vmem:[%s3 + $0x50] sm:$0xf] %v272
  %337 = vst [vmem:[%s3 + $0x54] sm:$0xf] %v273
  %338 = vst [vmem:[%s3 + $0x58] sm:$0xf] %v274
  %339 = vst [vmem:[%s3 + $0x5c] sm:$0xf] %v275
  %340 = vst [vmem:[%s3 + $0x60] sm:$0xf] %v276
  %341 = vst [vmem:[%s3 + $0x64] sm:$0xf] %v277
  %342 = vst [vmem:[%s3 + $0x68] sm:$0xf] %v278
  %343 = vst [vmem:[%s3 + $0x6c] sm:$0xf] %v279
  %344 = vst [vmem:[%s3 + $0x70] sm:$0xf] %v280
  %345 = vst [vmem:[%s3 + $0x74] sm:$0xf] %v281
  %346 = vst [vmem:[%s3 + $0x78] sm:$0xf] %v282
  %347 = vst [vmem:[%s3 + $0x7c] sm:$0xf] %v283
  // Predicated region
  $region14: #{_lambda_.21} parent=0 // pred_check
    _
  $region15: #{_lambda_.21} parent=0 // pred_check_branch
    %349 = sbr.rel (0) target = $region17
  $region16: #{_lambda_.21} parent=0 // pred_region
    _
  $region17: #{_lambda_.21} parent=0 // pred_fallthru
    _
  // Predicated region
  $region18: #{_lambda_.21} parent=0 // pred_check
    _
  $region19: #{_lambda_.21} parent=0 // pred_check_branch
    %351 = sbr.rel (0) target = $region21
  $region20: #{_lambda_.21} parent=0 // pred_region
    _
  $region21: #{_lambda_.21} parent=0 // pred_fallthru
    _

// kernel: _lambda_.20
$region0: #{_lambda_.20}
  #allocation0 [shape = 'u32[]', space=smem, size = 0x4, offset = 0x4, fixed_abs, tag = 'smem constant byte address 0x4 - core index']
  #allocation1 [shape = 'u32[144,128]{1,0:T(1,128)}', space=vmem, size = 0x12000, scoped, tag = 'internal scratch']
  %s0 = inlined_call_operand.vmem [shape: bf16[256,18], index: 0, kind: input, shape index: {}]
  %s1 = inlined_call_operand.vmem [shape: bf16[18,128], index: 1, kind: input, shape index: {}]
  %s2 = inlined_call_operand.vmem [shape: f32[1,128], index: 2, kind: input, shape index: {}]
  %s3 = inlined_call_operand.vmem [shape: bf16[256,128], index: 3, kind: output, shape index: {0}]
  %s4 = inlined_call_operand.vmem [shape: f32[1,2,128], index: 4, kind: output, shape index: {1}]
  %5 = xla_tuple %s3, %s4
  %s6 = sld [smem:[#allocation0]]
  $region30: #{_lambda_.20} parent=0
    _
  %s8 = ssub.s32 1, %s6
  %s9 = scalar_select 0, %s8, %s6
  // Predicated region
  $region2: #{_lambda_.20} parent=0 // pred_check
    _
  $region3: #{_lambda_.20} parent=0 // pred_check_branch
    %11 = sbr.rel (0) target = $region5
  $region4: #{_lambda_.20} parent=0 // pred_region
    _
  $region5: #{_lambda_.20} parent=0 // pred_fallthru
    _
  // Predicated region
  $region6: #{_lambda_.20} parent=0 // pred_check
    _
  $region7: #{_lambda_.20} parent=0 // pred_check_branch
    %13 = sbr.rel (0) target = $region9
  $region8: #{_lambda_.20} parent=0 // pred_region
    _
  $region9: #{_lambda_.20} parent=0 // pred_fallthru
    _
  // Predicated region
  $region10: #{_lambda_.20} parent=0 // pred_check
    _
  $region11: #{_lambda_.20} parent=0 // pred_check_branch
    %15 = sbr.rel (0) target = $region13
  $region12: #{_lambda_.20} parent=0 // pred_region
    _
  $region13: #{_lambda_.20} parent=0 // pred_fallthru
    _
  %v17 = vld [vmem:[%s0] sm:$0xf]
  %v18 = vld [vmem:[%s0 + $0x4] sm:$0xf]
  %v19 = vld [vmem:[%s0 + $0x8] sm:$0xf]
  %v20 = vld [vmem:[%s0 + $0xc] sm:$0xf]
  %v21 = vld [vmem:[%s0 + $0x10] sm:$0xf]
  %v22 = vld [vmem:[%s0 + $0x14] sm:$0xf]
  %v23 = vld [vmem:[%s0 + $0x18] sm:$0xf]
  %v24 = vld [vmem:[%s0 + $0x1c] sm:$0xf]
  %v25 = vld [vmem:[%s0 + $0x20] sm:$0xf]
  %v26 = vld [vmem:[%s0 + $0x24] sm:$0xf]
  %v27 = vld [vmem:[%s0 + $0x28] sm:$0xf]
  %v28 = vld [vmem:[%s0 + $0x2c] sm:$0xf]
  %v29 = vld [vmem:[%s0 + $0x30] sm:$0xf]
  %v30 = vld [vmem:[%s0 + $0x34] sm:$0xf]
  %v31 = vld [vmem:[%s0 + $0x38] sm:$0xf]
  %v32 = vld [vmem:[%s0 + $0x3c] sm:$0xf]
  %v33 = vld [vmem:[%s0 + $0x40] sm:$0xf]
  %v34 = vld [vmem:[%s0 + $0x44] sm:$0xf]
  %v35 = vld [vmem:[%s0 + $0x48] sm:$0xf]
  %v36 = vld [vmem:[%s0 + $0x4c] sm:$0xf]
  %v37 = vld [vmem:[%s0 + $0x50] sm:$0xf]
  %v38 = vld [vmem:[%s0 + $0x54] sm:$0xf]
  %v39 = vld [vmem:[%s0 + $0x58] sm:$0xf]
  %v40 = vld [vmem:[%s0 + $0x5c] sm:$0xf]
  %v41 = vld [vmem:[%s0 + $0x60] sm:$0xf]
  %v42 = vld [vmem:[%s0 + $0x64] sm:$0xf]
  %v43 = vld [vmem:[%s0 + $0x68] sm:$0xf]
  %v44 = vld [vmem:[%s0 + $0x6c] sm:$0xf]
  %v45 = vld [vmem:[%s0 + $0x70] sm:$0xf]
  %v46 = vld [vmem:[%s0 + $0x74] sm:$0xf]
  %v47 = vld [vmem:[%s0 + $0x78] sm:$0xf]
  %v48 = vld [vmem:[%s0 + $0x7c] sm:$0xf]
  %v49 = vld [vmem:[%s1] sm:$0xf]
  %v50 = vld [vmem:[%s1 + $0x4] sm:$0xf]
  %v51 = vld [vmem:[%s1 + $0x8] sm:$0x1]
  %v52 = vld [vmem:[%s2] sm:$0x1]
  %v54 = vlaneseq
  %v55 = vshrl.u32 %v54, 7
  %v56 = vsub.s32 0, %v55
  %v57 = vrot.slane %v52, %v56
  %v91 = vunpack.c.l.b16 %v17
  %v92 = vunpack.c.l.b16 %v18
  %v93 = vunpack.c.l.b16 %v19
  %v94 = vunpack.c.l.b16 %v20
  %v95 = vunpack.c.l.b16 %v21
  %v96 = vunpack.c.l.b16 %v22
  %v97 = vunpack.c.l.b16 %v23
  %v98 = vunpack.c.l.b16 %v24
  %v99 = vunpack.c.l.b16 %v25
  %v100 = vunpack.c.l.b16 %v26
  %v101 = vunpack.c.l.b16 %v27
  %v102 = vunpack.c.l.b16 %v28
  %v103 = vunpack.c.l.b16 %v29
  %v104 = vunpack.c.l.b16 %v30
  %v105 = vunpack.c.l.b16 %v31
  %v106 = vunpack.c.l.b16 %v32
  %v107 = vunpack.c.l.b16 %v33
  %v108 = vunpack.c.l.b16 %v34
  %v109 = vunpack.c.l.b16 %v35
  %v110 = vunpack.c.l.b16 %v36
  %v111 = vunpack.c.l.b16 %v37
  %v112 = vunpack.c.l.b16 %v38
  %v113 = vunpack.c.l.b16 %v39
  %v114 = vunpack.c.l.b16 %v40
  %v115 = vunpack.c.l.b16 %v41
  %v116 = vunpack.c.l.b16 %v42
  %v117 = vunpack.c.l.b16 %v43
  %v118 = vunpack.c.l.b16 %v44
  %v119 = vunpack.c.l.b16 %v45
  %v120 = vunpack.c.l.b16 %v46
  %v121 = vunpack.c.l.b16 %v47
  %v122 = vunpack.c.l.b16 %v48
  %v123 = vpack.c.b16 %v92, %v91
  %v124 = vpack.c.b16 %v94, %v93
  %v125 = vpack.c.b16 %v96, %v95
  %v126 = vpack.c.b16 %v98, %v97
  %v127 = vpack.c.b16 %v100, %v99
  %v128 = vpack.c.b16 %v102, %v101
  %v129 = vpack.c.b16 %v104, %v103
  %v130 = vpack.c.b16 %v106, %v105
  %v131 = vpack.c.b16 %v108, %v107
  %v132 = vpack.c.b16 %v110, %v109
  %v133 = vpack.c.b16 %v112, %v111
  %v134 = vpack.c.b16 %v114, %v113
  %v135 = vpack.c.b16 %v116, %v115
  %v136 = vpack.c.b16 %v118, %v117
  %v137 = vpack.c.b16 %v120, %v119
  %v138 = vpack.c.b16 %v122, %v121
  %v142 = vunpack.c.l.b16 %v49
  %v143 = vunpack.c.l.b16 %v50
  %v144 = vunpack.c.l.b16 %v51
  %v145 = vpack.c.b16 %v143, %v142
  %v146 = vpack.c.b16 %v144, %v144
  %vm148 = vcmask 146432
  %v150 = vsel %vm148, %v123, 0
  %v153 = vsel %vm148, %v124, 0
  %v156 = vsel %vm148, %v125, 0
  %v159 = vsel %vm148, %v126, 0
  %v162 = vsel %vm148, %v127, 0
  %v165 = vsel %vm148, %v128, 0
  %v168 = vsel %vm148, %v129, 0
  %v171 = vsel %vm148, %v130, 0
  %v174 = vsel %vm148, %v131, 0
  %v177 = vsel %vm148, %v132, 0
  %v180 = vsel %vm148, %v133, 0
  %v183 = vsel %vm148, %v134, 0
  %v186 = vsel %vm148, %v135, 0
  %v189 = vsel %vm148, %v136, 0
  %v192 = vsel %vm148, %v137, 0
  %v195 = vsel %vm148, %v138, 0
  %vm197 = vcmask 1040384
  %v199 = vsel %vm197, %v146, 0
  %201 = vmatprep.subr.bf16.mxu0 0
  %202 = vmatpush1.bf16.msra.mxu0 0
  %203 = vmatprep.subr.bf16.mxu0 0
  %204 = vmatpush1.bf16.msra.mxu0 0
  %205 = vmatprep.subr.bf16.mxu0 0
  %206 = vmatpush1.bf16.msra.mxu0 0
  %207 = vmatprep.subr.bf16.mxu0 0
  %208 = vmatpush1.bf16.msra.mxu0 0
  %209 = vmatprep.subr.bf16.mxu0 0
  %210 = vmatpush1.bf16.msra.mxu0 0
  %211 = vmatprep.subr.bf16.mxu0 0
  %212 = vmatpush1.bf16.msra.mxu0 0
  %213 = vmatprep.subr.bf16.mxu0 0
  %214 = vmatpush1.bf16.msra.mxu0 %v199
  %215 = vmatprep.subr.bf16.mxu0 0
  %216 = vmatpush1.bf16.msra.mxu0 %v145
  %217 = vmatprep.subr.bf16.mxu0 0
  %218 = vmatpush2.bf16.msra.mxu0 0
  %219 = vmatprep.subr.bf16.mxu0 0
  %220 = vmatpush2.bf16.msra.mxu0 0
  %221 = vmatprep.subr.bf16.mxu0 0
  %222 = vmatpush2.bf16.msra.mxu0 0
  %223 = vmatprep.subr.bf16.mxu0 0
  %224 = vmatpush2.bf16.msra.mxu0 0
  %225 = vmatprep.subr.bf16.mxu0 0
  %226 = vmatpush2.bf16.msra.mxu0 0
  %227 = vmatprep.subr.bf16.mxu0 0
  %228 = vmatpush2.bf16.msra.mxu0 0
  %229 = vmatprep.subr.bf16.mxu0 0
  %230 = vmatpush2.bf16.msra.mxu0 0
  %231 = vmatprep.subr.bf16.mxu0 0
  %232 = vmatpush2.bf16.msra.mxu0 0
  %233 = vmatprep.mubr.bf16.mxu0 0
  %234 = vmatmul.mubr.bf16.gmra.mxu0 %v150
  %v235 = vpop.f32.mrf.mxu0
  %v236 = vadd.f32 %v57, %v235
  %v237 = vpop.f32.mrf.mxu0
  %v238 = vpop.f32.mrf.mxu0
  %v239 = vadd.f32 %v57, %v238
  %v240 = vpop.f32.mrf.mxu0
  %241 = vmatprep.mubr.bf16.mxu0 0
  %242 = vmatmul.mubr.bf16.gmra.mxu0 %v153
  %v243 = vpop.f32.mrf.mxu0
  %v244 = vadd.f32 %v57, %v243
  %v245 = vpop.f32.mrf.mxu0
  %v246 = vpop.f32.mrf.mxu0
  %v247 = vadd.f32 %v57, %v246
  %v248 = vpop.f32.mrf.mxu0
  %249 = vmatprep.mubr.bf16.mxu0 0
  %250 = vmatmul.mubr.bf16.gmra.mxu0 %v156
  %v251 = vpop.f32.mrf.mxu0
  %v252 = vadd.f32 %v57, %v251
  %v253 = vpop.f32.mrf.mxu0
  %v254 = vpop.f32.mrf.mxu0
  %v255 = vadd.f32 %v57, %v254
  %v256 = vpop.f32.mrf.mxu0
  %257 = vmatprep.mubr.bf16.mxu0 0
  %258 = vmatmul.mubr.bf16.gmra.mxu0 %v159
  %v259 = vpop.f32.mrf.mxu0
  %v260 = vadd.f32 %v57, %v259
  %v261 = vpop.f32.mrf.mxu0
  %v262 = vpop.f32.mrf.mxu0
  %v263 = vadd.f32 %v57, %v262
  %v264 = vpop.f32.mrf.mxu0
  %265 = vmatprep.mubr.bf16.mxu0 0
  %266 = vmatmul.mubr.bf16.gmra.mxu0 %v162
  %v267 = vpop.f32.mrf.mxu0
  %v268 = vadd.f32 %v57, %v267
  %v269 = vpop.f32.mrf.mxu0
  %v270 = vpop.f32.mrf.mxu0
  %v271 = vadd.f32 %v57, %v270
  %v272 = vpop.f32.mrf.mxu0
  %273 = vmatprep.mubr.bf16.mxu0 0
  %274 = vmatmul.mubr.bf16.gmra.mxu0 %v165
  %v275 = vpop.f32.mrf.mxu0
  %v276 = vadd.f32 %v57, %v275
  %v277 = vpop.f32.mrf.mxu0
  %v278 = vpop.f32.mrf.mxu0
  %v279 = vadd.f32 %v57, %v278
  %v280 = vpop.f32.mrf.mxu0
  %281 = vmatprep.mubr.bf16.mxu0 0
  %282 = vmatmul.mubr.bf16.gmra.mxu0 %v168
  %v283 = vpop.f32.mrf.mxu0
  %v284 = vadd.f32 %v57, %v283
  %v285 = vpop.f32.mrf.mxu0
  %v286 = vpop.f32.mrf.mxu0
  %v287 = vadd.f32 %v57, %v286
  %v288 = vpop.f32.mrf.mxu0
  %289 = vmatprep.mubr.bf16.mxu0 0
  %290 = vmatmul.mubr.bf16.gmra.mxu0 %v171
  %v291 = vpop.f32.mrf.mxu0
  %v292 = vadd.f32 %v57, %v291
  %v293 = vpop.f32.mrf.mxu0
  %v294 = vpop.f32.mrf.mxu0
  %v295 = vadd.f32 %v57, %v294
  %v296 = vpop.f32.mrf.mxu0
  %297 = vmatprep.mubr.bf16.mxu0 0
  %298 = vmatmul.mubr.bf16.gmra.mxu0 %v174
  %v299 = vpop.f32.mrf.mxu0
  %v300 = vadd.f32 %v57, %v299
  %v301 = vpop.f32.mrf.mxu0
  %v302 = vpop.f32.mrf.mxu0
  %v303 = vadd.f32 %v57, %v302
  %v304 = vpop.f32.mrf.mxu0
  %305 = vmatprep.mubr.bf16.mxu0 0
  %306 = vmatmul.mubr.bf16.gmra.mxu0 %v177
  %v307 = vpop.f32.mrf.mxu0
  %v308 = vadd.f32 %v57, %v307
  %v309 = vpop.f32.mrf.mxu0
  %v310 = vpop.f32.mrf.mxu0
  %v311 = vadd.f32 %v57, %v310
  %v312 = vpop.f32.mrf.mxu0
  %313 = vmatprep.mubr.bf16.mxu0 0
  %314 = vmatmul.mubr.bf16.gmra.mxu0 %v180
  %v315 = vpop.f32.mrf.mxu0
  %v316 = vadd.f32 %v57, %v315
  %v317 = vpop.f32.mrf.mxu0
  %v318 = vpop.f32.mrf.mxu0
  %v319 = vadd.f32 %v57, %v318
  %v320 = vpop.f32.mrf.mxu0
  %321 = vmatprep.mubr.bf16.mxu0 0
  %322 = vmatmul.mubr.bf16.gmra.mxu0 %v183
  %v323 = vpop.f32.mrf.mxu0
  %v324 = vadd.f32 %v57, %v323
  %v325 = vpop.f32.mrf.mxu0
  %v326 = vpop.f32.mrf.mxu0
  %v327 = vadd.f32 %v57, %v326
  %v328 = vpop.f32.mrf.mxu0
  %329 = vmatprep.mubr.bf16.mxu0 0
  %330 = vmatmul.mubr.bf16.gmra.mxu0 %v186
  %v331 = vpop.f32.mrf.mxu0
  %v332 = vadd.f32 %v57, %v331
  %v333 = vpop.f32.mrf.mxu0
  %v334 = vpop.f32.mrf.mxu0
  %v335 = vadd.f32 %v57, %v334
  %v336 = vpop.f32.mrf.mxu0
  %337 = vmatprep.mubr.bf16.mxu0 0
  %338 = vmatmul.mubr.bf16.gmra.mxu0 %v189
  %v339 = vpop.f32.mrf.mxu0
  %v340 = vadd.f32 %v57, %v339
  %v341 = vpop.f32.mrf.mxu0
  %v342 = vpop.f32.mrf.mxu0
  %v343 = vadd.f32 %v57, %v342
  %v344 = vpop.f32.mrf.mxu0
  %345 = vmatprep.mubr.bf16.mxu0 0
  %346 = vmatmul.mubr.bf16.gmra.mxu0 %v192
  %v347 = vpop.f32.mrf.mxu0
  %v348 = vadd.f32 %v57, %v347
  %v349 = vpop.f32.mrf.mxu0
  %v350 = vpop.f32.mrf.mxu0
  %v351 = vadd.f32 %v57, %v350
  %v352 = vpop.f32.mrf.mxu0
  %353 = vmatprep.mubr.bf16.mxu0 0
  %354 = vmatmul.mubr.bf16.gmra.mxu0 %v195
  %v355 = vpop.f32.mrf.mxu0
  %v356 = vadd.f32 %v57, %v355
  %v357 = vpop.f32.mrf.mxu0
  %v358 = vpop.f32.mrf.mxu0
  %v359 = vadd.f32 %v57, %v358
  %v360 = vpop.f32.mrf.mxu0
  %361 = vdwg.mxu0
  %v362 = vpack.c.bf16 %v239, %v236
  %v363 = vpack.c.bf16 %v247, %v244
  %v364 = vpack.c.bf16 %v255, %v252
  %v365 = vpack.c.bf16 %v263, %v260
  %v366 = vpack.c.bf16 %v271, %v268
  %v367 = vpack.c.bf16 %v279, %v276
  %v368 = vpack.c.bf16 %v287, %v284
  %v369 = vpack.c.bf16 %v295, %v292
  %v370 = vpack.c.bf16 %v303, %v300
  %v371 = vpack.c.bf16 %v311, %v308
  %v372 = vpack.c.bf16 %v319, %v316
  %v373 = vpack.c.bf16 %v327, %v324
  %v374 = vpack.c.bf16 %v335, %v332
  %v375 = vpack.c.bf16 %v343, %v340
  %v376 = vpack.c.bf16 %v351, %v348
  %v377 = vpack.c.bf16 %v359, %v356
  %v394 = vunpack.c.l.b16 %v362
  %v395 = vunpack.c.h.b16 %v362
  %v396 = vunpack.c.l.b16 %v363
  %v397 = vunpack.c.h.b16 %v363
  %v398 = vunpack.c.l.b16 %v364
  %v399 = vunpack.c.h.b16 %v364
  %v400 = vunpack.c.l.b16 %v365
  %v401 = vunpack.c.h.b16 %v365
  %v402 = vunpack.c.l.b16 %v366
  %v403 = vunpack.c.h.b16 %v366
  %v404 = vunpack.c.l.b16 %v367
  %v405 = vunpack.c.h.b16 %v367
  %v406 = vunpack.c.l.b16 %v368
  %v407 = vunpack.c.h.b16 %v368
  %v408 = vunpack.c.l.b16 %v369
  %v409 = vunpack.c.h.b16 %v369
  %v410 = vunpack.c.l.b16 %v370
  %v411 = vunpack.c.h.b16 %v370
  %v412 = vunpack.c.l.b16 %v371
  %v413 = vunpack.c.h.b16 %v371
  %v414 = vunpack.c.l.b16 %v372
  %v415 = vunpack.c.h.b16 %v372
  %v416 = vunpack.c.l.b16 %v373
  %v417 = vunpack.c.h.b16 %v373
  %v418 = vunpack.c.l.b16 %v374
  %v419 = vunpack.c.h.b16 %v374
  %v420 = vunpack.c.l.b16 %v375
  %v421 = vunpack.c.h.b16 %v375
  %v422 = vunpack.c.l.b16 %v376
  %v423 = vunpack.c.h.b16 %v376
  %v424 = vunpack.c.l.b16 %v377
  %v425 = vunpack.c.h.b16 %v377
  %v426 = vpack.c.b16 %v394, %v394
  %v427 = vpack.c.b16 %v395, %v395
  %v428 = vpack.c.b16 %v396, %v396
  %v429 = vpack.c.b16 %v397, %v397
  %v430 = vpack.c.b16 %v398, %v398
  %v431 = vpack.c.b16 %v399, %v399
  %v432 = vpack.c.b16 %v400, %v400
  %v433 = vpack.c.b16 %v401, %v401
  %v434 = vpack.c.b16 %v402, %v402
  %v435 = vpack.c.b16 %v403, %v403
  %v436 = vpack.c.b16 %v404, %v404
  %v437 = vpack.c.b16 %v405, %v405
  %v438 = vpack.c.b16 %v406, %v406
  %v439 = vpack.c.b16 %v407, %v407
  %v440 = vpack.c.b16 %v408, %v408
  %v441 = vpack.c.b16 %v409, %v409
  %v442 = vpack.c.b16 %v410, %v410
  %v443 = vpack.c.b16 %v411, %v411
  %v444 = vpack.c.b16 %v412, %v412
  %v445 = vpack.c.b16 %v413, %v413
  %v446 = vpack.c.b16 %v414, %v414
  %v447 = vpack.c.b16 %v415, %v415
  %v448 = vpack.c.b16 %v416, %v416
  %v449 = vpack.c.b16 %v417, %v417
  %v450 = vpack.c.b16 %v418, %v418
  %v451 = vpack.c.b16 %v419, %v419
  %v452 = vpack.c.b16 %v420, %v420
  %v453 = vpack.c.b16 %v421, %v421
  %v454 = vpack.c.b16 %v422, %v422
  %v455 = vpack.c.b16 %v423, %v423
  %v456 = vpack.c.b16 %v424, %v424
  %v457 = vpack.c.b16 %v425, %v425
  %490 = vst [vmem:[%s3] sm:$0xf] %v426
  %491 = vst [vmem:[%s3 + $0x4] sm:$0xf] %v427
  %492 = vst [vmem:[%s3 + $0x8] sm:$0xf] %v428
  %493 = vst [vmem:[%s3 + $0xc] sm:$0xf] %v429
  %494 = vst [vmem:[%s3 + $0x10] sm:$0xf] %v430
  %495 = vst [vmem:[%s3 + $0x14] sm:$0xf] %v431
  %496 = vst [vmem:[%s3 + $0x18] sm:$0xf] %v432
  %497 = vst [vmem:[%s3 + $0x1c] sm:$0xf] %v433
  %498 = vst [vmem:[%s3 + $0x20] sm:$0xf] %v434
  %499 = vst [vmem:[%s3 + $0x24] sm:$0xf] %v435
  %500 = vst [vmem:[%s3 + $0x28] sm:$0xf] %v436
  %501 = vst [vmem:[%s3 + $0x2c] sm:$0xf] %v437
  %502 = vst [vmem:[%s3 + $0x30] sm:$0xf] %v438
  %503 = vst [vmem:[%s3 + $0x34] sm:$0xf] %v439
  %504 = vst [vmem:[%s3 + $0x38] sm:$0xf] %v440
  %505 = vst [vmem:[%s3 + $0x3c] sm:$0xf] %v441
  %506 = vst [vmem:[%s3 + $0x40] sm:$0xf] %v442
  %507 = vst [vmem:[%s3 + $0x44] sm:$0xf] %v443
  %508 = vst [vmem:[%s3 + $0x48] sm:$0xf] %v444
  %509 = vst [vmem:[%s3 + $0x4c] sm:$0xf] %v445
  %510 = vst [vmem:[%s3 + $0x50] sm:$0xf] %v446
  %511 = vst [vmem:[%s3 + $0x54] sm:$0xf] %v447
  %512 = vst [vmem:[%s3 + $0x58] sm:$0xf] %v448
  %513 = vst [vmem:[%s3 + $0x5c] sm:$0xf] %v449
  %514 = vst [vmem:[%s3 + $0x60] sm:$0xf] %v450
  %515 = vst [vmem:[%s3 + $0x64] sm:$0xf] %v451
  %516 = vst [vmem:[%s3 + $0x68] sm:$0xf] %v452
  %517 = vst [vmem:[%s3 + $0x6c] sm:$0xf] %v453
  %518 = vst [vmem:[%s3 + $0x70] sm:$0xf] %v454
  %519 = vst [vmem:[%s3 + $0x74] sm:$0xf] %v455
  %520 = vst [vmem:[%s3 + $0x78] sm:$0xf] %v456
  %521 = vst [vmem:[%s3 + $0x7c] sm:$0xf] %v457
  %s522 = smul.u32 0, 256
  %v523 = vlaneseq
  %v524 = vshrl.u32 %v523, 7
  %v525 = vadd.s32 %v524, 8
  %v526 = vadd.s32 %v524, 16
  %v527 = vadd.s32 %v524, 24
  %v528 = vadd.s32 %v524, 32
  %v529 = vadd.s32 %v524, 40
  %v530 = vadd.s32 %v524, 48
  %v531 = vadd.s32 %v524, 56
  %v532 = vadd.s32 %v524, 64
  %v533 = vadd.s32 %v524, 72
  %v534 = vadd.s32 %v524, 80
  %v535 = vadd.s32 %v524, 88
  %v536 = vadd.s32 %v524, 96
  %v537 = vadd.s32 %v524, 104
  %v538 = vadd.s32 %v524, 112
  %v539 = vadd.s32 %v524, 120
  %v540 = vadd.s32 %v524, 128
  %v541 = vadd.s32 %v524, 136
  %v542 = vadd.s32 %v524, 144
  %v543 = vadd.s32 %v524, 152
  %v544 = vadd.s32 %v524, 160
  %v545 = vadd.s32 %v524, 168
  %v546 = vadd.s32 %v524, 176
  %v547 = vadd.s32 %v524, 184
  %v548 = vadd.s32 %v524, 192
  %v549 = vadd.s32 %v524, 200
  %v550 = vadd.s32 %v524, 208
  %v551 = vadd.s32 %v524, 216
  %v552 = vadd.s32 %v524, 224
  %v553 = vadd.s32 %v524, 232
  %v554 = vadd.s32 %v524, 240
  %v555 = vadd.s32 %v524, 248
  %v556 = vstv %s522
  %v557 = vadd.s32 %v556, %v524
  %v558 = vadd.s32 %v556, %v525
  %v559 = vadd.s32 %v556, %v526
  %v560 = vadd.s32 %v556, %v527
  %v561 = vadd.s32 %v556, %v528
  %v562 = vadd.s32 %v556, %v529
  %v563 = vadd.s32 %v556, %v530
  %v564 = vadd.s32 %v556, %v531
  %v565 = vadd.s32 %v556, %v532
  %v566 = vadd.s32 %v556, %v533
  %v567 = vadd.s32 %v556, %v534
  %v568 = vadd.s32 %v556, %v535
  %v569 = vadd.s32 %v556, %v536
  %v570 = vadd.s32 %v556, %v537
  %v571 = vadd.s32 %v556, %v538
  %v572 = vadd.s32 %v556, %v539
  %v573 = vadd.s32 %v556, %v540
  %v574 = vadd.s32 %v556, %v541
  %v575 = vadd.s32 %v556, %v542
  %v576 = vadd.s32 %v556, %v543
  %v577 = vadd.s32 %v556, %v544
  %v578 = vadd.s32 %v556, %v545
  %v579 = vadd.s32 %v556, %v546
  %v580 = vadd.s32 %v556, %v547
  %v581 = vadd.s32 %v556, %v548
  %v582 = vadd.s32 %v556, %v549
  %v583 = vadd.s32 %v556, %v550
  %v584 = vadd.s32 %v556, %v551
  %v585 = vadd.s32 %v556, %v552
  %v586 = vadd.s32 %v556, %v553
  %v587 = vadd.s32 %v556, %v554
  %v588 = vadd.s32 %v556, %v555
  %vm589 = vcmp.lt.s32.totalorder %v557, 256
  %vm590 = vcmp.lt.s32.totalorder %v558, 256
  %vm591 = vcmp.lt.s32.totalorder %v559, 256
  %vm592 = vcmp.lt.s32.totalorder %v560, 256
  %vm593 = vcmp.lt.s32.totalorder %v561, 256
  %vm594 = vcmp.lt.s32.totalorder %v562, 256
  %vm595 = vcmp.lt.s32.totalorder %v563, 256
  %vm596 = vcmp.lt.s32.totalorder %v564, 256
  %vm597 = vcmp.lt.s32.totalorder %v565, 256
  %vm598 = vcmp.lt.s32.totalorder %v566, 256
  %vm599 = vcmp.lt.s32.totalorder %v567, 256
  %vm600 = vcmp.lt.s32.totalorder %v568, 256
  %vm601 = vcmp.lt.s32.totalorder %v569, 256
  %vm602 = vcmp.lt.s32.totalorder %v570, 256
  %vm603 = vcmp.lt.s32.totalorder %v571, 256
  %vm604 = vcmp.lt.s32.totalorder %v572, 256
  %vm605 = vcmp.lt.s32.totalorder %v573, 256
  %vm606 = vcmp.lt.s32.totalorder %v574, 256
  %vm607 = vcmp.lt.s32.totalorder %v575, 256
  %vm608 = vcmp.lt.s32.totalorder %v576, 256
  %vm609 = vcmp.lt.s32.totalorder %v577, 256
  %vm610 = vcmp.lt.s32.totalorder %v578, 256
  %vm611 = vcmp.lt.s32.totalorder %v579, 256
  %vm612 = vcmp.lt.s32.totalorder %v580, 256
  %vm613 = vcmp.lt.s32.totalorder %v581, 256
  %vm614 = vcmp.lt.s32.totalorder %v582, 256
  %vm615 = vcmp.lt.s32.totalorder %v583, 256
  %vm616 = vcmp.lt.s32.totalorder %v584, 256
  %vm617 = vcmp.lt.s32.totalorder %v585, 256
  %vm618 = vcmp.lt.s32.totalorder %v586, 256
  %vm619 = vcmp.lt.s32.totalorder %v587, 256
  %vm620 = vcmp.lt.s32.totalorder %v588, 256
  %v621 = vsel %vm589, 1, 0
  %v622 = vsel %vm590, 1, 0
  %v623 = vsel %vm591, 1, 0
  %v624 = vsel %vm592, 1, 0
  %v625 = vsel %vm593, 1, 0
  %v626 = vsel %vm594, 1, 0
  %v627 = vsel %vm595, 1, 0
  %v628 = vsel %vm596, 1, 0
  %v629 = vsel %vm597, 1, 0
  %v630 = vsel %vm598, 1, 0
  %v631 = vsel %vm599, 1, 0
  %v632 = vsel %vm600, 1, 0
  %v633 = vsel %vm601, 1, 0
  %v634 = vsel %vm602, 1, 0
  %v635 = vsel %vm603, 1, 0
  %v636 = vsel %vm604, 1, 0
  %v637 = vsel %vm605, 1, 0
  %v638 = vsel %vm606, 1, 0
  %v639 = vsel %vm607, 1, 0
  %v640 = vsel %vm608, 1, 0
  %v641 = vsel %vm609, 1, 0
  %v642 = vsel %vm610, 1, 0
  %v643 = vsel %vm611, 1, 0
  %v644 = vsel %vm612, 1, 0
  %v645 = vsel %vm613, 1, 0
  %v646 = vsel %vm614, 1, 0
  %v647 = vsel %vm615, 1, 0
  %v648 = vsel %vm616, 1, 0
  %v649 = vsel %vm617, 1, 0
  %v650 = vsel %vm618, 1, 0
  %v651 = vsel %vm619, 1, 0
  %v652 = vsel %vm620, 1, 0
  %vm653 = vcmp.eq.s32.totalorder %v621, 1
  %vm654 = vcmp.eq.s32.totalorder %v622, 1
  %vm655 = vcmp.eq.s32.totalorder %v623, 1
  %vm656 = vcmp.eq.s32.totalorder %v624, 1
  %vm657 = vcmp.eq.s32.totalorder %v625, 1
  %vm658 = vcmp.eq.s32.totalorder %v626, 1
  %vm659 = vcmp.eq.s32.totalorder %v627, 1
  %vm660 = vcmp.eq.s32.totalorder %v628, 1
  %vm661 = vcmp.eq.s32.totalorder %v629, 1
  %vm662 = vcmp.eq.s32.totalorder %v630, 1
  %vm663 = vcmp.eq.s32.totalorder %v631, 1
  %vm664 = vcmp.eq.s32.totalorder %v632, 1
  %vm665 = vcmp.eq.s32.totalorder %v633, 1
  %vm666 = vcmp.eq.s32.totalorder %v634, 1
  %vm667 = vcmp.eq.s32.totalorder %v635, 1
  %vm668 = vcmp.eq.s32.totalorder %v636, 1
  %vm669 = vcmp.eq.s32.totalorder %v637, 1
  %vm670 = vcmp.eq.s32.totalorder %v638, 1
  %vm671 = vcmp.eq.s32.totalorder %v639, 1
  %vm672 = vcmp.eq.s32.totalorder %v640, 1
  %vm673 = vcmp.eq.s32.totalorder %v641, 1
  %vm674 = vcmp.eq.s32.totalorder %v642, 1
  %vm675 = vcmp.eq.s32.totalorder %v643, 1
  %vm676 = vcmp.eq.s32.totalorder %v644, 1
  %vm677 = vcmp.eq.s32.totalorder %v645, 1
  %vm678 = vcmp.eq.s32.totalorder %v646, 1
  %vm679 = vcmp.eq.s32.totalorder %v647, 1
  %vm680 = vcmp.eq.s32.totalorder %v648, 1
  %vm681 = vcmp.eq.s32.totalorder %v649, 1
  %vm682 = vcmp.eq.s32.totalorder %v650, 1
  %vm683 = vcmp.eq.s32.totalorder %v651, 1
  %vm684 = vcmp.eq.s32.totalorder %v652, 1
  %v685 = vsel %vm653, %v236, 0.0
  %v686 = vsel %vm654, %v239, 0.0
  %v687 = vsel %vm655, %v244, 0.0
  %v688 = vsel %vm656, %v247, 0.0
  %v689 = vsel %vm657, %v252, 0.0
  %v690 = vsel %vm658, %v255, 0.0
  %v691 = vsel %vm659, %v260, 0.0
  %v692 = vsel %vm660, %v263, 0.0
  %v693 = vsel %vm661, %v268, 0.0
  %v694 = vsel %vm662, %v271, 0.0
  %v695 = vsel %vm663, %v276, 0.0
  %v696 = vsel %vm664, %v279, 0.0
  %v697 = vsel %vm665, %v284, 0.0
  %v698 = vsel %vm666, %v287, 0.0
  %v699 = vsel %vm667, %v292, 0.0
  %v700 = vsel %vm668, %v295, 0.0
  %v701 = vsel %vm669, %v300, 0.0
  %v702 = vsel %vm670, %v303, 0.0
  %v703 = vsel %vm671, %v308, 0.0
  %v704 = vsel %vm672, %v311, 0.0
  %v705 = vsel %vm673, %v316, 0.0
  %v706 = vsel %vm674, %v319, 0.0
  %v707 = vsel %vm675, %v324, 0.0
  %v708 = vsel %vm676, %v327, 0.0
  %v709 = vsel %vm677, %v332, 0.0
  %v710 = vsel %vm678, %v335, 0.0
  %v711 = vsel %vm679, %v340, 0.0
  %v712 = vsel %vm680, %v343, 0.0
  %v713 = vsel %vm681, %v348, 0.0
  %v714 = vsel %vm682, %v351, 0.0
  %v715 = vsel %vm683, %v356, 0.0
  %v716 = vsel %vm684, %v359, 0.0
  %v717 = vadd.f32 %v685, %v686
  %v718 = vadd.f32 %v717, %v687
  %v719 = vadd.f32 %v718, %v688
  %v720 = vadd.f32 %v719, %v689
  %v721 = vadd.f32 %v720, %v690
  %v722 = vadd.f32 %v721, %v691
  %v723 = vadd.f32 %v722, %v692
  %v724 = vadd.f32 %v723, %v693
  %v725 = vadd.f32 %v724, %v694
  %v726 = vadd.f32 %v725, %v695
  %v727 = vadd.f32 %v726, %v696
  %v728 = vadd.f32 %v727, %v697
  %v729 = vadd.f32 %v728, %v698
  %v730 = vadd.f32 %v729, %v699
  %v731 = vadd.f32 %v730, %v700
  %v732 = vadd.f32 %v731, %v701
  %v733 = vadd.f32 %v732, %v702
  %v734 = vadd.f32 %v733, %v703
  %v735 = vadd.f32 %v734, %v704
  %v736 = vadd.f32 %v735, %v705
  %v737 = vadd.f32 %v736, %v706
  %v738 = vadd.f32 %v737, %v707
  %v739 = vadd.f32 %v738, %v708
  %v740 = vadd.f32 %v739, %v709
  %v741 = vadd.f32 %v740, %v710
  %v742 = vadd.f32 %v741, %v711
  %v743 = vadd.f32 %v742, %v712
  %v744 = vadd.f32 %v743, %v713
  %v745 = vadd.f32 %v744, %v714
  %v746 = vadd.f32 %v745, %v715
  %v747 = vadd.f32 %v746, %v716
  %v748 = vrot.slane %v747, 4
  %v749 = vadd.f32 %v747, %v748
  %v750 = vrot.slane %v749, 2
  %v751 = vadd.f32 %v749, %v750
  %v752 = vrot.slane %v751, 1
  %v753 = vadd.f32 %v751, %v752
  %754 = vst [vmem:[%s4] sm:$0x1] %v753
  %v755 = vmul.f32 %v685, %v685
  %v756 = vmul.f32 %v686, %v686
  %v757 = vmul.f32 %v687, %v687
  %v758 = vmul.f32 %v688, %v688
  %v759 = vmul.f32 %v689, %v689
  %v760 = vmul.f32 %v690, %v690
  %v761 = vmul.f32 %v691, %v691
  %v762 = vmul.f32 %v692, %v692
  %v763 = vmul.f32 %v693, %v693
  %v764 = vmul.f32 %v694, %v694
  %v765 = vmul.f32 %v695, %v695
  %v766 = vmul.f32 %v696, %v696
  %v767 = vmul.f32 %v697, %v697
  %v768 = vmul.f32 %v698, %v698
  %v769 = vmul.f32 %v699, %v699
  %v770 = vmul.f32 %v700, %v700
  %v771 = vmul.f32 %v701, %v701
  %v772 = vmul.f32 %v702, %v702
  %v773 = vmul.f32 %v703, %v703
  %v774 = vmul.f32 %v704, %v704
  %v775 = vmul.f32 %v705, %v705
  %v776 = vmul.f32 %v706, %v706
  %v777 = vmul.f32 %v707, %v707
  %v778 = vmul.f32 %v708, %v708
  %v779 = vmul.f32 %v709, %v709
  %v780 = vmul.f32 %v710, %v710
  %v781 = vmul.f32 %v711, %v711
  %v782 = vmul.f32 %v712, %v712
  %v783 = vmul.f32 %v713, %v713
  %v784 = vmul.f32 %v714, %v714
  %v785 = vmul.f32 %v715, %v715
  %v786 = vmul.f32 %v716, %v716
  %v787 = vadd.f32 %v755, %v756
  %v788 = vadd.f32 %v787, %v757
  %v789 = vadd.f32 %v788, %v758
  %v790 = vadd.f32 %v789, %v759
  %v791 = vadd.f32 %v790, %v760
  %v792 = vadd.f32 %v791, %v761
  %v793 = vadd.f32 %v792, %v762
  %v794 = vadd.f32 %v793, %v763
  %v795 = vadd.f32 %v794, %v764
  %v796 = vadd.f32 %v795, %v765
  %v797 = vadd.f32 %v796, %v766
  %v798 = vadd.f32 %v797, %v767
  %v799 = vadd.f32 %v798, %v768
  %v800 = vadd.f32 %v799, %v769
  %v801 = vadd.f32 %v800, %v770
  %v802 = vadd.f32 %v801, %v771
  %v803 = vadd.f32 %v802, %v772
  %v804 = vadd.f32 %v803, %v773
  %v805 = vadd.f32 %v804, %v774
  %v806 = vadd.f32 %v805, %v775
  %v807 = vadd.f32 %v806, %v776
  %v808 = vadd.f32 %v807, %v777
  %v809 = vadd.f32 %v808, %v778
  %v810 = vadd.f32 %v809, %v779
  %v811 = vadd.f32 %v810, %v780
  %v812 = vadd.f32 %v811, %v781
  %v813 = vadd.f32 %v812, %v782
  %v814 = vadd.f32 %v813, %v783
  %v815 = vadd.f32 %v814, %v784
  %v816 = vadd.f32 %v815, %v785
  %v817 = vadd.f32 %v816, %v786
  %v818 = vrot.slane %v817, 4
  %v819 = vadd.f32 %v817, %v818
  %v820 = vrot.slane %v819, 2
  %v821 = vadd.f32 %v819, %v820
  %v822 = vrot.slane %v821, 1
  %v823 = vadd.f32 %v821, %v822
  %824 = vst [vmem:[%s4 + $0x1] sm:$0x1] %v823
  // Predicated region
  $region14: #{_lambda_.20} parent=0 // pred_check
    _
  $region15: #{_lambda_.20} parent=0 // pred_check_branch
    %826 = sbr.rel (0) target = $region17
  $region16: #{_lambda_.20} parent=0 // pred_region
    _
  $region17: #{_lambda_.20} parent=0 // pred_fallthru
    _
  // Predicated region
  $region18: #{_lambda_.20} parent=0 // pred_check
    _
  $region19: #{_lambda_.20} parent=0 // pred_check_branch
    %828 = sbr.rel (0) target = $region21
  $region20: #{_lambda_.20} parent=0 // pred_region
    _
  $region21: #{_lambda_.20} parent=0 // pred_fallthru
    _
  // Predicated region
  $region22: #{_lambda_.20} parent=0 // pred_check
    _
  $region23: #{_lambda_.20} parent=0 // pred_check_branch
    %830 = sbr.rel (0) target = $region25
  $region24: #{_lambda_.20} parent=0 // pred_region
    _
  $region25: #{_lambda_.20} parent=0 // pred_fallthru
    _
  // Predicated region
  $region26: #{_lambda_.20} parent=0 // pred_check
    _
  $region27: #{_lambda_.20} parent=0 // pred_check_branch
    %832 = sbr.rel (0) target = $region29
  $region28: #{_lambda_.20} parent=0 // pred_region
    _
  $region29: #{_lambda_.20} parent=0 // pred_fallthru
    _

// kernel: _lambda_.22
$region0: #{_lambda_.22}
  #allocation0 [shape = 'u32[]', space=smem, size = 0x4, offset = 0x4, fixed_abs, tag = 'smem constant byte address 0x4 - core index']
  #allocation1 [shape = 'u32[144,128]{1,0:T(1,128)}', space=vmem, size = 0x12000, scoped, tag = 'internal scratch']
  %s0 = inlined_call_operand.vmem [shape: bf16[256,36], index: 0, kind: input, shape index: {}]
  %s1 = inlined_call_operand.vmem [shape: bf16[36,128], index: 1, kind: input, shape index: {}]
  %s2 = inlined_call_operand.vmem [shape: f32[1,128], index: 2, kind: input, shape index: {}]
  %s3 = inlined_call_operand.vmem [shape: bf16[256,128], index: 3, kind: output, shape index: {0}]
  %s4 = inlined_call_operand.vmem [shape: f32[1,2,128], index: 4, kind: output, shape index: {1}]
  %5 = xla_tuple %s3, %s4
  %s6 = sld [smem:[#allocation0]]
  $region30: #{_lambda_.22} parent=0
    _
  %s8 = ssub.s32 1, %s6
  %s9 = scalar_select 0, %s8, %s6
  // Predicated region
  $region2: #{_lambda_.22} parent=0 // pred_check
    _
  $region3: #{_lambda_.22} parent=0 // pred_check_branch
    %11 = sbr.rel (0) target = $region5
  $region4: #{_lambda_.22} parent=0 // pred_region
    _
  $region5: #{_lambda_.22} parent=0 // pred_fallthru
    _
  // Predicated region
  $region6: #{_lambda_.22} parent=0 // pred_check
    _
  $region7: #{_lambda_.22} parent=0 // pred_check_branch
    %13 = sbr.rel (0) target = $region9
  $region8: #{_lambda_.22} parent=0 // pred_region
    _
  $region9: #{_lambda_.22} parent=0 // pred_fallthru
    _
  // Predicated region
  $region10: #{_lambda_.22} parent=0 // pred_check
    _
  $region11: #{_lambda_.22} parent=0 // pred_check_branch
    %15 = sbr.rel (0) target = $region13
  $region12: #{_lambda_.22} parent=0 // pred_region
    _
  $region13: #{_lambda_.22} parent=0 // pred_fallthru
    _
  %v17 = vld [vmem:[%s0] sm:$0xf]
  %v18 = vld [vmem:[%s0 + $0x4] sm:$0xf]
  %v19 = vld [vmem:[%s0 + $0x8] sm:$0xf]
  %v20 = vld [vmem:[%s0 + $0xc] sm:$0xf]
  %v21 = vld [vmem:[%s0 + $0x10] sm:$0xf]
  %v22 = vld [vmem:[%s0 + $0x14] sm:$0xf]
  %v23 = vld [vmem:[%s0 + $0x18] sm:$0xf]
  %v24 = vld [vmem:[%s0 + $0x1c] sm:$0xf]
  %v25 = vld [vmem:[%s0 + $0x20] sm:$0xf]
  %v26 = vld [vmem:[%s0 + $0x24] sm:$0xf]
  %v27 = vld [vmem:[%s0 + $0x28] sm:$0xf]
  %v28 = vld [vmem:[%s0 + $0x2c] sm:$0xf]
  %v29 = vld [vmem:[%s0 + $0x30] sm:$0xf]
  %v30 = vld [vmem:[%s0 + $0x34] sm:$0xf]
  %v31 = vld [vmem:[%s0 + $0x38] sm:$0xf]
  %v32 = vld [vmem:[%s0 + $0x3c] sm:$0xf]
  %v33 = vld [vmem:[%s0 + $0x40] sm:$0xf]
  %v34 = vld [vmem:[%s0 + $0x44] sm:$0xf]
  %v35 = vld [vmem:[%s0 + $0x48] sm:$0xf]
  %v36 = vld [vmem:[%s0 + $0x4c] sm:$0xf]
  %v37 = vld [vmem:[%s0 + $0x50] sm:$0xf]
  %v38 = vld [vmem:[%s0 + $0x54] sm:$0xf]
  %v39 = vld [vmem:[%s0 + $0x58] sm:$0xf]
  %v40 = vld [vmem:[%s0 + $0x5c] sm:$0xf]
  %v41 = vld [vmem:[%s0 + $0x60] sm:$0xf]
  %v42 = vld [vmem:[%s0 + $0x64] sm:$0xf]
  %v43 = vld [vmem:[%s0 + $0x68] sm:$0xf]
  %v44 = vld [vmem:[%s0 + $0x6c] sm:$0xf]
  %v45 = vld [vmem:[%s0 + $0x70] sm:$0xf]
  %v46 = vld [vmem:[%s0 + $0x74] sm:$0xf]
  %v47 = vld [vmem:[%s0 + $0x78] sm:$0xf]
  %v48 = vld [vmem:[%s0 + $0x7c] sm:$0xf]
  %v49 = vld [vmem:[%s1] sm:$0xf]
  %v50 = vld [vmem:[%s1 + $0x4] sm:$0xf]
  %v51 = vld [vmem:[%s1 + $0x8] sm:$0xf]
  %v52 = vld [vmem:[%s1 + $0xc] sm:$0xf]
  %v53 = vld [vmem:[%s1 + $0x10] sm:$0x3]
  %v54 = vld [vmem:[%s2] sm:$0x1]
  %v56 = vlaneseq
  %v57 = vshrl.u32 %v56, 7
  %v58 = vsub.s32 0, %v57
  %v59 = vrot.slane %v54, %v58
  %v93 = vunpack.c.l.b16 %v17
  %v94 = vunpack.c.l.b16 %v18
  %v95 = vunpack.c.l.b16 %v19
  %v96 = vunpack.c.l.b16 %v20
  %v97 = vunpack.c.l.b16 %v21
  %v98 = vunpack.c.l.b16 %v22
  %v99 = vunpack.c.l.b16 %v23
  %v100 = vunpack.c.l.b16 %v24
  %v101 = vunpack.c.l.b16 %v25
  %v102 = vunpack.c.l.b16 %v26
  %v103 = vunpack.c.l.b16 %v27
  %v104 = vunpack.c.l.b16 %v28
  %v105 = vunpack.c.l.b16 %v29
  %v106 = vunpack.c.l.b16 %v30
  %v107 = vunpack.c.l.b16 %v31
  %v108 = vunpack.c.l.b16 %v32
  %v109 = vunpack.c.l.b16 %v33
  %v110 = vunpack.c.l.b16 %v34
  %v111 = vunpack.c.l.b16 %v35
  %v112 = vunpack.c.l.b16 %v36
  %v113 = vunpack.c.l.b16 %v37
  %v114 = vunpack.c.l.b16 %v38
  %v115 = vunpack.c.l.b16 %v39
  %v116 = vunpack.c.l.b16 %v40
  %v117 = vunpack.c.l.b16 %v41
  %v118 = vunpack.c.l.b16 %v42
  %v119 = vunpack.c.l.b16 %v43
  %v120 = vunpack.c.l.b16 %v44
  %v121 = vunpack.c.l.b16 %v45
  %v122 = vunpack.c.l.b16 %v46
  %v123 = vunpack.c.l.b16 %v47
  %v124 = vunpack.c.l.b16 %v48
  %v125 = vpack.c.b16 %v94, %v93
  %v126 = vpack.c.b16 %v96, %v95
  %v127 = vpack.c.b16 %v98, %v97
  %v128 = vpack.c.b16 %v100, %v99
  %v129 = vpack.c.b16 %v102, %v101
  %v130 = vpack.c.b16 %v104, %v103
  %v131 = vpack.c.b16 %v106, %v105
  %v132 = vpack.c.b16 %v108, %v107
  %v133 = vpack.c.b16 %v110, %v109
  %v134 = vpack.c.b16 %v112, %v111
  %v135 = vpack.c.b16 %v114, %v113
  %v136 = vpack.c.b16 %v116, %v115
  %v137 = vpack.c.b16 %v118, %v117
  %v138 = vpack.c.b16 %v120, %v119
  %v139 = vpack.c.b16 %v122, %v121
  %v140 = vpack.c.b16 %v124, %v123
  %v146 = vunpack.c.l.b16 %v49
  %v147 = vunpack.c.l.b16 %v50
  %v148 = vunpack.c.l.b16 %v51
  %v149 = vunpack.c.l.b16 %v52
  %v150 = vunpack.c.l.b16 %v53
  %v151 = vpack.c.b16 %v147, %v146
  %v152 = vpack.c.b16 %v149, %v148
  %v153 = vpack.c.b16 %v150, %v150
  %vm156 = vcmask 293888
  %v158 = vsel %vm156, %v125, 0
  %v161 = vsel %vm156, %v126, 0
  %v164 = vsel %vm156, %v127, 0
  %v167 = vsel %vm156, %v128, 0
  %v170 = vsel %vm156, %v129, 0
  %v173 = vsel %vm156, %v130, 0
  %v176 = vsel %vm156, %v131, 0
  %v179 = vsel %vm156, %v132, 0
  %v182 = vsel %vm156, %v133, 0
  %v185 = vsel %vm156, %v134, 0
  %v188 = vsel %vm156, %v135, 0
  %v191 = vsel %vm156, %v136, 0
  %v194 = vsel %vm156, %v137, 0
  %v197 = vsel %vm156, %v138, 0
  %v200 = vsel %vm156, %v139, 0
  %v203 = vsel %vm156, %v140, 0
  %vm205 = vcmask 1041408
  %v207 = vsel %vm205, %v153, 0
  %209 = vmatprep.subr.bf16.mxu0 0
  %210 = vmatpush1.bf16.msra.mxu0 0
  %211 = vmatprep.subr.bf16.mxu0 0
  %212 = vmatpush1.bf16.msra.mxu0 0
  %213 = vmatprep.subr.bf16.mxu0 0
  %214 = vmatpush1.bf16.msra.mxu0 0
  %215 = vmatprep.subr.bf16.mxu0 0
  %216 = vmatpush1.bf16.msra.mxu0 0
  %217 = vmatprep.subr.bf16.mxu0 0
  %218 = vmatpush1.bf16.msra.mxu0 0
  %219 = vmatprep.subr.bf16.mxu0 0
  %220 = vmatpush1.bf16.msra.mxu0 %v207
  %221 = vmatprep.subr.bf16.mxu0 0
  %222 = vmatpush1.bf16.msra.mxu0 %v152
  %223 = vmatprep.subr.bf16.mxu0 0
  %224 = vmatpush1.bf16.msra.mxu0 %v151
  %225 = vmatprep.subr.bf16.mxu0 0
  %226 = vmatpush2.bf16.msra.mxu0 0
  %227 = vmatprep.subr.bf16.mxu0 0
  %228 = vmatpush2.bf16.msra.mxu0 0
  %229 = vmatprep.subr.bf16.mxu0 0
  %230 = vmatpush2.bf16.msra.mxu0 0
  %231 = vmatprep.subr.bf16.mxu0 0
  %232 = vmatpush2.bf16.msra.mxu0 0
  %233 = vmatprep.subr.bf16.mxu0 0
  %234 = vmatpush2.bf16.msra.mxu0 0
  %235 = vmatprep.subr.bf16.mxu0 0
  %236 = vmatpush2.bf16.msra.mxu0 0
  %237 = vmatprep.subr.bf16.mxu0 0
  %238 = vmatpush2.bf16.msra.mxu0 0
  %239 = vmatprep.subr.bf16.mxu0 0
  %240 = vmatpush2.bf16.msra.mxu0 0
  %241 = vmatprep.mubr.bf16.mxu0 0
  %242 = vmatmul.mubr.bf16.gmra.mxu0 %v158
  %v243 = vpop.f32.mrf.mxu0
  %v244 = vadd.f32 %v59, %v243
  %v245 = vpop.f32.mrf.mxu0
  %v246 = vpop.f32.mrf.mxu0
  %v247 = vadd.f32 %v59, %v246
  %v248 = vpop.f32.mrf.mxu0
  %249 = vmatprep.mubr.bf16.mxu0 0
  %250 = vmatmul.mubr.bf16.gmra.mxu0 %v161
  %v251 = vpop.f32.mrf.mxu0
  %v252 = vadd.f32 %v59, %v251
  %v253 = vpop.f32.mrf.mxu0
  %v254 = vpop.f32.mrf.mxu0
  %v255 = vadd.f32 %v59, %v254
  %v256 = vpop.f32.mrf.mxu0
  %257 = vmatprep.mubr.bf16.mxu0 0
  %258 = vmatmul.mubr.bf16.gmra.mxu0 %v164
  %v259 = vpop.f32.mrf.mxu0
  %v260 = vadd.f32 %v59, %v259
  %v261 = vpop.f32.mrf.mxu0
  %v262 = vpop.f32.mrf.mxu0
  %v263 = vadd.f32 %v59, %v262
  %v264 = vpop.f32.mrf.mxu0
  %265 = vmatprep.mubr.bf16.mxu0 0
  %266 = vmatmul.mubr.bf16.gmra.mxu0 %v167
  %v267 = vpop.f32.mrf.mxu0
  %v268 = vadd.f32 %v59, %v267
  %v269 = vpop.f32.mrf.mxu0
  %v270 = vpop.f32.mrf.mxu0
  %v271 = vadd.f32 %v59, %v270
  %v272 = vpop.f32.mrf.mxu0
  %273 = vmatprep.mubr.bf16.mxu0 0
  %274 = vmatmul.mubr.bf16.gmra.mxu0 %v170
  %v275 = vpop.f32.mrf.mxu0
  %v276 = vadd.f32 %v59, %v275
  %v277 = vpop.f32.mrf.mxu0
  %v278 = vpop.f32.mrf.mxu0
  %v279 = vadd.f32 %v59, %v278
  %v280 = vpop.f32.mrf.mxu0
  %281 = vmatprep.mubr.bf16.mxu0 0
  %282 = vmatmul.mubr.bf16.gmra.mxu0 %v173
  %v283 = vpop.f32.mrf.mxu0
  %v284 = vadd.f32 %v59, %v283
  %v285 = vpop.f32.mrf.mxu0
  %v286 = vpop.f32.mrf.mxu0
  %v287 = vadd.f32 %v59, %v286
  %v288 = vpop.f32.mrf.mxu0
  %289 = vmatprep.mubr.bf16.mxu0 0
  %290 = vmatmul.mubr.bf16.gmra.mxu0 %v176
  %v291 = vpop.f32.mrf.mxu0
  %v292 = vadd.f32 %v59, %v291
  %v293 = vpop.f32.mrf.mxu0
  %v294 = vpop.f32.mrf.mxu0
  %v295 = vadd.f32 %v59, %v294
  %v296 = vpop.f32.mrf.mxu0
  %297 = vmatprep.mubr.bf16.mxu0 0
  %298 = vmatmul.mubr.bf16.gmra.mxu0 %v179
  %v299 = vpop.f32.mrf.mxu0
  %v300 = vadd.f32 %v59, %v299
  %v301 = vpop.f32.mrf.mxu0
  %v302 = vpop.f32.mrf.mxu0
  %v303 = vadd.f32 %v59, %v302
  %v304 = vpop.f32.mrf.mxu0
  %305 = vmatprep.mubr.bf16.mxu0 0
  %306 = vmatmul.mubr.bf16.gmra.mxu0 %v182
  %v307 = vpop.f32.mrf.mxu0
  %v308 = vadd.f32 %v59, %v307
  %v309 = vpop.f32.mrf.mxu0
  %v310 = vpop.f32.mrf.mxu0
  %v311 = vadd.f32 %v59, %v310
  %v312 = vpop.f32.mrf.mxu0
  %313 = vmatprep.mubr.bf16.mxu0 0
  %314 = vmatmul.mubr.bf16.gmra.mxu0 %v185
  %v315 = vpop.f32.mrf.mxu0
  %v316 = vadd.f32 %v59, %v315
  %v317 = vpop.f32.mrf.mxu0
  %v318 = vpop.f32.mrf.mxu0
  %v319 = vadd.f32 %v59, %v318
  %v320 = vpop.f32.mrf.mxu0
  %321 = vmatprep.mubr.bf16.mxu0 0
  %322 = vmatmul.mubr.bf16.gmra.mxu0 %v188
  %v323 = vpop.f32.mrf.mxu0
  %v324 = vadd.f32 %v59, %v323
  %v325 = vpop.f32.mrf.mxu0
  %v326 = vpop.f32.mrf.mxu0
  %v327 = vadd.f32 %v59, %v326
  %v328 = vpop.f32.mrf.mxu0
  %329 = vmatprep.mubr.bf16.mxu0 0
  %330 = vmatmul.mubr.bf16.gmra.mxu0 %v191
  %v331 = vpop.f32.mrf.mxu0
  %v332 = vadd.f32 %v59, %v331
  %v333 = vpop.f32.mrf.mxu0
  %v334 = vpop.f32.mrf.mxu0
  %v335 = vadd.f32 %v59, %v334
  %v336 = vpop.f32.mrf.mxu0
  %337 = vmatprep.mubr.bf16.mxu0 0
  %338 = vmatmul.mubr.bf16.gmra.mxu0 %v194
  %v339 = vpop.f32.mrf.mxu0
  %v340 = vadd.f32 %v59, %v339
  %v341 = vpop.f32.mrf.mxu0
  %v342 = vpop.f32.mrf.mxu0
  %v343 = vadd.f32 %v59, %v342
  %v344 = vpop.f32.mrf.mxu0
  %345 = vmatprep.mubr.bf16.mxu0 0
  %346 = vmatmul.mubr.bf16.gmra.mxu0 %v197
  %v347 = vpop.f32.mrf.mxu0
  %v348 = vadd.f32 %v59, %v347
  %v349 = vpop.f32.mrf.mxu0
  %v350 = vpop.f32.mrf.mxu0
  %v351 = vadd.f32 %v59, %v350
  %v352 = vpop.f32.mrf.mxu0
  %353 = vmatprep.mubr.bf16.mxu0 0
  %354 = vmatmul.mubr.bf16.gmra.mxu0 %v200
  %v355 = vpop.f32.mrf.mxu0
  %v356 = vadd.f32 %v59, %v355
  %v357 = vpop.f32.mrf.mxu0
  %v358 = vpop.f32.mrf.mxu0
  %v359 = vadd.f32 %v59, %v358
  %v360 = vpop.f32.mrf.mxu0
  %361 = vmatprep.mubr.bf16.mxu0 0
  %362 = vmatmul.mubr.bf16.gmra.mxu0 %v203
  %v363 = vpop.f32.mrf.mxu0
  %v364 = vadd.f32 %v59, %v363
  %v365 = vpop.f32.mrf.mxu0
  %v366 = vpop.f32.mrf.mxu0
  %v367 = vadd.f32 %v59, %v366
  %v368 = vpop.f32.mrf.mxu0
  %369 = vdwg.mxu0
  %v370 = vpack.c.bf16 %v247, %v244
  %v371 = vpack.c.bf16 %v255, %v252
  %v372 = vpack.c.bf16 %v263, %v260
  %v373 = vpack.c.bf16 %v271, %v268
  %v374 = vpack.c.bf16 %v279, %v276
  %v375 = vpack.c.bf16 %v287, %v284
  %v376 = vpack.c.bf16 %v295, %v292
  %v377 = vpack.c.bf16 %v303, %v300
  %v378 = vpack.c.bf16 %v311, %v308
  %v379 = vpack.c.bf16 %v319, %v316
  %v380 = vpack.c.bf16 %v327, %v324
  %v381 = vpack.c.bf16 %v335, %v332
  %v382 = vpack.c.bf16 %v343, %v340
  %v383 = vpack.c.bf16 %v351, %v348
  %v384 = vpack.c.bf16 %v359, %v356
  %v385 = vpack.c.bf16 %v367, %v364
  %v402 = vunpack.c.l.b16 %v370
  %v403 = vunpack.c.h.b16 %v370
  %v404 = vunpack.c.l.b16 %v371
  %v405 = vunpack.c.h.b16 %v371
  %v406 = vunpack.c.l.b16 %v372
  %v407 = vunpack.c.h.b16 %v372
  %v408 = vunpack.c.l.b16 %v373
  %v409 = vunpack.c.h.b16 %v373
  %v410 = vunpack.c.l.b16 %v374
  %v411 = vunpack.c.h.b16 %v374
  %v412 = vunpack.c.l.b16 %v375
  %v413 = vunpack.c.h.b16 %v375
  %v414 = vunpack.c.l.b16 %v376
  %v415 = vunpack.c.h.b16 %v376
  %v416 = vunpack.c.l.b16 %v377
  %v417 = vunpack.c.h.b16 %v377
  %v418 = vunpack.c.l.b16 %v378
  %v419 = vunpack.c.h.b16 %v378
  %v420 = vunpack.c.l.b16 %v379
  %v421 = vunpack.c.h.b16 %v379
  %v422 = vunpack.c.l.b16 %v380
  %v423 = vunpack.c.h.b16 %v380
  %v424 = vunpack.c.l.b16 %v381
  %v425 = vunpack.c.h.b16 %v381
  %v426 = vunpack.c.l.b16 %v382
  %v427 = vunpack.c.h.b16 %v382
  %v428 = vunpack.c.l.b16 %v383
  %v429 = vunpack.c.h.b16 %v383
  %v430 = vunpack.c.l.b16 %v384
  %v431 = vunpack.c.h.b16 %v384
  %v432 = vunpack.c.l.b16 %v385
  %v433 = vunpack.c.h.b16 %v385
  %v434 = vpack.c.b16 %v402, %v402
  %v435 = vpack.c.b16 %v403, %v403
  %v436 = vpack.c.b16 %v404, %v404
  %v437 = vpack.c.b16 %v405, %v405
  %v438 = vpack.c.b16 %v406, %v406
  %v439 = vpack.c.b16 %v407, %v407
  %v440 = vpack.c.b16 %v408, %v408
  %v441 = vpack.c.b16 %v409, %v409
  %v442 = vpack.c.b16 %v410, %v410
  %v443 = vpack.c.b16 %v411, %v411
  %v444 = vpack.c.b16 %v412, %v412
  %v445 = vpack.c.b16 %v413, %v413
  %v446 = vpack.c.b16 %v414, %v414
  %v447 = vpack.c.b16 %v415, %v415
  %v448 = vpack.c.b16 %v416, %v416
  %v449 = vpack.c.b16 %v417, %v417
  %v450 = vpack.c.b16 %v418, %v418
  %v451 = vpack.c.b16 %v419, %v419
  %v452 = vpack.c.b16 %v420, %v420
  %v453 = vpack.c.b16 %v421, %v421
  %v454 = vpack.c.b16 %v422, %v422
  %v455 = vpack.c.b16 %v423, %v423
  %v456 = vpack.c.b16 %v424, %v424
  %v457 = vpack.c.b16 %v425, %v425
  %v458 = vpack.c.b16 %v426, %v426
  %v459 = vpack.c.b16 %v427, %v427
  %v460 = vpack.c.b16 %v428, %v428
  %v461 = vpack.c.b16 %v429, %v429
  %v462 = vpack.c.b16 %v430, %v430
  %v463 = vpack.c.b16 %v431, %v431
  %v464 = vpack.c.b16 %v432, %v432
  %v465 = vpack.c.b16 %v433, %v433
  %498 = vst [vmem:[%s3] sm:$0xf] %v434
  %499 = vst [vmem:[%s3 + $0x4] sm:$0xf] %v435
  %500 = vst [vmem:[%s3 + $0x8] sm:$0xf] %v436
  %501 = vst [vmem:[%s3 + $0xc] sm:$0xf] %v437
  %502 = vst [vmem:[%s3 + $0x10] sm:$0xf] %v438
  %503 = vst [vmem:[%s3 + $0x14] sm:$0xf] %v439
  %504 = vst [vmem:[%s3 + $0x18] sm:$0xf] %v440
  %505 = vst [vmem:[%s3 + $0x1c] sm:$0xf] %v441
  %506 = vst [vmem:[%s3 + $0x20] sm:$0xf] %v442
  %507 = vst [vmem:[%s3 + $0x24] sm:$0xf] %v443
  %508 = vst [vmem:[%s3 + $0x28] sm:$0xf] %v444
  %509 = vst [vmem:[%s3 + $0x2c] sm:$0xf] %v445
  %510 = vst [vmem:[%s3 + $0x30] sm:$0xf] %v446
  %511 = vst [vmem:[%s3 + $0x34] sm:$0xf] %v447
  %512 = vst [vmem:[%s3 + $0x38] sm:$0xf] %v448
  %513 = vst [vmem:[%s3 + $0x3c] sm:$0xf] %v449
  %514 = vst [vmem:[%s3 + $0x40] sm:$0xf] %v450
  %515 = vst [vmem:[%s3 + $0x44] sm:$0xf] %v451
  %516 = vst [vmem:[%s3 + $0x48] sm:$0xf] %v452
  %517 = vst [vmem:[%s3 + $0x4c] sm:$0xf] %v453
  %518 = vst [vmem:[%s3 + $0x50] sm:$0xf] %v454
  %519 = vst [vmem:[%s3 + $0x54] sm:$0xf] %v455
  %520 = vst [vmem:[%s3 + $0x58] sm:$0xf] %v456
  %521 = vst [vmem:[%s3 + $0x5c] sm:$0xf] %v457
  %522 = vst [vmem:[%s3 + $0x60] sm:$0xf] %v458
  %523 = vst [vmem:[%s3 + $0x64] sm:$0xf] %v459
  %524 = vst [vmem:[%s3 + $0x68] sm:$0xf] %v460
  %525 = vst [vmem:[%s3 + $0x6c] sm:$0xf] %v461
  %526 = vst [vmem:[%s3 + $0x70] sm:$0xf] %v462
  %527 = vst [vmem:[%s3 + $0x74] sm:$0xf] %v463
  %528 = vst [vmem:[%s3 + $0x78] sm:$0xf] %v464
  %529 = vst [vmem:[%s3 + $0x7c] sm:$0xf] %v465
  %s530 = smul.u32 0, 256
  %v531 = vlaneseq
  %v532 = vshrl.u32 %v531, 7
  %v533 = vadd.s32 %v532, 8
  %v534 = vadd.s32 %v532, 16
  %v535 = vadd.s32 %v532, 24
  %v536 = vadd.s32 %v532, 32
  %v537 = vadd.s32 %v532, 40
  %v538 = vadd.s32 %v532, 48
  %v539 = vadd.s32 %v532, 56
  %v540 = vadd.s32 %v532, 64
  %v541 = vadd.s32 %v532, 72
  %v542 = vadd.s32 %v532, 80
  %v543 = vadd.s32 %v532, 88
  %v544 = vadd.s32 %v532, 96
  %v545 = vadd.s32 %v532, 104
  %v546 = vadd.s32 %v532, 112
  %v547 = vadd.s32 %v532, 120
  %v548 = vadd.s32 %v532, 128
  %v549 = vadd.s32 %v532, 136
  %v550 = vadd.s32 %v532, 144
  %v551 = vadd.s32 %v532, 152
  %v552 = vadd.s32 %v532, 160
  %v553 = vadd.s32 %v532, 168
  %v554 = vadd.s32 %v532, 176
  %v555 = vadd.s32 %v532, 184
  %v556 = vadd.s32 %v532, 192
  %v557 = vadd.s32 %v532, 200
  %v558 = vadd.s32 %v532, 208
  %v559 = vadd.s32 %v532, 216
  %v560 = vadd.s32 %v532, 224
  %v561 = vadd.s32 %v532, 232
  %v562 = vadd.s32 %v532, 240
  %v563 = vadd.s32 %v532, 248
  %v564 = vstv %s530
  %v565 = vadd.s32 %v564, %v532
  %v566 = vadd.s32 %v564, %v533
  %v567 = vadd.s32 %v564, %v534
  %v568 = vadd.s32 %v564, %v535
  %v569 = vadd.s32 %v564, %v536
  %v570 = vadd.s32 %v564, %v537
  %v571 = vadd.s32 %v564, %v538
  %v572 = vadd.s32 %v564, %v539
  %v573 = vadd.s32 %v564, %v540
  %v574 = vadd.s32 %v564, %v541
  %v575 = vadd.s32 %v564, %v542
  %v576 = vadd.s32 %v564, %v543
  %v577 = vadd.s32 %v564, %v544
  %v578 = vadd.s32 %v564, %v545
  %v579 = vadd.s32 %v564, %v546
  %v580 = vadd.s32 %v564, %v547
  %v581 = vadd.s32 %v564, %v548
  %v582 = vadd.s32 %v564, %v549
  %v583 = vadd.s32 %v564, %v550
  %v584 = vadd.s32 %v564, %v551
  %v585 = vadd.s32 %v564, %v552
  %v586 = vadd.s32 %v564, %v553
  %v587 = vadd.s32 %v564, %v554
  %v588 = vadd.s32 %v564, %v555
  %v589 = vadd.s32 %v564, %v556
  %v590 = vadd.s32 %v564, %v557
  %v591 = vadd.s32 %v564, %v558
  %v592 = vadd.s32 %v564, %v559
  %v593 = vadd.s32 %v564, %v560
  %v594 = vadd.s32 %v564, %v561
  %v595 = vadd.s32 %v564, %v562
  %v596 = vadd.s32 %v564, %v563
  %vm597 = vcmp.lt.s32.totalorder %v565, 256
  %vm598 = vcmp.lt.s32.totalorder %v566, 256
  %vm599 = vcmp.lt.s32.totalorder %v567, 256
  %vm600 = vcmp.lt.s32.totalorder %v568, 256
  %vm601 = vcmp.lt.s32.totalorder %v569, 256
  %vm602 = vcmp.lt.s32.totalorder %v570, 256
  %vm603 = vcmp.lt.s32.totalorder %v571, 256
  %vm604 = vcmp.lt.s32.totalorder %v572, 256
  %vm605 = vcmp.lt.s32.totalorder %v573, 256
  %vm606 = vcmp.lt.s32.totalorder %v574, 256
  %vm607 = vcmp.lt.s32.totalorder %v575, 256
  %vm608 = vcmp.lt.s32.totalorder %v576, 256
  %vm609 = vcmp.lt.s32.totalorder %v577, 256
  %vm610 = vcmp.lt.s32.totalorder %v578, 256
  %vm611 = vcmp.lt.s32.totalorder %v579, 256
  %vm612 = vcmp.lt.s32.totalorder %v580, 256
  %vm613 = vcmp.lt.s32.totalorder %v581, 256
  %vm614 = vcmp.lt.s32.totalorder %v582, 256
  %vm615 = vcmp.lt.s32.totalorder %v583, 256
  %vm616 = vcmp.lt.s32.totalorder %v584, 256
  %vm617 = vcmp.lt.s32.totalorder %v585, 256
  %vm618 = vcmp.lt.s32.totalorder %v586, 256
  %vm619 = vcmp.lt.s32.totalorder %v587, 256
  %vm620 = vcmp.lt.s32.totalorder %v588, 256
  %vm621 = vcmp.lt.s32.totalorder %v589, 256
  %vm622 = vcmp.lt.s32.totalorder %v590, 256
  %vm623 = vcmp.lt.s32.totalorder %v591, 256
  %vm624 = vcmp.lt.s32.totalorder %v592, 256
  %vm625 = vcmp.lt.s32.totalorder %v593, 256
  %vm626 = vcmp.lt.s32.totalorder %v594, 256
  %vm627 = vcmp.lt.s32.totalorder %v595, 256
  %vm628 = vcmp.lt.s32.totalorder %v596, 256
  %v629 = vsel %vm597, 1, 0
  %v630 = vsel %vm598, 1, 0
  %v631 = vsel %vm599, 1, 0
  %v632 = vsel %vm600, 1, 0
  %v633 = vsel %vm601, 1, 0
  %v634 = vsel %vm602, 1, 0
  %v635 = vsel %vm603, 1, 0
  %v636 = vsel %vm604, 1, 0
  %v637 = vsel %vm605, 1, 0
  %v638 = vsel %vm606, 1, 0
  %v639 = vsel %vm607, 1, 0
  %v640 = vsel %vm608, 1, 0
  %v641 = vsel %vm609, 1, 0
  %v642 = vsel %vm610, 1, 0
  %v643 = vsel %vm611, 1, 0
  %v644 = vsel %vm612, 1, 0
  %v645 = vsel %vm613, 1, 0
  %v646 = vsel %vm614, 1, 0
  %v647 = vsel %vm615, 1, 0
  %v648 = vsel %vm616, 1, 0
  %v649 = vsel %vm617, 1, 0
  %v650 = vsel %vm618, 1, 0
  %v651 = vsel %vm619, 1, 0
  %v652 = vsel %vm620, 1, 0
  %v653 = vsel %vm621, 1, 0
  %v654 = vsel %vm622, 1, 0
  %v655 = vsel %vm623, 1, 0
  %v656 = vsel %vm624, 1, 0
  %v657 = vsel %vm625, 1, 0
  %v658 = vsel %vm626, 1, 0
  %v659 = vsel %vm627, 1, 0
  %v660 = vsel %vm628, 1, 0
  %vm661 = vcmp.eq.s32.totalorder %v629, 1
  %vm662 = vcmp.eq.s32.totalorder %v630, 1
  %vm663 = vcmp.eq.s32.totalorder %v631, 1
  %vm664 = vcmp.eq.s32.totalorder %v632, 1
  %vm665 = vcmp.eq.s32.totalorder %v633, 1
  %vm666 = vcmp.eq.s32.totalorder %v634, 1
  %vm667 = vcmp.eq.s32.totalorder %v635, 1
  %vm668 = vcmp.eq.s32.totalorder %v636, 1
  %vm669 = vcmp.eq.s32.totalorder %v637, 1
  %vm670 = vcmp.eq.s32.totalorder %v638, 1
  %vm671 = vcmp.eq.s32.totalorder %v639, 1
  %vm672 = vcmp.eq.s32.totalorder %v640, 1
  %vm673 = vcmp.eq.s32.totalorder %v641, 1
  %vm674 = vcmp.eq.s32.totalorder %v642, 1
  %vm675 = vcmp.eq.s32.totalorder %v643, 1
  %vm676 = vcmp.eq.s32.totalorder %v644, 1
  %vm677 = vcmp.eq.s32.totalorder %v645, 1
  %vm678 = vcmp.eq.s32.totalorder %v646, 1
  %vm679 = vcmp.eq.s32.totalorder %v647, 1
  %vm680 = vcmp.eq.s32.totalorder %v648, 1
  %vm681 = vcmp.eq.s32.totalorder %v649, 1
  %vm682 = vcmp.eq.s32.totalorder %v650, 1
  %vm683 = vcmp.eq.s32.totalorder %v651, 1
  %vm684 = vcmp.eq.s32.totalorder %v652, 1
  %vm685 = vcmp.eq.s32.totalorder %v653, 1
  %vm686 = vcmp.eq.s32.totalorder %v654, 1
  %vm687 = vcmp.eq.s32.totalorder %v655, 1
  %vm688 = vcmp.eq.s32.totalorder %v656, 1
  %vm689 = vcmp.eq.s32.totalorder %v657, 1
  %vm690 = vcmp.eq.s32.totalorder %v658, 1
  %vm691 = vcmp.eq.s32.totalorder %v659, 1
  %vm692 = vcmp.eq.s32.totalorder %v660, 1
  %v693 = vsel %vm661, %v244, 0.0
  %v694 = vsel %vm662, %v247, 0.0
  %v695 = vsel %vm663, %v252, 0.0
  %v696 = vsel %vm664, %v255, 0.0
  %v697 = vsel %vm665, %v260, 0.0
  %v698 = vsel %vm666, %v263, 0.0
  %v699 = vsel %vm667, %v268, 0.0
  %v700 = vsel %vm668, %v271, 0.0
  %v701 = vsel %vm669, %v276, 0.0
  %v702 = vsel %vm670, %v279, 0.0
  %v703 = vsel %vm671, %v284, 0.0
  %v704 = vsel %vm672, %v287, 0.0
  %v705 = vsel %vm673, %v292, 0.0
  %v706 = vsel %vm674, %v295, 0.0
  %v707 = vsel %vm675, %v300, 0.0
  %v708 = vsel %vm676, %v303, 0.0
  %v709 = vsel %vm677, %v308, 0.0
  %v710 = vsel %vm678, %v311, 0.0
  %v711 = vsel %vm679, %v316, 0.0
  %v712 = vsel %vm680, %v319, 0.0
  %v713 = vsel %vm681, %v324, 0.0
  %v714 = vsel %vm682, %v327, 0.0
  %v715 = vsel %vm683, %v332, 0.0
  %v716 = vsel %vm684, %v335, 0.0
  %v717 = vsel %vm685, %v340, 0.0
  %v718 = vsel %vm686, %v343, 0.0
  %v719 = vsel %vm687, %v348, 0.0
  %v720 = vsel %vm688, %v351, 0.0
  %v721 = vsel %vm689, %v356, 0.0
  %v722 = vsel %vm690, %v359, 0.0
  %v723 = vsel %vm691, %v364, 0.0
  %v724 = vsel %vm692, %v367, 0.0
  %v725 = vadd.f32 %v693, %v694
  %v726 = vadd.f32 %v725, %v695
  %v727 = vadd.f32 %v726, %v696
  %v728 = vadd.f32 %v727, %v697
  %v729 = vadd.f32 %v728, %v698
  %v730 = vadd.f32 %v729, %v699
  %v731 = vadd.f32 %v730, %v700
  %v732 = vadd.f32 %v731, %v701
  %v733 = vadd.f32 %v732, %v702
  %v734 = vadd.f32 %v733, %v703
  %v735 = vadd.f32 %v734, %v704
  %v736 = vadd.f32 %v735, %v705
  %v737 = vadd.f32 %v736, %v706
  %v738 = vadd.f32 %v737, %v707
  %v739 = vadd.f32 %v738, %v708
  %v740 = vadd.f32 %v739, %v709
  %v741 = vadd.f32 %v740, %v710
  %v742 = vadd.f32 %v741, %v711
  %v743 = vadd.f32 %v742, %v712
  %v744 = vadd.f32 %v743, %v713
  %v745 = vadd.f32 %v744, %v714
  %v746 = vadd.f32 %v745, %v715
  %v747 = vadd.f32 %v746, %v716
  %v748 = vadd.f32 %v747, %v717
  %v749 = vadd.f32 %v748, %v718
  %v750 = vadd.f32 %v749, %v719
  %v751 = vadd.f32 %v750, %v720
  %v752 = vadd.f32 %v751, %v721
  %v753 = vadd.f32 %v752, %v722
  %v754 = vadd.f32 %v753, %v723
  %v755 = vadd.f32 %v754, %v724
  %v756 = vrot.slane %v755, 4
  %v757 = vadd.f32 %v755, %v756
  %v758 = vrot.slane %v757, 2
  %v759 = vadd.f32 %v757, %v758
  %v760 = vrot.slane %v759, 1
  %v761 = vadd.f32 %v759, %v760
  %762 = vst [vmem:[%s4] sm:$0x1] %v761
  %v763 = vmul.f32 %v693, %v693
  %v764 = vmul.f32 %v694, %v694
  %v765 = vmul.f32 %v695, %v695
  %v766 = vmul.f32 %v696, %v696
  %v767 = vmul.f32 %v697, %v697
  %v768 = vmul.f32 %v698, %v698
  %v769 = vmul.f32 %v699, %v699
  %v770 = vmul.f32 %v700, %v700
  %v771 = vmul.f32 %v701, %v701
  %v772 = vmul.f32 %v702, %v702
  %v773 = vmul.f32 %v703, %v703
  %v774 = vmul.f32 %v704, %v704
  %v775 = vmul.f32 %v705, %v705
  %v776 = vmul.f32 %v706, %v706
  %v777 = vmul.f32 %v707, %v707
  %v778 = vmul.f32 %v708, %v708
  %v779 = vmul.f32 %v709, %v709
  %v780 = vmul.f32 %v710, %v710
  %v781 = vmul.f32 %v711, %v711
  %v782 = vmul.f32 %v712, %v712
  %v783 = vmul.f32 %v713, %v713
  %v784 = vmul.f32 %v714, %v714
  %v785 = vmul.f32 %v715, %v715
  %v786 = vmul.f32 %v716, %v716
  %v787 = vmul.f32 %v717, %v717
  %v788 = vmul.f32 %v718, %v718
  %v789 = vmul.f32 %v719, %v719
  %v790 = vmul.f32 %v720, %v720
  %v791 = vmul.f32 %v721, %v721
  %v792 = vmul.f32 %v722, %v722
  %v793 = vmul.f32 %v723, %v723
  %v794 = vmul.f32 %v724, %v724
  %v795 = vadd.f32 %v763, %v764
  %v796 = vadd.f32 %v795, %v765
  %v797 = vadd.f32 %v796, %v766
  %v798 = vadd.f32 %v797, %v767
  %v799 = vadd.f32 %v798, %v768
  %v800 = vadd.f32 %v799, %v769
  %v801 = vadd.f32 %v800, %v770
  %v802 = vadd.f32 %v801, %v771
  %v803 = vadd.f32 %v802, %v772
  %v804 = vadd.f32 %v803, %v773
  %v805 = vadd.f32 %v804, %v774
  %v806 = vadd.f32 %v805, %v775
  %v807 = vadd.f32 %v806, %v776
  %v808 = vadd.f32 %v807, %v777
  %v809 = vadd.f32 %v808, %v778
  %v810 = vadd.f32 %v809, %v779
  %v811 = vadd.f32 %v810, %v780
  %v812 = vadd.f32 %v811, %v781
  %v813 = vadd.f32 %v812, %v782
  %v814 = vadd.f32 %v813, %v783
  %v815 = vadd.f32 %v814, %v784
  %v816 = vadd.f32 %v815, %v785
  %v817 = vadd.f32 %v816, %v786
  %v818 = vadd.f32 %v817, %v787
  %v819 = vadd.f32 %v818, %v788
  %v820 = vadd.f32 %v819, %v789
  %v821 = vadd.f32 %v820, %v790
  %v822 = vadd.f32 %v821, %v791
  %v823 = vadd.f32 %v822, %v792
  %v824 = vadd.f32 %v823, %v793
  %v825 = vadd.f32 %v824, %v794
  %v826 = vrot.slane %v825, 4
  %v827 = vadd.f32 %v825, %v826
  %v828 = vrot.slane %v827, 2
  %v829 = vadd.f32 %v827, %v828
  %v830 = vrot.slane %v829, 1
  %v831 = vadd.f32 %v829, %v830
  %832 = vst [vmem:[%s4 + $0x1] sm:$0x1] %v831
  // Predicated region
  $region14: #{_lambda_.22} parent=0 // pred_check
    _
  $region15: #{_lambda_.22} parent=0 // pred_check_branch
    %834 = sbr.rel (0) target = $region17
  $region16: #{_lambda_.22} parent=0 // pred_region
    _
  $region17: #{_lambda_.22} parent=0 // pred_fallthru
    _
  // Predicated region
  $region18: #{_lambda_.22} parent=0 // pred_check
    _
  $region19: #{_lambda_.22} parent=0 // pred_check_branch
    %836 = sbr.rel (0) target = $region21
  $region20: #{_lambda_.22} parent=0 // pred_region
    _
  $region21: #{_lambda_.22} parent=0 // pred_fallthru
    _
  // Predicated region
  $region22: #{_lambda_.22} parent=0 // pred_check
    _
  $region23: #{_lambda_.22} parent=0 // pred_check_branch
    %838 = sbr.rel (0) target = $region25
  $region24: #{_lambda_.22} parent=0 // pred_region
    _
  $region25: #{_lambda_.22} parent=0 // pred_fallthru
    _
  // Predicated region
  $region26: #{_lambda_.22} parent=0 // pred_check
    _
  $region27: #{_lambda_.22} parent=0 // pred_check_branch
    %840 = sbr.rel (0) target = $region29
  $region28: #{_lambda_.22} parent=0 // pred_region
    _
  $region29: #{_lambda_.22} parent=0 // pred_fallthru
    _

// kernel: _lambda_.28
$region0: #{_lambda_.28}
  #allocation0 [shape = 'u32[]', space=smem, size = 0x4, offset = 0x4, fixed_abs, tag = 'smem constant byte address 0x4 - core index']
  #allocation1 [shape = 'u32[144,128]{1,0:T(1,128)}', space=vmem, size = 0x12000, scoped, tag = 'internal scratch']
  %s0 = inlined_call_operand.vmem [shape: bf16[16,64], index: 0, kind: input, shape index: {}]
  %s1 = inlined_call_operand.vmem [shape: bf16[64,128], index: 1, kind: input, shape index: {}]
  %s2 = inlined_call_operand.vmem [shape: f32[1,128], index: 2, kind: input, shape index: {}]
  %s3 = inlined_call_operand.vmem [shape: f32[16,128], index: 3, kind: output, shape index: {}]
  %s4 = sld [smem:[#allocation0]]
  $region22: #{_lambda_.28} parent=0
    _
  %s6 = ssub.s32 1, %s4
  %s7 = scalar_select 0, %s6, %s4
  // Predicated region
  $region2: #{_lambda_.28} parent=0 // pred_check
    _
  $region3: #{_lambda_.28} parent=0 // pred_check_branch
    %9 = sbr.rel (0) target = $region5
  $region4: #{_lambda_.28} parent=0 // pred_region
    _
  $region5: #{_lambda_.28} parent=0 // pred_fallthru
    _
  // Predicated region
  $region6: #{_lambda_.28} parent=0 // pred_check
    _
  $region7: #{_lambda_.28} parent=0 // pred_check_branch
    %11 = sbr.rel (0) target = $region9
  $region8: #{_lambda_.28} parent=0 // pred_region
    _
  $region9: #{_lambda_.28} parent=0 // pred_fallthru
    _
  // Predicated region
  $region10: #{_lambda_.28} parent=0 // pred_check
    _
  $region11: #{_lambda_.28} parent=0 // pred_check_branch
    %13 = sbr.rel (0) target = $region13
  $region12: #{_lambda_.28} parent=0 // pred_region
    _
  $region13: #{_lambda_.28} parent=0 // pred_fallthru
    _
  %v15 = vld [vmem:[%s0] sm:$0xf]
  %v16 = vld [vmem:[%s0 + $0x4] sm:$0xf]
  %v17 = vld [vmem:[%s1] sm:$0xf]
  %v18 = vld [vmem:[%s1 + $0x4] sm:$0xf]
  %v19 = vld [vmem:[%s1 + $0x8] sm:$0xf]
  %v20 = vld [vmem:[%s1 + $0xc] sm:$0xf]
  %v21 = vld [vmem:[%s1 + $0x10] sm:$0xf]
  %v22 = vld [vmem:[%s1 + $0x14] sm:$0xf]
  %v23 = vld [vmem:[%s1 + $0x18] sm:$0xf]
  %v24 = vld [vmem:[%s1 + $0x1c] sm:$0xf]
  %v25 = vld [vmem:[%s2] sm:$0x1]
  %v27 = vlaneseq
  %v28 = vshrl.u32 %v27, 7
  %v29 = vsub.s32 0, %v28
  %v30 = vrot.slane %v25, %v29
  %v34 = vunpack.c.l.b16 %v15
  %v35 = vunpack.c.l.b16 %v16
  %v36 = vpack.c.b16 %v35, %v34
  %v45 = vunpack.c.l.b16 %v17
  %v46 = vunpack.c.l.b16 %v18
  %v47 = vunpack.c.l.b16 %v19
  %v48 = vunpack.c.l.b16 %v20
  %v49 = vunpack.c.l.b16 %v21
  %v50 = vunpack.c.l.b16 %v22
  %v51 = vunpack.c.l.b16 %v23
  %v52 = vunpack.c.l.b16 %v24
  %v53 = vpack.c.b16 %v46, %v45
  %v54 = vpack.c.b16 %v48, %v47
  %v55 = vpack.c.b16 %v50, %v49
  %v56 = vpack.c.b16 %v52, %v51
  %vm61 = vcmask 523264
  %v63 = vsel %vm61, %v36, 0
  %65 = vmatprep.subr.bf16.mxu0 0
  %66 = vmatpush1.bf16.msra.mxu0 0
  %67 = vmatprep.subr.bf16.mxu0 0
  %68 = vmatpush1.bf16.msra.mxu0 0
  %69 = vmatprep.subr.bf16.mxu0 0
  %70 = vmatpush1.bf16.msra.mxu0 0
  %71 = vmatprep.subr.bf16.mxu0 0
  %72 = vmatpush1.bf16.msra.mxu0 0
  %73 = vmatprep.subr.bf16.mxu0 0
  %74 = vmatpush1.bf16.msra.mxu0 %v56
  %75 = vmatprep.subr.bf16.mxu0 0
  %76 = vmatpush1.bf16.msra.mxu0 %v55
  %77 = vmatprep.subr.bf16.mxu0 0
  %78 = vmatpush1.bf16.msra.mxu0 %v54
  %79 = vmatprep.subr.bf16.mxu0 0
  %80 = vmatpush1.bf16.msra.mxu0 %v53
  %81 = vmatprep.subr.bf16.mxu0 0
  %82 = vmatpush2.bf16.msra.mxu0 0
  %83 = vmatprep.subr.bf16.mxu0 0
  %84 = vmatpush2.bf16.msra.mxu0 0
  %85 = vmatprep.subr.bf16.mxu0 0
  %86 = vmatpush2.bf16.msra.mxu0 0
  %87 = vmatprep.subr.bf16.mxu0 0
  %88 = vmatpush2.bf16.msra.mxu0 0
  %89 = vmatprep.subr.bf16.mxu0 0
  %90 = vmatpush2.bf16.msra.mxu0 0
  %91 = vmatprep.subr.bf16.mxu0 0
  %92 = vmatpush2.bf16.msra.mxu0 0
  %93 = vmatprep.subr.bf16.mxu0 0
  %94 = vmatpush2.bf16.msra.mxu0 0
  %95 = vmatprep.subr.bf16.mxu0 0
  %96 = vmatpush2.bf16.msra.mxu0 0
  %97 = vmatprep.mubr.bf16.mxu0 0
  %98 = vmatmul.mubr.bf16.gmra.mxu0 %v63
  %v99 = vpop.f32.mrf.mxu0
  %v100 = vadd.f32 %v30, %v99
  %v101 = vpop.f32.mrf.mxu0
  %v102 = vpop.f32.mrf.mxu0
  %v103 = vadd.f32 %v30, %v102
  %v104 = vpop.f32.mrf.mxu0
  %105 = vdwg.mxu0
  %106 = vst [vmem:[%s3] sm:$0xff] %v100
  %107 = vst [vmem:[%s3 + $0x8] sm:$0xff] %v103
  // Predicated region
  $region14: #{_lambda_.28} parent=0 // pred_check
    _
  $region15: #{_lambda_.28} parent=0 // pred_check_branch
    %109 = sbr.rel (0) target = $region17
  $region16: #{_lambda_.28} parent=0 // pred_region
    _
  $region17: #{_lambda_.28} parent=0 // pred_fallthru
    _
  // Predicated region
  $region18: #{_lambda_.28} parent=0 // pred_check
    _
  $region19: #{_lambda_.28} parent=0 // pred_check_branch
    %111 = sbr.rel (0) target = $region21
  $region20: #{_lambda_.28} parent=0 // pred_region
    _
  $region21: #{_lambda_.28} parent=0 // pred_fallthru
    _

// kernel: _lambda_.29
$region0: #{_lambda_.29}
  #allocation0 [shape = 'u32[]', space=smem, size = 0x4, offset = 0x4, fixed_abs, tag = 'smem constant byte address 0x4 - core index']
  #allocation1 [shape = 'u32[144,128]{1,0:T(1,128)}', space=vmem, size = 0x12000, scoped, tag = 'internal scratch']
  %s0 = inlined_call_operand.vmem [shape: f32[16,8], index: 0, kind: input, shape index: {}]
  %s1 = inlined_call_operand.vmem [shape: bf16[8,128], index: 1, kind: input, shape index: {}]
  %s2 = inlined_call_operand.vmem [shape: f32[1,128], index: 2, kind: input, shape index: {}]
  %s3 = inlined_call_operand.vmem [shape: f32[16,128], index: 3, kind: output, shape index: {}]
  %s4 = sld [smem:[#allocation0]]
  $region22: #{_lambda_.29} parent=0
    _
  %s6 = ssub.s32 1, %s4
  %s7 = scalar_select 0, %s6, %s4
  // Predicated region
  $region2: #{_lambda_.29} parent=0 // pred_check
    _
  $region3: #{_lambda_.29} parent=0 // pred_check_branch
    %9 = sbr.rel (0) target = $region5
  $region4: #{_lambda_.29} parent=0 // pred_region
    _
  $region5: #{_lambda_.29} parent=0 // pred_fallthru
    _
  // Predicated region
  $region6: #{_lambda_.29} parent=0 // pred_check
    _
  $region7: #{_lambda_.29} parent=0 // pred_check_branch
    %11 = sbr.rel (0) target = $region9
  $region8: #{_lambda_.29} parent=0 // pred_region
    _
  $region9: #{_lambda_.29} parent=0 // pred_fallthru
    _
  // Predicated region
  $region10: #{_lambda_.29} parent=0 // pred_check
    _
  $region11: #{_lambda_.29} parent=0 // pred_check_branch
    %13 = sbr.rel (0) target = $region13
  $region12: #{_lambda_.29} parent=0 // pred_region
    _
  $region13: #{_lambda_.29} parent=0 // pred_fallthru
    _
  %v15 = vld [vmem:[%s0] sm:$0xff]
  %v16 = vld [vmem:[%s0 + $0x8] sm:$0xff]
  %v17 = vpack.c.bf16 %v16, %v15
  %v18 = vld [vmem:[%s1] sm:$0xf]
  %v19 = vld [vmem:[%s2] sm:$0x1]
  %v21 = vlaneseq
  %v22 = vshrl.u32 %v21, 7
  %v23 = vsub.s32 0, %v22
  %v24 = vrot.slane %v19, %v23
  %vm26 = vcmask 64512
  %v28 = vsel %vm26, %v17, 0
  %vm30 = vcmask 1043456
  %v32 = vsel %vm30, %v18, 0
  %34 = vmatprep.subr.bf16.mxu0 0
  %35 = vmatpush1.bf16.msra.mxu0 0
  %36 = vmatprep.subr.bf16.mxu0 0
  %37 = vmatpush1.bf16.msra.mxu0 0
  %38 = vmatprep.subr.bf16.mxu0 0
  %39 = vmatpush1.bf16.msra.mxu0 0
  %40 = vmatprep.subr.bf16.mxu0 0
  %41 = vmatpush1.bf16.msra.mxu0 0
  %42 = vmatprep.subr.bf16.mxu0 0
  %43 = vmatpush1.bf16.msra.mxu0 0
  %44 = vmatprep.subr.bf16.mxu0 0
  %45 = vmatpush1.bf16.msra.mxu0 0
  %46 = vmatprep.subr.bf16.mxu0 0
  %47 = vmatpush1.bf16.msra.mxu0 0
  %48 = vmatprep.subr.bf16.mxu0 0
  %49 = vmatpush1.bf16.msra.mxu0 %v32
  %50 = vmatprep.subr.bf16.mxu0 0
  %51 = vmatpush2.bf16.msra.mxu0 0
  %52 = vmatprep.subr.bf16.mxu0 0
  %53 = vmatpush2.bf16.msra.mxu0 0
  %54 = vmatprep.subr.bf16.mxu0 0
  %55 = vmatpush2.bf16.msra.mxu0 0
  %56 = vmatprep.subr.bf16.mxu0 0
  %57 = vmatpush2.bf16.msra.mxu0 0
  %58 = vmatprep.subr.bf16.mxu0 0
  %59 = vmatpush2.bf16.msra.mxu0 0
  %60 = vmatprep.subr.bf16.mxu0 0
  %61 = vmatpush2.bf16.msra.mxu0 0
  %62 = vmatprep.subr.bf16.mxu0 0
  %63 = vmatpush2.bf16.msra.mxu0 0
  %64 = vmatprep.subr.bf16.mxu0 0
  %65 = vmatpush2.bf16.msra.mxu0 0
  %66 = vmatprep.mubr.bf16.mxu0 0
  %67 = vmatmul.mubr.bf16.gmra.mxu0 %v28
  %v68 = vpop.f32.mrf.mxu0
  %v69 = vadd.f32 %v24, %v68
  %v70 = vpop.f32.mrf.mxu0
  %v71 = vpop.f32.mrf.mxu0
  %v72 = vadd.f32 %v24, %v71
  %v73 = vpop.f32.mrf.mxu0
  %74 = vdwg.mxu0
  %75 = vst [vmem:[%s3] sm:$0xff] %v69
  %76 = vst [vmem:[%s3 + $0x8] sm:$0xff] %v72
  // Predicated region
  $region14: #{_lambda_.29} parent=0 // pred_check
    _
  $region15: #{_lambda_.29} parent=0 // pred_check_branch
    %78 = sbr.rel (0) target = $region17
  $region16: #{_lambda_.29} parent=0 // pred_region
    _
  $region17: #{_lambda_.29} parent=0 // pred_fallthru
    _
  // Predicated region
  $region18: #{_lambda_.29} parent=0 // pred_check
    _
  $region19: #{_lambda_.29} parent=0 // pred_check_branch
    %80 = sbr.rel (0) target = $region21
  $region20: #{_lambda_.29} parent=0 // pred_region
    _
  $region21: #{_lambda_.29} parent=0 // pred_fallthru
    _

// kernel: _lambda_.30
$region0: #{_lambda_.30}
  #allocation0 [shape = 'u32[]', space=smem, size = 0x4, offset = 0x4, fixed_abs, tag = 'smem constant byte address 0x4 - core index']
  #allocation1 [shape = 'u32[144,128]{1,0:T(1,128)}', space=vmem, size = 0x12000, scoped, tag = 'internal scratch']
  %s0 = inlined_call_operand.vmem [shape: bf16[64,32], index: 0, kind: input, shape index: {}]
  %s1 = inlined_call_operand.vmem [shape: bf16[32,128], index: 1, kind: input, shape index: {}]
  %s2 = inlined_call_operand.vmem [shape: f32[1,128], index: 2, kind: input, shape index: {}]
  %s3 = inlined_call_operand.vmem [shape: f32[64,128], index: 3, kind: output, shape index: {}]
  %s4 = sld [smem:[#allocation0]]
  $region22: #{_lambda_.30} parent=0
    _
  %s6 = ssub.s32 1, %s4
  %s7 = scalar_select 0, %s6, %s4
  // Predicated region
  $region2: #{_lambda_.30} parent=0 // pred_check
    _
  $region3: #{_lambda_.30} parent=0 // pred_check_branch
    %9 = sbr.rel (0) target = $region5
  $region4: #{_lambda_.30} parent=0 // pred_region
    _
  $region5: #{_lambda_.30} parent=0 // pred_fallthru
    _
  // Predicated region
  $region6: #{_lambda_.30} parent=0 // pred_check
    _
  $region7: #{_lambda_.30} parent=0 // pred_check_branch
    %11 = sbr.rel (0) target = $region9
  $region8: #{_lambda_.30} parent=0 // pred_region
    _
  $region9: #{_lambda_.30} parent=0 // pred_fallthru
    _
  // Predicated region
  $region10: #{_lambda_.30} parent=0 // pred_check
    _
  $region11: #{_lambda_.30} parent=0 // pred_check_branch
    %13 = sbr.rel (0) target = $region13
  $region12: #{_lambda_.30} parent=0 // pred_region
    _
  $region13: #{_lambda_.30} parent=0 // pred_fallthru
    _
  %v15 = vld [vmem:[%s0] sm:$0xf]
  %v16 = vld [vmem:[%s0 + $0x4] sm:$0xf]
  %v17 = vld [vmem:[%s0 + $0x8] sm:$0xf]
  %v18 = vld [vmem:[%s0 + $0xc] sm:$0xf]
  %v19 = vld [vmem:[%s0 + $0x10] sm:$0xf]
  %v20 = vld [vmem:[%s0 + $0x14] sm:$0xf]
  %v21 = vld [vmem:[%s0 + $0x18] sm:$0xf]
  %v22 = vld [vmem:[%s0 + $0x1c] sm:$0xf]
  %v23 = vld [vmem:[%s1] sm:$0xf]
  %v24 = vld [vmem:[%s1 + $0x4] sm:$0xf]
  %v25 = vld [vmem:[%s1 + $0x8] sm:$0xf]
  %v26 = vld [vmem:[%s1 + $0xc] sm:$0xf]
  %v27 = vld [vmem:[%s2] sm:$0x1]
  %v29 = vlaneseq
  %v30 = vshrl.u32 %v29, 7
  %v31 = vsub.s32 0, %v30
  %v32 = vrot.slane %v27, %v31
  %v42 = vunpack.c.l.b16 %v15
  %v43 = vunpack.c.l.b16 %v16
  %v44 = vunpack.c.l.b16 %v17
  %v45 = vunpack.c.l.b16 %v18
  %v46 = vunpack.c.l.b16 %v19
  %v47 = vunpack.c.l.b16 %v20
  %v48 = vunpack.c.l.b16 %v21
  %v49 = vunpack.c.l.b16 %v22
  %v50 = vpack.c.b16 %v43, %v42
  %v51 = vpack.c.b16 %v45, %v44
  %v52 = vpack.c.b16 %v47, %v46
  %v53 = vpack.c.b16 %v49, %v48
  %v58 = vunpack.c.l.b16 %v23
  %v59 = vunpack.c.l.b16 %v24
  %v60 = vunpack.c.l.b16 %v25
  %v61 = vunpack.c.l.b16 %v26
  %v62 = vpack.c.b16 %v59, %v58
  %v63 = vpack.c.b16 %v61, %v60
  %vm66 = vcmask 261120
  %v68 = vsel %vm66, %v50, 0
  %v71 = vsel %vm66, %v51, 0
  %v74 = vsel %vm66, %v52, 0
  %v77 = vsel %vm66, %v53, 0
  %79 = vmatprep.subr.bf16.mxu0 0
  %80 = vmatpush1.bf16.msra.mxu0 0
  %81 = vmatprep.subr.bf16.mxu0 0
  %82 = vmatpush1.bf16.msra.mxu0 0
  %83 = vmatprep.subr.bf16.mxu0 0
  %84 = vmatpush1.bf16.msra.mxu0 0
  %85 = vmatprep.subr.bf16.mxu0 0
  %86 = vmatpush1.bf16.msra.mxu0 0
  %87 = vmatprep.subr.bf16.mxu0 0
  %88 = vmatpush1.bf16.msra.mxu0 0
  %89 = vmatprep.subr.bf16.mxu0 0
  %90 = vmatpush1.bf16.msra.mxu0 0
  %91 = vmatprep.subr.bf16.mxu0 0
  %92 = vmatpush1.bf16.msra.mxu0 %v63
  %93 = vmatprep.subr.bf16.mxu0 0
  %94 = vmatpush1.bf16.msra.mxu0 %v62
  %95 = vmatprep.subr.bf16.mxu0 0
  %96 = vmatpush2.bf16.msra.mxu0 0
  %97 = vmatprep.subr.bf16.mxu0 0
  %98 = vmatpush2.bf16.msra.mxu0 0
  %99 = vmatprep.subr.bf16.mxu0 0
  %100 = vmatpush2.bf16.msra.mxu0 0
  %101 = vmatprep.subr.bf16.mxu0 0
  %102 = vmatpush2.bf16.msra.mxu0 0
  %103 = vmatprep.subr.bf16.mxu0 0
  %104 = vmatpush2.bf16.msra.mxu0 0
  %105 = vmatprep.subr.bf16.mxu0 0
  %106 = vmatpush2.bf16.msra.mxu0 0
  %107 = vmatprep.subr.bf16.mxu0 0
  %108 = vmatpush2.bf16.msra.mxu0 0
  %109 = vmatprep.subr.bf16.mxu0 0
  %110 = vmatpush2.bf16.msra.mxu0 0
  %111 = vmatprep.mubr.bf16.mxu0 0
  %112 = vmatmul.mubr.bf16.gmra.mxu0 %v68
  %v113 = vpop.f32.mrf.mxu0
  %v114 = vadd.f32 %v32, %v113
  %v115 = vpop.f32.mrf.mxu0
  %v116 = vpop.f32.mrf.mxu0
  %v117 = vadd.f32 %v32, %v116
  %v118 = vpop.f32.mrf.mxu0
  %119 = vmatprep.mubr.bf16.mxu0 0
  %120 = vmatmul.mubr.bf16.gmra.mxu0 %v71
  %v121 = vpop.f32.mrf.mxu0
  %v122 = vadd.f32 %v32, %v121
  %v123 = vpop.f32.mrf.mxu0
  %v124 = vpop.f32.mrf.mxu0
  %v125 = vadd.f32 %v32, %v124
  %v126 = vpop.f32.mrf.mxu0
  %127 = vmatprep.mubr.bf16.mxu0 0
  %128 = vmatmul.mubr.bf16.gmra.mxu0 %v74
  %v129 = vpop.f32.mrf.mxu0
  %v130 = vadd.f32 %v32, %v129
  %v131 = vpop.f32.mrf.mxu0
  %v132 = vpop.f32.mrf.mxu0
  %v133 = vadd.f32 %v32, %v132
  %v134 = vpop.f32.mrf.mxu0
  %135 = vmatprep.mubr.bf16.mxu0 0
  %136 = vmatmul.mubr.bf16.gmra.mxu0 %v77
  %v137 = vpop.f32.mrf.mxu0
  %v138 = vadd.f32 %v32, %v137
  %v139 = vpop.f32.mrf.mxu0
  %v140 = vpop.f32.mrf.mxu0
  %v141 = vadd.f32 %v32, %v140
  %v142 = vpop.f32.mrf.mxu0
  %143 = vdwg.mxu0
  %144 = vst [vmem:[%s3] sm:$0xff] %v114
  %145 = vst [vmem:[%s3 + $0x8] sm:$0xff] %v117
  %146 = vst [vmem:[%s3 + $0x10] sm:$0xff] %v122
  %147 = vst [vmem:[%s3 + $0x18] sm:$0xff] %v125
  %148 = vst [vmem:[%s3 + $0x20] sm:$0xff] %v130
  %149 = vst [vmem:[%s3 + $0x28] sm:$0xff] %v133
  %150 = vst [vmem:[%s3 + $0x30] sm:$0xff] %v138
  %151 = vst [vmem:[%s3 + $0x38] sm:$0xff] %v141
  // Predicated region
  $region14: #{_lambda_.30} parent=0 // pred_check
    _
  $region15: #{_lambda_.30} parent=0 // pred_check_branch
    %153 = sbr.rel (0) target = $region17
  $region16: #{_lambda_.30} parent=0 // pred_region
    _
  $region17: #{_lambda_.30} parent=0 // pred_fallthru
    _
  // Predicated region
  $region18: #{_lambda_.30} parent=0 // pred_check
    _
  $region19: #{_lambda_.30} parent=0 // pred_check_branch
    %155 = sbr.rel (0) target = $region21
  $region20: #{_lambda_.30} parent=0 // pred_region
    _
  $region21: #{_lambda_.30} parent=0 // pred_fallthru
    _

// kernel: _lambda_.32
$region0: #{_lambda_.32}
  #allocation0 [shape = 'u32[]', space=smem, size = 0x4, offset = 0x4, fixed_abs, tag = 'smem constant byte address 0x4 - core index']
  #allocation1 [shape = 'u32[144,128]{1,0:T(1,128)}', space=vmem, size = 0x12000, scoped, tag = 'internal scratch']
  %s0 = inlined_call_operand.vmem [shape: bf16[64,32], index: 0, kind: input, shape index: {}]
  %s1 = inlined_call_operand.vmem [shape: bf16[32,128], index: 1, kind: input, shape index: {}]
  %s2 = inlined_call_operand.vmem [shape: f32[1,128], index: 2, kind: input, shape index: {}]
  %s3 = inlined_call_operand.vmem [shape: bf16[64,128], index: 3, kind: output, shape index: {}]
  %s4 = sld [smem:[#allocation0]]
  $region22: #{_lambda_.32} parent=0
    _
  %s6 = ssub.s32 1, %s4
  %s7 = scalar_select 0, %s6, %s4
  // Predicated region
  $region2: #{_lambda_.32} parent=0 // pred_check
    _
  $region3: #{_lambda_.32} parent=0 // pred_check_branch
    %9 = sbr.rel (0) target = $region5
  $region4: #{_lambda_.32} parent=0 // pred_region
    _
  $region5: #{_lambda_.32} parent=0 // pred_fallthru
    _
  // Predicated region
  $region6: #{_lambda_.32} parent=0 // pred_check
    _
  $region7: #{_lambda_.32} parent=0 // pred_check_branch
    %11 = sbr.rel (0) target = $region9
  $region8: #{_lambda_.32} parent=0 // pred_region
    _
  $region9: #{_lambda_.32} parent=0 // pred_fallthru
    _
  // Predicated region
  $region10: #{_lambda_.32} parent=0 // pred_check
    _
  $region11: #{_lambda_.32} parent=0 // pred_check_branch
    %13 = sbr.rel (0) target = $region13
  $region12: #{_lambda_.32} parent=0 // pred_region
    _
  $region13: #{_lambda_.32} parent=0 // pred_fallthru
    _
  %v15 = vld [vmem:[%s0] sm:$0xf]
  %v16 = vld [vmem:[%s0 + $0x4] sm:$0xf]
  %v17 = vld [vmem:[%s0 + $0x8] sm:$0xf]
  %v18 = vld [vmem:[%s0 + $0xc] sm:$0xf]
  %v19 = vld [vmem:[%s0 + $0x10] sm:$0xf]
  %v20 = vld [vmem:[%s0 + $0x14] sm:$0xf]
  %v21 = vld [vmem:[%s0 + $0x18] sm:$0xf]
  %v22 = vld [vmem:[%s0 + $0x1c] sm:$0xf]
  %v23 = vld [vmem:[%s1] sm:$0xf]
  %v24 = vld [vmem:[%s1 + $0x4] sm:$0xf]
  %v25 = vld [vmem:[%s1 + $0x8] sm:$0xf]
  %v26 = vld [vmem:[%s1 + $0xc] sm:$0xf]
  %v27 = vld [vmem:[%s2] sm:$0x1]
  %v29 = vlaneseq
  %v30 = vshrl.u32 %v29, 7
  %v31 = vsub.s32 0, %v30
  %v32 = vrot.slane %v27, %v31
  %v42 = vunpack.c.l.b16 %v15
  %v43 = vunpack.c.l.b16 %v16
  %v44 = vunpack.c.l.b16 %v17
  %v45 = vunpack.c.l.b16 %v18
  %v46 = vunpack.c.l.b16 %v19
  %v47 = vunpack.c.l.b16 %v20
  %v48 = vunpack.c.l.b16 %v21
  %v49 = vunpack.c.l.b16 %v22
  %v50 = vpack.c.b16 %v43, %v42
  %v51 = vpack.c.b16 %v45, %v44
  %v52 = vpack.c.b16 %v47, %v46
  %v53 = vpack.c.b16 %v49, %v48
  %v58 = vunpack.c.l.b16 %v23
  %v59 = vunpack.c.l.b16 %v24
  %v60 = vunpack.c.l.b16 %v25
  %v61 = vunpack.c.l.b16 %v26
  %v62 = vpack.c.b16 %v59, %v58
  %v63 = vpack.c.b16 %v61, %v60
  %vm66 = vcmask 261120
  %v68 = vsel %vm66, %v50, 0
  %v71 = vsel %vm66, %v51, 0
  %v74 = vsel %vm66, %v52, 0
  %v77 = vsel %vm66, %v53, 0
  %79 = vmatprep.subr.bf16.mxu0 0
  %80 = vmatpush1.bf16.msra.mxu0 0
  %81 = vmatprep.subr.bf16.mxu0 0
  %82 = vmatpush1.bf16.msra.mxu0 0
  %83 = vmatprep.subr.bf16.mxu0 0
  %84 = vmatpush1.bf16.msra.mxu0 0
  %85 = vmatprep.subr.bf16.mxu0 0
  %86 = vmatpush1.bf16.msra.mxu0 0
  %87 = vmatprep.subr.bf16.mxu0 0
  %88 = vmatpush1.bf16.msra.mxu0 0
  %89 = vmatprep.subr.bf16.mxu0 0
  %90 = vmatpush1.bf16.msra.mxu0 0
  %91 = vmatprep.subr.bf16.mxu0 0
  %92 = vmatpush1.bf16.msra.mxu0 %v63
  %93 = vmatprep.subr.bf16.mxu0 0
  %94 = vmatpush1.bf16.msra.mxu0 %v62
  %95 = vmatprep.subr.bf16.mxu0 0
  %96 = vmatpush2.bf16.msra.mxu0 0
  %97 = vmatprep.subr.bf16.mxu0 0
  %98 = vmatpush2.bf16.msra.mxu0 0
  %99 = vmatprep.subr.bf16.mxu0 0
  %100 = vmatpush2.bf16.msra.mxu0 0
  %101 = vmatprep.subr.bf16.mxu0 0
  %102 = vmatpush2.bf16.msra.mxu0 0
  %103 = vmatprep.subr.bf16.mxu0 0
  %104 = vmatpush2.bf16.msra.mxu0 0
  %105 = vmatprep.subr.bf16.mxu0 0
  %106 = vmatpush2.bf16.msra.mxu0 0
  %107 = vmatprep.subr.bf16.mxu0 0
  %108 = vmatpush2.bf16.msra.mxu0 0
  %109 = vmatprep.subr.bf16.mxu0 0
  %110 = vmatpush2.bf16.msra.mxu0 0
  %111 = vmatprep.mubr.bf16.mxu0 0
  %112 = vmatmul.mubr.bf16.gmra.mxu0 %v68
  %v113 = vpop.f32.mrf.mxu0
  %v114 = vadd.f32 %v32, %v113
  %v115 = vpop.f32.mrf.mxu0
  %v116 = vpop.f32.mrf.mxu0
  %v117 = vadd.f32 %v32, %v116
  %v118 = vpop.f32.mrf.mxu0
  %119 = vmatprep.mubr.bf16.mxu0 0
  %120 = vmatmul.mubr.bf16.gmra.mxu0 %v71
  %v121 = vpop.f32.mrf.mxu0
  %v122 = vadd.f32 %v32, %v121
  %v123 = vpop.f32.mrf.mxu0
  %v124 = vpop.f32.mrf.mxu0
  %v125 = vadd.f32 %v32, %v124
  %v126 = vpop.f32.mrf.mxu0
  %127 = vmatprep.mubr.bf16.mxu0 0
  %128 = vmatmul.mubr.bf16.gmra.mxu0 %v74
  %v129 = vpop.f32.mrf.mxu0
  %v130 = vadd.f32 %v32, %v129
  %v131 = vpop.f32.mrf.mxu0
  %v132 = vpop.f32.mrf.mxu0
  %v133 = vadd.f32 %v32, %v132
  %v134 = vpop.f32.mrf.mxu0
  %135 = vmatprep.mubr.bf16.mxu0 0
  %136 = vmatmul.mubr.bf16.gmra.mxu0 %v77
  %v137 = vpop.f32.mrf.mxu0
  %v138 = vadd.f32 %v32, %v137
  %v139 = vpop.f32.mrf.mxu0
  %v140 = vpop.f32.mrf.mxu0
  %v141 = vadd.f32 %v32, %v140
  %v142 = vpop.f32.mrf.mxu0
  %143 = vdwg.mxu0
  %v144 = vmax.f32 %v114, 0.0
  %v145 = vmax.f32 %v117, 0.0
  %v146 = vmax.f32 %v122, 0.0
  %v147 = vmax.f32 %v125, 0.0
  %v148 = vmax.f32 %v130, 0.0
  %v149 = vmax.f32 %v133, 0.0
  %v150 = vmax.f32 %v138, 0.0
  %v151 = vmax.f32 %v141, 0.0
  %v152 = vpack.c.bf16 %v145, %v144
  %v153 = vpack.c.bf16 %v147, %v146
  %v154 = vpack.c.bf16 %v149, %v148
  %v155 = vpack.c.bf16 %v151, %v150
  %v160 = vunpack.c.l.b16 %v152
  %v161 = vunpack.c.h.b16 %v152
  %v162 = vunpack.c.l.b16 %v153
  %v163 = vunpack.c.h.b16 %v153
  %v164 = vunpack.c.l.b16 %v154
  %v165 = vunpack.c.h.b16 %v154
  %v166 = vunpack.c.l.b16 %v155
  %v167 = vunpack.c.h.b16 %v155
  %v168 = vpack.c.b16 %v160, %v160
  %v169 = vpack.c.b16 %v161, %v161
  %v170 = vpack.c.b16 %v162, %v162
  %v171 = vpack.c.b16 %v163, %v163
  %v172 = vpack.c.b16 %v164, %v164
  %v173 = vpack.c.b16 %v165, %v165
  %v174 = vpack.c.b16 %v166, %v166
  %v175 = vpack.c.b16 %v167, %v167
  %184 = vst [vmem:[%s3] sm:$0xf] %v168
  %185 = vst [vmem:[%s3 + $0x4] sm:$0xf] %v169
  %186 = vst [vmem:[%s3 + $0x8] sm:$0xf] %v170
  %187 = vst [vmem:[%s3 + $0xc] sm:$0xf] %v171
  %188 = vst [vmem:[%s3 + $0x10] sm:$0xf] %v172
  %189 = vst [vmem:[%s3 + $0x14] sm:$0xf] %v173
  %190 = vst [vmem:[%s3 + $0x18] sm:$0xf] %v174
  %191 = vst [vmem:[%s3 + $0x1c] sm:$0xf] %v175
  // Predicated region
  $region14: #{_lambda_.32} parent=0 // pred_check
    _
  $region15: #{_lambda_.32} parent=0 // pred_check_branch
    %193 = sbr.rel (0) target = $region17
  $region16: #{_lambda_.32} parent=0 // pred_region
    _
  $region17: #{_lambda_.32} parent=0 // pred_fallthru
    _
  // Predicated region
  $region18: #{_lambda_.32} parent=0 // pred_check
    _
  $region19: #{_lambda_.32} parent=0 // pred_check_branch
    %195 = sbr.rel (0) target = $region21
  $region20: #{_lambda_.32} parent=0 // pred_region
    _
  $region21: #{_lambda_.32} parent=0 // pred_fallthru
    _

// kernel: _lambda_.31
$region0: #{_lambda_.31}
  #allocation0 [shape = 'u32[]', space=smem, size = 0x4, offset = 0x4, fixed_abs, tag = 'smem constant byte address 0x4 - core index']
  #allocation1 [shape = 'u32[144,128]{1,0:T(1,128)}', space=vmem, size = 0x12000, scoped, tag = 'internal scratch']
  #allocation2 [shape = 'f32[8,16]{1,0:T(8,128)}', space=vmem, size = 0x1000, scoped, tag = 'scratch operand']
  #allocation3 [shape = 'f32[8,16]{1,0:T(8,128)}', space=vmem, size = 0x1000, scoped, tag = 'scratch operand']
  %s0 = inlined_call_operand.vmem [shape: f32[2,8,8,64], index: 0, kind: input, shape index: {}]
  %s1 = inlined_call_operand.vmem [shape: f32[8,8,1], index: 1, kind: input, shape index: {}]
  %s2 = inlined_call_operand.vmem [shape: bf16[2,16,64], index: 2, kind: input, shape index: {}]
  %s3 = inlined_call_operand.vmem [shape: bf16[2,8,8,16], index: 3, kind: output, shape index: {}]
  %s4 = sld [smem:[#allocation0]]
  $region49: #{_lambda_.31} parent=0
    _
  %s6 = ssub.s32 1, %s4
  %s7 = scalar_select 0, %s6, %s4
  loop: start=0, step=1, limit=4
  $region2: #{_lambda_.31} parent=0 // loop_pre_header
    _
  $region3: #{_lambda_.31} parent=0 // loop_header
    %s9 = sphi 0, %s13
    %p10 = scmp.ge.s32.totalorder %s9, 4
    %s16 = sphi 0, %s28
    %s17 = sphi 0, %s24
    %s18 = sphi 0, %s16
    %s19 = sphi 0, %s17
    %s20 = sphi 0, %s18
    %s21 = sphi 0, %s19
    %s43 = sphi 0, %s45
    %s46 = sphi 0, %s43
    %s47 = sphi 0, %s46
    %s63 = sphi 0, %s47
    %s79 = sphi 0, %s81
    %s82 = sphi 0, %s79
    %s83 = sphi 0, %s82
    %s99 = sphi 0, %s83
    %s105 = sphi 0, %s107
    %s108 = sphi 0, %s105
    %s109 = sphi 0, %s108
    %s125 = sphi 0, %s109
    %s143 = sphi 0, %s145
    %s146 = sphi 0, %s143
    %s147 = sphi 0, %s146
    %s163 = sphi 0, %s147
  $region4: #{_lambda_.31} parent=0 // loop_header_branch
    %12 = sbr.rel (%p10) target = $region8
  $region5: #{_lambda_.31} parent=0 // loop_body
    %s14 = ssub.s32 %s9, 1
    %s15 = ssub.s32 %s9, 2
    %s22 = sadd.s32 1, %s17
    %p23 = scmp.ge.s32.totalorder %s22, 1
    %s24 = scalar_select %p23, 0, %s22
    %s25 = sadd.s32 1, %s16
    %s26 = scalar_select %p23, %s25, %s16
    %p27 = scmp.ge.s32.totalorder %s26, 2
    %s28 = scalar_select %p27, 0, %s26
    %s29 = ssub.s32 1, %s16
    %s30 = smul.u32 %s29, %s17
    %s31 = ssub.s32 0, %s17
    %s32 = smul.u32 %s16, %s31
    %s33 = sadd.s32 %s30, %s32
    %s34 = ssub.s32 1, %s28
    %s35 = smul.u32 %s34, %s24
    %s36 = ssub.s32 0, %s24
    %s37 = smul.u32 %s28, %s36
    %s38 = sadd.s32 %s35, %s37
    %s39 = ssub.s32 %s16, %s28
    %s40 = ssub.s32 %s33, %s38
    %s41 = sor.u32 %s39, %s40
    %p42 = scmp.eq.s32.totalorder %s41, 0
    %s44 = sadd.s32 %s43, 1
    %s45 = scalar_select %p42, %s43, %s44
    %p48 = pneg %p42
    %p49 = scmp.eq.s32.totalorder %s9, 1
    %p50 = por %p48, %p49
    %p51 = scmp.ne.s32.totalorder %s43, %s46
    %p52 = scmp.eq.s32.totalorder %s9, 0
    %p53 = por %p51, %p52
    %p54 = scmp.ne.s32.totalorder %s43, %s46
    %p55 = scmp.eq.s32.totalorder %s14, 1
    %p56 = por %p54, %p55
    %p57 = scmp.ne.s32.totalorder %s46, %s47
    %p58 = scmp.eq.s32.totalorder %s14, 0
    %p59 = por %p57, %p58
    %p60 = scmp.ne.s32.totalorder %s46, %s47
    %p61 = scmp.eq.s32.totalorder %s15, 1
    %p62 = por %p60, %p61
    %p64 = scmp.ne.s32.totalorder %s47, %s63
    %p65 = scmp.eq.s32.totalorder %s15, 0
    %p66 = por %p64, %p65
    %s67 = ssub.s32 1, %s16
    %s68 = smul.u32 %s67, %s17
    %s69 = ssub.s32 0, %s17
    %s70 = smul.u32 %s16, %s69
    %s71 = sadd.s32 %s68, %s70
    %s72 = ssub.s32 1, %s28
    %s73 = smul.u32 %s72, %s24
    %s74 = ssub.s32 0, %s24
    %s75 = smul.u32 %s28, %s74
    %s76 = sadd.s32 %s73, %s75
    %s77 = ssub.s32 %s71, %s76
    %p78 = scmp.eq.s32.totalorder %s77, 0
    %s80 = sadd.s32 %s79, 1
    %s81 = scalar_select %p78, %s79, %s80
    %p84 = pneg %p78
    %p85 = scmp.eq.s32.totalorder %s9, 1
    %p86 = por %p84, %p85
    %p87 = scmp.ne.s32.totalorder %s79, %s82
    %p88 = scmp.eq.s32.totalorder %s9, 0
    %p89 = por %p87, %p88
    %p90 = scmp.ne.s32.totalorder %s79, %s82
    %p91 = scmp.eq.s32.totalorder %s14, 1
    %p92 = por %p90, %p91
    %p93 = scmp.ne.s32.totalorder %s82, %s83
    %p94 = scmp.eq.s32.totalorder %s14, 0
    %p95 = por %p93, %p94
    %p96 = scmp.ne.s32.totalorder %s82, %s83
    %p97 = scmp.eq.s32.totalorder %s15, 1
    %p98 = por %p96, %p97
    %p100 = scmp.ne.s32.totalorder %s83, %s99
    %p101 = scmp.eq.s32.totalorder %s15, 0
    %p102 = por %p100, %p101
    %s103 = ssub.s32 %s16, %s28
    %p104 = scmp.eq.s32.totalorder %s103, 0
    %s106 = sadd.s32 %s105, 1
    %s107 = scalar_select %p104, %s105, %s106
    %p110 = pneg %p104
    %p111 = scmp.eq.s32.totalorder %s9, 1
    %p112 = por %p110, %p111
    %p113 = scmp.ne.s32.totalorder %s105, %s108
    %p114 = scmp.eq.s32.totalorder %s9, 0
    %p115 = por %p113, %p114
    %p116 = scmp.ne.s32.totalorder %s105, %s108
    %p117 = scmp.eq.s32.totalorder %s14, 1
    %p118 = por %p116, %p117
    %p119 = scmp.ne.s32.totalorder %s108, %s109
    %p120 = scmp.eq.s32.totalorder %s14, 0
    %p121 = por %p119, %p120
    %p122 = scmp.ne.s32.totalorder %s108, %s109
    %p123 = scmp.eq.s32.totalorder %s15, 1
    %p124 = por %p122, %p123
    %p126 = scmp.ne.s32.totalorder %s109, %s125
    %p127 = scmp.eq.s32.totalorder %s15, 0
    %p128 = por %p126, %p127
    %s129 = ssub.s32 1, %s16
    %s130 = smul.u32 %s129, %s17
    %s131 = ssub.s32 0, %s17
    %s132 = smul.u32 %s16, %s131
    %s133 = sadd.s32 %s130, %s132
    %s134 = ssub.s32 1, %s28
    %s135 = smul.u32 %s134, %s24
    %s136 = ssub.s32 0, %s24
    %s137 = smul.u32 %s28, %s136
    %s138 = sadd.s32 %s135, %s137
    %s139 = ssub.s32 %s16, %s28
    %s140 = ssub.s32 %s133, %s138
    %s141 = sor.u32 %s139, %s140
    %p142 = scmp.eq.s32.totalorder %s141, 0
    %s144 = sadd.s32 %s143, 1
    %s145 = scalar_select %p142, %s143, %s144
    %p148 = pneg %p142
    %p149 = scmp.eq.s32.totalorder %s9, 1
    %p150 = por %p148, %p149
    %p151 = scmp.ne.s32.totalorder %s143, %s146
    %p152 = scmp.eq.s32.totalorder %s9, 0
    %p153 = por %p151, %p152
    %p154 = scmp.ne.s32.totalorder %s143, %s146
    %p155 = scmp.eq.s32.totalorder %s14, 1
    %p156 = por %p154, %p155
    %p157 = scmp.ne.s32.totalorder %s146, %s147
    %p158 = scmp.eq.s32.totalorder %s14, 0
    %p159 = por %p157, %p158
    %p160 = scmp.ne.s32.totalorder %s146, %s147
    %p161 = scmp.eq.s32.totalorder %s15, 1
    %p162 = por %p160, %p161
    %p164 = scmp.ne.s32.totalorder %s147, %s163
    %p165 = scmp.eq.s32.totalorder %s15, 0
    %p166 = por %p164, %p165
    %p167 = scmp.le.s32.totalorder 1, %s9
    %p168 = scmp.lt.s32.totalorder %s9, 3
    %p169 = pnand %p167, %p168
    %p170 = pneg %p169
    // Predicated region
    $region9: #{_lambda_.31} parent=5 // pred_check
      _
    $region10: #{_lambda_.31} parent=5 // pred_check_branch
      %172 = sbr.rel (%p169) target = $region12
    $region11: #{_lambda_.31} parent=5 // pred_region
      %s173 = ssub.s32 %s9, 1
    $region12: #{_lambda_.31} parent=5 // pred_fallthru
      _
    %p174 = scmp.lt.s32.totalorder %s9, 2
    // Predicated region
    $region13: #{_lambda_.31} parent=5 // pred_check
      %p175 = pneg %p174
    $region14: #{_lambda_.31} parent=5 // pred_check_branch
      %177 = sbr.rel (%p175) target = $region16
    $region15: #{_lambda_.31} parent=5 // pred_region
      // Predicated region
      $region17: #{_lambda_.31} parent=15 // pred_check
        %p178 = pneg %p53
      $region18: #{_lambda_.31} parent=15 // pred_check_branch
        %180 = sbr.rel (%p178) target = $region20
      $region19: #{_lambda_.31} parent=15 // pred_region
        %s181 = ssub.s32 1, %s16
        %s182 = smul.u32 %s181, %s17
        %s183 = ssub.s32 0, %s17
        %s184 = smul.u32 %s16, %s183
        %s185 = sadd.s32 %s182, %s184
        %s186 = smul.u32 8, %s185
        %p187 = scmp.lt.s32.totalorder %s16, 1
        %s188 = scalar_select %p187, %s16, 1
        %p189 = scmp.lt.s32.totalorder %s186, 7
        %s190 = scalar_select %p189, %s186, 7
        %s191 = smul.addr %s188, 8
        %s192 = sadd.s32 %s190, %s191
        %s193 = smul.addr %s192, 8
        %s194 = scalar_lea.vmem %s0, %s193
        %s195 = ssub.s32 1, %s16
        %s196 = smul.u32 %s195, %s17
        %s197 = ssub.s32 0, %s17
        %s198 = smul.u32 %s16, %s197
        %s199 = sadd.s32 %s196, %s198
        %s200 = smul.u32 8, %s199
      $region20: #{_lambda_.31} parent=15 // pred_fallthru
        _
      // Predicated region
      $region21: #{_lambda_.31} parent=15 // pred_check
        %p201 = pneg %p89
      $region22: #{_lambda_.31} parent=15 // pred_check_branch
        %203 = sbr.rel (%p201) target = $region24
      $region23: #{_lambda_.31} parent=15 // pred_region
        %s204 = ssub.s32 1, %s16
        %s205 = smul.u32 %s204, %s17
        %s206 = ssub.s32 0, %s17
        %s207 = smul.u32 %s16, %s206
        %s208 = sadd.s32 %s205, %s207
        %s209 = smul.u32 8, %s208
        %p210 = scmp.lt.s32.totalorder %s209, 7
        %s211 = scalar_select %p210, %s209, 7
        %s212 = smul.addr %s211, 8
        %s213 = scalar_lea.vmem %s1, %s212
        %s214 = ssub.s32 1, %s16
        %s215 = smul.u32 %s214, %s17
        %s216 = ssub.s32 0, %s17
        %s217 = smul.u32 %s16, %s216
        %s218 = sadd.s32 %s215, %s217
        %s219 = smul.u32 8, %s218
      $region24: #{_lambda_.31} parent=15 // pred_fallthru
        _
      // Predicated region
      $region25: #{_lambda_.31} parent=15 // pred_check
        %p220 = pneg %p115
      $region26: #{_lambda_.31} parent=15 // pred_check_branch
        %222 = sbr.rel (%p220) target = $region28
      $region27: #{_lambda_.31} parent=15 // pred_region
        %p223 = scmp.lt.s32.totalorder %s16, 1
        %s224 = scalar_select %p223, %s16, 1
        %s225 = smul.addr %s224, 2
        %s226 = smul.addr %s225, 4
        %s227 = scalar_lea.vmem %s2, %s226
      $region28: #{_lambda_.31} parent=15 // pred_fallthru
        _
    $region16: #{_lambda_.31} parent=5 // pred_fallthru
      _
    %p228 = scmp.le.s32.totalorder 1, %s9
    %p229 = scmp.lt.s32.totalorder %s9, 3
    %p230 = pnand %p228, %p229
    %p231 = pneg %p230
    // Predicated region
    $region29: #{_lambda_.31} parent=5 // pred_check
      _
    $region30: #{_lambda_.31} parent=5 // pred_check_branch
      %233 = sbr.rel (%p230) target = $region32
    $region31: #{_lambda_.31} parent=5 // pred_region
      %s234 = ssub.s32 %s9, 1
      %s235 = ssub.s32 1, %s18
      %s236 = smul.u32 %s235, %s19
      %s237 = ssub.s32 0, %s19
      %s238 = smul.u32 %s18, %s237
      %s239 = sadd.s32 %s236, %s238
      %s240 = smul.u32 8, %s239
      %p241 = scmp.lt.s32.totalorder %s18, 1
      %s242 = scalar_select %p241, %s18, 1
      %p243 = scmp.lt.s32.totalorder %s240, 7
      %s244 = scalar_select %p243, %s240, 7
      %s245 = smul.addr %s242, 8
      %s246 = sadd.s32 %s244, %s245
      %s247 = smul.addr %s246, 8
      %s248 = scalar_lea.vmem %s0, %s247
      %p249 = pneg %p59
      %p250 = pneg %p56
      %s251 = ssub.s32 1, %s18
      %s252 = smul.u32 %s251, %s19
      %s253 = ssub.s32 0, %s19
      %s254 = smul.u32 %s18, %s253
      %s255 = sadd.s32 %s252, %s254
      %s256 = smul.u32 8, %s255
      %p257 = scmp.lt.s32.totalorder %s256, 7
      %s258 = scalar_select %p257, %s256, 7
      %s259 = smul.addr %s258, 8
      %s260 = scalar_lea.vmem %s1, %s259
      %p261 = pneg %p95
      %p262 = pneg %p92
      %p263 = scmp.lt.s32.totalorder %s18, 1
      %s264 = scalar_select %p263, %s18, 1
      %s265 = smul.addr %s264, 2
      %s266 = smul.addr %s265, 4
      %s267 = scalar_lea.vmem %s2, %s266
      %p268 = pneg %p121
      %p269 = pneg %p118
      %p270 = pneg %p159
      %p271 = pneg %p156
      %s272 = ssub.s32 1, %s18
      %s273 = smul.u32 %s272, %s19
      %s274 = ssub.s32 0, %s19
      %s275 = smul.u32 %s18, %s274
      %s276 = sadd.s32 %s273, %s275
      %s277 = smul.u32 8, %s276
      %p278 = scmp.lt.s32.totalorder %s18, 1
      %s279 = scalar_select %p278, %s18, 1
      %p280 = scmp.lt.s32.totalorder %s277, 7
      %s281 = scalar_select %p280, %s277, 7
      %s282 = smul.addr %s279, 8
      %s283 = sadd.s32 %s281, %s282
      %s284 = smul.addr %s283, 4
      %s285 = scalar_lea.vmem %s3, %s284
      %s286 = ssub.s32 1, %s18
      %s287 = smul.u32 %s286, %s19
      %s288 = ssub.s32 0, %s19
      %s289 = smul.u32 %s18, %s288
      %s290 = sadd.s32 %s287, %s289
      %s291 = smul.u32 8, %s290
      %p292 = scmp.lt.s32.totalorder %s18, 1
      %s293 = scalar_select %p292, %s18, 1
      %p294 = scmp.lt.s32.totalorder %s291, 7
      %s295 = scalar_select %p294, %s291, 7
      %s296 = smul.addr %s293, 8
      %s297 = sadd.s32 %s295, %s296
      %s298 = smul.addr %s297, 8
      %s299 = scalar_lea.vmem %s0, %s298
      %s300 = ssub.s32 1, %s18
      %s301 = smul.u32 %s300, %s19
      %s302 = ssub.s32 0, %s19
      %s303 = smul.u32 %s18, %s302
      %s304 = sadd.s32 %s301, %s303
      %s305 = smul.u32 8, %s304
      %s306 = ssub.s32 1, %s18
      %s307 = smul.u32 %s306, %s19
      %s308 = ssub.s32 0, %s19
      %s309 = smul.u32 %s18, %s308
      %s310 = sadd.s32 %s307, %s309
      %s311 = smul.u32 8, %s310
      %p312 = scmp.lt.s32.totalorder %s311, 7
      %s313 = scalar_select %p312, %s311, 7
      %s314 = smul.addr %s313, 8
      %s315 = scalar_lea.vmem %s1, %s314
      %s316 = ssub.s32 1, %s18
      %s317 = smul.u32 %s316, %s19
      %s318 = ssub.s32 0, %s19
      %s319 = smul.u32 %s18, %s318
      %s320 = sadd.s32 %s317, %s319
      %s321 = smul.u32 8, %s320
      %p322 = scmp.lt.s32.totalorder %s18, 1
      %s323 = scalar_select %p322, %s18, 1
      %s324 = smul.addr %s323, 2
      %s325 = smul.addr %s324, 4
      %s326 = scalar_lea.vmem %s2, %s325
      %s327 = ssub.s32 1, %s18
      %s328 = smul.u32 %s327, %s19
      %s329 = ssub.s32 0, %s19
      %s330 = smul.u32 %s18, %s329
      %s331 = sadd.s32 %s328, %s330
      %s332 = smul.u32 8, %s331
      %p333 = scmp.lt.s32.totalorder %s18, 1
      %s334 = scalar_select %p333, %s18, 1
      %p335 = scmp.lt.s32.totalorder %s332, 7
      %s336 = scalar_select %p335, %s332, 7
      %s337 = smul.addr %s334, 8
      %s338 = sadd.s32 %s336, %s337
      %s339 = smul.addr %s338, 4
      %s340 = scalar_lea.vmem %s3, %s339
      %s341 = ssub.s32 1, %s18
      %s342 = smul.u32 %s341, %s19
      %s343 = ssub.s32 0, %s19
      %s344 = smul.u32 %s18, %s343
      %s345 = sadd.s32 %s342, %s344
      %s346 = smul.u32 8, %s345
      %p348 = scmp.eq.s32.totalorder %s19, 0
      // Predicated region
      $region33: #{_lambda_.31} parent=31 // pred_check
        %p349 = pneg %p348
      $region34: #{_lambda_.31} parent=31 // pred_check_branch
        %351 = sbr.rel (%p349) target = $region36
      $region35: #{_lambda_.31} parent=31 // pred_region
        %vm352 = vcmask 130048
        %353 = vst.msk [vmem:[#allocation2] sm:$0xff] %vm352, 0.0
        %354 = vst.msk [vmem:[#allocation3] sm:$0xff] %vm352, 0.0
      $region36: #{_lambda_.31} parent=31 // pred_fallthru
        _
      %v355 = vld [vmem:[%s326] sm:$0xf]
      %v356 = vld [vmem:[%s326 + $0x4] sm:$0xf]
      %s357 = smul.u32 %s18, 7
      %v358 = vld [vmem:[#allocation2] sm:$0xff]
      %v359 = vld [vmem:[#allocation3] sm:$0xff]
      %s360 = smul.u32 %s357, 8
      %s361 = scalar_lea.vmem %s299, %s360
      %v362 = vld [vmem:[%s361] sm:$0xff]
      %v363 = vpack.c.bf16 %v358, %v358
      %v366 = vunpack.c.l.b16 %v355
      %v367 = vunpack.c.l.b16 %v356
      %v368 = vpack.c.b16 %v367, %v366
      %vm370 = vcmask 130048
      %v372 = vsel %vm370, %v363, 0
      %374 = vmatprep.subr.bf16.mxu0 0
      %375 = vmatpush1.bf16.msra.mxu0 0
      %376 = vmatprep.subr.bf16.mxu0 0
      %377 = vmatpush1.bf16.msra.mxu0 0
      %378 = vmatprep.subr.bf16.mxu0 0
      %379 = vmatpush1.bf16.msra.mxu0 0
      %380 = vmatprep.subr.bf16.mxu0 0
      %381 = vmatpush1.bf16.msra.mxu0 0
      %382 = vmatprep.subr.bf16.mxu0 0
      %383 = vmatpush1.bf16.msra.mxu0 0
      %384 = vmatprep.subr.bf16.mxu0 0
      %385 = vmatpush1.bf16.msra.mxu0 0
      %386 = vmatprep.subr.bf16.mxu0 0
      %387 = vmatpush1.bf16.msra.mxu0 0
      %388 = vmatprep.subr.bf16.mxu0 0
      %389 = vmatpush1.bf16.msra.mxu0 %v368
      %390 = vmatprep.subr.bf16.mxu0 0
      %391 = vmatpush2.bf16.msra.mxu0 0
      %392 = vmatprep.subr.bf16.mxu0 0
      %393 = vmatpush2.bf16.msra.mxu0 0
      %394 = vmatprep.subr.bf16.mxu0 0
      %395 = vmatpush2.bf16.msra.mxu0 0
      %396 = vmatprep.subr.bf16.mxu0 0
      %397 = vmatpush2.bf16.msra.mxu0 0
      %398 = vmatprep.subr.bf16.mxu0 0
      %399 = vmatpush2.bf16.msra.mxu0 0
      %400 = vmatprep.subr.bf16.mxu0 0
      %401 = vmatpush2.bf16.msra.mxu0 0
      %402 = vmatprep.subr.bf16.mxu0 0
      %403 = vmatpush2.bf16.msra.mxu0 0
      %404 = vmatprep.subr.bf16.mxu0 0
      %405 = vmatpush2.bf16.msra.mxu0 0
      %406 = vmatprep.mubr.bf16.mxu0 0
      %407 = vmatmul.mubr.bf16.gmra.mxu0 %v372
      %v408 = vpop.f32.mrf.mxu0
      %v409 = vadd.f32 0.0, %v408
      %v410 = vpop.f32.mrf.mxu0
      %v411 = vpop.f32.mrf.mxu0
      %v412 = vpop.f32.mrf.mxu0
      %413 = vdwg.mxu0
      %v414 = vadd.f32 %v362, %v409
      %v415 = vxor.u32 %v414, 2147483648
      %v416 = vmul.f32 %v415, 1.442695
      %v417 = vpow.pop %v416
      %v418 = vadd.f32 %v417, 1.0
      %v419 = vrcp.pop %v418
      %v420 = vmul.f32 1.0, %v419
      %v421 = vtanh.pop %v414
      %423 = vrot.lane.b32.xlu0 %v359, 16
      %v424 = vpop.permute.xlu0 %423
      %v426 = vmul.f32 %v420, %v424
      %428 = vrot.lane.b32.xlu0 %v421, 96
      %v429 = vpop.permute.xlu0 %428
      %v431 = vmul.f32 %v420, %v429
      %433 = vrot.lane.b32.xlu0 %v431, 16
      %v434 = vpop.permute.xlu0 %433
      %v436 = vadd.f32 %v426, %v434
      %v437 = vtanh.pop %v436
      %439 = vrot.lane.b32.xlu0 %v437, 32
      %v440 = vpop.permute.xlu0 %439
      %v442 = vmul.f32 %v420, %v440
      %s443 = scalar_lea.vmem %s315, %s360
      %v444 = vld [vmem:[%s443] sm:$0xff]
      %446 = vrot.lane.b32.xlu0 %v358, 48
      %v447 = vpop.permute.xlu0 %446
      %v449 = vsub.f32 %v442, %v447
      %451 = vset.pattern.permute.xlu0 0
      %452 = vperm.xlu0 %451, %v444
      %v453 = vpop.permute.xlu0 %452
      %v455 = vmul.f32 %v453, %v449
      %457 = vrot.lane.b32.xlu0 %v455, 80
      %v458 = vpop.permute.xlu0 %457
      %v460 = vadd.f32 %v358, %v458
      %461 = vst.msk [vmem:[#allocation2] sm:$0xff] %vm370, %v460
      %v462 = vsub.f32 %v436, %v424
      %v463 = vmul.f32 %v453, %v462
      %465 = vrot.lane.b32.xlu0 %v463, 112
      %v466 = vpop.permute.xlu0 %465
      %v468 = vadd.f32 %v359, %v466
      %469 = vst.msk [vmem:[#allocation3] sm:$0xff] %vm370, %v468
      %v470 = vmul.f32 %v442, %v453
      %v471 = vpack.c.bf16 %v470, %v470
      %v473 = vunpack.c.l.b16 %v471
      %v474 = vpack.c.b16 %v473, %v473
      %475 = vrot.lane.b32.xlu0 %v474, 80
      %v476 = vpop.permute.xlu0 %475
      %s478 = smul.addr %s357, 4
      %s479 = scalar_lea.vmem %s340, %s478
      %vm480 = vcmask 125952
      %481 = vst.msk [vmem:[%s479] sm:$0xf] %vm480, %v476
      %s482 = smul.u32 %s18, 5
      %s483 = sadd.s32 %s482, 1
      %v484 = vld [vmem:[#allocation2] sm:$0xff]
      %v485 = vld [vmem:[#allocation3] sm:$0xff]
      %s486 = smul.u32 %s483, 8
      %s487 = scalar_lea.vmem %s299, %s486
      %v488 = vld [vmem:[%s487] sm:$0xff]
      %v489 = vpack.c.bf16 %v484, %v484
      %v491 = vsel %vm370, %v489, 0
      %493 = vmatprep.subr.bf16.mxu0 0
      %494 = vmatpush1.bf16.msra.mxu0 0
      %495 = vmatprep.subr.bf16.mxu0 0
      %496 = vmatpush1.bf16.msra.mxu0 0
      %497 = vmatprep.subr.bf16.mxu0 0
      %498 = vmatpush1.bf16.msra.mxu0 0
      %499 = vmatprep.subr.bf16.mxu0 0
      %500 = vmatpush1.bf16.msra.mxu0 0
      %501 = vmatprep.subr.bf16.mxu0 0
      %502 = vmatpush1.bf16.msra.mxu0 0
      %503 = vmatprep.subr.bf16.mxu0 0
      %504 = vmatpush1.bf16.msra.mxu0 0
      %505 = vmatprep.subr.bf16.mxu0 0
      %506 = vmatpush1.bf16.msra.mxu0 0
      %507 = vmatprep.subr.bf16.mxu0 0
      %508 = vmatpush1.bf16.msra.mxu0 %v368
      %509 = vmatprep.subr.bf16.mxu0 0
      %510 = vmatpush2.bf16.msra.mxu0 0
      %511 = vmatprep.subr.bf16.mxu0 0
      %512 = vmatpush2.bf16.msra.mxu0 0
      %513 = vmatprep.subr.bf16.mxu0 0
      %514 = vmatpush2.bf16.msra.mxu0 0
      %515 = vmatprep.subr.bf16.mxu0 0
      %516 = vmatpush2.bf16.msra.mxu0 0
      %517 = vmatprep.subr.bf16.mxu0 0
      %518 = vmatpush2.bf16.msra.mxu0 0
      %519 = vmatprep.subr.bf16.mxu0 0
      %520 = vmatpush2.bf16.msra.mxu0 0
      %521 = vmatprep.subr.bf16.mxu0 0
      %522 = vmatpush2.bf16.msra.mxu0 0
      %523 = vmatprep.subr.bf16.mxu0 0
      %524 = vmatpush2.bf16.msra.mxu0 0
      %525 = vmatprep.mubr.bf16.mxu0 0
      %526 = vmatmul.mubr.bf16.gmra.mxu0 %v491
      %v527 = vpop.f32.mrf.mxu0
      %v528 = vadd.f32 0.0, %v527
      %v529 = vpop.f32.mrf.mxu0
      %v530 = vpop.f32.mrf.mxu0
      %v531 = vpop.f32.mrf.mxu0
      %532 = vdwg.mxu0
      %v533 = vadd.f32 %v488, %v528
      %v534 = vxor.u32 %v533, 2147483648
      %v535 = vmul.f32 %v534, 1.442695
      %v536 = vpow.pop %v535
      %v537 = vadd.f32 %v536, 1.0
      %v538 = vrcp.pop %v537
      %v539 = vmul.f32 1.0, %v538
      %v540 = vtanh.pop %v533
      %542 = vrot.lane.b32.xlu0 %v485, 16
      %v543 = vpop.permute.xlu0 %542
      %v545 = vmul.f32 %v539, %v543
      %547 = vrot.lane.b32.xlu0 %v540, 96
      %v548 = vpop.permute.xlu0 %547
      %v550 = vmul.f32 %v539, %v548
      %552 = vrot.lane.b32.xlu0 %v550, 16
      %v553 = vpop.permute.xlu0 %552
      %v555 = vadd.f32 %v545, %v553
      %v556 = vtanh.pop %v555
      %558 = vrot.lane.b32.xlu0 %v556, 32
      %v559 = vpop.permute.xlu0 %558
      %v561 = vmul.f32 %v539, %v559
      %s562 = scalar_lea.vmem %s315, %s486
      %v563 = vld [vmem:[%s562] sm:$0xff]
      %565 = vrot.lane.b32.xlu0 %v484, 48
      %v566 = vpop.permute.xlu0 %565
      %v568 = vsub.f32 %v561, %v566
      %570 = vset.pattern.permute.xlu0 0
      %571 = vperm.xlu0 %570, %v563
      %v572 = vpop.permute.xlu0 %571
      %v574 = vmul.f32 %v572, %v568
      %576 = vrot.lane.b32.xlu0 %v574, 80
      %v577 = vpop.permute.xlu0 %576
      %v579 = vadd.f32 %v484, %v577
      %580 = vst.msk [vmem:[#allocation2] sm:$0xff] %vm370, %v579
      %v581 = vsub.f32 %v555, %v543
      %v582 = vmul.f32 %v572, %v581
      %584 = vrot.lane.b32.xlu0 %v582, 112
      %v585 = vpop.permute.xlu0 %584
      %v587 = vadd.f32 %v485, %v585
      %588 = vst.msk [vmem:[#allocation3] sm:$0xff] %vm370, %v587
      %v589 = vmul.f32 %v561, %v572
      %v590 = vpack.c.bf16 %v589, %v589
      %v592 = vunpack.c.l.b16 %v590
      %v593 = vpack.c.b16 %v592, %v592
      %594 = vrot.lane.b32.xlu0 %v593, 80
      %v595 = vpop.permute.xlu0 %594
      %s597 = smul.addr %s483, 4
      %s598 = scalar_lea.vmem %s340, %s597
      %599 = vst.msk [vmem:[%s598] sm:$0xf] %vm480, %v595
      %s600 = smul.u32 %s18, 3
      %s601 = sadd.s32 %s600, 2
      %v602 = vld [vmem:[#allocation2] sm:$0xff]
      %v603 = vld [vmem:[#allocation3] sm:$0xff]
      %s604 = smul.u32 %s601, 8
      %s605 = scalar_lea.vmem %s299, %s604
      %v606 = vld [vmem:[%s605] sm:$0xff]
      %v607 = vpack.c.bf16 %v602, %v602
      %v609 = vsel %vm370, %v607, 0
      %611 = vmatprep.subr.bf16.mxu0 0
      %612 = vmatpush1.bf16.msra.mxu0 0
      %613 = vmatprep.subr.bf16.mxu0 0
      %614 = vmatpush1.bf16.msra.mxu0 0
      %615 = vmatprep.subr.bf16.mxu0 0
      %616 = vmatpush1.bf16.msra.mxu0 0
      %617 = vmatprep.subr.bf16.mxu0 0
      %618 = vmatpush1.bf16.msra.mxu0 0
      %619 = vmatprep.subr.bf16.mxu0 0
      %620 = vmatpush1.bf16.msra.mxu0 0
      %621 = vmatprep.subr.bf16.mxu0 0
      %622 = vmatpush1.bf16.msra.mxu0 0
      %623 = vmatprep.subr.bf16.mxu0 0
      %624 = vmatpush1.bf16.msra.mxu0 0
      %625 = vmatprep.subr.bf16.mxu0 0
      %626 = vmatpush1.bf16.msra.mxu0 %v368
      %627 = vmatprep.subr.bf16.mxu0 0
      %628 = vmatpush2.bf16.msra.mxu0 0
      %629 = vmatprep.subr.bf16.mxu0 0
      %630 = vmatpush2.bf16.msra.mxu0 0
      %631 = vmatprep.subr.bf16.mxu0 0
      %632 = vmatpush2.bf16.msra.mxu0 0
      %633 = vmatprep.subr.bf16.mxu0 0
      %634 = vmatpush2.bf16.msra.mxu0 0
      %635 = vmatprep.subr.bf16.mxu0 0
      %636 = vmatpush2.bf16.msra.mxu0 0
      %637 = vmatprep.subr.bf16.mxu0 0
      %638 = vmatpush2.bf16.msra.mxu0 0
      %639 = vmatprep.subr.bf16.mxu0 0
      %640 = vmatpush2.bf16.msra.mxu0 0
      %641 = vmatprep.subr.bf16.mxu0 0
      %642 = vmatpush2.bf16.msra.mxu0 0
      %643 = vmatprep.mubr.bf16.mxu0 0
      %644 = vmatmul.mubr.bf16.gmra.mxu0 %v609
      %v645 = vpop.f32.mrf.mxu0
      %v646 = vadd.f32 0.0, %v645
      %v647 = vpop.f32.mrf.mxu0
      %v648 = vpop.f32.mrf.mxu0
      %v649 = vpop.f32.mrf.mxu0
      %650 = vdwg.mxu0
      %v651 = vadd.f32 %v606, %v646
      %v652 = vxor.u32 %v651, 2147483648
      %v653 = vmul.f32 %v652, 1.442695
      %v654 = vpow.pop %v653
      %v655 = vadd.f32 %v654, 1.0
      %v656 = vrcp.pop %v655
      %v657 = vmul.f32 1.0, %v656
      %v658 = vtanh.pop %v651
      %660 = vrot.lane.b32.xlu0 %v603, 16
      %v661 = vpop.permute.xlu0 %660
      %v663 = vmul.f32 %v657, %v661
      %665 = vrot.lane.b32.xlu0 %v658, 96
      %v666 = vpop.permute.xlu0 %665
      %v668 = vmul.f32 %v657, %v666
      %670 = vrot.lane.b32.xlu0 %v668, 16
      %v671 = vpop.permute.xlu0 %670
      %v673 = vadd.f32 %v663, %v671
      %v674 = vtanh.pop %v673
      %676 = vrot.lane.b32.xlu0 %v674, 32
      %v677 = vpop.permute.xlu0 %676
      %v679 = vmul.f32 %v657, %v677
      %s680 = scalar_lea.vmem %s315, %s604
      %v681 = vld [vmem:[%s680] sm:$0xff]
      %683 = vrot.lane.b32.xlu0 %v602, 48
      %v684 = vpop.permute.xlu0 %683
      %v686 = vsub.f32 %v679, %v684
      %688 = vset.pattern.permute.xlu0 0
      %689 = vperm.xlu0 %688, %v681
      %v690 = vpop.permute.xlu0 %689
      %v692 = vmul.f32 %v690, %v686
      %694 = vrot.lane.b32.xlu0 %v692, 80
      %v695 = vpop.permute.xlu0 %694
      %v697 = vadd.f32 %v602, %v695
      %698 = vst.msk [vmem:[#allocation2] sm:$0xff] %vm370, %v697
      %v699 = vsub.f32 %v673, %v661
      %v700 = vmul.f32 %v690, %v699
      %702 = vrot.lane.b32.xlu0 %v700, 112
      %v703 = vpop.permute.xlu0 %702
      %v705 = vadd.f32 %v603, %v703
      %706 = vst.msk [vmem:[#allocation3] sm:$0xff] %vm370, %v705
      %v707 = vmul.f32 %v679, %v690
      %v708 = vpack.c.bf16 %v707, %v707
      %v710 = vunpack.c.l.b16 %v708
      %v711 = vpack.c.b16 %v710, %v710
      %712 = vrot.lane.b32.xlu0 %v711, 80
      %v713 = vpop.permute.xlu0 %712
      %s715 = smul.addr %s601, 4
      %s716 = scalar_lea.vmem %s340, %s715
      %717 = vst.msk [vmem:[%s716] sm:$0xf] %vm480, %v713
      %s718 = sadd.s32 %s18, 3
      %v719 = vld [vmem:[#allocation2] sm:$0xff]
      %v720 = vld [vmem:[#allocation3] sm:$0xff]
      %s721 = smul.u32 %s718, 8
      %s722 = scalar_lea.vmem %s299, %s721
      %v723 = vld [vmem:[%s722] sm:$0xff]
      %v724 = vpack.c.bf16 %v719, %v719
      %v726 = vsel %vm370, %v724, 0
      %728 = vmatprep.subr.bf16.mxu0 0
      %729 = vmatpush1.bf16.msra.mxu0 0
      %730 = vmatprep.subr.bf16.mxu0 0
      %731 = vmatpush1.bf16.msra.mxu0 0
      %732 = vmatprep.subr.bf16.mxu0 0
      %733 = vmatpush1.bf16.msra.mxu0 0
      %734 = vmatprep.subr.bf16.mxu0 0
      %735 = vmatpush1.bf16.msra.mxu0 0
      %736 = vmatprep.subr.bf16.mxu0 0
      %737 = vmatpush1.bf16.msra.mxu0 0
      %738 = vmatprep.subr.bf16.mxu0 0
      %739 = vmatpush1.bf16.msra.mxu0 0
      %740 = vmatprep.subr.bf16.mxu0 0
      %741 = vmatpush1.bf16.msra.mxu0 0
      %742 = vmatprep.subr.bf16.mxu0 0
      %743 = vmatpush1.bf16.msra.mxu0 %v368
      %744 = vmatprep.subr.bf16.mxu0 0
      %745 = vmatpush2.bf16.msra.mxu0 0
      %746 = vmatprep.subr.bf16.mxu0 0
      %747 = vmatpush2.bf16.msra.mxu0 0
      %748 = vmatprep.subr.bf16.mxu0 0
      %749 = vmatpush2.bf16.msra.mxu0 0
      %750 = vmatprep.subr.bf16.mxu0 0
      %751 = vmatpush2.bf16.msra.mxu0 0
      %752 = vmatprep.subr.bf16.mxu0 0
      %753 = vmatpush2.bf16.msra.mxu0 0
      %754 = vmatprep.subr.bf16.mxu0 0
      %755 = vmatpush2.bf16.msra.mxu0 0
      %756 = vmatprep.subr.bf16.mxu0 0
      %757 = vmatpush2.bf16.msra.mxu0 0
      %758 = vmatprep.subr.bf16.mxu0 0
      %759 = vmatpush2.bf16.msra.mxu0 0
      %760 = vmatprep.mubr.bf16.mxu0 0
      %761 = vmatmul.mubr.bf16.gmra.mxu0 %v726
      %v762 = vpop.f32.mrf.mxu0
      %v763 = vadd.f32 0.0, %v762
      %v764 = vpop.f32.mrf.mxu0
      %v765 = vpop.f32.mrf.mxu0
      %v766 = vpop.f32.mrf.mxu0
      %767 = vdwg.mxu0
      %v768 = vadd.f32 %v723, %v763
      %v769 = vxor.u32 %v768, 2147483648
      %v770 = vmul.f32 %v769, 1.442695
      %v771 = vpow.pop %v770
      %v772 = vadd.f32 %v771, 1.0
      %v773 = vrcp.pop %v772
      %v774 = vmul.f32 1.0, %v773
      %v775 = vtanh.pop %v768
      %777 = vrot.lane.b32.xlu0 %v720, 16
      %v778 = vpop.permute.xlu0 %777
      %v780 = vmul.f32 %v774, %v778
      %782 = vrot.lane.b32.xlu0 %v775, 96
      %v783 = vpop.permute.xlu0 %782
      %v785 = vmul.f32 %v774, %v783
      %787 = vrot.lane.b32.xlu0 %v785, 16
      %v788 = vpop.permute.xlu0 %787
      %v790 = vadd.f32 %v780, %v788
      %v791 = vtanh.pop %v790
      %793 = vrot.lane.b32.xlu0 %v791, 32
      %v794 = vpop.permute.xlu0 %793
      %v796 = vmul.f32 %v774, %v794
      %s797 = scalar_lea.vmem %s315, %s721
      %v798 = vld [vmem:[%s797] sm:$0xff]
      %800 = vrot.lane.b32.xlu0 %v719, 48
      %v801 = vpop.permute.xlu0 %800
      %v803 = vsub.f32 %v796, %v801
      %805 = vset.pattern.permute.xlu0 0
      %806 = vperm.xlu0 %805, %v798
      %v807 = vpop.permute.xlu0 %806
      %v809 = vmul.f32 %v807, %v803
      %811 = vrot.lane.b32.xlu0 %v809, 80
      %v812 = vpop.permute.xlu0 %811
      %v814 = vadd.f32 %v719, %v812
      %815 = vst.msk [vmem:[#allocation2] sm:$0xff] %vm370, %v814
      %v816 = vsub.f32 %v790, %v778
      %v817 = vmul.f32 %v807, %v816
      %819 = vrot.lane.b32.xlu0 %v817, 112
      %v820 = vpop.permute.xlu0 %819
      %v822 = vadd.f32 %v720, %v820
      %823 = vst.msk [vmem:[#allocation3] sm:$0xff] %vm370, %v822
      %v824 = vmul.f32 %v796, %v807
      %v825 = vpack.c.bf16 %v824, %v824
      %v827 = vunpack.c.l.b16 %v825
      %v828 = vpack.c.b16 %v827, %v827
      %829 = vrot.lane.b32.xlu0 %v828, 80
      %v830 = vpop.permute.xlu0 %829
      %s832 = smul.addr %s718, 4
      %s833 = scalar_lea.vmem %s340, %s832
      %834 = vst.msk [vmem:[%s833] sm:$0xf] %vm480, %v830
      %s835 = ssub.s32 4, %s18
      %v836 = vld [vmem:[#allocation2] sm:$0xff]
      %v837 = vld [vmem:[#allocation3] sm:$0xff]
      %s838 = smul.u32 %s835, 8
      %s839 = scalar_lea.vmem %s299, %s838
      %v840 = vld [vmem:[%s839] sm:$0xff]
      %v841 = vpack.c.bf16 %v836, %v836
      %v843 = vsel %vm370, %v841, 0
      %845 = vmatprep.subr.bf16.mxu0 0
      %846 = vmatpush1.bf16.msra.mxu0 0
      %847 = vmatprep.subr.bf16.mxu0 0
      %848 = vmatpush1.bf16.msra.mxu0 0
      %849 = vmatprep.subr.bf16.mxu0 0
      %850 = vmatpush1.bf16.msra.mxu0 0
      %851 = vmatprep.subr.bf16.mxu0 0
      %852 = vmatpush1.bf16.msra.mxu0 0
      %853 = vmatprep.subr.bf16.mxu0 0
      %854 = vmatpush1.bf16.msra.mxu0 0
      %855 = vmatprep.subr.bf16.mxu0 0
      %856 = vmatpush1.bf16.msra.mxu0 0
      %857 = vmatprep.subr.bf16.mxu0 0
      %858 = vmatpush1.bf16.msra.mxu0 0
      %859 = vmatprep.subr.bf16.mxu0 0
      %860 = vmatpush1.bf16.msra.mxu0 %v368
      %861 = vmatprep.subr.bf16.mxu0 0
      %862 = vmatpush2.bf16.msra.mxu0 0
      %863 = vmatprep.subr.bf16.mxu0 0
      %864 = vmatpush2.bf16.msra.mxu0 0
      %865 = vmatprep.subr.bf16.mxu0 0
      %866 = vmatpush2.bf16.msra.mxu0 0
      %867 = vmatprep.subr.bf16.mxu0 0
      %868 = vmatpush2.bf16.msra.mxu0 0
      %869 = vmatprep.subr.bf16.mxu0 0
      %870 = vmatpush2.bf16.msra.mxu0 0
      %871 = vmatprep.subr.bf16.mxu0 0
      %872 = vmatpush2.bf16.msra.mxu0 0
      %873 = vmatprep.subr.bf16.mxu0 0
      %874 = vmatpush2.bf16.msra.mxu0 0
      %875 = vmatprep.subr.bf16.mxu0 0
      %876 = vmatpush2.bf16.msra.mxu0 0
      %877 = vmatprep.mubr.bf16.mxu0 0
      %878 = vmatmul.mubr.bf16.gmra.mxu0 %v843
      %v879 = vpop.f32.mrf.mxu0
      %v880 = vadd.f32 0.0, %v879
      %v881 = vpop.f32.mrf.mxu0
      %v882 = vpop.f32.mrf.mxu0
      %v883 = vpop.f32.mrf.mxu0
      %884 = vdwg.mxu0
      %v885 = vadd.f32 %v840, %v880
      %v886 = vxor.u32 %v885, 2147483648
      %v887 = vmul.f32 %v886, 1.442695
      %v888 = vpow.pop %v887
      %v889 = vadd.f32 %v888, 1.0
      %v890 = vrcp.pop %v889
      %v891 = vmul.f32 1.0, %v890
      %v892 = vtanh.pop %v885
      %894 = vrot.lane.b32.xlu0 %v837, 16
      %v895 = vpop.permute.xlu0 %894
      %v897 = vmul.f32 %v891, %v895
      %899 = vrot.lane.b32.xlu0 %v892, 96
      %v900 = vpop.permute.xlu0 %899
      %v902 = vmul.f32 %v891, %v900
      %904 = vrot.lane.b32.xlu0 %v902, 16
      %v905 = vpop.permute.xlu0 %904
      %v907 = vadd.f32 %v897, %v905
      %v908 = vtanh.pop %v907
      %910 = vrot.lane.b32.xlu0 %v908, 32
      %v911 = vpop.permute.xlu0 %910
      %v913 = vmul.f32 %v891, %v911
      %s914 = scalar_lea.vmem %s315, %s838
      %v915 = vld [vmem:[%s914] sm:$0xff]
      %917 = vrot.lane.b32.xlu0 %v836, 48
      %v918 = vpop.permute.xlu0 %917
      %v920 = vsub.f32 %v913, %v918
      %922 = vset.pattern.permute.xlu0 0
      %923 = vperm.xlu0 %922, %v915
      %v924 = vpop.permute.xlu0 %923
      %v926 = vmul.f32 %v924, %v920
      %928 = vrot.lane.b32.xlu0 %v926, 80
      %v929 = vpop.permute.xlu0 %928
      %v931 = vadd.f32 %v836, %v929
      %932 = vst.msk [vmem:[#allocation2] sm:$0xff] %vm370, %v931
      %v933 = vsub.f32 %v907, %v895
      %v934 = vmul.f32 %v924, %v933
      %936 = vrot.lane.b32.xlu0 %v934, 112
      %v937 = vpop.permute.xlu0 %936
      %v939 = vadd.f32 %v837, %v937
      %940 = vst.msk [vmem:[#allocation3] sm:$0xff] %vm370, %v939
      %v941 = vmul.f32 %v913, %v924
      %v942 = vpack.c.bf16 %v941, %v941
      %v944 = vunpack.c.l.b16 %v942
      %v945 = vpack.c.b16 %v944, %v944
      %946 = vrot.lane.b32.xlu0 %v945, 80
      %v947 = vpop.permute.xlu0 %946
      %s949 = smul.addr %s835, 4
      %s950 = scalar_lea.vmem %s340, %s949
      %951 = vst.msk [vmem:[%s950] sm:$0xf] %vm480, %v947
      %s952 = smul.u32 %s18, 4294967293
      %s953 = sadd.s32 %s952, 5
      %v954 = vld [vmem:[#allocation2] sm:$0xff]
      %v955 = vld [vmem:[#allocation3] sm:$0xff]
      %s956 = smul.u32 %s953, 8
      %s957 = scalar_lea.vmem %s299, %s956
      %v958 = vld [vmem:[%s957] sm:$0xff]
      %v959 = vpack.c.bf16 %v954, %v954
      %v961 = vsel %vm370, %v959, 0
      %963 = vmatprep.subr.bf16.mxu0 0
      %964 = vmatpush1.bf16.msra.mxu0 0
      %965 = vmatprep.subr.bf16.mxu0 0
      %966 = vmatpush1.bf16.msra.mxu0 0
      %967 = vmatprep.subr.bf16.mxu0 0
      %968 = vmatpush1.bf16.msra.mxu0 0
      %969 = vmatprep.subr.bf16.mxu0 0
      %970 = vmatpush1.bf16.msra.mxu0 0
      %971 = vmatprep.subr.bf16.mxu0 0
      %972 = vmatpush1.bf16.msra.mxu0 0
      %973 = vmatprep.subr.bf16.mxu0 0
      %974 = vmatpush1.bf16.msra.mxu0 0
      %975 = vmatprep.subr.bf16.mxu0 0
      %976 = vmatpush1.bf16.msra.mxu0 0
      %977 = vmatprep.subr.bf16.mxu0 0
      %978 = vmatpush1.bf16.msra.mxu0 %v368
      %979 = vmatprep.subr.bf16.mxu0 0
      %980 = vmatpush2.bf16.msra.mxu0 0
      %981 = vmatprep.subr.bf16.mxu0 0
      %982 = vmatpush2.bf16.msra.mxu0 0
      %983 = vmatprep.subr.bf16.mxu0 0
      %984 = vmatpush2.bf16.msra.mxu0 0
      %985 = vmatprep.subr.bf16.mxu0 0
      %986 = vmatpush2.bf16.msra.mxu0 0
      %987 = vmatprep.subr.bf16.mxu0 0
      %988 = vmatpush2.bf16.msra.mxu0 0
      %989 = vmatprep.subr.bf16.mxu0 0
      %990 = vmatpush2.bf16.msra.mxu0 0
      %991 = vmatprep.subr.bf16.mxu0 0
      %992 = vmatpush2.bf16.msra.mxu0 0
      %993 = vmatprep.subr.bf16.mxu0 0
      %994 = vmatpush2.bf16.msra.mxu0 0
      %995 = vmatprep.mubr.bf16.mxu0 0
      %996 = vmatmul.mubr.bf16.gmra.mxu0 %v961
      %v997 = vpop.f32.mrf.mxu0
      %v998 = vadd.f32 0.0, %v997
      %v999 = vpop.f32.mrf.mxu0
      %v1000 = vpop.f32.mrf.mxu0
      %v1001 = vpop.f32.mrf.mxu0
      %1002 = vdwg.mxu0
      %v1003 = vadd.f32 %v958, %v998
      %v1004 = vxor.u32 %v1003, 2147483648
      %v1005 = vmul.f32 %v1004, 1.442695
      %v1006 = vpow.pop %v1005
      %v1007 = vadd.f32 %v1006, 1.0
      %v1008 = vrcp.pop %v1007
      %v1009 = vmul.f32 1.0, %v1008
      %v1010 = vtanh.pop %v1003
      %1012 = vrot.lane.b32.xlu0 %v955, 16
      %v1013 = vpop.permute.xlu0 %1012
      %v1015 = vmul.f32 %v1009, %v1013
      %1017 = vrot.lane.b32.xlu0 %v1010, 96
      %v1018 = vpop.permute.xlu0 %1017
      %v1020 = vmul.f32 %v1009, %v1018
      %1022 = vrot.lane.b32.xlu0 %v1020, 16
      %v1023 = vpop.permute.xlu0 %1022
      %v1025 = vadd.f32 %v1015, %v1023
      %v1026 = vtanh.pop %v1025
      %1028 = vrot.lane.b32.xlu0 %v1026, 32
      %v1029 = vpop.permute.xlu0 %1028
      %v1031 = vmul.f32 %v1009, %v1029
      %s1032 = scalar_lea.vmem %s315, %s956
      %v1033 = vld [vmem:[%s1032] sm:$0xff]
      %1035 = vrot.lane.b32.xlu0 %v954, 48
      %v1036 = vpop.permute.xlu0 %1035
      %v1038 = vsub.f32 %v1031, %v1036
      %1040 = vset.pattern.permute.xlu0 0
      %1041 = vperm.xlu0 %1040, %v1033
      %v1042 = vpop.permute.xlu0 %1041
      %v1044 = vmul.f32 %v1042, %v1038
      %1046 = vrot.lane.b32.xlu0 %v1044, 80
      %v1047 = vpop.permute.xlu0 %1046
      %v1049 = vadd.f32 %v954, %v1047
      %1050 = vst.msk [vmem:[#allocation2] sm:$0xff] %vm370, %v1049
      %v1051 = vsub.f32 %v1025, %v1013
      %v1052 = vmul.f32 %v1042, %v1051
      %1054 = vrot.lane.b32.xlu0 %v1052, 112
      %v1055 = vpop.permute.xlu0 %1054
      %v1057 = vadd.f32 %v955, %v1055
      %1058 = vst.msk [vmem:[#allocation3] sm:$0xff] %vm370, %v1057
      %v1059 = vmul.f32 %v1031, %v1042
      %v1060 = vpack.c.bf16 %v1059, %v1059
      %v1062 = vunpack.c.l.b16 %v1060
      %v1063 = vpack.c.b16 %v1062, %v1062
      %1064 = vrot.lane.b32.xlu0 %v1063, 80
      %v1065 = vpop.permute.xlu0 %1064
      %s1067 = smul.addr %s953, 4
      %s1068 = scalar_lea.vmem %s340, %s1067
      %1069 = vst.msk [vmem:[%s1068] sm:$0xf] %vm480, %v1065
      %s1070 = smul.u32 %s18, 4294967291
      %s1071 = sadd.s32 %s1070, 6
      %v1072 = vld [vmem:[#allocation2] sm:$0xff]
      %v1073 = vld [vmem:[#allocation3] sm:$0xff]
      %s1074 = smul.u32 %s1071, 8
      %s1075 = scalar_lea.vmem %s299, %s1074
      %v1076 = vld [vmem:[%s1075] sm:$0xff]
      %v1077 = vpack.c.bf16 %v1072, %v1072
      %v1079 = vsel %vm370, %v1077, 0
      %1081 = vmatprep.subr.bf16.mxu0 0
      %1082 = vmatpush1.bf16.msra.mxu0 0
      %1083 = vmatprep.subr.bf16.mxu0 0
      %1084 = vmatpush1.bf16.msra.mxu0 0
      %1085 = vmatprep.subr.bf16.mxu0 0
      %1086 = vmatpush1.bf16.msra.mxu0 0
      %1087 = vmatprep.subr.bf16.mxu0 0
      %1088 = vmatpush1.bf16.msra.mxu0 0
      %1089 = vmatprep.subr.bf16.mxu0 0
      %1090 = vmatpush1.bf16.msra.mxu0 0
      %1091 = vmatprep.subr.bf16.mxu0 0
      %1092 = vmatpush1.bf16.msra.mxu0 0
      %1093 = vmatprep.subr.bf16.mxu0 0
      %1094 = vmatpush1.bf16.msra.mxu0 0
      %1095 = vmatprep.subr.bf16.mxu0 0
      %1096 = vmatpush1.bf16.msra.mxu0 %v368
      %1097 = vmatprep.subr.bf16.mxu0 0
      %1098 = vmatpush2.bf16.msra.mxu0 0
      %1099 = vmatprep.subr.bf16.mxu0 0
      %1100 = vmatpush2.bf16.msra.mxu0 0
      %1101 = vmatprep.subr.bf16.mxu0 0
      %1102 = vmatpush2.bf16.msra.mxu0 0
      %1103 = vmatprep.subr.bf16.mxu0 0
      %1104 = vmatpush2.bf16.msra.mxu0 0
      %1105 = vmatprep.subr.bf16.mxu0 0
      %1106 = vmatpush2.bf16.msra.mxu0 0
      %1107 = vmatprep.subr.bf16.mxu0 0
      %1108 = vmatpush2.bf16.msra.mxu0 0
      %1109 = vmatprep.subr.bf16.mxu0 0
      %1110 = vmatpush2.bf16.msra.mxu0 0
      %1111 = vmatprep.subr.bf16.mxu0 0
      %1112 = vmatpush2.bf16.msra.mxu0 0
      %1113 = vmatprep.mubr.bf16.mxu0 0
      %1114 = vmatmul.mubr.bf16.gmra.mxu0 %v1079
      %v1115 = vpop.f32.mrf.mxu0
      %v1116 = vadd.f32 0.0, %v1115
      %v1117 = vpop.f32.mrf.mxu0
      %v1118 = vpop.f32.mrf.mxu0
      %v1119 = vpop.f32.mrf.mxu0
      %1120 = vdwg.mxu0
      %v1121 = vadd.f32 %v1076, %v1116
      %v1122 = vxor.u32 %v1121, 2147483648
      %v1123 = vmul.f32 %v1122, 1.442695
      %v1124 = vpow.pop %v1123
      %v1125 = vadd.f32 %v1124, 1.0
      %v1126 = vrcp.pop %v1125
      %v1127 = vmul.f32 1.0, %v1126
      %v1128 = vtanh.pop %v1121
      %1130 = vrot.lane.b32.xlu0 %v1073, 16
      %v1131 = vpop.permute.xlu0 %1130
      %v1133 = vmul.f32 %v1127, %v1131
      %1135 = vrot.lane.b32.xlu0 %v1128, 96
      %v1136 = vpop.permute.xlu0 %1135
      %v1138 = vmul.f32 %v1127, %v1136
      %1140 = vrot.lane.b32.xlu0 %v1138, 16
      %v1141 = vpop.permute.xlu0 %1140
      %v1143 = vadd.f32 %v1133, %v1141
      %v1144 = vtanh.pop %v1143
      %1146 = vrot.lane.b32.xlu0 %v1144, 32
      %v1147 = vpop.permute.xlu0 %1146
      %v1149 = vmul.f32 %v1127, %v1147
      %s1150 = scalar_lea.vmem %s315, %s1074
      %v1151 = vld [vmem:[%s1150] sm:$0xff]
      %1153 = vrot.lane.b32.xlu0 %v1072, 48
      %v1154 = vpop.permute.xlu0 %1153
      %v1156 = vsub.f32 %v1149, %v1154
      %1158 = vset.pattern.permute.xlu0 0
      %1159 = vperm.xlu0 %1158, %v1151
      %v1160 = vpop.permute.xlu0 %1159
      %v1162 = vmul.f32 %v1160, %v1156
      %1164 = vrot.lane.b32.xlu0 %v1162, 80
      %v1165 = vpop.permute.xlu0 %1164
      %v1167 = vadd.f32 %v1072, %v1165
      %1168 = vst.msk [vmem:[#allocation2] sm:$0xff] %vm370, %v1167
      %v1169 = vsub.f32 %v1143, %v1131
      %v1170 = vmul.f32 %v1160, %v1169
      %1172 = vrot.lane.b32.xlu0 %v1170, 112
      %v1173 = vpop.permute.xlu0 %1172
      %v1175 = vadd.f32 %v1073, %v1173
      %1176 = vst.msk [vmem:[#allocation3] sm:$0xff] %vm370, %v1175
      %v1177 = vmul.f32 %v1149, %v1160
      %v1178 = vpack.c.bf16 %v1177, %v1177
      %v1180 = vunpack.c.l.b16 %v1178
      %v1181 = vpack.c.b16 %v1180, %v1180
      %1182 = vrot.lane.b32.xlu0 %v1181, 80
      %v1183 = vpop.permute.xlu0 %1182
      %s1185 = smul.addr %s1071, 4
      %s1186 = scalar_lea.vmem %s340, %s1185
      %1187 = vst.msk [vmem:[%s1186] sm:$0xf] %vm480, %v1183
      %s1188 = smul.u32 %s18, 4294967289
      %s1189 = sadd.s32 %s1188, 7
      %v1190 = vld [vmem:[#allocation2] sm:$0xff]
      %v1191 = vld [vmem:[#allocation3] sm:$0xff]
      %s1192 = smul.u32 %s1189, 8
      %s1193 = scalar_lea.vmem %s299, %s1192
      %v1194 = vld [vmem:[%s1193] sm:$0xff]
      %v1195 = vpack.c.bf16 %v1190, %v1190
      %v1197 = vsel %vm370, %v1195, 0
      %1199 = vmatprep.subr.bf16.mxu0 0
      %1200 = vmatpush1.bf16.msra.mxu0 0
      %1201 = vmatprep.subr.bf16.mxu0 0
      %1202 = vmatpush1.bf16.msra.mxu0 0
      %1203 = vmatprep.subr.bf16.mxu0 0
      %1204 = vmatpush1.bf16.msra.mxu0 0
      %1205 = vmatprep.subr.bf16.mxu0 0
      %1206 = vmatpush1.bf16.msra.mxu0 0
      %1207 = vmatprep.subr.bf16.mxu0 0
      %1208 = vmatpush1.bf16.msra.mxu0 0
      %1209 = vmatprep.subr.bf16.mxu0 0
      %1210 = vmatpush1.bf16.msra.mxu0 0
      %1211 = vmatprep.subr.bf16.mxu0 0
      %1212 = vmatpush1.bf16.msra.mxu0 0
      %1213 = vmatprep.subr.bf16.mxu0 0
      %1214 = vmatpush1.bf16.msra.mxu0 %v368
      %1215 = vmatprep.subr.bf16.mxu0 0
      %1216 = vmatpush2.bf16.msra.mxu0 0
      %1217 = vmatprep.subr.bf16.mxu0 0
      %1218 = vmatpush2.bf16.msra.mxu0 0
      %1219 = vmatprep.subr.bf16.mxu0 0
      %1220 = vmatpush2.bf16.msra.mxu0 0
      %1221 = vmatprep.subr.bf16.mxu0 0
      %1222 = vmatpush2.bf16.msra.mxu0 0
      %1223 = vmatprep.subr.bf16.mxu0 0
      %1224 = vmatpush2.bf16.msra.mxu0 0
      %1225 = vmatprep.subr.bf16.mxu0 0
      %1226 = vmatpush2.bf16.msra.mxu0 0
      %1227 = vmatprep.subr.bf16.mxu0 0
      %1228 = vmatpush2.bf16.msra.mxu0 0
      %1229 = vmatprep.subr.bf16.mxu0 0
      %1230 = vmatpush2.bf16.msra.mxu0 0
      %1231 = vmatprep.mubr.bf16.mxu0 0
      %1232 = vmatmul.mubr.bf16.gmra.mxu0 %v1197
      %v1233 = vpop.f32.mrf.mxu0
      %v1234 = vadd.f32 0.0, %v1233
      %v1235 = vpop.f32.mrf.mxu0
      %v1236 = vpop.f32.mrf.mxu0
      %v1237 = vpop.f32.mrf.mxu0
      %1238 = vdwg.mxu0
      %v1239 = vadd.f32 %v1194, %v1234
      %v1240 = vxor.u32 %v1239, 2147483648
      %v1241 = vmul.f32 %v1240, 1.442695
      %v1242 = vpow.pop %v1241
      %v1243 = vadd.f32 %v1242, 1.0
      %v1244 = vrcp.pop %v1243
      %v1245 = vmul.f32 1.0, %v1244
      %v1246 = vtanh.pop %v1239
      %1248 = vrot.lane.b32.xlu0 %v1191, 16
      %v1249 = vpop.permute.xlu0 %1248
      %v1251 = vmul.f32 %v1245, %v1249
      %1253 = vrot.lane.b32.xlu0 %v1246, 96
      %v1254 = vpop.permute.xlu0 %1253
      %v1256 = vmul.f32 %v1245, %v1254
      %1258 = vrot.lane.b32.xlu0 %v1256, 16
      %v1259 = vpop.permute.xlu0 %1258
      %v1261 = vadd.f32 %v1251, %v1259
      %v1262 = vtanh.pop %v1261
      %1264 = vrot.lane.b32.xlu0 %v1262, 32
      %v1265 = vpop.permute.xlu0 %1264
      %v1267 = vmul.f32 %v1245, %v1265
      %s1268 = scalar_lea.vmem %s315, %s1192
      %v1269 = vld [vmem:[%s1268] sm:$0xff]
      %1271 = vrot.lane.b32.xlu0 %v1190, 48
      %v1272 = vpop.permute.xlu0 %1271
      %v1274 = vsub.f32 %v1267, %v1272
      %1276 = vset.pattern.permute.xlu0 0
      %1277 = vperm.xlu0 %1276, %v1269
      %v1278 = vpop.permute.xlu0 %1277
      %v1280 = vmul.f32 %v1278, %v1274
      %1282 = vrot.lane.b32.xlu0 %v1280, 80
      %v1283 = vpop.permute.xlu0 %1282
      %v1285 = vadd.f32 %v1190, %v1283
      %1286 = vst.msk [vmem:[#allocation2] sm:$0xff] %vm370, %v1285
      %v1287 = vsub.f32 %v1261, %v1249
      %v1288 = vmul.f32 %v1278, %v1287
      %1290 = vrot.lane.b32.xlu0 %v1288, 112
      %v1291 = vpop.permute.xlu0 %1290
      %v1293 = vadd.f32 %v1191, %v1291
      %1294 = vst.msk [vmem:[#allocation3] sm:$0xff] %vm370, %v1293
      %v1295 = vmul.f32 %v1267, %v1278
      %v1296 = vpack.c.bf16 %v1295, %v1295
      %v1298 = vunpack.c.l.b16 %v1296
      %v1299 = vpack.c.b16 %v1298, %v1298
      %1300 = vrot.lane.b32.xlu0 %v1299, 80
      %v1301 = vpop.permute.xlu0 %1300
      %s1303 = smul.addr %s1189, 4
      %s1304 = scalar_lea.vmem %s340, %s1303
      %1305 = vst.msk [vmem:[%s1304] sm:$0xf] %vm480, %v1301
      %s1306 = ssub.s32 1, %s18
      %s1307 = smul.u32 %s1306, %s19
      %s1308 = ssub.s32 0, %s19
      %s1309 = smul.u32 %s18, %s1308
      %s1310 = sadd.s32 %s1307, %s1309
      %s1311 = smul.u32 8, %s1310
      %p1312 = scmp.lt.s32.totalorder %s18, 1
      %s1313 = scalar_select %p1312, %s18, 1
      %p1314 = scmp.lt.s32.totalorder %s1311, 7
      %s1315 = scalar_select %p1314, %s1311, 7
      %s1316 = smul.addr %s1313, 8
      %s1317 = sadd.s32 %s1315, %s1316
      %s1318 = smul.addr %s1317, 4
      %s1319 = scalar_lea.vmem %s3, %s1318
      // Predicated region
      $region37: #{_lambda_.31} parent=31 // pred_check
        %p1320 = pneg %p156
      $region38: #{_lambda_.31} parent=31 // pred_check_branch
        %1322 = sbr.rel (%p1320) target = $region40
      $region39: #{_lambda_.31} parent=31 // pred_region
        %s1323 = ssub.s32 1, %s18
        %s1324 = smul.u32 %s1323, %s19
        %s1325 = ssub.s32 0, %s19
        %s1326 = smul.u32 %s18, %s1325
        %s1327 = sadd.s32 %s1324, %s1326
        %s1328 = smul.u32 8, %s1327
      $region40: #{_lambda_.31} parent=31 // pred_fallthru
        _
    $region32: #{_lambda_.31} parent=5 // pred_fallthru
      _
    %p1329 = scmp.le.s32.totalorder 2, %s9
    // Predicated region
    $region41: #{_lambda_.31} parent=5 // pred_check
      %p1330 = pneg %p1329
    $region42: #{_lambda_.31} parent=5 // pred_check_branch
      %1332 = sbr.rel (%p1330) target = $region44
    $region43: #{_lambda_.31} parent=5 // pred_region
      %s1333 = ssub.s32 %s9, 2
      // Predicated region
      $region45: #{_lambda_.31} parent=43 // pred_check
        %p1334 = pneg %p162
      $region46: #{_lambda_.31} parent=43 // pred_check_branch
        %1336 = sbr.rel (%p1334) target = $region48
      $region47: #{_lambda_.31} parent=43 // pred_region
        %s1337 = ssub.s32 1, %s20
        %s1338 = smul.u32 %s1337, %s21
        %s1339 = ssub.s32 0, %s21
        %s1340 = smul.u32 %s20, %s1339
        %s1341 = sadd.s32 %s1338, %s1340
        %s1342 = smul.u32 8, %s1341
        %p1343 = scmp.lt.s32.totalorder %s20, 1
        %s1344 = scalar_select %p1343, %s20, 1
        %p1345 = scmp.lt.s32.totalorder %s1342, 7
        %s1346 = scalar_select %p1345, %s1342, 7
        %s1347 = smul.addr %s1344, 8
        %s1348 = sadd.s32 %s1346, %s1347
        %s1349 = smul.addr %s1348, 4
        %s1350 = scalar_lea.vmem %s3, %s1349
      $region48: #{_lambda_.31} parent=43 // pred_fallthru
        _
    $region44: #{_lambda_.31} parent=5 // pred_fallthru
      _
  $region6: #{_lambda_.31} parent=0 // loop_footer
    %s13 = sadd.s32 1, %s9
  $region7: #{_lambda_.31} parent=0 // loop_footer_branch
    %8 = sbr.rel target = $region3
  $region8: #{_lambda_.31} parent=0 // loop_exit
    _

// kernel: _lambda_.36
$region0: #{_lambda_.36}
  #allocation0 [shape = 'u32[]', space=smem, size = 0x4, offset = 0x4, fixed_abs, tag = 'smem constant byte address 0x4 - core index']
  #allocation1 [shape = 'u32[144,128]{1,0:T(1,128)}', space=vmem, size = 0x12000, scoped, tag = 'internal scratch']
  %s0 = inlined_call_operand.vmem [shape: bf16[16,128], index: 0, kind: input, shape index: {}]
  %s1 = inlined_call_operand.vmem [shape: bf16[128,128], index: 1, kind: input, shape index: {}]
  %s2 = inlined_call_operand.vmem [shape: f32[1,128], index: 2, kind: input, shape index: {}]
  %s3 = inlined_call_operand.vmem [shape: f32[16,128], index: 3, kind: output, shape index: {}]
  %s4 = sld [smem:[#allocation0]]
  $region22: #{_lambda_.36} parent=0
    _
  %s6 = ssub.s32 1, %s4
  %s7 = scalar_select 0, %s6, %s4
  // Predicated region
  $region2: #{_lambda_.36} parent=0 // pred_check
    _
  $region3: #{_lambda_.36} parent=0 // pred_check_branch
    %9 = sbr.rel (0) target = $region5
  $region4: #{_lambda_.36} parent=0 // pred_region
    _
  $region5: #{_lambda_.36} parent=0 // pred_fallthru
    _
  // Predicated region
  $region6: #{_lambda_.36} parent=0 // pred_check
    _
  $region7: #{_lambda_.36} parent=0 // pred_check_branch
    %11 = sbr.rel (0) target = $region9
  $region8: #{_lambda_.36} parent=0 // pred_region
    _
  $region9: #{_lambda_.36} parent=0 // pred_fallthru
    _
  // Predicated region
  $region10: #{_lambda_.36} parent=0 // pred_check
    _
  $region11: #{_lambda_.36} parent=0 // pred_check_branch
    %13 = sbr.rel (0) target = $region13
  $region12: #{_lambda_.36} parent=0 // pred_region
    _
  $region13: #{_lambda_.36} parent=0 // pred_fallthru
    _
  %v15 = vld [vmem:[%s0] sm:$0xf]
  %v16 = vld [vmem:[%s0 + $0x4] sm:$0xf]
  %v17 = vld [vmem:[%s1] sm:$0xf]
  %v18 = vld [vmem:[%s1 + $0x4] sm:$0xf]
  %v19 = vld [vmem:[%s1 + $0x8] sm:$0xf]
  %v20 = vld [vmem:[%s1 + $0xc] sm:$0xf]
  %v21 = vld [vmem:[%s1 + $0x10] sm:$0xf]
  %v22 = vld [vmem:[%s1 + $0x14] sm:$0xf]
  %v23 = vld [vmem:[%s1 + $0x18] sm:$0xf]
  %v24 = vld [vmem:[%s1 + $0x1c] sm:$0xf]
  %v25 = vld [vmem:[%s1 + $0x20] sm:$0xf]
  %v26 = vld [vmem:[%s1 + $0x24] sm:$0xf]
  %v27 = vld [vmem:[%s1 + $0x28] sm:$0xf]
  %v28 = vld [vmem:[%s1 + $0x2c] sm:$0xf]
  %v29 = vld [vmem:[%s1 + $0x30] sm:$0xf]
  %v30 = vld [vmem:[%s1 + $0x34] sm:$0xf]
  %v31 = vld [vmem:[%s1 + $0x38] sm:$0xf]
  %v32 = vld [vmem:[%s1 + $0x3c] sm:$0xf]
  %v33 = vld [vmem:[%s2] sm:$0x1]
  %v35 = vlaneseq
  %v36 = vshrl.u32 %v35, 7
  %v37 = vsub.s32 0, %v36
  %v38 = vrot.slane %v33, %v37
  %v42 = vunpack.c.l.b16 %v15
  %v43 = vunpack.c.l.b16 %v16
  %v44 = vpack.c.b16 %v43, %v42
  %v62 = vunpack.c.l.b16 %v17
  %v63 = vunpack.c.l.b16 %v18
  %v64 = vunpack.c.l.b16 %v19
  %v65 = vunpack.c.l.b16 %v20
  %v66 = vunpack.c.l.b16 %v21
  %v67 = vunpack.c.l.b16 %v22
  %v68 = vunpack.c.l.b16 %v23
  %v69 = vunpack.c.l.b16 %v24
  %v70 = vunpack.c.l.b16 %v25
  %v71 = vunpack.c.l.b16 %v26
  %v72 = vunpack.c.l.b16 %v27
  %v73 = vunpack.c.l.b16 %v28
  %v74 = vunpack.c.l.b16 %v29
  %v75 = vunpack.c.l.b16 %v30
  %v76 = vunpack.c.l.b16 %v31
  %v77 = vunpack.c.l.b16 %v32
  %v78 = vpack.c.b16 %v63, %v62
  %v79 = vpack.c.b16 %v65, %v64
  %v80 = vpack.c.b16 %v67, %v66
  %v81 = vpack.c.b16 %v69, %v68
  %v82 = vpack.c.b16 %v71, %v70
  %v83 = vpack.c.b16 %v73, %v72
  %v84 = vpack.c.b16 %v75, %v74
  %v85 = vpack.c.b16 %v77, %v76
  %94 = vmatprep.subr.bf16.mxu0 0
  %95 = vmatpush1.bf16.msra.mxu0 %v85
  %96 = vmatprep.subr.bf16.mxu0 0
  %97 = vmatpush1.bf16.msra.mxu0 %v84
  %98 = vmatprep.subr.bf16.mxu0 0
  %99 = vmatpush1.bf16.msra.mxu0 %v83
  %100 = vmatprep.subr.bf16.mxu0 0
  %101 = vmatpush1.bf16.msra.mxu0 %v82
  %102 = vmatprep.subr.bf16.mxu0 0
  %103 = vmatpush1.bf16.msra.mxu0 %v81
  %104 = vmatprep.subr.bf16.mxu0 0
  %105 = vmatpush1.bf16.msra.mxu0 %v80
  %106 = vmatprep.subr.bf16.mxu0 0
  %107 = vmatpush1.bf16.msra.mxu0 %v79
  %108 = vmatprep.subr.bf16.mxu0 0
  %109 = vmatpush1.bf16.msra.mxu0 %v78
  %110 = vmatprep.subr.bf16.mxu0 0
  %111 = vmatpush2.bf16.msra.mxu0 0
  %112 = vmatprep.subr.bf16.mxu0 0
  %113 = vmatpush2.bf16.msra.mxu0 0
  %114 = vmatprep.subr.bf16.mxu0 0
  %115 = vmatpush2.bf16.msra.mxu0 0
  %116 = vmatprep.subr.bf16.mxu0 0
  %117 = vmatpush2.bf16.msra.mxu0 0
  %118 = vmatprep.subr.bf16.mxu0 0
  %119 = vmatpush2.bf16.msra.mxu0 0
  %120 = vmatprep.subr.bf16.mxu0 0
  %121 = vmatpush2.bf16.msra.mxu0 0
  %122 = vmatprep.subr.bf16.mxu0 0
  %123 = vmatpush2.bf16.msra.mxu0 0
  %124 = vmatprep.subr.bf16.mxu0 0
  %125 = vmatpush2.bf16.msra.mxu0 0
  %126 = vmatprep.mubr.bf16.mxu0 0
  %127 = vmatmul.mubr.bf16.gmra.mxu0 %v44
  %v128 = vpop.f32.mrf.mxu0
  %v129 = vadd.f32 %v38, %v128
  %v130 = vpop.f32.mrf.mxu0
  %v131 = vpop.f32.mrf.mxu0
  %v132 = vadd.f32 %v38, %v131
  %v133 = vpop.f32.mrf.mxu0
  %134 = vdwg.mxu0
  %135 = vst [vmem:[%s3] sm:$0xff] %v129
  %136 = vst [vmem:[%s3 + $0x8] sm:$0xff] %v132
  // Predicated region
  $region14: #{_lambda_.36} parent=0 // pred_check
    _
  $region15: #{_lambda_.36} parent=0 // pred_check_branch
    %138 = sbr.rel (0) target = $region17
  $region16: #{_lambda_.36} parent=0 // pred_region
    _
  $region17: #{_lambda_.36} parent=0 // pred_fallthru
    _
  // Predicated region
  $region18: #{_lambda_.36} parent=0 // pred_check
    _
  $region19: #{_lambda_.36} parent=0 // pred_check_branch
    %140 = sbr.rel (0) target = $region21
  $region20: #{_lambda_.36} parent=0 // pred_region
    _
  $region21: #{_lambda_.36} parent=0 // pred_fallthru
    _

// kernel: _lambda_.39
$region0: #{_lambda_.39}
  #allocation0 [shape = 'u32[]', space=smem, size = 0x4, offset = 0x4, fixed_abs, tag = 'smem constant byte address 0x4 - core index']
  #allocation1 [shape = 'u32[144,128]{1,0:T(1,128)}', space=vmem, size = 0x12000, scoped, tag = 'internal scratch']
  %s0 = inlined_call_operand.vmem [shape: bf16[16,32], index: 0, kind: input, shape index: {}]
  %s1 = inlined_call_operand.vmem [shape: bf16[32,128], index: 1, kind: input, shape index: {}]
  %s2 = inlined_call_operand.vmem [shape: f32[1,128], index: 2, kind: input, shape index: {}]
  %s3 = inlined_call_operand.vmem [shape: f32[16,128], index: 3, kind: output, shape index: {}]
  %s4 = sld [smem:[#allocation0]]
  $region22: #{_lambda_.39} parent=0
    _
  %s6 = ssub.s32 1, %s4
  %s7 = scalar_select 0, %s6, %s4
  // Predicated region
  $region2: #{_lambda_.39} parent=0 // pred_check
    _
  $region3: #{_lambda_.39} parent=0 // pred_check_branch
    %9 = sbr.rel (0) target = $region5
  $region4: #{_lambda_.39} parent=0 // pred_region
    _
  $region5: #{_lambda_.39} parent=0 // pred_fallthru
    _
  // Predicated region
  $region6: #{_lambda_.39} parent=0 // pred_check
    _
  $region7: #{_lambda_.39} parent=0 // pred_check_branch
    %11 = sbr.rel (0) target = $region9
  $region8: #{_lambda_.39} parent=0 // pred_region
    _
  $region9: #{_lambda_.39} parent=0 // pred_fallthru
    _
  // Predicated region
  $region10: #{_lambda_.39} parent=0 // pred_check
    _
  $region11: #{_lambda_.39} parent=0 // pred_check_branch
    %13 = sbr.rel (0) target = $region13
  $region12: #{_lambda_.39} parent=0 // pred_region
    _
  $region13: #{_lambda_.39} parent=0 // pred_fallthru
    _
  %v15 = vld [vmem:[%s0] sm:$0xf]
  %v16 = vld [vmem:[%s0 + $0x4] sm:$0xf]
  %v17 = vld [vmem:[%s1] sm:$0xf]
  %v18 = vld [vmem:[%s1 + $0x4] sm:$0xf]
  %v19 = vld [vmem:[%s1 + $0x8] sm:$0xf]
  %v20 = vld [vmem:[%s1 + $0xc] sm:$0xf]
  %v21 = vld [vmem:[%s2] sm:$0x1]
  %v23 = vlaneseq
  %v24 = vshrl.u32 %v23, 7
  %v25 = vsub.s32 0, %v24
  %v26 = vrot.slane %v21, %v25
  %v30 = vunpack.c.l.b16 %v15
  %v31 = vunpack.c.l.b16 %v16
  %v32 = vpack.c.b16 %v31, %v30
  %v37 = vunpack.c.l.b16 %v17
  %v38 = vunpack.c.l.b16 %v18
  %v39 = vunpack.c.l.b16 %v19
  %v40 = vunpack.c.l.b16 %v20
  %v41 = vpack.c.b16 %v38, %v37
  %v42 = vpack.c.b16 %v40, %v39
  %vm45 = vcmask 261120
  %v47 = vsel %vm45, %v32, 0
  %49 = vmatprep.subr.bf16.mxu0 0
  %50 = vmatpush1.bf16.msra.mxu0 0
  %51 = vmatprep.subr.bf16.mxu0 0
  %52 = vmatpush1.bf16.msra.mxu0 0
  %53 = vmatprep.subr.bf16.mxu0 0
  %54 = vmatpush1.bf16.msra.mxu0 0
  %55 = vmatprep.subr.bf16.mxu0 0
  %56 = vmatpush1.bf16.msra.mxu0 0
  %57 = vmatprep.subr.bf16.mxu0 0
  %58 = vmatpush1.bf16.msra.mxu0 0
  %59 = vmatprep.subr.bf16.mxu0 0
  %60 = vmatpush1.bf16.msra.mxu0 0
  %61 = vmatprep.subr.bf16.mxu0 0
  %62 = vmatpush1.bf16.msra.mxu0 %v42
  %63 = vmatprep.subr.bf16.mxu0 0
  %64 = vmatpush1.bf16.msra.mxu0 %v41
  %65 = vmatprep.subr.bf16.mxu0 0
  %66 = vmatpush2.bf16.msra.mxu0 0
  %67 = vmatprep.subr.bf16.mxu0 0
  %68 = vmatpush2.bf16.msra.mxu0 0
  %69 = vmatprep.subr.bf16.mxu0 0
  %70 = vmatpush2.bf16.msra.mxu0 0
  %71 = vmatprep.subr.bf16.mxu0 0
  %72 = vmatpush2.bf16.msra.mxu0 0
  %73 = vmatprep.subr.bf16.mxu0 0
  %74 = vmatpush2.bf16.msra.mxu0 0
  %75 = vmatprep.subr.bf16.mxu0 0
  %76 = vmatpush2.bf16.msra.mxu0 0
  %77 = vmatprep.subr.bf16.mxu0 0
  %78 = vmatpush2.bf16.msra.mxu0 0
  %79 = vmatprep.subr.bf16.mxu0 0
  %80 = vmatpush2.bf16.msra.mxu0 0
  %81 = vmatprep.mubr.bf16.mxu0 0
  %82 = vmatmul.mubr.bf16.gmra.mxu0 %v47
  %v83 = vpop.f32.mrf.mxu0
  %v84 = vadd.f32 %v26, %v83
  %v85 = vpop.f32.mrf.mxu0
  %v86 = vpop.f32.mrf.mxu0
  %v87 = vadd.f32 %v26, %v86
  %v88 = vpop.f32.mrf.mxu0
  %89 = vdwg.mxu0
  %90 = vst [vmem:[%s3] sm:$0xff] %v84
  %91 = vst [vmem:[%s3 + $0x8] sm:$0xff] %v87
  // Predicated region
  $region14: #{_lambda_.39} parent=0 // pred_check
    _
  $region15: #{_lambda_.39} parent=0 // pred_check_branch
    %93 = sbr.rel (0) target = $region17
  $region16: #{_lambda_.39} parent=0 // pred_region
    _
  $region17: #{_lambda_.39} parent=0 // pred_fallthru
    _
  // Predicated region
  $region18: #{_lambda_.39} parent=0 // pred_check
    _
  $region19: #{_lambda_.39} parent=0 // pred_check_branch
    %95 = sbr.rel (0) target = $region21
  $region20: #{_lambda_.39} parent=0 // pred_region
    _
  $region21: #{_lambda_.39} parent=0 // pred_fallthru
    _

// kernel: _lambda_.38
$region0: #{_lambda_.38}
  #allocation0 [shape = 'u32[]', space=smem, size = 0x4, offset = 0x4, fixed_abs, tag = 'smem constant byte address 0x4 - core index']
  #allocation1 [shape = 'u32[144,128]{1,0:T(1,128)}', space=vmem, size = 0x12000, scoped, tag = 'internal scratch']
  %s0 = inlined_call_operand.vmem [shape: bf16[16,32], index: 0, kind: input, shape index: {}]
  %s1 = inlined_call_operand.vmem [shape: bf16[32,128], index: 1, kind: input, shape index: {}]
  %s2 = inlined_call_operand.vmem [shape: f32[1,128], index: 2, kind: input, shape index: {}]
  %s3 = inlined_call_operand.vmem [shape: bf16[16,128], index: 3, kind: output, shape index: {}]
  %s4 = sld [smem:[#allocation0]]
  $region22: #{_lambda_.38} parent=0
    _
  %s6 = ssub.s32 1, %s4
  %s7 = scalar_select 0, %s6, %s4
  // Predicated region
  $region2: #{_lambda_.38} parent=0 // pred_check
    _
  $region3: #{_lambda_.38} parent=0 // pred_check_branch
    %9 = sbr.rel (0) target = $region5
  $region4: #{_lambda_.38} parent=0 // pred_region
    _
  $region5: #{_lambda_.38} parent=0 // pred_fallthru
    _
  // Predicated region
  $region6: #{_lambda_.38} parent=0 // pred_check
    _
  $region7: #{_lambda_.38} parent=0 // pred_check_branch
    %11 = sbr.rel (0) target = $region9
  $region8: #{_lambda_.38} parent=0 // pred_region
    _
  $region9: #{_lambda_.38} parent=0 // pred_fallthru
    _
  // Predicated region
  $region10: #{_lambda_.38} parent=0 // pred_check
    _
  $region11: #{_lambda_.38} parent=0 // pred_check_branch
    %13 = sbr.rel (0) target = $region13
  $region12: #{_lambda_.38} parent=0 // pred_region
    _
  $region13: #{_lambda_.38} parent=0 // pred_fallthru
    _
  %v15 = vld [vmem:[%s0] sm:$0xf]
  %v16 = vld [vmem:[%s0 + $0x4] sm:$0xf]
  %v17 = vld [vmem:[%s1] sm:$0xf]
  %v18 = vld [vmem:[%s1 + $0x4] sm:$0xf]
  %v19 = vld [vmem:[%s1 + $0x8] sm:$0xf]
  %v20 = vld [vmem:[%s1 + $0xc] sm:$0xf]
  %v21 = vld [vmem:[%s2] sm:$0x1]
  %v23 = vlaneseq
  %v24 = vshrl.u32 %v23, 7
  %v25 = vsub.s32 0, %v24
  %v26 = vrot.slane %v21, %v25
  %v30 = vunpack.c.l.b16 %v15
  %v31 = vunpack.c.l.b16 %v16
  %v32 = vpack.c.b16 %v31, %v30
  %v37 = vunpack.c.l.b16 %v17
  %v38 = vunpack.c.l.b16 %v18
  %v39 = vunpack.c.l.b16 %v19
  %v40 = vunpack.c.l.b16 %v20
  %v41 = vpack.c.b16 %v38, %v37
  %v42 = vpack.c.b16 %v40, %v39
  %vm45 = vcmask 261120
  %v47 = vsel %vm45, %v32, 0
  %49 = vmatprep.subr.bf16.mxu0 0
  %50 = vmatpush1.bf16.msra.mxu0 0
  %51 = vmatprep.subr.bf16.mxu0 0
  %52 = vmatpush1.bf16.msra.mxu0 0
  %53 = vmatprep.subr.bf16.mxu0 0
  %54 = vmatpush1.bf16.msra.mxu0 0
  %55 = vmatprep.subr.bf16.mxu0 0
  %56 = vmatpush1.bf16.msra.mxu0 0
  %57 = vmatprep.subr.bf16.mxu0 0
  %58 = vmatpush1.bf16.msra.mxu0 0
  %59 = vmatprep.subr.bf16.mxu0 0
  %60 = vmatpush1.bf16.msra.mxu0 0
  %61 = vmatprep.subr.bf16.mxu0 0
  %62 = vmatpush1.bf16.msra.mxu0 %v42
  %63 = vmatprep.subr.bf16.mxu0 0
  %64 = vmatpush1.bf16.msra.mxu0 %v41
  %65 = vmatprep.subr.bf16.mxu0 0
  %66 = vmatpush2.bf16.msra.mxu0 0
  %67 = vmatprep.subr.bf16.mxu0 0
  %68 = vmatpush2.bf16.msra.mxu0 0
  %69 = vmatprep.subr.bf16.mxu0 0
  %70 = vmatpush2.bf16.msra.mxu0 0
  %71 = vmatprep.subr.bf16.mxu0 0
  %72 = vmatpush2.bf16.msra.mxu0 0
  %73 = vmatprep.subr.bf16.mxu0 0
  %74 = vmatpush2.bf16.msra.mxu0 0
  %75 = vmatprep.subr.bf16.mxu0 0
  %76 = vmatpush2.bf16.msra.mxu0 0
  %77 = vmatprep.subr.bf16.mxu0 0
  %78 = vmatpush2.bf16.msra.mxu0 0
  %79 = vmatprep.subr.bf16.mxu0 0
  %80 = vmatpush2.bf16.msra.mxu0 0
  %81 = vmatprep.mubr.bf16.mxu0 0
  %82 = vmatmul.mubr.bf16.gmra.mxu0 %v47
  %v83 = vpop.f32.mrf.mxu0
  %v84 = vadd.f32 %v26, %v83
  %v85 = vpop.f32.mrf.mxu0
  %v86 = vpop.f32.mrf.mxu0
  %v87 = vadd.f32 %v26, %v86
  %v88 = vpop.f32.mrf.mxu0
  %89 = vdwg.mxu0
  %v90 = vmax.f32 %v84, 0.0
  %v91 = vmax.f32 %v87, 0.0
  %v92 = vpack.c.bf16 %v91, %v90
  %v94 = vunpack.c.l.b16 %v92
  %v95 = vunpack.c.h.b16 %v92
  %v96 = vpack.c.b16 %v94, %v94
  %v97 = vpack.c.b16 %v95, %v95
  %100 = vst [vmem:[%s3] sm:$0xf] %v96
  %101 = vst [vmem:[%s3 + $0x4] sm:$0xf] %v97
  // Predicated region
  $region14: #{_lambda_.38} parent=0 // pred_check
    _
  $region15: #{_lambda_.38} parent=0 // pred_check_branch
    %103 = sbr.rel (0) target = $region17
  $region16: #{_lambda_.38} parent=0 // pred_region
    _
  $region17: #{_lambda_.38} parent=0 // pred_fallthru
    _
  // Predicated region
  $region18: #{_lambda_.38} parent=0 // pred_check
    _
  $region19: #{_lambda_.38} parent=0 // pred_check_branch
    %105 = sbr.rel (0) target = $region21
  $region20: #{_lambda_.38} parent=0 // pred_region
    _
  $region21: #{_lambda_.38} parent=0 // pred_fallthru
    _

// kernel: _lambda_.37
$region0: #{_lambda_.37}
  #allocation0 [shape = 'u32[]', space=smem, size = 0x4, offset = 0x4, fixed_abs, tag = 'smem constant byte address 0x4 - core index']
  #allocation1 [shape = 'u32[144,128]{1,0:T(1,128)}', space=vmem, size = 0x12000, scoped, tag = 'internal scratch']
  #allocation2 [shape = 'f32[2,16]{1,0:T(2,128)}', space=vmem, size = 0x400, scoped, tag = 'scratch operand']
  #allocation3 [shape = 'f32[2,16]{1,0:T(2,128)}', space=vmem, size = 0x400, scoped, tag = 'scratch operand']
  %s0 = inlined_call_operand.vmem [shape: f32[2,8,2,64], index: 0, kind: input, shape index: {}]
  %s1 = inlined_call_operand.vmem [shape: f32[8,2,1], index: 1, kind: input, shape index: {}]
  %s2 = inlined_call_operand.vmem [shape: bf16[2,16,64], index: 2, kind: input, shape index: {}]
  %s3 = inlined_call_operand.vmem [shape: bf16[2,8,2,16], index: 3, kind: output, shape index: {}]
  %s4 = sld [smem:[#allocation0]]
  $region49: #{_lambda_.37} parent=0
    _
  %s6 = ssub.s32 1, %s4
  %s7 = scalar_select 0, %s6, %s4
  loop: start=0, step=1, limit=4
  $region2: #{_lambda_.37} parent=0 // loop_pre_header
    _
  $region3: #{_lambda_.37} parent=0 // loop_header
    %s9 = sphi 0, %s13
    %p10 = scmp.ge.s32.totalorder %s9, 4
    %s16 = sphi 0, %s28
    %s17 = sphi 0, %s24
    %s18 = sphi 0, %s16
    %s19 = sphi 0, %s17
    %s20 = sphi 0, %s18
    %s21 = sphi 0, %s19
    %s43 = sphi 0, %s45
    %s46 = sphi 0, %s43
    %s47 = sphi 0, %s46
    %s63 = sphi 0, %s47
    %s79 = sphi 0, %s81
    %s82 = sphi 0, %s79
    %s83 = sphi 0, %s82
    %s99 = sphi 0, %s83
    %s105 = sphi 0, %s107
    %s108 = sphi 0, %s105
    %s109 = sphi 0, %s108
    %s125 = sphi 0, %s109
    %s143 = sphi 0, %s145
    %s146 = sphi 0, %s143
    %s147 = sphi 0, %s146
    %s163 = sphi 0, %s147
  $region4: #{_lambda_.37} parent=0 // loop_header_branch
    %12 = sbr.rel (%p10) target = $region8
  $region5: #{_lambda_.37} parent=0 // loop_body
    %s14 = ssub.s32 %s9, 1
    %s15 = ssub.s32 %s9, 2
    %s22 = sadd.s32 1, %s17
    %p23 = scmp.ge.s32.totalorder %s22, 1
    %s24 = scalar_select %p23, 0, %s22
    %s25 = sadd.s32 1, %s16
    %s26 = scalar_select %p23, %s25, %s16
    %p27 = scmp.ge.s32.totalorder %s26, 2
    %s28 = scalar_select %p27, 0, %s26
    %s29 = ssub.s32 1, %s16
    %s30 = smul.u32 %s29, %s17
    %s31 = ssub.s32 0, %s17
    %s32 = smul.u32 %s16, %s31
    %s33 = sadd.s32 %s30, %s32
    %s34 = ssub.s32 1, %s28
    %s35 = smul.u32 %s34, %s24
    %s36 = ssub.s32 0, %s24
    %s37 = smul.u32 %s28, %s36
    %s38 = sadd.s32 %s35, %s37
    %s39 = ssub.s32 %s16, %s28
    %s40 = ssub.s32 %s33, %s38
    %s41 = sor.u32 %s39, %s40
    %p42 = scmp.eq.s32.totalorder %s41, 0
    %s44 = sadd.s32 %s43, 1
    %s45 = scalar_select %p42, %s43, %s44
    %p48 = pneg %p42
    %p49 = scmp.eq.s32.totalorder %s9, 1
    %p50 = por %p48, %p49
    %p51 = scmp.ne.s32.totalorder %s43, %s46
    %p52 = scmp.eq.s32.totalorder %s9, 0
    %p53 = por %p51, %p52
    %p54 = scmp.ne.s32.totalorder %s43, %s46
    %p55 = scmp.eq.s32.totalorder %s14, 1
    %p56 = por %p54, %p55
    %p57 = scmp.ne.s32.totalorder %s46, %s47
    %p58 = scmp.eq.s32.totalorder %s14, 0
    %p59 = por %p57, %p58
    %p60 = scmp.ne.s32.totalorder %s46, %s47
    %p61 = scmp.eq.s32.totalorder %s15, 1
    %p62 = por %p60, %p61
    %p64 = scmp.ne.s32.totalorder %s47, %s63
    %p65 = scmp.eq.s32.totalorder %s15, 0
    %p66 = por %p64, %p65
    %s67 = ssub.s32 1, %s16
    %s68 = smul.u32 %s67, %s17
    %s69 = ssub.s32 0, %s17
    %s70 = smul.u32 %s16, %s69
    %s71 = sadd.s32 %s68, %s70
    %s72 = ssub.s32 1, %s28
    %s73 = smul.u32 %s72, %s24
    %s74 = ssub.s32 0, %s24
    %s75 = smul.u32 %s28, %s74
    %s76 = sadd.s32 %s73, %s75
    %s77 = ssub.s32 %s71, %s76
    %p78 = scmp.eq.s32.totalorder %s77, 0
    %s80 = sadd.s32 %s79, 1
    %s81 = scalar_select %p78, %s79, %s80
    %p84 = pneg %p78
    %p85 = scmp.eq.s32.totalorder %s9, 1
    %p86 = por %p84, %p85
    %p87 = scmp.ne.s32.totalorder %s79, %s82
    %p88 = scmp.eq.s32.totalorder %s9, 0
    %p89 = por %p87, %p88
    %p90 = scmp.ne.s32.totalorder %s79, %s82
    %p91 = scmp.eq.s32.totalorder %s14, 1
    %p92 = por %p90, %p91
    %p93 = scmp.ne.s32.totalorder %s82, %s83
    %p94 = scmp.eq.s32.totalorder %s14, 0
    %p95 = por %p93, %p94
    %p96 = scmp.ne.s32.totalorder %s82, %s83
    %p97 = scmp.eq.s32.totalorder %s15, 1
    %p98 = por %p96, %p97
    %p100 = scmp.ne.s32.totalorder %s83, %s99
    %p101 = scmp.eq.s32.totalorder %s15, 0
    %p102 = por %p100, %p101
    %s103 = ssub.s32 %s16, %s28
    %p104 = scmp.eq.s32.totalorder %s103, 0
    %s106 = sadd.s32 %s105, 1
    %s107 = scalar_select %p104, %s105, %s106
    %p110 = pneg %p104
    %p111 = scmp.eq.s32.totalorder %s9, 1
    %p112 = por %p110, %p111
    %p113 = scmp.ne.s32.totalorder %s105, %s108
    %p114 = scmp.eq.s32.totalorder %s9, 0
    %p115 = por %p113, %p114
    %p116 = scmp.ne.s32.totalorder %s105, %s108
    %p117 = scmp.eq.s32.totalorder %s14, 1
    %p118 = por %p116, %p117
    %p119 = scmp.ne.s32.totalorder %s108, %s109
    %p120 = scmp.eq.s32.totalorder %s14, 0
    %p121 = por %p119, %p120
    %p122 = scmp.ne.s32.totalorder %s108, %s109
    %p123 = scmp.eq.s32.totalorder %s15, 1
    %p124 = por %p122, %p123
    %p126 = scmp.ne.s32.totalorder %s109, %s125
    %p127 = scmp.eq.s32.totalorder %s15, 0
    %p128 = por %p126, %p127
    %s129 = ssub.s32 1, %s16
    %s130 = smul.u32 %s129, %s17
    %s131 = ssub.s32 0, %s17
    %s132 = smul.u32 %s16, %s131
    %s133 = sadd.s32 %s130, %s132
    %s134 = ssub.s32 1, %s28
    %s135 = smul.u32 %s134, %s24
    %s136 = ssub.s32 0, %s24
    %s137 = smul.u32 %s28, %s136
    %s138 = sadd.s32 %s135, %s137
    %s139 = ssub.s32 %s16, %s28
    %s140 = ssub.s32 %s133, %s138
    %s141 = sor.u32 %s139, %s140
    %p142 = scmp.eq.s32.totalorder %s141, 0
    %s144 = sadd.s32 %s143, 1
    %s145 = scalar_select %p142, %s143, %s144
    %p148 = pneg %p142
    %p149 = scmp.eq.s32.totalorder %s9, 1
    %p150 = por %p148, %p149
    %p151 = scmp.ne.s32.totalorder %s143, %s146
    %p152 = scmp.eq.s32.totalorder %s9, 0
    %p153 = por %p151, %p152
    %p154 = scmp.ne.s32.totalorder %s143, %s146
    %p155 = scmp.eq.s32.totalorder %s14, 1
    %p156 = por %p154, %p155
    %p157 = scmp.ne.s32.totalorder %s146, %s147
    %p158 = scmp.eq.s32.totalorder %s14, 0
    %p159 = por %p157, %p158
    %p160 = scmp.ne.s32.totalorder %s146, %s147
    %p161 = scmp.eq.s32.totalorder %s15, 1
    %p162 = por %p160, %p161
    %p164 = scmp.ne.s32.totalorder %s147, %s163
    %p165 = scmp.eq.s32.totalorder %s15, 0
    %p166 = por %p164, %p165
    %p167 = scmp.le.s32.totalorder 1, %s9
    %p168 = scmp.lt.s32.totalorder %s9, 3
    %p169 = pnand %p167, %p168
    %p170 = pneg %p169
    // Predicated region
    $region9: #{_lambda_.37} parent=5 // pred_check
      _
    $region10: #{_lambda_.37} parent=5 // pred_check_branch
      %172 = sbr.rel (%p169) target = $region12
    $region11: #{_lambda_.37} parent=5 // pred_region
      %s173 = ssub.s32 %s9, 1
    $region12: #{_lambda_.37} parent=5 // pred_fallthru
      _
    %p174 = scmp.lt.s32.totalorder %s9, 2
    // Predicated region
    $region13: #{_lambda_.37} parent=5 // pred_check
      %p175 = pneg %p174
    $region14: #{_lambda_.37} parent=5 // pred_check_branch
      %177 = sbr.rel (%p175) target = $region16
    $region15: #{_lambda_.37} parent=5 // pred_region
      // Predicated region
      $region17: #{_lambda_.37} parent=15 // pred_check
        %p178 = pneg %p53
      $region18: #{_lambda_.37} parent=15 // pred_check_branch
        %180 = sbr.rel (%p178) target = $region20
      $region19: #{_lambda_.37} parent=15 // pred_region
        %s181 = ssub.s32 1, %s16
        %s182 = smul.u32 %s181, %s17
        %s183 = ssub.s32 0, %s17
        %s184 = smul.u32 %s16, %s183
        %s185 = sadd.s32 %s182, %s184
        %s186 = smul.u32 8, %s185
        %p187 = scmp.lt.s32.totalorder %s16, 1
        %s188 = scalar_select %p187, %s16, 1
        %p189 = scmp.lt.s32.totalorder %s186, 7
        %s190 = scalar_select %p189, %s186, 7
        %s191 = smul.addr %s188, 8
        %s192 = sadd.s32 %s190, %s191
        %s193 = smul.addr %s192, 2
        %s194 = scalar_lea.vmem %s0, %s193
        %s195 = ssub.s32 1, %s16
        %s196 = smul.u32 %s195, %s17
        %s197 = ssub.s32 0, %s17
        %s198 = smul.u32 %s16, %s197
        %s199 = sadd.s32 %s196, %s198
        %s200 = smul.u32 8, %s199
      $region20: #{_lambda_.37} parent=15 // pred_fallthru
        _
      // Predicated region
      $region21: #{_lambda_.37} parent=15 // pred_check
        %p201 = pneg %p89
      $region22: #{_lambda_.37} parent=15 // pred_check_branch
        %203 = sbr.rel (%p201) target = $region24
      $region23: #{_lambda_.37} parent=15 // pred_region
        %s204 = ssub.s32 1, %s16
        %s205 = smul.u32 %s204, %s17
        %s206 = ssub.s32 0, %s17
        %s207 = smul.u32 %s16, %s206
        %s208 = sadd.s32 %s205, %s207
        %s209 = smul.u32 8, %s208
        %p210 = scmp.lt.s32.totalorder %s209, 7
        %s211 = scalar_select %p210, %s209, 7
        %s212 = smul.addr %s211, 2
        %s213 = scalar_lea.vmem %s1, %s212
        %s214 = ssub.s32 1, %s16
        %s215 = smul.u32 %s214, %s17
        %s216 = ssub.s32 0, %s17
        %s217 = smul.u32 %s16, %s216
        %s218 = sadd.s32 %s215, %s217
        %s219 = smul.u32 8, %s218
      $region24: #{_lambda_.37} parent=15 // pred_fallthru
        _
      // Predicated region
      $region25: #{_lambda_.37} parent=15 // pred_check
        %p220 = pneg %p115
      $region26: #{_lambda_.37} parent=15 // pred_check_branch
        %222 = sbr.rel (%p220) target = $region28
      $region27: #{_lambda_.37} parent=15 // pred_region
        %p223 = scmp.lt.s32.totalorder %s16, 1
        %s224 = scalar_select %p223, %s16, 1
        %s225 = smul.addr %s224, 2
        %s226 = smul.addr %s225, 4
        %s227 = scalar_lea.vmem %s2, %s226
      $region28: #{_lambda_.37} parent=15 // pred_fallthru
        _
    $region16: #{_lambda_.37} parent=5 // pred_fallthru
      _
    %p228 = scmp.le.s32.totalorder 1, %s9
    %p229 = scmp.lt.s32.totalorder %s9, 3
    %p230 = pnand %p228, %p229
    %p231 = pneg %p230
    // Predicated region
    $region29: #{_lambda_.37} parent=5 // pred_check
      _
    $region30: #{_lambda_.37} parent=5 // pred_check_branch
      %233 = sbr.rel (%p230) target = $region32
    $region31: #{_lambda_.37} parent=5 // pred_region
      %s234 = ssub.s32 %s9, 1
      %s235 = ssub.s32 1, %s18
      %s236 = smul.u32 %s235, %s19
      %s237 = ssub.s32 0, %s19
      %s238 = smul.u32 %s18, %s237
      %s239 = sadd.s32 %s236, %s238
      %s240 = smul.u32 8, %s239
      %p241 = scmp.lt.s32.totalorder %s18, 1
      %s242 = scalar_select %p241, %s18, 1
      %p243 = scmp.lt.s32.totalorder %s240, 7
      %s244 = scalar_select %p243, %s240, 7
      %s245 = smul.addr %s242, 8
      %s246 = sadd.s32 %s244, %s245
      %s247 = smul.addr %s246, 2
      %s248 = scalar_lea.vmem %s0, %s247
      %p249 = pneg %p59
      %p250 = pneg %p56
      %s251 = ssub.s32 1, %s18
      %s252 = smul.u32 %s251, %s19
      %s253 = ssub.s32 0, %s19
      %s254 = smul.u32 %s18, %s253
      %s255 = sadd.s32 %s252, %s254
      %s256 = smul.u32 8, %s255
      %p257 = scmp.lt.s32.totalorder %s256, 7
      %s258 = scalar_select %p257, %s256, 7
      %s259 = smul.addr %s258, 2
      %s260 = scalar_lea.vmem %s1, %s259
      %p261 = pneg %p95
      %p262 = pneg %p92
      %p263 = scmp.lt.s32.totalorder %s18, 1
      %s264 = scalar_select %p263, %s18, 1
      %s265 = smul.addr %s264, 2
      %s266 = smul.addr %s265, 4
      %s267 = scalar_lea.vmem %s2, %s266
      %p268 = pneg %p121
      %p269 = pneg %p118
      %p270 = pneg %p159
      %p271 = pneg %p156
      %s272 = ssub.s32 1, %s18
      %s273 = smul.u32 %s272, %s19
      %s274 = ssub.s32 0, %s19
      %s275 = smul.u32 %s18, %s274
      %s276 = sadd.s32 %s273, %s275
      %s277 = smul.u32 8, %s276
      %p278 = scmp.lt.s32.totalorder %s18, 1
      %s279 = scalar_select %p278, %s18, 1
      %p280 = scmp.lt.s32.totalorder %s277, 7
      %s281 = scalar_select %p280, %s277, 7
      %s282 = smul.addr %s279, 8
      %s283 = sadd.s32 %s281, %s282
      %s284 = scalar_lea.vmem %s3, %s283
      %s285 = ssub.s32 1, %s18
      %s286 = smul.u32 %s285, %s19
      %s287 = ssub.s32 0, %s19
      %s288 = smul.u32 %s18, %s287
      %s289 = sadd.s32 %s286, %s288
      %s290 = smul.u32 8, %s289
      %p291 = scmp.lt.s32.totalorder %s18, 1
      %s292 = scalar_select %p291, %s18, 1
      %p293 = scmp.lt.s32.totalorder %s290, 7
      %s294 = scalar_select %p293, %s290, 7
      %s295 = smul.addr %s292, 8
      %s296 = sadd.s32 %s294, %s295
      %s297 = smul.addr %s296, 2
      %s298 = scalar_lea.vmem %s0, %s297
      %s299 = ssub.s32 1, %s18
      %s300 = smul.u32 %s299, %s19
      %s301 = ssub.s32 0, %s19
      %s302 = smul.u32 %s18, %s301
      %s303 = sadd.s32 %s300, %s302
      %s304 = smul.u32 8, %s303
      %s305 = ssub.s32 1, %s18
      %s306 = smul.u32 %s305, %s19
      %s307 = ssub.s32 0, %s19
      %s308 = smul.u32 %s18, %s307
      %s309 = sadd.s32 %s306, %s308
      %s310 = smul.u32 8, %s309
      %p311 = scmp.lt.s32.totalorder %s310, 7
      %s312 = scalar_select %p311, %s310, 7
      %s313 = smul.addr %s312, 2
      %s314 = scalar_lea.vmem %s1, %s313
      %s315 = ssub.s32 1, %s18
      %s316 = smul.u32 %s315, %s19
      %s317 = ssub.s32 0, %s19
      %s318 = smul.u32 %s18, %s317
      %s319 = sadd.s32 %s316, %s318
      %s320 = smul.u32 8, %s319
      %p321 = scmp.lt.s32.totalorder %s18, 1
      %s322 = scalar_select %p321, %s18, 1
      %s323 = smul.addr %s322, 2
      %s324 = smul.addr %s323, 4
      %s325 = scalar_lea.vmem %s2, %s324
      %s326 = ssub.s32 1, %s18
      %s327 = smul.u32 %s326, %s19
      %s328 = ssub.s32 0, %s19
      %s329 = smul.u32 %s18, %s328
      %s330 = sadd.s32 %s327, %s329
      %s331 = smul.u32 8, %s330
      %p332 = scmp.lt.s32.totalorder %s18, 1
      %s333 = scalar_select %p332, %s18, 1
      %p334 = scmp.lt.s32.totalorder %s331, 7
      %s335 = scalar_select %p334, %s331, 7
      %s336 = smul.addr %s333, 8
      %s337 = sadd.s32 %s335, %s336
      %s338 = scalar_lea.vmem %s3, %s337
      %s339 = ssub.s32 1, %s18
      %s340 = smul.u32 %s339, %s19
      %s341 = ssub.s32 0, %s19
      %s342 = smul.u32 %s18, %s341
      %s343 = sadd.s32 %s340, %s342
      %s344 = smul.u32 8, %s343
      %p346 = scmp.eq.s32.totalorder %s19, 0
      // Predicated region
      $region33: #{_lambda_.37} parent=31 // pred_check
        %p347 = pneg %p346
      $region34: #{_lambda_.37} parent=31 // pred_check_branch
        %349 = sbr.rel (%p347) target = $region36
      $region35: #{_lambda_.37} parent=31 // pred_region
        %vm350 = vcmask 123904
        %351 = vst.msk [vmem:[#allocation2] sm:$0x3] %vm350, 0.0
        %352 = vst.msk [vmem:[#allocation3] sm:$0x3] %vm350, 0.0
      $region36: #{_lambda_.37} parent=31 // pred_fallthru
        _
      %v353 = vld [vmem:[%s325] sm:$0xf]
      %v354 = vld [vmem:[%s325 + $0x4] sm:$0xf]
      %s355 = smul.u32 %s18, 7
      %v356 = vld [vmem:[#allocation2] sm:$0x3]
      %v357 = vld [vmem:[#allocation3] sm:$0x3]
      %s358 = smul.u32 %s355, 2
      %s359 = scalar_lea.vmem %s298, %s358
      %v360 = vld [vmem:[%s359] sm:$0x3]
      %v361 = vpack.c.bf16 %v356, %v356
      %v364 = vunpack.c.l.b16 %v353
      %v365 = vunpack.c.l.b16 %v354
      %v366 = vpack.c.b16 %v365, %v364
      %vm368 = vcmask 130048
      %v370 = vsel %vm368, %v361, 0
      %372 = vmatprep.subr.bf16.mxu0 0
      %373 = vmatpush1.bf16.msra.mxu0 0
      %374 = vmatprep.subr.bf16.mxu0 0
      %375 = vmatpush1.bf16.msra.mxu0 0
      %376 = vmatprep.subr.bf16.mxu0 0
      %377 = vmatpush1.bf16.msra.mxu0 0
      %378 = vmatprep.subr.bf16.mxu0 0
      %379 = vmatpush1.bf16.msra.mxu0 0
      %380 = vmatprep.subr.bf16.mxu0 0
      %381 = vmatpush1.bf16.msra.mxu0 0
      %382 = vmatprep.subr.bf16.mxu0 0
      %383 = vmatpush1.bf16.msra.mxu0 0
      %384 = vmatprep.subr.bf16.mxu0 0
      %385 = vmatpush1.bf16.msra.mxu0 0
      %386 = vmatprep.subr.bf16.mxu0 0
      %387 = vmatpush1.bf16.msra.mxu0 %v366
      %388 = vmatprep.subr.bf16.mxu0 0
      %389 = vmatpush2.bf16.msra.mxu0 0
      %390 = vmatprep.subr.bf16.mxu0 0
      %391 = vmatpush2.bf16.msra.mxu0 0
      %392 = vmatprep.subr.bf16.mxu0 0
      %393 = vmatpush2.bf16.msra.mxu0 0
      %394 = vmatprep.subr.bf16.mxu0 0
      %395 = vmatpush2.bf16.msra.mxu0 0
      %396 = vmatprep.subr.bf16.mxu0 0
      %397 = vmatpush2.bf16.msra.mxu0 0
      %398 = vmatprep.subr.bf16.mxu0 0
      %399 = vmatpush2.bf16.msra.mxu0 0
      %400 = vmatprep.subr.bf16.mxu0 0
      %401 = vmatpush2.bf16.msra.mxu0 0
      %402 = vmatprep.subr.bf16.mxu0 0
      %403 = vmatpush2.bf16.msra.mxu0 0
      %404 = vmatprep.mubr.bf16.mxu0 0
      %405 = vmatmul.mubr.bf16.gmra.mxu0 %v370
      %v406 = vpop.f32.mrf.mxu0
      %v407 = vadd.f32 0.0, %v406
      %v408 = vpop.f32.mrf.mxu0
      %v409 = vpop.f32.mrf.mxu0
      %v410 = vpop.f32.mrf.mxu0
      %411 = vdwg.mxu0
      %v412 = vadd.f32 %v360, %v407
      %v413 = vxor.u32 %v412, 2147483648
      %v414 = vmul.f32 %v413, 1.442695
      %v415 = vpow.pop %v414
      %v416 = vadd.f32 %v415, 1.0
      %v417 = vrcp.pop %v416
      %v418 = vmul.f32 1.0, %v417
      %v419 = vtanh.pop %v412
      %421 = vrot.lane.b32.xlu0 %v357, 16
      %v422 = vpop.permute.xlu0 %421
      %v424 = vmul.f32 %v418, %v422
      %426 = vrot.lane.b32.xlu0 %v419, 96
      %v427 = vpop.permute.xlu0 %426
      %v429 = vmul.f32 %v418, %v427
      %431 = vrot.lane.b32.xlu0 %v429, 16
      %v432 = vpop.permute.xlu0 %431
      %v434 = vadd.f32 %v424, %v432
      %v435 = vtanh.pop %v434
      %437 = vrot.lane.b32.xlu0 %v435, 32
      %v438 = vpop.permute.xlu0 %437
      %v440 = vmul.f32 %v418, %v438
      %s441 = scalar_lea.vmem %s314, %s358
      %v442 = vld [vmem:[%s441] sm:$0x3]
      %444 = vrot.lane.b32.xlu0 %v356, 48
      %v445 = vpop.permute.xlu0 %444
      %v447 = vsub.f32 %v440, %v445
      %449 = vset.pattern.permute.xlu0 0
      %450 = vperm.xlu0 %449, %v442
      %v451 = vpop.permute.xlu0 %450
      %v453 = vmul.f32 %v451, %v447
      %455 = vrot.lane.b32.xlu0 %v453, 80
      %v456 = vpop.permute.xlu0 %455
      %v458 = vadd.f32 %v356, %v456
      %vm459 = vcmask 123904
      %460 = vst.msk [vmem:[#allocation2] sm:$0x3] %vm459, %v458
      %v461 = vsub.f32 %v434, %v422
      %v462 = vmul.f32 %v451, %v461
      %464 = vrot.lane.b32.xlu0 %v462, 112
      %v465 = vpop.permute.xlu0 %464
      %v467 = vadd.f32 %v357, %v465
      %468 = vst.msk [vmem:[#allocation3] sm:$0x3] %vm459, %v467
      %v469 = vmul.f32 %v440, %v451
      %v470 = vpack.c.bf16 %v469, %v469
      %v473 = vunpack.c.l.s4 1966171168
      %v474 = vunpack.c.0.s8 %v473
      %v475 = vlaneseq
      %v476 = vshrl.u32 %v475, 7
      %v477 = vsub.s32 %v474, %v476
      %v478 = vrot.slane %v470, %v477
      %v480 = vunpack.c.l.s4 1966171168
      %v481 = vunpack.c.0.s8 %v480
      %v482 = vlaneseq
      %v483 = vshrl.u32 %v482, 7
      %v484 = vsub.s32 %v481, %v483
      %v485 = vrot.slane %v478, %v484
      %486 = vrot.lane.b32.xlu0 %v485, 80
      %v487 = vpop.permute.xlu0 %486
      %s489 = scalar_lea.vmem %s338, %s355
      %vm490 = vcmask 122880
      %491 = vst.msk [vmem:[%s489] sm:$0x1] %vm490, %v487
      %s492 = smul.u32 %s18, 5
      %s493 = sadd.s32 %s492, 1
      %v494 = vld [vmem:[#allocation2] sm:$0x3]
      %v495 = vld [vmem:[#allocation3] sm:$0x3]
      %s496 = smul.u32 %s493, 2
      %s497 = scalar_lea.vmem %s298, %s496
      %v498 = vld [vmem:[%s497] sm:$0x3]
      %v499 = vpack.c.bf16 %v494, %v494
      %v501 = vsel %vm368, %v499, 0
      %503 = vmatprep.subr.bf16.mxu0 0
      %504 = vmatpush1.bf16.msra.mxu0 0
      %505 = vmatprep.subr.bf16.mxu0 0
      %506 = vmatpush1.bf16.msra.mxu0 0
      %507 = vmatprep.subr.bf16.mxu0 0
      %508 = vmatpush1.bf16.msra.mxu0 0
      %509 = vmatprep.subr.bf16.mxu0 0
      %510 = vmatpush1.bf16.msra.mxu0 0
      %511 = vmatprep.subr.bf16.mxu0 0
      %512 = vmatpush1.bf16.msra.mxu0 0
      %513 = vmatprep.subr.bf16.mxu0 0
      %514 = vmatpush1.bf16.msra.mxu0 0
      %515 = vmatprep.subr.bf16.mxu0 0
      %516 = vmatpush1.bf16.msra.mxu0 0
      %517 = vmatprep.subr.bf16.mxu0 0
      %518 = vmatpush1.bf16.msra.mxu0 %v366
      %519 = vmatprep.subr.bf16.mxu0 0
      %520 = vmatpush2.bf16.msra.mxu0 0
      %521 = vmatprep.subr.bf16.mxu0 0
      %522 = vmatpush2.bf16.msra.mxu0 0
      %523 = vmatprep.subr.bf16.mxu0 0
      %524 = vmatpush2.bf16.msra.mxu0 0
      %525 = vmatprep.subr.bf16.mxu0 0
      %526 = vmatpush2.bf16.msra.mxu0 0
      %527 = vmatprep.subr.bf16.mxu0 0
      %528 = vmatpush2.bf16.msra.mxu0 0
      %529 = vmatprep.subr.bf16.mxu0 0
      %530 = vmatpush2.bf16.msra.mxu0 0
      %531 = vmatprep.subr.bf16.mxu0 0
      %532 = vmatpush2.bf16.msra.mxu0 0
      %533 = vmatprep.subr.bf16.mxu0 0
      %534 = vmatpush2.bf16.msra.mxu0 0
      %535 = vmatprep.mubr.bf16.mxu0 0
      %536 = vmatmul.mubr.bf16.gmra.mxu0 %v501
      %v537 = vpop.f32.mrf.mxu0
      %v538 = vadd.f32 0.0, %v537
      %v539 = vpop.f32.mrf.mxu0
      %v540 = vpop.f32.mrf.mxu0
      %v541 = vpop.f32.mrf.mxu0
      %542 = vdwg.mxu0
      %v543 = vadd.f32 %v498, %v538
      %v544 = vxor.u32 %v543, 2147483648
      %v545 = vmul.f32 %v544, 1.442695
      %v546 = vpow.pop %v545
      %v547 = vadd.f32 %v546, 1.0
      %v548 = vrcp.pop %v547
      %v549 = vmul.f32 1.0, %v548
      %v550 = vtanh.pop %v543
      %552 = vrot.lane.b32.xlu0 %v495, 16
      %v553 = vpop.permute.xlu0 %552
      %v555 = vmul.f32 %v549, %v553
      %557 = vrot.lane.b32.xlu0 %v550, 96
      %v558 = vpop.permute.xlu0 %557
      %v560 = vmul.f32 %v549, %v558
      %562 = vrot.lane.b32.xlu0 %v560, 16
      %v563 = vpop.permute.xlu0 %562
      %v565 = vadd.f32 %v555, %v563
      %v566 = vtanh.pop %v565
      %568 = vrot.lane.b32.xlu0 %v566, 32
      %v569 = vpop.permute.xlu0 %568
      %v571 = vmul.f32 %v549, %v569
      %s572 = scalar_lea.vmem %s314, %s496
      %v573 = vld [vmem:[%s572] sm:$0x3]
      %575 = vrot.lane.b32.xlu0 %v494, 48
      %v576 = vpop.permute.xlu0 %575
      %v578 = vsub.f32 %v571, %v576
      %580 = vset.pattern.permute.xlu0 0
      %581 = vperm.xlu0 %580, %v573
      %v582 = vpop.permute.xlu0 %581
      %v584 = vmul.f32 %v582, %v578
      %586 = vrot.lane.b32.xlu0 %v584, 80
      %v587 = vpop.permute.xlu0 %586
      %v589 = vadd.f32 %v494, %v587
      %590 = vst.msk [vmem:[#allocation2] sm:$0x3] %vm459, %v589
      %v591 = vsub.f32 %v565, %v553
      %v592 = vmul.f32 %v582, %v591
      %594 = vrot.lane.b32.xlu0 %v592, 112
      %v595 = vpop.permute.xlu0 %594
      %v597 = vadd.f32 %v495, %v595
      %598 = vst.msk [vmem:[#allocation3] sm:$0x3] %vm459, %v597
      %v599 = vmul.f32 %v571, %v582
      %v600 = vpack.c.bf16 %v599, %v599
      %v603 = vunpack.c.l.s4 1966171168
      %v604 = vunpack.c.0.s8 %v603
      %v605 = vlaneseq
      %v606 = vshrl.u32 %v605, 7
      %v607 = vsub.s32 %v604, %v606
      %v608 = vrot.slane %v600, %v607
      %v610 = vunpack.c.l.s4 1966171168
      %v611 = vunpack.c.0.s8 %v610
      %v612 = vlaneseq
      %v613 = vshrl.u32 %v612, 7
      %v614 = vsub.s32 %v611, %v613
      %v615 = vrot.slane %v608, %v614
      %616 = vrot.lane.b32.xlu0 %v615, 80
      %v617 = vpop.permute.xlu0 %616
      %s619 = scalar_lea.vmem %s338, %s493
      %620 = vst.msk [vmem:[%s619] sm:$0x1] %vm490, %v617
      %s621 = smul.u32 %s18, 3
      %s622 = sadd.s32 %s621, 2
      %v623 = vld [vmem:[#allocation2] sm:$0x3]
      %v624 = vld [vmem:[#allocation3] sm:$0x3]
      %s625 = smul.u32 %s622, 2
      %s626 = scalar_lea.vmem %s298, %s625
      %v627 = vld [vmem:[%s626] sm:$0x3]
      %v628 = vpack.c.bf16 %v623, %v623
      %v630 = vsel %vm368, %v628, 0
      %632 = vmatprep.subr.bf16.mxu0 0
      %633 = vmatpush1.bf16.msra.mxu0 0
      %634 = vmatprep.subr.bf16.mxu0 0
      %635 = vmatpush1.bf16.msra.mxu0 0
      %636 = vmatprep.subr.bf16.mxu0 0
      %637 = vmatpush1.bf16.msra.mxu0 0
      %638 = vmatprep.subr.bf16.mxu0 0
      %639 = vmatpush1.bf16.msra.mxu0 0
      %640 = vmatprep.subr.bf16.mxu0 0
      %641 = vmatpush1.bf16.msra.mxu0 0
      %642 = vmatprep.subr.bf16.mxu0 0
      %643 = vmatpush1.bf16.msra.mxu0 0
      %644 = vmatprep.subr.bf16.mxu0 0
      %645 = vmatpush1.bf16.msra.mxu0 0
      %646 = vmatprep.subr.bf16.mxu0 0
      %647 = vmatpush1.bf16.msra.mxu0 %v366
      %648 = vmatprep.subr.bf16.mxu0 0
      %649 = vmatpush2.bf16.msra.mxu0 0
      %650 = vmatprep.subr.bf16.mxu0 0
      %651 = vmatpush2.bf16.msra.mxu0 0
      %652 = vmatprep.subr.bf16.mxu0 0
      %653 = vmatpush2.bf16.msra.mxu0 0
      %654 = vmatprep.subr.bf16.mxu0 0
      %655 = vmatpush2.bf16.msra.mxu0 0
      %656 = vmatprep.subr.bf16.mxu0 0
      %657 = vmatpush2.bf16.msra.mxu0 0
      %658 = vmatprep.subr.bf16.mxu0 0
      %659 = vmatpush2.bf16.msra.mxu0 0
      %660 = vmatprep.subr.bf16.mxu0 0
      %661 = vmatpush2.bf16.msra.mxu0 0
      %662 = vmatprep.subr.bf16.mxu0 0
      %663 = vmatpush2.bf16.msra.mxu0 0
      %664 = vmatprep.mubr.bf16.mxu0 0
      %665 = vmatmul.mubr.bf16.gmra.mxu0 %v630
      %v666 = vpop.f32.mrf.mxu0
      %v667 = vadd.f32 0.0, %v666
      %v668 = vpop.f32.mrf.mxu0
      %v669 = vpop.f32.mrf.mxu0
      %v670 = vpop.f32.mrf.mxu0
      %671 = vdwg.mxu0
      %v672 = vadd.f32 %v627, %v667
      %v673 = vxor.u32 %v672, 2147483648
      %v674 = vmul.f32 %v673, 1.442695
      %v675 = vpow.pop %v674
      %v676 = vadd.f32 %v675, 1.0
      %v677 = vrcp.pop %v676
      %v678 = vmul.f32 1.0, %v677
      %v679 = vtanh.pop %v672
      %681 = vrot.lane.b32.xlu0 %v624, 16
      %v682 = vpop.permute.xlu0 %681
      %v684 = vmul.f32 %v678, %v682
      %686 = vrot.lane.b32.xlu0 %v679, 96
      %v687 = vpop.permute.xlu0 %686
      %v689 = vmul.f32 %v678, %v687
      %691 = vrot.lane.b32.xlu0 %v689, 16
      %v692 = vpop.permute.xlu0 %691
      %v694 = vadd.f32 %v684, %v692
      %v695 = vtanh.pop %v694
      %697 = vrot.lane.b32.xlu0 %v695, 32
      %v698 = vpop.permute.xlu0 %697
      %v700 = vmul.f32 %v678, %v698
      %s701 = scalar_lea.vmem %s314, %s625
      %v702 = vld [vmem:[%s701] sm:$0x3]
      %704 = vrot.lane.b32.xlu0 %v623, 48
      %v705 = vpop.permute.xlu0 %704
      %v707 = vsub.f32 %v700, %v705
      %709 = vset.pattern.permute.xlu0 0
      %710 = vperm.xlu0 %709, %v702
      %v711 = vpop.permute.xlu0 %710
      %v713 = vmul.f32 %v711, %v707
      %715 = vrot.lane.b32.xlu0 %v713, 80
      %v716 = vpop.permute.xlu0 %715
      %v718 = vadd.f32 %v623, %v716
      %719 = vst.msk [vmem:[#allocation2] sm:$0x3] %vm459, %v718
      %v720 = vsub.f32 %v694, %v682
      %v721 = vmul.f32 %v711, %v720
      %723 = vrot.lane.b32.xlu0 %v721, 112
      %v724 = vpop.permute.xlu0 %723
      %v726 = vadd.f32 %v624, %v724
      %727 = vst.msk [vmem:[#allocation3] sm:$0x3] %vm459, %v726
      %v728 = vmul.f32 %v700, %v711
      %v729 = vpack.c.bf16 %v728, %v728
      %v732 = vunpack.c.l.s4 1966171168
      %v733 = vunpack.c.0.s8 %v732
      %v734 = vlaneseq
      %v735 = vshrl.u32 %v734, 7
      %v736 = vsub.s32 %v733, %v735
      %v737 = vrot.slane %v729, %v736
      %v739 = vunpack.c.l.s4 1966171168
      %v740 = vunpack.c.0.s8 %v739
      %v741 = vlaneseq
      %v742 = vshrl.u32 %v741, 7
      %v743 = vsub.s32 %v740, %v742
      %v744 = vrot.slane %v737, %v743
      %745 = vrot.lane.b32.xlu0 %v744, 80
      %v746 = vpop.permute.xlu0 %745
      %s748 = scalar_lea.vmem %s338, %s622
      %749 = vst.msk [vmem:[%s748] sm:$0x1] %vm490, %v746
      %s750 = sadd.s32 %s18, 3
      %v751 = vld [vmem:[#allocation2] sm:$0x3]
      %v752 = vld [vmem:[#allocation3] sm:$0x3]
      %s753 = smul.u32 %s750, 2
      %s754 = scalar_lea.vmem %s298, %s753
      %v755 = vld [vmem:[%s754] sm:$0x3]
      %v756 = vpack.c.bf16 %v751, %v751
      %v758 = vsel %vm368, %v756, 0
      %760 = vmatprep.subr.bf16.mxu0 0
      %761 = vmatpush1.bf16.msra.mxu0 0
      %762 = vmatprep.subr.bf16.mxu0 0
      %763 = vmatpush1.bf16.msra.mxu0 0
      %764 = vmatprep.subr.bf16.mxu0 0
      %765 = vmatpush1.bf16.msra.mxu0 0
      %766 = vmatprep.subr.bf16.mxu0 0
      %767 = vmatpush1.bf16.msra.mxu0 0
      %768 = vmatprep.subr.bf16.mxu0 0
      %769 = vmatpush1.bf16.msra.mxu0 0
      %770 = vmatprep.subr.bf16.mxu0 0
      %771 = vmatpush1.bf16.msra.mxu0 0
      %772 = vmatprep.subr.bf16.mxu0 0
      %773 = vmatpush1.bf16.msra.mxu0 0
      %774 = vmatprep.subr.bf16.mxu0 0
      %775 = vmatpush1.bf16.msra.mxu0 %v366
      %776 = vmatprep.subr.bf16.mxu0 0
      %777 = vmatpush2.bf16.msra.mxu0 0
      %778 = vmatprep.subr.bf16.mxu0 0
      %779 = vmatpush2.bf16.msra.mxu0 0
      %780 = vmatprep.subr.bf16.mxu0 0
      %781 = vmatpush2.bf16.msra.mxu0 0
      %782 = vmatprep.subr.bf16.mxu0 0
      %783 = vmatpush2.bf16.msra.mxu0 0
      %784 = vmatprep.subr.bf16.mxu0 0
      %785 = vmatpush2.bf16.msra.mxu0 0
      %786 = vmatprep.subr.bf16.mxu0 0
      %787 = vmatpush2.bf16.msra.mxu0 0
      %788 = vmatprep.subr.bf16.mxu0 0
      %789 = vmatpush2.bf16.msra.mxu0 0
      %790 = vmatprep.subr.bf16.mxu0 0
      %791 = vmatpush2.bf16.msra.mxu0 0
      %792 = vmatprep.mubr.bf16.mxu0 0
      %793 = vmatmul.mubr.bf16.gmra.mxu0 %v758
      %v794 = vpop.f32.mrf.mxu0
      %v795 = vadd.f32 0.0, %v794
      %v796 = vpop.f32.mrf.mxu0
      %v797 = vpop.f32.mrf.mxu0
      %v798 = vpop.f32.mrf.mxu0
      %799 = vdwg.mxu0
      %v800 = vadd.f32 %v755, %v795
      %v801 = vxor.u32 %v800, 2147483648
      %v802 = vmul.f32 %v801, 1.442695
      %v803 = vpow.pop %v802
      %v804 = vadd.f32 %v803, 1.0
      %v805 = vrcp.pop %v804
      %v806 = vmul.f32 1.0, %v805
      %v807 = vtanh.pop %v800
      %809 = vrot.lane.b32.xlu0 %v752, 16
      %v810 = vpop.permute.xlu0 %809
      %v812 = vmul.f32 %v806, %v810
      %814 = vrot.lane.b32.xlu0 %v807, 96
      %v815 = vpop.permute.xlu0 %814
      %v817 = vmul.f32 %v806, %v815
      %819 = vrot.lane.b32.xlu0 %v817, 16
      %v820 = vpop.permute.xlu0 %819
      %v822 = vadd.f32 %v812, %v820
      %v823 = vtanh.pop %v822
      %825 = vrot.lane.b32.xlu0 %v823, 32
      %v826 = vpop.permute.xlu0 %825
      %v828 = vmul.f32 %v806, %v826
      %s829 = scalar_lea.vmem %s314, %s753
      %v830 = vld [vmem:[%s829] sm:$0x3]
      %832 = vrot.lane.b32.xlu0 %v751, 48
      %v833 = vpop.permute.xlu0 %832
      %v835 = vsub.f32 %v828, %v833
      %837 = vset.pattern.permute.xlu0 0
      %838 = vperm.xlu0 %837, %v830
      %v839 = vpop.permute.xlu0 %838
      %v841 = vmul.f32 %v839, %v835
      %843 = vrot.lane.b32.xlu0 %v841, 80
      %v844 = vpop.permute.xlu0 %843
      %v846 = vadd.f32 %v751, %v844
      %847 = vst.msk [vmem:[#allocation2] sm:$0x3] %vm459, %v846
      %v848 = vsub.f32 %v822, %v810
      %v849 = vmul.f32 %v839, %v848
      %851 = vrot.lane.b32.xlu0 %v849, 112
      %v852 = vpop.permute.xlu0 %851
      %v854 = vadd.f32 %v752, %v852
      %855 = vst.msk [vmem:[#allocation3] sm:$0x3] %vm459, %v854
      %v856 = vmul.f32 %v828, %v839
      %v857 = vpack.c.bf16 %v856, %v856
      %v860 = vunpack.c.l.s4 1966171168
      %v861 = vunpack.c.0.s8 %v860
      %v862 = vlaneseq
      %v863 = vshrl.u32 %v862, 7
      %v864 = vsub.s32 %v861, %v863
      %v865 = vrot.slane %v857, %v864
      %v867 = vunpack.c.l.s4 1966171168
      %v868 = vunpack.c.0.s8 %v867
      %v869 = vlaneseq
      %v870 = vshrl.u32 %v869, 7
      %v871 = vsub.s32 %v868, %v870
      %v872 = vrot.slane %v865, %v871
      %873 = vrot.lane.b32.xlu0 %v872, 80
      %v874 = vpop.permute.xlu0 %873
      %s876 = scalar_lea.vmem %s338, %s750
      %877 = vst.msk [vmem:[%s876] sm:$0x1] %vm490, %v874
      %s878 = ssub.s32 4, %s18
      %v879 = vld [vmem:[#allocation2] sm:$0x3]
      %v880 = vld [vmem:[#allocation3] sm:$0x3]
      %s881 = smul.u32 %s878, 2
      %s882 = scalar_lea.vmem %s298, %s881
      %v883 = vld [vmem:[%s882] sm:$0x3]
      %v884 = vpack.c.bf16 %v879, %v879
      %v886 = vsel %vm368, %v884, 0
      %888 = vmatprep.subr.bf16.mxu0 0
      %889 = vmatpush1.bf16.msra.mxu0 0
      %890 = vmatprep.subr.bf16.mxu0 0
      %891 = vmatpush1.bf16.msra.mxu0 0
      %892 = vmatprep.subr.bf16.mxu0 0
      %893 = vmatpush1.bf16.msra.mxu0 0
      %894 = vmatprep.subr.bf16.mxu0 0
      %895 = vmatpush1.bf16.msra.mxu0 0
      %896 = vmatprep.subr.bf16.mxu0 0
      %897 = vmatpush1.bf16.msra.mxu0 0
      %898 = vmatprep.subr.bf16.mxu0 0
      %899 = vmatpush1.bf16.msra.mxu0 0
      %900 = vmatprep.subr.bf16.mxu0 0
      %901 = vmatpush1.bf16.msra.mxu0 0
      %902 = vmatprep.subr.bf16.mxu0 0
      %903 = vmatpush1.bf16.msra.mxu0 %v366
      %904 = vmatprep.subr.bf16.mxu0 0
      %905 = vmatpush2.bf16.msra.mxu0 0
      %906 = vmatprep.subr.bf16.mxu0 0
      %907 = vmatpush2.bf16.msra.mxu0 0
      %908 = vmatprep.subr.bf16.mxu0 0
      %909 = vmatpush2.bf16.msra.mxu0 0
      %910 = vmatprep.subr.bf16.mxu0 0
      %911 = vmatpush2.bf16.msra.mxu0 0
      %912 = vmatprep.subr.bf16.mxu0 0
      %913 = vmatpush2.bf16.msra.mxu0 0
      %914 = vmatprep.subr.bf16.mxu0 0
      %915 = vmatpush2.bf16.msra.mxu0 0
      %916 = vmatprep.subr.bf16.mxu0 0
      %917 = vmatpush2.bf16.msra.mxu0 0
      %918 = vmatprep.subr.bf16.mxu0 0
      %919 = vmatpush2.bf16.msra.mxu0 0
      %920 = vmatprep.mubr.bf16.mxu0 0
      %921 = vmatmul.mubr.bf16.gmra.mxu0 %v886
      %v922 = vpop.f32.mrf.mxu0
      %v923 = vadd.f32 0.0, %v922
      %v924 = vpop.f32.mrf.mxu0
      %v925 = vpop.f32.mrf.mxu0
      %v926 = vpop.f32.mrf.mxu0
      %927 = vdwg.mxu0
      %v928 = vadd.f32 %v883, %v923
      %v929 = vxor.u32 %v928, 2147483648
      %v930 = vmul.f32 %v929, 1.442695
      %v931 = vpow.pop %v930
      %v932 = vadd.f32 %v931, 1.0
      %v933 = vrcp.pop %v932
      %v934 = vmul.f32 1.0, %v933
      %v935 = vtanh.pop %v928
      %937 = vrot.lane.b32.xlu0 %v880, 16
      %v938 = vpop.permute.xlu0 %937
      %v940 = vmul.f32 %v934, %v938
      %942 = vrot.lane.b32.xlu0 %v935, 96
      %v943 = vpop.permute.xlu0 %942
      %v945 = vmul.f32 %v934, %v943
      %947 = vrot.lane.b32.xlu0 %v945, 16
      %v948 = vpop.permute.xlu0 %947
      %v950 = vadd.f32 %v940, %v948
      %v951 = vtanh.pop %v950
      %953 = vrot.lane.b32.xlu0 %v951, 32
      %v954 = vpop.permute.xlu0 %953
      %v956 = vmul.f32 %v934, %v954
      %s957 = scalar_lea.vmem %s314, %s881
      %v958 = vld [vmem:[%s957] sm:$0x3]
      %960 = vrot.lane.b32.xlu0 %v879, 48
      %v961 = vpop.permute.xlu0 %960
      %v963 = vsub.f32 %v956, %v961
      %965 = vset.pattern.permute.xlu0 0
      %966 = vperm.xlu0 %965, %v958
      %v967 = vpop.permute.xlu0 %966
      %v969 = vmul.f32 %v967, %v963
      %971 = vrot.lane.b32.xlu0 %v969, 80
      %v972 = vpop.permute.xlu0 %971
      %v974 = vadd.f32 %v879, %v972
      %975 = vst.msk [vmem:[#allocation2] sm:$0x3] %vm459, %v974
      %v976 = vsub.f32 %v950, %v938
      %v977 = vmul.f32 %v967, %v976
      %979 = vrot.lane.b32.xlu0 %v977, 112
      %v980 = vpop.permute.xlu0 %979
      %v982 = vadd.f32 %v880, %v980
      %983 = vst.msk [vmem:[#allocation3] sm:$0x3] %vm459, %v982
      %v984 = vmul.f32 %v956, %v967
      %v985 = vpack.c.bf16 %v984, %v984
      %v988 = vunpack.c.l.s4 1966171168
      %v989 = vunpack.c.0.s8 %v988
      %v990 = vlaneseq
      %v991 = vshrl.u32 %v990, 7
      %v992 = vsub.s32 %v989, %v991
      %v993 = vrot.slane %v985, %v992
      %v995 = vunpack.c.l.s4 1966171168
      %v996 = vunpack.c.0.s8 %v995
      %v997 = vlaneseq
      %v998 = vshrl.u32 %v997, 7
      %v999 = vsub.s32 %v996, %v998
      %v1000 = vrot.slane %v993, %v999
      %1001 = vrot.lane.b32.xlu0 %v1000, 80
      %v1002 = vpop.permute.xlu0 %1001
      %s1004 = scalar_lea.vmem %s338, %s878
      %1005 = vst.msk [vmem:[%s1004] sm:$0x1] %vm490, %v1002
      %s1006 = smul.u32 %s18, 4294967293
      %s1007 = sadd.s32 %s1006, 5
      %v1008 = vld [vmem:[#allocation2] sm:$0x3]
      %v1009 = vld [vmem:[#allocation3] sm:$0x3]
      %s1010 = smul.u32 %s1007, 2
      %s1011 = scalar_lea.vmem %s298, %s1010
      %v1012 = vld [vmem:[%s1011] sm:$0x3]
      %v1013 = vpack.c.bf16 %v1008, %v1008
      %v1015 = vsel %vm368, %v1013, 0
      %1017 = vmatprep.subr.bf16.mxu0 0
      %1018 = vmatpush1.bf16.msra.mxu0 0
      %1019 = vmatprep.subr.bf16.mxu0 0
      %1020 = vmatpush1.bf16.msra.mxu0 0
      %1021 = vmatprep.subr.bf16.mxu0 0
      %1022 = vmatpush1.bf16.msra.mxu0 0
      %1023 = vmatprep.subr.bf16.mxu0 0
      %1024 = vmatpush1.bf16.msra.mxu0 0
      %1025 = vmatprep.subr.bf16.mxu0 0
      %1026 = vmatpush1.bf16.msra.mxu0 0
      %1027 = vmatprep.subr.bf16.mxu0 0
      %1028 = vmatpush1.bf16.msra.mxu0 0
      %1029 = vmatprep.subr.bf16.mxu0 0
      %1030 = vmatpush1.bf16.msra.mxu0 0
      %1031 = vmatprep.subr.bf16.mxu0 0
      %1032 = vmatpush1.bf16.msra.mxu0 %v366
      %1033 = vmatprep.subr.bf16.mxu0 0
      %1034 = vmatpush2.bf16.msra.mxu0 0
      %1035 = vmatprep.subr.bf16.mxu0 0
      %1036 = vmatpush2.bf16.msra.mxu0 0
      %1037 = vmatprep.subr.bf16.mxu0 0
      %1038 = vmatpush2.bf16.msra.mxu0 0
      %1039 = vmatprep.subr.bf16.mxu0 0
      %1040 = vmatpush2.bf16.msra.mxu0 0
      %1041 = vmatprep.subr.bf16.mxu0 0
      %1042 = vmatpush2.bf16.msra.mxu0 0
      %1043 = vmatprep.subr.bf16.mxu0 0
      %1044 = vmatpush2.bf16.msra.mxu0 0
      %1045 = vmatprep.subr.bf16.mxu0 0
      %1046 = vmatpush2.bf16.msra.mxu0 0
      %1047 = vmatprep.subr.bf16.mxu0 0
      %1048 = vmatpush2.bf16.msra.mxu0 0
      %1049 = vmatprep.mubr.bf16.mxu0 0
      %1050 = vmatmul.mubr.bf16.gmra.mxu0 %v1015
      %v1051 = vpop.f32.mrf.mxu0
      %v1052 = vadd.f32 0.0, %v1051
      %v1053 = vpop.f32.mrf.mxu0
      %v1054 = vpop.f32.mrf.mxu0
      %v1055 = vpop.f32.mrf.mxu0
      %1056 = vdwg.mxu0
      %v1057 = vadd.f32 %v1012, %v1052
      %v1058 = vxor.u32 %v1057, 2147483648
      %v1059 = vmul.f32 %v1058, 1.442695
      %v1060 = vpow.pop %v1059
      %v1061 = vadd.f32 %v1060, 1.0
      %v1062 = vrcp.pop %v1061
      %v1063 = vmul.f32 1.0, %v1062
      %v1064 = vtanh.pop %v1057
      %1066 = vrot.lane.b32.xlu0 %v1009, 16
      %v1067 = vpop.permute.xlu0 %1066
      %v1069 = vmul.f32 %v1063, %v1067
      %1071 = vrot.lane.b32.xlu0 %v1064, 96
      %v1072 = vpop.permute.xlu0 %1071
      %v1074 = vmul.f32 %v1063, %v1072
      %1076 = vrot.lane.b32.xlu0 %v1074, 16
      %v1077 = vpop.permute.xlu0 %1076
      %v1079 = vadd.f32 %v1069, %v1077
      %v1080 = vtanh.pop %v1079
      %1082 = vrot.lane.b32.xlu0 %v1080, 32
      %v1083 = vpop.permute.xlu0 %1082
      %v1085 = vmul.f32 %v1063, %v1083
      %s1086 = scalar_lea.vmem %s314, %s1010
      %v1087 = vld [vmem:[%s1086] sm:$0x3]
      %1089 = vrot.lane.b32.xlu0 %v1008, 48
      %v1090 = vpop.permute.xlu0 %1089
      %v1092 = vsub.f32 %v1085, %v1090
      %1094 = vset.pattern.permute.xlu0 0
      %1095 = vperm.xlu0 %1094, %v1087
      %v1096 = vpop.permute.xlu0 %1095
      %v1098 = vmul.f32 %v1096, %v1092
      %1100 = vrot.lane.b32.xlu0 %v1098, 80
      %v1101 = vpop.permute.xlu0 %1100
      %v1103 = vadd.f32 %v1008, %v1101
      %1104 = vst.msk [vmem:[#allocation2] sm:$0x3] %vm459, %v1103
      %v1105 = vsub.f32 %v1079, %v1067
      %v1106 = vmul.f32 %v1096, %v1105
      %1108 = vrot.lane.b32.xlu0 %v1106, 112
      %v1109 = vpop.permute.xlu0 %1108
      %v1111 = vadd.f32 %v1009, %v1109
      %1112 = vst.msk [vmem:[#allocation3] sm:$0x3] %vm459, %v1111
      %v1113 = vmul.f32 %v1085, %v1096
      %v1114 = vpack.c.bf16 %v1113, %v1113
      %v1117 = vunpack.c.l.s4 1966171168
      %v1118 = vunpack.c.0.s8 %v1117
      %v1119 = vlaneseq
      %v1120 = vshrl.u32 %v1119, 7
      %v1121 = vsub.s32 %v1118, %v1120
      %v1122 = vrot.slane %v1114, %v1121
      %v1124 = vunpack.c.l.s4 1966171168
      %v1125 = vunpack.c.0.s8 %v1124
      %v1126 = vlaneseq
      %v1127 = vshrl.u32 %v1126, 7
      %v1128 = vsub.s32 %v1125, %v1127
      %v1129 = vrot.slane %v1122, %v1128
      %1130 = vrot.lane.b32.xlu0 %v1129, 80
      %v1131 = vpop.permute.xlu0 %1130
      %s1133 = scalar_lea.vmem %s338, %s1007
      %1134 = vst.msk [vmem:[%s1133] sm:$0x1] %vm490, %v1131
      %s1135 = smul.u32 %s18, 4294967291
      %s1136 = sadd.s32 %s1135, 6
      %v1137 = vld [vmem:[#allocation2] sm:$0x3]
      %v1138 = vld [vmem:[#allocation3] sm:$0x3]
      %s1139 = smul.u32 %s1136, 2
      %s1140 = scalar_lea.vmem %s298, %s1139
      %v1141 = vld [vmem:[%s1140] sm:$0x3]
      %v1142 = vpack.c.bf16 %v1137, %v1137
      %v1144 = vsel %vm368, %v1142, 0
      %1146 = vmatprep.subr.bf16.mxu0 0
      %1147 = vmatpush1.bf16.msra.mxu0 0
      %1148 = vmatprep.subr.bf16.mxu0 0
      %1149 = vmatpush1.bf16.msra.mxu0 0
      %1150 = vmatprep.subr.bf16.mxu0 0
      %1151 = vmatpush1.bf16.msra.mxu0 0
      %1152 = vmatprep.subr.bf16.mxu0 0
      %1153 = vmatpush1.bf16.msra.mxu0 0
      %1154 = vmatprep.subr.bf16.mxu0 0
      %1155 = vmatpush1.bf16.msra.mxu0 0
      %1156 = vmatprep.subr.bf16.mxu0 0
      %1157 = vmatpush1.bf16.msra.mxu0 0
      %1158 = vmatprep.subr.bf16.mxu0 0
      %1159 = vmatpush1.bf16.msra.mxu0 0
      %1160 = vmatprep.subr.bf16.mxu0 0
      %1161 = vmatpush1.bf16.msra.mxu0 %v366
      %1162 = vmatprep.subr.bf16.mxu0 0
      %1163 = vmatpush2.bf16.msra.mxu0 0
      %1164 = vmatprep.subr.bf16.mxu0 0
      %1165 = vmatpush2.bf16.msra.mxu0 0
      %1166 = vmatprep.subr.bf16.mxu0 0
      %1167 = vmatpush2.bf16.msra.mxu0 0
      %1168 = vmatprep.subr.bf16.mxu0 0
      %1169 = vmatpush2.bf16.msra.mxu0 0
      %1170 = vmatprep.subr.bf16.mxu0 0
      %1171 = vmatpush2.bf16.msra.mxu0 0
      %1172 = vmatprep.subr.bf16.mxu0 0
      %1173 = vmatpush2.bf16.msra.mxu0 0
      %1174 = vmatprep.subr.bf16.mxu0 0
      %1175 = vmatpush2.bf16.msra.mxu0 0
      %1176 = vmatprep.subr.bf16.mxu0 0
      %1177 = vmatpush2.bf16.msra.mxu0 0
      %1178 = vmatprep.mubr.bf16.mxu0 0
      %1179 = vmatmul.mubr.bf16.gmra.mxu0 %v1144
      %v1180 = vpop.f32.mrf.mxu0
      %v1181 = vadd.f32 0.0, %v1180
      %v1182 = vpop.f32.mrf.mxu0
      %v1183 = vpop.f32.mrf.mxu0
      %v1184 = vpop.f32.mrf.mxu0
      %1185 = vdwg.mxu0
      %v1186 = vadd.f32 %v1141, %v1181
      %v1187 = vxor.u32 %v1186, 2147483648
      %v1188 = vmul.f32 %v1187, 1.442695
      %v1189 = vpow.pop %v1188
      %v1190 = vadd.f32 %v1189, 1.0
      %v1191 = vrcp.pop %v1190
      %v1192 = vmul.f32 1.0, %v1191
      %v1193 = vtanh.pop %v1186
      %1195 = vrot.lane.b32.xlu0 %v1138, 16
      %v1196 = vpop.permute.xlu0 %1195
      %v1198 = vmul.f32 %v1192, %v1196
      %1200 = vrot.lane.b32.xlu0 %v1193, 96
      %v1201 = vpop.permute.xlu0 %1200
      %v1203 = vmul.f32 %v1192, %v1201
      %1205 = vrot.lane.b32.xlu0 %v1203, 16
      %v1206 = vpop.permute.xlu0 %1205
      %v1208 = vadd.f32 %v1198, %v1206
      %v1209 = vtanh.pop %v1208
      %1211 = vrot.lane.b32.xlu0 %v1209, 32
      %v1212 = vpop.permute.xlu0 %1211
      %v1214 = vmul.f32 %v1192, %v1212
      %s1215 = scalar_lea.vmem %s314, %s1139
      %v1216 = vld [vmem:[%s1215] sm:$0x3]
      %1218 = vrot.lane.b32.xlu0 %v1137, 48
      %v1219 = vpop.permute.xlu0 %1218
      %v1221 = vsub.f32 %v1214, %v1219
      %1223 = vset.pattern.permute.xlu0 0
      %1224 = vperm.xlu0 %1223, %v1216
      %v1225 = vpop.permute.xlu0 %1224
      %v1227 = vmul.f32 %v1225, %v1221
      %1229 = vrot.lane.b32.xlu0 %v1227, 80
      %v1230 = vpop.permute.xlu0 %1229
      %v1232 = vadd.f32 %v1137, %v1230
      %1233 = vst.msk [vmem:[#allocation2] sm:$0x3] %vm459, %v1232
      %v1234 = vsub.f32 %v1208, %v1196
      %v1235 = vmul.f32 %v1225, %v1234
      %1237 = vrot.lane.b32.xlu0 %v1235, 112
      %v1238 = vpop.permute.xlu0 %1237
      %v1240 = vadd.f32 %v1138, %v1238
      %1241 = vst.msk [vmem:[#allocation3] sm:$0x3] %vm459, %v1240
      %v1242 = vmul.f32 %v1214, %v1225
      %v1243 = vpack.c.bf16 %v1242, %v1242
      %v1246 = vunpack.c.l.s4 1966171168
      %v1247 = vunpack.c.0.s8 %v1246
      %v1248 = vlaneseq
      %v1249 = vshrl.u32 %v1248, 7
      %v1250 = vsub.s32 %v1247, %v1249
      %v1251 = vrot.slane %v1243, %v1250
      %v1253 = vunpack.c.l.s4 1966171168
      %v1254 = vunpack.c.0.s8 %v1253
      %v1255 = vlaneseq
      %v1256 = vshrl.u32 %v1255, 7
      %v1257 = vsub.s32 %v1254, %v1256
      %v1258 = vrot.slane %v1251, %v1257
      %1259 = vrot.lane.b32.xlu0 %v1258, 80
      %v1260 = vpop.permute.xlu0 %1259
      %s1262 = scalar_lea.vmem %s338, %s1136
      %1263 = vst.msk [vmem:[%s1262] sm:$0x1] %vm490, %v1260
      %s1264 = smul.u32 %s18, 4294967289
      %s1265 = sadd.s32 %s1264, 7
      %v1266 = vld [vmem:[#allocation2] sm:$0x3]
      %v1267 = vld [vmem:[#allocation3] sm:$0x3]
      %s1268 = smul.u32 %s1265, 2
      %s1269 = scalar_lea.vmem %s298, %s1268
      %v1270 = vld [vmem:[%s1269] sm:$0x3]
      %v1271 = vpack.c.bf16 %v1266, %v1266
      %v1273 = vsel %vm368, %v1271, 0
      %1275 = vmatprep.subr.bf16.mxu0 0
      %1276 = vmatpush1.bf16.msra.mxu0 0
      %1277 = vmatprep.subr.bf16.mxu0 0
      %1278 = vmatpush1.bf16.msra.mxu0 0
      %1279 = vmatprep.subr.bf16.mxu0 0
      %1280 = vmatpush1.bf16.msra.mxu0 0
      %1281 = vmatprep.subr.bf16.mxu0 0
      %1282 = vmatpush1.bf16.msra.mxu0 0
      %1283 = vmatprep.subr.bf16.mxu0 0
      %1284 = vmatpush1.bf16.msra.mxu0 0
      %1285 = vmatprep.subr.bf16.mxu0 0
      %1286 = vmatpush1.bf16.msra.mxu0 0
      %1287 = vmatprep.subr.bf16.mxu0 0
      %1288 = vmatpush1.bf16.msra.mxu0 0
      %1289 = vmatprep.subr.bf16.mxu0 0
      %1290 = vmatpush1.bf16.msra.mxu0 %v366
      %1291 = vmatprep.subr.bf16.mxu0 0
      %1292 = vmatpush2.bf16.msra.mxu0 0
      %1293 = vmatprep.subr.bf16.mxu0 0
      %1294 = vmatpush2.bf16.msra.mxu0 0
      %1295 = vmatprep.subr.bf16.mxu0 0
      %1296 = vmatpush2.bf16.msra.mxu0 0
      %1297 = vmatprep.subr.bf16.mxu0 0
      %1298 = vmatpush2.bf16.msra.mxu0 0
      %1299 = vmatprep.subr.bf16.mxu0 0
      %1300 = vmatpush2.bf16.msra.mxu0 0
      %1301 = vmatprep.subr.bf16.mxu0 0
      %1302 = vmatpush2.bf16.msra.mxu0 0
      %1303 = vmatprep.subr.bf16.mxu0 0
      %1304 = vmatpush2.bf16.msra.mxu0 0
      %1305 = vmatprep.subr.bf16.mxu0 0
      %1306 = vmatpush2.bf16.msra.mxu0 0
      %1307 = vmatprep.mubr.bf16.mxu0 0
      %1308 = vmatmul.mubr.bf16.gmra.mxu0 %v1273
      %v1309 = vpop.f32.mrf.mxu0
      %v1310 = vadd.f32 0.0, %v1309
      %v1311 = vpop.f32.mrf.mxu0
      %v1312 = vpop.f32.mrf.mxu0
      %v1313 = vpop.f32.mrf.mxu0
      %1314 = vdwg.mxu0
      %v1315 = vadd.f32 %v1270, %v1310
      %v1316 = vxor.u32 %v1315, 2147483648
      %v1317 = vmul.f32 %v1316, 1.442695
      %v1318 = vpow.pop %v1317
      %v1319 = vadd.f32 %v1318, 1.0
      %v1320 = vrcp.pop %v1319
      %v1321 = vmul.f32 1.0, %v1320
      %v1322 = vtanh.pop %v1315
      %1324 = vrot.lane.b32.xlu0 %v1267, 16
      %v1325 = vpop.permute.xlu0 %1324
      %v1327 = vmul.f32 %v1321, %v1325
      %1329 = vrot.lane.b32.xlu0 %v1322, 96
      %v1330 = vpop.permute.xlu0 %1329
      %v1332 = vmul.f32 %v1321, %v1330
      %1334 = vrot.lane.b32.xlu0 %v1332, 16
      %v1335 = vpop.permute.xlu0 %1334
      %v1337 = vadd.f32 %v1327, %v1335
      %v1338 = vtanh.pop %v1337
      %1340 = vrot.lane.b32.xlu0 %v1338, 32
      %v1341 = vpop.permute.xlu0 %1340
      %v1343 = vmul.f32 %v1321, %v1341
      %s1344 = scalar_lea.vmem %s314, %s1268
      %v1345 = vld [vmem:[%s1344] sm:$0x3]
      %1347 = vrot.lane.b32.xlu0 %v1266, 48
      %v1348 = vpop.permute.xlu0 %1347
      %v1350 = vsub.f32 %v1343, %v1348
      %1352 = vset.pattern.permute.xlu0 0
      %1353 = vperm.xlu0 %1352, %v1345
      %v1354 = vpop.permute.xlu0 %1353
      %v1356 = vmul.f32 %v1354, %v1350
      %1358 = vrot.lane.b32.xlu0 %v1356, 80
      %v1359 = vpop.permute.xlu0 %1358
      %v1361 = vadd.f32 %v1266, %v1359
      %1362 = vst.msk [vmem:[#allocation2] sm:$0x3] %vm459, %v1361
      %v1363 = vsub.f32 %v1337, %v1325
      %v1364 = vmul.f32 %v1354, %v1363
      %1366 = vrot.lane.b32.xlu0 %v1364, 112
      %v1367 = vpop.permute.xlu0 %1366
      %v1369 = vadd.f32 %v1267, %v1367
      %1370 = vst.msk [vmem:[#allocation3] sm:$0x3] %vm459, %v1369
      %v1371 = vmul.f32 %v1343, %v1354
      %v1372 = vpack.c.bf16 %v1371, %v1371
      %v1375 = vunpack.c.l.s4 1966171168
      %v1376 = vunpack.c.0.s8 %v1375
      %v1377 = vlaneseq
      %v1378 = vshrl.u32 %v1377, 7
      %v1379 = vsub.s32 %v1376, %v1378
      %v1380 = vrot.slane %v1372, %v1379
      %v1382 = vunpack.c.l.s4 1966171168
      %v1383 = vunpack.c.0.s8 %v1382
      %v1384 = vlaneseq
      %v1385 = vshrl.u32 %v1384, 7
      %v1386 = vsub.s32 %v1383, %v1385
      %v1387 = vrot.slane %v1380, %v1386
      %1388 = vrot.lane.b32.xlu0 %v1387, 80
      %v1389 = vpop.permute.xlu0 %1388
      %s1391 = scalar_lea.vmem %s338, %s1265
      %1392 = vst.msk [vmem:[%s1391] sm:$0x1] %vm490, %v1389
      %s1393 = ssub.s32 1, %s18
      %s1394 = smul.u32 %s1393, %s19
      %s1395 = ssub.s32 0, %s19
      %s1396 = smul.u32 %s18, %s1395
      %s1397 = sadd.s32 %s1394, %s1396
      %s1398 = smul.u32 8, %s1397
      %p1399 = scmp.lt.s32.totalorder %s18, 1
      %s1400 = scalar_select %p1399, %s18, 1
      %p1401 = scmp.lt.s32.totalorder %s1398, 7
      %s1402 = scalar_select %p1401, %s1398, 7
      %s1403 = smul.addr %s1400, 8
      %s1404 = sadd.s32 %s1402, %s1403
      %s1405 = scalar_lea.vmem %s3, %s1404
      // Predicated region
      $region37: #{_lambda_.37} parent=31 // pred_check
        %p1406 = pneg %p156
      $region38: #{_lambda_.37} parent=31 // pred_check_branch
        %1408 = sbr.rel (%p1406) target = $region40
      $region39: #{_lambda_.37} parent=31 // pred_region
        %s1409 = ssub.s32 1, %s18
        %s1410 = smul.u32 %s1409, %s19
        %s1411 = ssub.s32 0, %s19
        %s1412 = smul.u32 %s18, %s1411
        %s1413 = sadd.s32 %s1410, %s1412
        %s1414 = smul.u32 8, %s1413
      $region40: #{_lambda_.37} parent=31 // pred_fallthru
        _
    $region32: #{_lambda_.37} parent=5 // pred_fallthru
      _
    %p1415 = scmp.le.s32.totalorder 2, %s9
    // Predicated region
    $region41: #{_lambda_.37} parent=5 // pred_check
      %p1416 = pneg %p1415
    $region42: #{_lambda_.37} parent=5 // pred_check_branch
      %1418 = sbr.rel (%p1416) target = $region44
    $region43: #{_lambda_.37} parent=5 // pred_region
      %s1419 = ssub.s32 %s9, 2
      // Predicated region
      $region45: #{_lambda_.37} parent=43 // pred_check
        %p1420 = pneg %p162
      $region46: #{_lambda_.37} parent=43 // pred_check_branch
        %1422 = sbr.rel (%p1420) target = $region48
      $region47: #{_lambda_.37} parent=43 // pred_region
        %s1423 = ssub.s32 1, %s20
        %s1424 = smul.u32 %s1423, %s21
        %s1425 = ssub.s32 0, %s21
        %s1426 = smul.u32 %s20, %s1425
        %s1427 = sadd.s32 %s1424, %s1426
        %s1428 = smul.u32 8, %s1427
        %p1429 = scmp.lt.s32.totalorder %s20, 1
        %s1430 = scalar_select %p1429, %s20, 1
        %p1431 = scmp.lt.s32.totalorder %s1428, 7
        %s1432 = scalar_select %p1431, %s1428, 7
        %s1433 = smul.addr %s1430, 8
        %s1434 = sadd.s32 %s1432, %s1433
        %s1435 = scalar_lea.vmem %s3, %s1434
      $region48: #{_lambda_.37} parent=43 // pred_fallthru
        _
    $region44: #{_lambda_.37} parent=5 // pred_fallthru
      _
  $region6: #{_lambda_.37} parent=0 // loop_footer
    %s13 = sadd.s32 1, %s9
  $region7: #{_lambda_.37} parent=0 // loop_footer_branch
    %8 = sbr.rel target = $region3
  $region8: #{_lambda_.37} parent=0 // loop_exit
    _

</llo_original>
